<compile_context>
chip_gen: v5e
topology: v5e:2x2
jax: 0.10.0
libtpu: 0.0.40
codegen_flags: <defaults>
</compile_context>

<pallas_src>
import jax
import jax.numpy as jnp
import numpy as np
from jax import lax
from jax.experimental import pallas as pl
from jax.experimental.pallas import tpu as pltpu


def _selu(z):
    alpha = 1.6732632423543772
    scale = 1.0507009873554805
    # Clamp the unselected branch so exp() of large positives never produces inf.
    return scale * jnp.where(z > 0, z, alpha * (jnp.exp(jnp.minimum(z, 0.0)) - 1.0))


# ----------------------------------------------------------------------------
# Fused Pallas kernel: bi-LSTM (fwd+bwd) -> uni-LSTM -> head
# ----------------------------------------------------------------------------
def _fused_lstm_kernel(
    # ---- inputs ----
    x_ref,                                        # (T*B, Din) time-major, flattened
    wih_f_ref, whh_f_ref, b_f_ref,                # bi fwd: (Din,4H) (H,4H) (1,4H)
    wih_b_ref, whh_b_ref, b_b_ref,                # bi bwd
    wihf_u_ref, wihb_u_ref, whh_u_ref, b_u_ref,   # uni: W_ih split into fwd/bwd halves
    w1_ref, b1_ref, w2_ref, b2_ref,               # head: (H,300) (1,300) (300,out) (1,out)
    # ---- output ----
    o_ref,                                        # (B, out)
    # ---- scratch ----
    proj_f, proj_b, proj_u,                       # (T*B, 4H) f32
    yf, yb,                                       # (T*B, H)  f32
    hf, cf, hb, cb, hu, cu,                       # (B, H)    f32
):
    f32 = jnp.float32
    B, H = hf.shape
    T = x_ref.shape[0] // B

    def cell(gates, c_prev):
        i = jax.nn.sigmoid(gates[:, 0:H])
        f = jax.nn.sigmoid(gates[:, H:2 * H])
        g = jnp.tanh(gates[:, 2 * H:3 * H])
        o = jax.nn.sigmoid(gates[:, 3 * H:4 * H])
        c = f * c_prev + i * g
        h = o * jnp.tanh(c)
        return h, c

    # Hoisted input projections (+bias) for the bidirectional layer:
    # one (T*B, Din) x (Din, 4H) matmul per direction, off the serial path.
    xv = x_ref[...]
    proj_f[...] = jnp.dot(xv, wih_f_ref[...], preferred_element_type=f32) + b_f_ref[...]
    proj_b[...] = jnp.dot(xv, wih_b_ref[...], preferred_element_type=f32) + b_b_ref[...]

    for r in (hf, cf, hb, cb, hu, cu):
        r[...] = jnp.zeros(r.shape, f32)

    # Bidirectional layer: fwd (time t) and bwd (time T-1-t) interleave per step.
    # Small static T -> plain unrolled loop; switch to a grid over T chunks when scaling.
    for t in range(T):
        tb = T - 1 - t
        g_f = proj_f[pl.ds(t * B, B), :] + jnp.dot(
            hf[...].astype(whh_f_ref.dtype), whh_f_ref[...], preferred_element_type=f32)
        g_b = proj_b[pl.ds(tb * B, B), :] + jnp.dot(
            hb[...].astype(whh_b_ref.dtype), whh_b_ref[...], preferred_element_type=f32)
        h_f, c_f = cell(g_f, cf[...])
        h_b, c_b = cell(g_b, cb[...])
        hf[...] = h_f
        cf[...] = c_f
        hb[...] = h_b
        cb[...] = c_b
        yf[pl.ds(t * B, B), :] = h_f
        yb[pl.ds(tb * B, B), :] = h_b

    # Unidirectional layer input projection: replaces the (T,B,2H) concat with two
    # matmuls against the split W_ih halves, again hoisted out of the recurrence.
    proj_u[...] = (
        jnp.dot(yf[...].astype(wihf_u_ref.dtype), wihf_u_ref[...], preferred_element_type=f32)
        + jnp.dot(yb[...].astype(wihb_u_ref.dtype), wihb_u_ref[...], preferred_element_type=f32)
        + b_u_ref[...]
    )

    for t in range(T):
        g_u = proj_u[pl.ds(t * B, B), :] + jnp.dot(
            hu[...].astype(whh_u_ref.dtype), whh_u_ref[...], preferred_element_type=f32)
        h_u, c_u = cell(g_u, cu[...])
        hu[...] = h_u
        cu[...] = c_u

    # Head fused onto the last timestep: Linear(H->300) -> SELU -> Dropout(eval) -> Linear(300->out)
    z = jnp.dot(hu[...].astype(w1_ref.dtype), w1_ref[...], preferred_element_type=f32) + b1_ref[...]
    z = _selu(z)
    # TODO(synk): Dropout(0.5) implemented with eval-mode semantics (identity).
    o_ref[...] = jnp.dot(z.astype(w2_ref.dtype), w2_ref[...], preferred_element_type=f32) + b2_ref[...]


# ----------------------------------------------------------------------------
# Wrapper
# ----------------------------------------------------------------------------
def lstm_model_forward(x, params):
    """Forward pass matching the PyTorch LSTM module (is_classifier=False).

    x: (B, T, input_size) batch-first, like nn.LSTM(batch_first=True).
    """
    wih_f, whh_f, b_f = params["bi_fwd"]
    wih_b, whh_b, b_b = params["bi_bwd"]
    wih_u, whh_u, b_u = params["uni"]
    w1, b1, w2, b2 = params["head"]

    B, T, Din = x.shape
    H = whh_f.shape[0]
    out_dim = w2.shape[1]

    # batch-first -> time-major, flattened to (T*B, Din)
    x_tb = jnp.transpose(x, (1, 0, 2)).reshape(T * B, Din).astype(wih_f.dtype)
    # Split the uni layer's W_ih: rows [0:H] multiply y_fwd, rows [H:2H] multiply y_bwd
    # (PyTorch concatenates [fwd, bwd] along the feature dim).
    wihf_u, wihb_u = wih_u[:H], wih_u[H:]

    vspec = pl.BlockSpec(memory_space=pltpu.MemorySpace.VMEM)
    return pl.pallas_call(
        _fused_lstm_kernel,
        out_shape=jax.ShapeDtypeStruct((B, out_dim), jnp.float32),
        in_specs=[vspec] * 15,
        out_specs=vspec,
        scratch_shapes=[
            pltpu.VMEM((T * B, 4 * H), jnp.float32),   # proj_f
            pltpu.VMEM((T * B, 4 * H), jnp.float32),   # proj_b
            pltpu.VMEM((T * B, 4 * H), jnp.float32),   # proj_u
            pltpu.VMEM((T * B, H), jnp.float32),       # yf
            pltpu.VMEM((T * B, H), jnp.float32),       # yb
        ] + [pltpu.VMEM((B, H), jnp.float32)] * 6,     # hf cf hb cb hu cu
        compiler_params=pltpu.CompilerParams(
            # Total residency (inputs + scratch) is < 2 MiB at these shapes; keep the
            # scoped limit well under v7x's 64 MiB/TC physical VMEM.
            vmem_limit_bytes=32 * 1024 * 1024,
        ),
    )(x_tb, wih_f, whh_f, b_f, wih_b, whh_b, b_b,
      wihf_u, wihb_u, whh_u, b_u, w1, b1, w2, b2)


lstm_model_forward_jit = jax.jit(lstm_model_forward)


# ----------------------------------------------------------------------------
# Pure-JAX reference (mirrors the kernel's bf16-operand / f32-accumulate matmuls)
# ----------------------------------------------------------------------------
def _lstm_ref(x_tbd, wih, whh, b):
    H = whh.shape[0]
    B = x_tbd.shape[1]

    def step(carry, xt):
        h, c = carry
        gates = (jnp.dot(xt.astype(wih.dtype), wih, preferred_element_type=jnp.float32)
                 + jnp.dot(h.astype(whh.dtype), whh, preferred_element_type=jnp.float32)
                 + b)
        i = jax.nn.sigmoid(gates[:, :H])
        f = jax.nn.sigmoid(gates[:, H:2 * H])
        g = jnp.tanh(gates[:, 2 * H:3 * H])
        o = jax.nn.sigmoid(gates[:, 3 * H:])
        c = f * c + i * g
        h = o * jnp.tanh(c)
        return (h, c), h

    init = (jnp.zeros((B, H), jnp.float32), jnp.zeros((B, H), jnp.float32))
    _, ys = lax.scan(step, init, x_tbd)
    return ys


def _forward_ref(x, params):
    x_t = jnp.transpose(x, (1, 0, 2)).astype(jnp.float32)
    y_fwd = _lstm_ref(x_t, *params["bi_fwd"])
    y_bwd = _lstm_ref(x_t[::-1], *params["bi_bwd"])[::-1]
    y_bi = jnp.concatenate([y_fwd, y_bwd], axis=-1)
    y_uni = _lstm_ref(y_bi, *params["uni"])
    last = y_uni[-1]
    w1, b1, w2, b2 = params["head"]
    z = jnp.dot(last.astype(w1.dtype), w1, preferred_element_type=jnp.float32) + b1
    z = _selu(z)
    return jnp.dot(z.astype(w2.dtype), w2, preferred_element_type=jnp.float32) + b2


# ----------------------------------------------------------------------------
# Deterministic parameter initialization (PyTorch-style uniform init)
# ----------------------------------------------------------------------------
def _uniform(key, shape, bound):
    return jax.random.uniform(key, shape, jnp.float32, -bound, bound)


def make_lstm_layer_params(key, din, hidden, ih_dtype, hh_dtype):
    k = 1.0 / np.sqrt(hidden)
    k1, k2, k3, k4 = jax.random.split(key, 4)
    w_ih = _uniform(k1, (4 * hidden, din), k)      # PyTorch shape (4H, Din)
    w_hh = _uniform(k2, (4 * hidden, hidden), k)   # (4H, H)
    b_ih = _uniform(k3, (4 * hidden,), k)
    b_hh = _uniform(k4, (4 * hidden,), k)
    # Kernel layout: (Din, 4H), (H, 4H), (1, 4H); PyTorch gate order i,f,g,o.
    return (w_ih.T.astype(ih_dtype),
            w_hh.T.astype(hh_dtype),
            (b_ih + b_hh)[None, :].astype(jnp.float32))


def make_params(key, input_size, hidden_size, output_size):
    k_bf, k_bb, k_u, k_h1, k_h2 = jax.random.split(key, 5)
    # bf16 for the K=H recurrent / uni-input matmul weights (v6e/v7x MXU, halves VMEM
    # traffic); the bi-layer W_ih has K = input_size = 1 so it (and x) stay f32.
    params = {
        "bi_fwd": make_lstm_layer_params(k_bf, input_size, hidden_size,
                                         jnp.float32, jnp.bfloat16),
        "bi_bwd": make_lstm_layer_params(k_bb, input_size, hidden_size,
                                         jnp.float32, jnp.bfloat16),
        "uni": make_lstm_layer_params(k_u, 2 * hidden_size, hidden_size,
                                      jnp.bfloat16, jnp.bfloat16),
    }
    # Head: Linear(H, 300) -> SELU -> Dropout -> Linear(300, output_size), f32 (runs once).
    k1a, k1b = jax.random.split(k_h1)
    k2a, k2b = jax.random.split(k_h2)
    bound1 = 1.0 / np.sqrt(hidden_size)
    bound2 = 1.0 / np.sqrt(300)
    w1 = _uniform(k1a, (300, hidden_size), bound1).T         # (H, 300)
    b1 = _uniform(k1b, (300,), bound1)[None, :]              # (1, 300)
    w2 = _uniform(k2a, (output_size, 300), bound2).T         # (300, out)
    b2 = _uniform(k2b, (output_size,), bound2)[None, :]      # (1, out)
    params["head"] = (w1, b1, w2, b2)
    return params


# ----------------------------------------------------------------------------
# Main
# ----------------------------------------------------------------------------
if __name__ == "__main__":
    input_size = 1
    hidden_size = 128
    output_size = 1
    batch = 8     # >= 8 fills f32 sublanes / MXU rows and keeps per-step slices 8-aligned
    seq = 8

    key = jax.random.PRNGKey(0)
    k_params, k_x = jax.random.split(key)
    params = make_params(k_params, input_size, hidden_size, output_size)

    x = jax.random.normal(k_x, (batch, seq, input_size), dtype=jnp.float32)

    out = lstm_model_forward_jit(x, params)
    out = jax.block_until_ready(out)

    ref = _forward_ref(x, params)
    np.testing.assert_allclose(np.asarray(out), np.asarray(ref), rtol=2e-3, atol=2e-3)
    assert out.shape == (batch, output_size)

    print("KERNEL_OK")
</pallas_src>

<mosaic_0001>
module attributes {stable_mosaic.version = 11 : i64} {
  func.func @_fused_lstm_kernel(%arg0: memref<64x1xf32, #tpu.memory_space<vmem>>, %arg1: memref<1x512xf32, #tpu.memory_space<vmem>>, %arg2: memref<128x512xbf16, #tpu.memory_space<vmem>>, %arg3: memref<1x512xf32, #tpu.memory_space<vmem>>, %arg4: memref<1x512xf32, #tpu.memory_space<vmem>>, %arg5: memref<128x512xbf16, #tpu.memory_space<vmem>>, %arg6: memref<1x512xf32, #tpu.memory_space<vmem>>, %arg7: memref<128x512xbf16, #tpu.memory_space<vmem>>, %arg8: memref<128x512xbf16, #tpu.memory_space<vmem>>, %arg9: memref<128x512xbf16, #tpu.memory_space<vmem>>, %arg10: memref<1x512xf32, #tpu.memory_space<vmem>>, %arg11: memref<128x300xf32, #tpu.memory_space<vmem>>, %arg12: memref<1x300xf32, #tpu.memory_space<vmem>>, %arg13: memref<300x1xf32, #tpu.memory_space<vmem>>, %arg14: memref<1x1xf32, #tpu.memory_space<vmem>>, %arg15: memref<8x1xf32, #tpu.memory_space<vmem>>, %arg16: memref<64x512xf32, #tpu.memory_space<vmem>>, %arg17: memref<64x512xf32, #tpu.memory_space<vmem>>, %arg18: memref<64x512xf32, #tpu.memory_space<vmem>>, %arg19: memref<64x128xf32, #tpu.memory_space<vmem>>, %arg20: memref<64x128xf32, #tpu.memory_space<vmem>>, %arg21: memref<8x128xf32, #tpu.memory_space<vmem>>, %arg22: memref<8x128xf32, #tpu.memory_space<vmem>>, %arg23: memref<8x128xf32, #tpu.memory_space<vmem>>, %arg24: memref<8x128xf32, #tpu.memory_space<vmem>>, %arg25: memref<8x128xf32, #tpu.memory_space<vmem>>, %arg26: memref<8x128xf32, #tpu.memory_space<vmem>>) attributes {dimension_semantics = [], scalar_prefetch = 0 : i64, scratch_operands = 11 : i64, tpu.core_type = #tpu.core_type<tc>} {
    %c0 = arith.constant 0 : index
    %c0_0 = arith.constant 0 : index
    %0 = vector.load %arg0[%c0, %c0_0] : memref<64x1xf32, #tpu.memory_space<vmem>>, vector<64x1xf32>
    %c0_1 = arith.constant 0 : index
    %c0_2 = arith.constant 0 : index
    %1 = vector.load %arg1[%c0_1, %c0_2] : memref<1x512xf32, #tpu.memory_space<vmem>>, vector<1x512xf32>
    %cst = arith.constant dense<0.000000e+00> : vector<64x512xf32>
    %2 = tpu.matmul %0, %1, %cst {dimension_numbers = #tpu.dot_dimension_numbers<[1], [0], [0], [1], [0, 0, 1, 1], [], []>} : vector<64x1xf32>, vector<1x512xf32>, vector<64x512xf32> -> vector<64x512xf32>
    %c0_3 = arith.constant 0 : index
    %c0_4 = arith.constant 0 : index
    %3 = vector.load %arg3[%c0_3, %c0_4] : memref<1x512xf32, #tpu.memory_space<vmem>>, vector<1x512xf32>
    %4 = vector.broadcast %3 : vector<1x512xf32> to vector<64x512xf32>
    %5 = arith.addf %2, %4 : vector<64x512xf32>
    %c0_5 = arith.constant 0 : index
    %c0_6 = arith.constant 0 : index
    %6 = vector.load %arg16[%c0_5, %c0_6] : memref<64x512xf32, #tpu.memory_space<vmem>>, vector<64x512xf32>
    tpu.vector_store %arg16[%c0_5, %c0_6], %5 {strides = array<i32>} : memref<64x512xf32, #tpu.memory_space<vmem>>, vector<64x512xf32>,
    %c0_7 = arith.constant 0 : index
    %c0_8 = arith.constant 0 : index
    %7 = vector.load %arg4[%c0_7, %c0_8] : memref<1x512xf32, #tpu.memory_space<vmem>>, vector<1x512xf32>
    %cst_9 = arith.constant dense<0.000000e+00> : vector<64x512xf32>
    %8 = tpu.matmul %0, %7, %cst_9 {dimension_numbers = #tpu.dot_dimension_numbers<[1], [0], [0], [1], [0, 0, 1, 1], [], []>} : vector<64x1xf32>, vector<1x512xf32>, vector<64x512xf32> -> vector<64x512xf32>
    %c0_10 = arith.constant 0 : index
    %c0_11 = arith.constant 0 : index
    %9 = vector.load %arg6[%c0_10, %c0_11] : memref<1x512xf32, #tpu.memory_space<vmem>>, vector<1x512xf32>
    %10 = vector.broadcast %9 : vector<1x512xf32> to vector<64x512xf32>
    %11 = arith.addf %8, %10 : vector<64x512xf32>
    %c0_12 = arith.constant 0 : index
    %c0_13 = arith.constant 0 : index
    %12 = vector.load %arg17[%c0_12, %c0_13] : memref<64x512xf32, #tpu.memory_space<vmem>>, vector<64x512xf32>
    tpu.vector_store %arg17[%c0_12, %c0_13], %11 {strides = array<i32>} : memref<64x512xf32, #tpu.memory_space<vmem>>, vector<64x512xf32>,
    %cst_14 = arith.constant 0.000000e+00 : f32
    %13 = vector.broadcast %cst_14 : f32 to vector<8x128xf32>
    %c0_15 = arith.constant 0 : index
    %c0_16 = arith.constant 0 : index
    %14 = vector.load %arg21[%c0_15, %c0_16] : memref<8x128xf32, #tpu.memory_space<vmem>>, vector<8x128xf32>
    tpu.vector_store %arg21[%c0_15, %c0_16], %13 {strides = array<i32>} : memref<8x128xf32, #tpu.memory_space<vmem>>, vector<8x128xf32>,
    %cst_17 = arith.constant 0.000000e+00 : f32
    %15 = vector.broadcast %cst_17 : f32 to vector<8x128xf32>
    %c0_18 = arith.constant 0 : index
    %c0_19 = arith.constant 0 : index
    %16 = vector.load %arg22[%c0_18, %c0_19] : memref<8x128xf32, #tpu.memory_space<vmem>>, vector<8x128xf32>
    tpu.vector_store %arg22[%c0_18, %c0_19], %15 {strides = array<i32>} : memref<8x128xf32, #tpu.memory_space<vmem>>, vector<8x128xf32>,
    %cst_20 = arith.constant 0.000000e+00 : f32
    %17 = vector.broadcast %cst_20 : f32 to vector<8x128xf32>
    %c0_21 = arith.constant 0 : index
    %c0_22 = arith.constant 0 : index
    %18 = vector.load %arg23[%c0_21, %c0_22] : memref<8x128xf32, #tpu.memory_space<vmem>>, vector<8x128xf32>
    tpu.vector_store %arg23[%c0_21, %c0_22], %17 {strides = array<i32>} : memref<8x128xf32, #tpu.memory_space<vmem>>, vector<8x128xf32>,
    %cst_23 = arith.constant 0.000000e+00 : f32
    %19 = vector.broadcast %cst_23 : f32 to vector<8x128xf32>
    %c0_24 = arith.constant 0 : index
    %c0_25 = arith.constant 0 : index
    %20 = vector.load %arg24[%c0_24, %c0_25] : memref<8x128xf32, #tpu.memory_space<vmem>>, vector<8x128xf32>
    tpu.vector_store %arg24[%c0_24, %c0_25], %19 {strides = array<i32>} : memref<8x128xf32, #tpu.memory_space<vmem>>, vector<8x128xf32>,
    %cst_26 = arith.constant 0.000000e+00 : f32
    %21 = vector.broadcast %cst_26 : f32 to vector<8x128xf32>
    %c0_27 = arith.constant 0 : index
    %c0_28 = arith.constant 0 : index
    %22 = vector.load %arg25[%c0_27, %c0_28] : memref<8x128xf32, #tpu.memory_space<vmem>>, vector<8x128xf32>
    tpu.vector_store %arg25[%c0_27, %c0_28], %21 {strides = array<i32>} : memref<8x128xf32, #tpu.memory_space<vmem>>, vector<8x128xf32>,
    %cst_29 = arith.constant 0.000000e+00 : f32
    %23 = vector.broadcast %cst_29 : f32 to vector<8x128xf32>
    %c0_30 = arith.constant 0 : index
    %c0_31 = arith.constant 0 : index
    %24 = vector.load %arg26[%c0_30, %c0_31] : memref<8x128xf32, #tpu.memory_space<vmem>>, vector<8x128xf32>
    tpu.vector_store %arg26[%c0_30, %c0_31], %23 {strides = array<i32>} : memref<8x128xf32, #tpu.memory_space<vmem>>, vector<8x128xf32>,
    %c0_32 = arith.constant 0 : index
    %c0_33 = arith.constant 0 : index
    %25 = vector.load %arg16[%c0_32, %c0_33] : memref<64x512xf32, #tpu.memory_space<vmem>>, vector<8x512xf32>
    %c0_34 = arith.constant 0 : index
    %c0_35 = arith.constant 0 : index
    %26 = vector.load %arg21[%c0_34, %c0_35] : memref<8x128xf32, #tpu.memory_space<vmem>>, vector<8x128xf32>
    %27 = arith.truncf %26 : vector<8x128xf32> to vector<8x128xbf16>
    %c0_36 = arith.constant 0 : index
    %c0_37 = arith.constant 0 : index
    %28 = vector.load %arg2[%c0_36, %c0_37] : memref<128x512xbf16, #tpu.memory_space<vmem>>, vector<128x512xbf16>
    %cst_38 = arith.constant dense<0.000000e+00> : vector<8x512xf32>
    %29 = tpu.matmul %27, %28, %cst_38 {dimension_numbers = #tpu.dot_dimension_numbers<[1], [0], [0], [1], [0, 0, 1, 1], [], []>} : vector<8x128xbf16>, vector<128x512xbf16>, vector<8x512xf32> -> vector<8x512xf32>
    %30 = arith.addf %25, %29 : vector<8x512xf32>
    %c56 = arith.constant 56 : index
    %c0_39 = arith.constant 0 : index
    %31 = vector.load %arg17[%c56, %c0_39] : memref<64x512xf32, #tpu.memory_space<vmem>>, vector<8x512xf32>
    %c0_40 = arith.constant 0 : index
    %c0_41 = arith.constant 0 : index
    %32 = vector.load %arg23[%c0_40, %c0_41] : memref<8x128xf32, #tpu.memory_space<vmem>>, vector<8x128xf32>
    %33 = arith.truncf %32 : vector<8x128xf32> to vector<8x128xbf16>
    %c0_42 = arith.constant 0 : index
    %c0_43 = arith.constant 0 : index
    %34 = vector.load %arg5[%c0_42, %c0_43] : memref<128x512xbf16, #tpu.memory_space<vmem>>, vector<128x512xbf16>
    %cst_44 = arith.constant dense<0.000000e+00> : vector<8x512xf32>
    %35 = tpu.matmul %33, %34, %cst_44 {dimension_numbers = #tpu.dot_dimension_numbers<[1], [0], [0], [1], [0, 0, 1, 1], [], []>} : vector<8x128xbf16>, vector<128x512xbf16>, vector<8x512xf32> -> vector<8x512xf32>
    %36 = arith.addf %31, %35 : vector<8x512xf32>
    %c0_45 = arith.constant 0 : index
    %c0_46 = arith.constant 0 : index
    %37 = vector.load %arg22[%c0_45, %c0_46] : memref<8x128xf32, #tpu.memory_space<vmem>>, vector<8x128xf32>
    %38 = vector.extract_strided_slice %30 {offsets = [0, 0], sizes = [8, 128], strides = [1, 1]} : vector<8x512xf32> to vector<8x128xf32>
    %39 = arith.negf %38 : vector<8x128xf32>
    %40 = math.exp %39 : vector<8x128xf32>
    %cst_47 = arith.constant 1.000000e+00 : f32
    %41 = vector.broadcast %cst_47 : f32 to vector<8x128xf32>
    %42 = arith.addf %41, %40 : vector<8x128xf32>
    %43 = arith.divf %41, %42 : vector<8x128xf32>
    %44 = vector.extract_strided_slice %30 {offsets = [0, 128], sizes = [8, 128], strides = [1, 1]} : vector<8x512xf32> to vector<8x128xf32>
    %45 = arith.negf %44 : vector<8x128xf32>
    %46 = math.exp %45 : vector<8x128xf32>
    %cst_48 = arith.constant 1.000000e+00 : f32
    %47 = vector.broadcast %cst_48 : f32 to vector<8x128xf32>
    %48 = arith.addf %47, %46 : vector<8x128xf32>
    %49 = arith.divf %47, %48 : vector<8x128xf32>
    %50 = vector.extract_strided_slice %30 {offsets = [0, 256], sizes = [8, 128], strides = [1, 1]} : vector<8x512xf32> to vector<8x128xf32>
    %51 = math.tanh %50 : vector<8x128xf32>
    %52 = vector.extract_strided_slice %30 {offsets = [0, 384], sizes = [8, 128], strides = [1, 1]} : vector<8x512xf32> to vector<8x128xf32>
    %53 = arith.negf %52 : vector<8x128xf32>
    %54 = math.exp %53 : vector<8x128xf32>
    %cst_49 = arith.constant 1.000000e+00 : f32
    %55 = vector.broadcast %cst_49 : f32 to vector<8x128xf32>
    %56 = arith.addf %55, %54 : vector<8x128xf32>
    %57 = arith.divf %55, %56 : vector<8x128xf32>
    %58 = arith.mulf %49, %37 : vector<8x128xf32>
    %59 = arith.mulf %43, %51 : vector<8x128xf32>
    %60 = arith.addf %58, %59 : vector<8x128xf32>
    %61 = math.tanh %60 : vector<8x128xf32>
    %62 = arith.mulf %57, %61 : vector<8x128xf32>
    %c0_50 = arith.constant 0 : index
    %c0_51 = arith.constant 0 : index
    %63 = vector.load %arg24[%c0_50, %c0_51] : memref<8x128xf32, #tpu.memory_space<vmem>>, vector<8x128xf32>
    %64 = vector.extract_strided_slice %36 {offsets = [0, 0], sizes = [8, 128], strides = [1, 1]} : vector<8x512xf32> to vector<8x128xf32>
    %65 = arith.negf %64 : vector<8x128xf32>
    %66 = math.exp %65 : vector<8x128xf32>
    %cst_52 = arith.constant 1.000000e+00 : f32
    %67 = vector.broadcast %cst_52 : f32 to vector<8x128xf32>
    %68 = arith.addf %67, %66 : vector<8x128xf32>
    %69 = arith.divf %67, %68 : vector<8x128xf32>
    %70 = vector.extract_strided_slice %36 {offsets = [0, 128], sizes = [8, 128], strides = [1, 1]} : vector<8x512xf32> to vector<8x128xf32>
    %71 = arith.negf %70 : vector<8x128xf32>
    %72 = math.exp %71 : vector<8x128xf32>
    %cst_53 = arith.constant 1.000000e+00 : f32
    %73 = vector.broadcast %cst_53 : f32 to vector<8x128xf32>
    %74 = arith.addf %73, %72 : vector<8x128xf32>
    %75 = arith.divf %73, %74 : vector<8x128xf32>
    %76 = vector.extract_strided_slice %36 {offsets = [0, 256], sizes = [8, 128], strides = [1, 1]} : vector<8x512xf32> to vector<8x128xf32>
    %77 = math.tanh %76 : vector<8x128xf32>
    %78 = vector.extract_strided_slice %36 {offsets = [0, 384], sizes = [8, 128], strides = [1, 1]} : vector<8x512xf32> to vector<8x128xf32>
    %79 = arith.negf %78 : vector<8x128xf32>
    %80 = math.exp %79 : vector<8x128xf32>
    %cst_54 = arith.constant 1.000000e+00 : f32
    %81 = vector.broadcast %cst_54 : f32 to vector<8x128xf32>
    %82 = arith.addf %81, %80 : vector<8x128xf32>
    %83 = arith.divf %81, %82 : vector<8x128xf32>
    %84 = arith.mulf %75, %63 : vector<8x128xf32>
    %85 = arith.mulf %69, %77 : vector<8x128xf32>
    %86 = arith.addf %84, %85 : vector<8x128xf32>
    %87 = math.tanh %86 : vector<8x128xf32>
    %88 = arith.mulf %83, %87 : vector<8x128xf32>
    %c0_55 = arith.constant 0 : index
    %c0_56 = arith.constant 0 : index
    %89 = vector.load %arg21[%c0_55, %c0_56] : memref<8x128xf32, #tpu.memory_space<vmem>>, vector<8x128xf32>
    tpu.vector_store %arg21[%c0_55, %c0_56], %62 {strides = array<i32>} : memref<8x128xf32, #tpu.memory_space<vmem>>, vector<8x128xf32>,
    %c0_57 = arith.constant 0 : index
    %c0_58 = arith.constant 0 : index
    %90 = vector.load %arg22[%c0_57, %c0_58] : memref<8x128xf32, #tpu.memory_space<vmem>>, vector<8x128xf32>
    tpu.vector_store %arg22[%c0_57, %c0_58], %60 {strides = array<i32>} : memref<8x128xf32, #tpu.memory_space<vmem>>, vector<8x128xf32>,
    %c0_59 = arith.constant 0 : index
    %c0_60 = arith.constant 0 : index
    %91 = vector.load %arg23[%c0_59, %c0_60] : memref<8x128xf32, #tpu.memory_space<vmem>>, vector<8x128xf32>
    tpu.vector_store %arg23[%c0_59, %c0_60], %88 {strides = array<i32>} : memref<8x128xf32, #tpu.memory_space<vmem>>, vector<8x128xf32>,
    %c0_61 = arith.constant 0 : index
    %c0_62 = arith.constant 0 : index
    %92 = vector.load %arg24[%c0_61, %c0_62] : memref<8x128xf32, #tpu.memory_space<vmem>>, vector<8x128xf32>
    tpu.vector_store %arg24[%c0_61, %c0_62], %86 {strides = array<i32>} : memref<8x128xf32, #tpu.memory_space<vmem>>, vector<8x128xf32>,
    %c0_63 = arith.constant 0 : index
    %c0_64 = arith.constant 0 : index
    %93 = vector.load %arg19[%c0_63, %c0_64] : memref<64x128xf32, #tpu.memory_space<vmem>>, vector<8x128xf32>
    tpu.vector_store %arg19[%c0_63, %c0_64], %62 {strides = array<i32>} : memref<64x128xf32, #tpu.memory_space<vmem>>, vector<8x128xf32>,
    %c56_65 = arith.constant 56 : index
    %c0_66 = arith.constant 0 : index
    %94 = vector.load %arg20[%c56_65, %c0_66] : memref<64x128xf32, #tpu.memory_space<vmem>>, vector<8x128xf32>
    tpu.vector_store %arg20[%c56_65, %c0_66], %88 {strides = array<i32>} : memref<64x128xf32, #tpu.memory_space<vmem>>, vector<8x128xf32>,
    %c8 = arith.constant 8 : index
    %c0_67 = arith.constant 0 : index
    %95 = vector.load %arg16[%c8, %c0_67] : memref<64x512xf32, #tpu.memory_space<vmem>>, vector<8x512xf32>
    %c0_68 = arith.constant 0 : index
    %c0_69 = arith.constant 0 : index
    %96 = vector.load %arg21[%c0_68, %c0_69] : memref<8x128xf32, #tpu.memory_space<vmem>>, vector<8x128xf32>
    %97 = arith.truncf %96 : vector<8x128xf32> to vector<8x128xbf16>
    %c0_70 = arith.constant 0 : index
    %c0_71 = arith.constant 0 : index
    %98 = vector.load %arg2[%c0_70, %c0_71] : memref<128x512xbf16, #tpu.memory_space<vmem>>, vector<128x512xbf16>
    %cst_72 = arith.constant dense<0.000000e+00> : vector<8x512xf32>
    %99 = tpu.matmul %97, %98, %cst_72 {dimension_numbers = #tpu.dot_dimension_numbers<[1], [0], [0], [1], [0, 0, 1, 1], [], []>} : vector<8x128xbf16>, vector<128x512xbf16>, vector<8x512xf32> -> vector<8x512xf32>
    %100 = arith.addf %95, %99 : vector<8x512xf32>
    %c48 = arith.constant 48 : index
    %c0_73 = arith.constant 0 : index
    %101 = vector.load %arg17[%c48, %c0_73] : memref<64x512xf32, #tpu.memory_space<vmem>>, vector<8x512xf32>
    %c0_74 = arith.constant 0 : index
    %c0_75 = arith.constant 0 : index
    %102 = vector.load %arg23[%c0_74, %c0_75] : memref<8x128xf32, #tpu.memory_space<vmem>>, vector<8x128xf32>
    %103 = arith.truncf %102 : vector<8x128xf32> to vector<8x128xbf16>
    %c0_76 = arith.constant 0 : index
    %c0_77 = arith.constant 0 : index
    %104 = vector.load %arg5[%c0_76, %c0_77] : memref<128x512xbf16, #tpu.memory_space<vmem>>, vector<128x512xbf16>
    %cst_78 = arith.constant dense<0.000000e+00> : vector<8x512xf32>
    %105 = tpu.matmul %103, %104, %cst_78 {dimension_numbers = #tpu.dot_dimension_numbers<[1], [0], [0], [1], [0, 0, 1, 1], [], []>} : vector<8x128xbf16>, vector<128x512xbf16>, vector<8x512xf32> -> vector<8x512xf32>
    %106 = arith.addf %101, %105 : vector<8x512xf32>
    %c0_79 = arith.constant 0 : index
    %c0_80 = arith.constant 0 : index
    %107 = vector.load %arg22[%c0_79, %c0_80] : memref<8x128xf32, #tpu.memory_space<vmem>>, vector<8x128xf32>
    %108 = vector.extract_strided_slice %100 {offsets = [0, 0], sizes = [8, 128], strides = [1, 1]} : vector<8x512xf32> to vector<8x128xf32>
    %109 = arith.negf %108 : vector<8x128xf32>
    %110 = math.exp %109 : vector<8x128xf32>
    %cst_81 = arith.constant 1.000000e+00 : f32
    %111 = vector.broadcast %cst_81 : f32 to vector<8x128xf32>
    %112 = arith.addf %111, %110 : vector<8x128xf32>
    %113 = arith.divf %111, %112 : vector<8x128xf32>
    %114 = vector.extract_strided_slice %100 {offsets = [0, 128], sizes = [8, 128], strides = [1, 1]} : vector<8x512xf32> to vector<8x128xf32>
    %115 = arith.negf %114 : vector<8x128xf32>
    %116 = math.exp %115 : vector<8x128xf32>
    %cst_82 = arith.constant 1.000000e+00 : f32
    %117 = vector.broadcast %cst_82 : f32 to vector<8x128xf32>
    %118 = arith.addf %117, %116 : vector<8x128xf32>
    %119 = arith.divf %117, %118 : vector<8x128xf32>
    %120 = vector.extract_strided_slice %100 {offsets = [0, 256], sizes = [8, 128], strides = [1, 1]} : vector<8x512xf32> to vector<8x128xf32>
    %121 = math.tanh %120 : vector<8x128xf32>
    %122 = vector.extract_strided_slice %100 {offsets = [0, 384], sizes = [8, 128], strides = [1, 1]} : vector<8x512xf32> to vector<8x128xf32>
    %123 = arith.negf %122 : vector<8x128xf32>
    %124 = math.exp %123 : vector<8x128xf32>
    %cst_83 = arith.constant 1.000000e+00 : f32
    %125 = vector.broadcast %cst_83 : f32 to vector<8x128xf32>
    %126 = arith.addf %125, %124 : vector<8x128xf32>
    %127 = arith.divf %125, %126 : vector<8x128xf32>
    %128 = arith.mulf %119, %107 : vector<8x128xf32>
    %129 = arith.mulf %113, %121 : vector<8x128xf32>
    %130 = arith.addf %128, %129 : vector<8x128xf32>
    %131 = math.tanh %130 : vector<8x128xf32>
    %132 = arith.mulf %127, %131 : vector<8x128xf32>
    %c0_84 = arith.constant 0 : index
    %c0_85 = arith.constant 0 : index
    %133 = vector.load %arg24[%c0_84, %c0_85] : memref<8x128xf32, #tpu.memory_space<vmem>>, vector<8x128xf32>
    %134 = vector.extract_strided_slice %106 {offsets = [0, 0], sizes = [8, 128], strides = [1, 1]} : vector<8x512xf32> to vector<8x128xf32>
    %135 = arith.negf %134 : vector<8x128xf32>
    %136 = math.exp %135 : vector<8x128xf32>
    %cst_86 = arith.constant 1.000000e+00 : f32
    %137 = vector.broadcast %cst_86 : f32 to vector<8x128xf32>
    %138 = arith.addf %137, %136 : vector<8x128xf32>
    %139 = arith.divf %137, %138 : vector<8x128xf32>
    %140 = vector.extract_strided_slice %106 {offsets = [0, 128], sizes = [8, 128], strides = [1, 1]} : vector<8x512xf32> to vector<8x128xf32>
    %141 = arith.negf %140 : vector<8x128xf32>
    %142 = math.exp %141 : vector<8x128xf32>
    %cst_87 = arith.constant 1.000000e+00 : f32
    %143 = vector.broadcast %cst_87 : f32 to vector<8x128xf32>
    %144 = arith.addf %143, %142 : vector<8x128xf32>
    %145 = arith.divf %143, %144 : vector<8x128xf32>
    %146 = vector.extract_strided_slice %106 {offsets = [0, 256], sizes = [8, 128], strides = [1, 1]} : vector<8x512xf32> to vector<8x128xf32>
    %147 = math.tanh %146 : vector<8x128xf32>
    %148 = vector.extract_strided_slice %106 {offsets = [0, 384], sizes = [8, 128], strides = [1, 1]} : vector<8x512xf32> to vector<8x128xf32>
    %149 = arith.negf %148 : vector<8x128xf32>
    %150 = math.exp %149 : vector<8x128xf32>
    %cst_88 = arith.constant 1.000000e+00 : f32
    %151 = vector.broadcast %cst_88 : f32 to vector<8x128xf32>
    %152 = arith.addf %151, %150 : vector<8x128xf32>
    %153 = arith.divf %151, %152 : vector<8x128xf32>
    %154 = arith.mulf %145, %133 : vector<8x128xf32>
    %155 = arith.mulf %139, %147 : vector<8x128xf32>
    %156 = arith.addf %154, %155 : vector<8x128xf32>
    %157 = math.tanh %156 : vector<8x128xf32>
    %158 = arith.mulf %153, %157 : vector<8x128xf32>
    %c0_89 = arith.constant 0 : index
    %c0_90 = arith.constant 0 : index
    %159 = vector.load %arg21[%c0_89, %c0_90] : memref<8x128xf32, #tpu.memory_space<vmem>>, vector<8x128xf32>
    tpu.vector_store %arg21[%c0_89, %c0_90], %132 {strides = array<i32>} : memref<8x128xf32, #tpu.memory_space<vmem>>, vector<8x128xf32>,
    %c0_91 = arith.constant 0 : index
    %c0_92 = arith.constant 0 : index
    %160 = vector.load %arg22[%c0_91, %c0_92] : memref<8x128xf32, #tpu.memory_space<vmem>>, vector<8x128xf32>
    tpu.vector_store %arg22[%c0_91, %c0_92], %130 {strides = array<i32>} : memref<8x128xf32, #tpu.memory_space<vmem>>, vector<8x128xf32>,
    %c0_93 = arith.constant 0 : index
    %c0_94 = arith.constant 0 : index
    %161 = vector.load %arg23[%c0_93, %c0_94] : memref<8x128xf32, #tpu.memory_space<vmem>>, vector<8x128xf32>
    tpu.vector_store %arg23[%c0_93, %c0_94], %158 {strides = array<i32>} : memref<8x128xf32, #tpu.memory_space<vmem>>, vector<8x128xf32>,
    %c0_95 = arith.constant 0 : index
    %c0_96 = arith.constant 0 : index
    %162 = vector.load %arg24[%c0_95, %c0_96] : memref<8x128xf32, #tpu.memory_space<vmem>>, vector<8x128xf32>
    tpu.vector_store %arg24[%c0_95, %c0_96], %156 {strides = array<i32>} : memref<8x128xf32, #tpu.memory_space<vmem>>, vector<8x128xf32>,
    %c8_97 = arith.constant 8 : index
    %c0_98 = arith.constant 0 : index
    %163 = vector.load %arg19[%c8_97, %c0_98] : memref<64x128xf32, #tpu.memory_space<vmem>>, vector<8x128xf32>
    tpu.vector_store %arg19[%c8_97, %c0_98], %132 {strides = array<i32>} : memref<64x128xf32, #tpu.memory_space<vmem>>, vector<8x128xf32>,
    %c48_99 = arith.constant 48 : index
    %c0_100 = arith.constant 0 : index
    %164 = vector.load %arg20[%c48_99, %c0_100] : memref<64x128xf32, #tpu.memory_space<vmem>>, vector<8x128xf32>
    tpu.vector_store %arg20[%c48_99, %c0_100], %158 {strides = array<i32>} : memref<64x128xf32, #tpu.memory_space<vmem>>, vector<8x128xf32>,
    %c16 = arith.constant 16 : index
    %c0_101 = arith.constant 0 : index
    %165 = vector.load %arg16[%c16, %c0_101] : memref<64x512xf32, #tpu.memory_space<vmem>>, vector<8x512xf32>
    %c0_102 = arith.constant 0 : index
    %c0_103 = arith.constant 0 : index
    %166 = vector.load %arg21[%c0_102, %c0_103] : memref<8x128xf32, #tpu.memory_space<vmem>>, vector<8x128xf32>
    %167 = arith.truncf %166 : vector<8x128xf32> to vector<8x128xbf16>
    %c0_104 = arith.constant 0 : index
    %c0_105 = arith.constant 0 : index
    %168 = vector.load %arg2[%c0_104, %c0_105] : memref<128x512xbf16, #tpu.memory_space<vmem>>, vector<128x512xbf16>
    %cst_106 = arith.constant dense<0.000000e+00> : vector<8x512xf32>
    %169 = tpu.matmul %167, %168, %cst_106 {dimension_numbers = #tpu.dot_dimension_numbers<[1], [0], [0], [1], [0, 0, 1, 1], [], []>} : vector<8x128xbf16>, vector<128x512xbf16>, vector<8x512xf32> -> vector<8x512xf32>
    %170 = arith.addf %165, %169 : vector<8x512xf32>
    %c40 = arith.constant 40 : index
    %c0_107 = arith.constant 0 : index
    %171 = vector.load %arg17[%c40, %c0_107] : memref<64x512xf32, #tpu.memory_space<vmem>>, vector<8x512xf32>
    %c0_108 = arith.constant 0 : index
    %c0_109 = arith.constant 0 : index
    %172 = vector.load %arg23[%c0_108, %c0_109] : memref<8x128xf32, #tpu.memory_space<vmem>>, vector<8x128xf32>
    %173 = arith.truncf %172 : vector<8x128xf32> to vector<8x128xbf16>
    %c0_110 = arith.constant 0 : index
    %c0_111 = arith.constant 0 : index
    %174 = vector.load %arg5[%c0_110, %c0_111] : memref<128x512xbf16, #tpu.memory_space<vmem>>, vector<128x512xbf16>
    %cst_112 = arith.constant dense<0.000000e+00> : vector<8x512xf32>
    %175 = tpu.matmul %173, %174, %cst_112 {dimension_numbers = #tpu.dot_dimension_numbers<[1], [0], [0], [1], [0, 0, 1, 1], [], []>} : vector<8x128xbf16>, vector<128x512xbf16>, vector<8x512xf32> -> vector<8x512xf32>
    %176 = arith.addf %171, %175 : vector<8x512xf32>
    %c0_113 = arith.constant 0 : index
    %c0_114 = arith.constant 0 : index
    %177 = vector.load %arg22[%c0_113, %c0_114] : memref<8x128xf32, #tpu.memory_space<vmem>>, vector<8x128xf32>
    %178 = vector.extract_strided_slice %170 {offsets = [0, 0], sizes = [8, 128], strides = [1, 1]} : vector<8x512xf32> to vector<8x128xf32>
    %179 = arith.negf %178 : vector<8x128xf32>
    %180 = math.exp %179 : vector<8x128xf32>
    %cst_115 = arith.constant 1.000000e+00 : f32
    %181 = vector.broadcast %cst_115 : f32 to vector<8x128xf32>
    %182 = arith.addf %181, %180 : vector<8x128xf32>
    %183 = arith.divf %181, %182 : vector<8x128xf32>
    %184 = vector.extract_strided_slice %170 {offsets = [0, 128], sizes = [8, 128], strides = [1, 1]} : vector<8x512xf32> to vector<8x128xf32>
    %185 = arith.negf %184 : vector<8x128xf32>
    %186 = math.exp %185 : vector<8x128xf32>
    %cst_116 = arith.constant 1.000000e+00 : f32
    %187 = vector.broadcast %cst_116 : f32 to vector<8x128xf32>
    %188 = arith.addf %187, %186 : vector<8x128xf32>
    %189 = arith.divf %187, %188 : vector<8x128xf32>
    %190 = vector.extract_strided_slice %170 {offsets = [0, 256], sizes = [8, 128], strides = [1, 1]} : vector<8x512xf32> to vector<8x128xf32>
    %191 = math.tanh %190 : vector<8x128xf32>
    %192 = vector.extract_strided_slice %170 {offsets = [0, 384], sizes = [8, 128], strides = [1, 1]} : vector<8x512xf32> to vector<8x128xf32>
    %193 = arith.negf %192 : vector<8x128xf32>
    %194 = math.exp %193 : vector<8x128xf32>
    %cst_117 = arith.constant 1.000000e+00 : f32
    %195 = vector.broadcast %cst_117 : f32 to vector<8x128xf32>
    %196 = arith.addf %195, %194 : vector<8x128xf32>
    %197 = arith.divf %195, %196 : vector<8x128xf32>
    %198 = arith.mulf %189, %177 : vector<8x128xf32>
    %199 = arith.mulf %183, %191 : vector<8x128xf32>
    %200 = arith.addf %198, %199 : vector<8x128xf32>
    %201 = math.tanh %200 : vector<8x128xf32>
    %202 = arith.mulf %197, %201 : vector<8x128xf32>
    %c0_118 = arith.constant 0 : index
    %c0_119 = arith.constant 0 : index
    %203 = vector.load %arg24[%c0_118, %c0_119] : memref<8x128xf32, #tpu.memory_space<vmem>>, vector<8x128xf32>
    %204 = vector.extract_strided_slice %176 {offsets = [0, 0], sizes = [8, 128], strides = [1, 1]} : vector<8x512xf32> to vector<8x128xf32>
    %205 = arith.negf %204 : vector<8x128xf32>
    %206 = math.exp %205 : vector<8x128xf32>
    %cst_120 = arith.constant 1.000000e+00 : f32
    %207 = vector.broadcast %cst_120 : f32 to vector<8x128xf32>
    %208 = arith.addf %207, %206 : vector<8x128xf32>
    %209 = arith.divf %207, %208 : vector<8x128xf32>
    %210 = vector.extract_strided_slice %176 {offsets = [0, 128], sizes = [8, 128], strides = [1, 1]} : vector<8x512xf32> to vector<8x128xf32>
    %211 = arith.negf %210 : vector<8x128xf32>
    %212 = math.exp %211 : vector<8x128xf32>
    %cst_121 = arith.constant 1.000000e+00 : f32
    %213 = vector.broadcast %cst_121 : f32 to vector<8x128xf32>
    %214 = arith.addf %213, %212 : vector<8x128xf32>
    %215 = arith.divf %213, %214 : vector<8x128xf32>
    %216 = vector.extract_strided_slice %176 {offsets = [0, 256], sizes = [8, 128], strides = [1, 1]} : vector<8x512xf32> to vector<8x128xf32>
    %217 = math.tanh %216 : vector<8x128xf32>
    %218 = vector.extract_strided_slice %176 {offsets = [0, 384], sizes = [8, 128], strides = [1, 1]} : vector<8x512xf32> to vector<8x128xf32>
    %219 = arith.negf %218 : vector<8x128xf32>
    %220 = math.exp %219 : vector<8x128xf32>
    %cst_122 = arith.constant 1.000000e+00 : f32
    %221 = vector.broadcast %cst_122 : f32 to vector<8x128xf32>
    %222 = arith.addf %221, %220 : vector<8x128xf32>
    %223 = arith.divf %221, %222 : vector<8x128xf32>
    %224 = arith.mulf %215, %203 : vector<8x128xf32>
    %225 = arith.mulf %209, %217 : vector<8x128xf32>
    %226 = arith.addf %224, %225 : vector<8x128xf32>
    %227 = math.tanh %226 : vector<8x128xf32>
    %228 = arith.mulf %223, %227 : vector<8x128xf32>
    %c0_123 = arith.constant 0 : index
    %c0_124 = arith.constant 0 : index
    %229 = vector.load %arg21[%c0_123, %c0_124] : memref<8x128xf32, #tpu.memory_space<vmem>>, vector<8x128xf32>
    tpu.vector_store %arg21[%c0_123, %c0_124], %202 {strides = array<i32>} : memref<8x128xf32, #tpu.memory_space<vmem>>, vector<8x128xf32>,
    %c0_125 = arith.constant 0 : index
    %c0_126 = arith.constant 0 : index
    %230 = vector.load %arg22[%c0_125, %c0_126] : memref<8x128xf32, #tpu.memory_space<vmem>>, vector<8x128xf32>
    tpu.vector_store %arg22[%c0_125, %c0_126], %200 {strides = array<i32>} : memref<8x128xf32, #tpu.memory_space<vmem>>, vector<8x128xf32>,
    %c0_127 = arith.constant 0 : index
    %c0_128 = arith.constant 0 : index
    %231 = vector.load %arg23[%c0_127, %c0_128] : memref<8x128xf32, #tpu.memory_space<vmem>>, vector<8x128xf32>
    tpu.vector_store %arg23[%c0_127, %c0_128], %228 {strides = array<i32>} : memref<8x128xf32, #tpu.memory_space<vmem>>, vector<8x128xf32>,
    %c0_129 = arith.constant 0 : index
    %c0_130 = arith.constant 0 : index
    %232 = vector.load %arg24[%c0_129, %c0_130] : memref<8x128xf32, #tpu.memory_space<vmem>>, vector<8x128xf32>
    tpu.vector_store %arg24[%c0_129, %c0_130], %226 {strides = array<i32>} : memref<8x128xf32, #tpu.memory_space<vmem>>, vector<8x128xf32>,
    %c16_131 = arith.constant 16 : index
    %c0_132 = arith.constant 0 : index
    %233 = vector.load %arg19[%c16_131, %c0_132] : memref<64x128xf32, #tpu.memory_space<vmem>>, vector<8x128xf32>
    tpu.vector_store %arg19[%c16_131, %c0_132], %202 {strides = array<i32>} : memref<64x128xf32, #tpu.memory_space<vmem>>, vector<8x128xf32>,
    %c40_133 = arith.constant 40 : index
    %c0_134 = arith.constant 0 : index
    %234 = vector.load %arg20[%c40_133, %c0_134] : memref<64x128xf32, #tpu.memory_space<vmem>>, vector<8x128xf32>
    tpu.vector_store %arg20[%c40_133, %c0_134], %228 {strides = array<i32>} : memref<64x128xf32, #tpu.memory_space<vmem>>, vector<8x128xf32>,
    %c24 = arith.constant 24 : index
    %c0_135 = arith.constant 0 : index
    %235 = vector.load %arg16[%c24, %c0_135] : memref<64x512xf32, #tpu.memory_space<vmem>>, vector<8x512xf32>
    %c0_136 = arith.constant 0 : index
    %c0_137 = arith.constant 0 : index
    %236 = vector.load %arg21[%c0_136, %c0_137] : memref<8x128xf32, #tpu.memory_space<vmem>>, vector<8x128xf32>
    %237 = arith.truncf %236 : vector<8x128xf32> to vector<8x128xbf16>
    %c0_138 = arith.constant 0 : index
    %c0_139 = arith.constant 0 : index
    %238 = vector.load %arg2[%c0_138, %c0_139] : memref<128x512xbf16, #tpu.memory_space<vmem>>, vector<128x512xbf16>
    %cst_140 = arith.constant dense<0.000000e+00> : vector<8x512xf32>
    %239 = tpu.matmul %237, %238, %cst_140 {dimension_numbers = #tpu.dot_dimension_numbers<[1], [0], [0], [1], [0, 0, 1, 1], [], []>} : vector<8x128xbf16>, vector<128x512xbf16>, vector<8x512xf32> -> vector<8x512xf32>
    %240 = arith.addf %235, %239 : vector<8x512xf32>
    %c32 = arith.constant 32 : index
    %c0_141 = arith.constant 0 : index
    %241 = vector.load %arg17[%c32, %c0_141] : memref<64x512xf32, #tpu.memory_space<vmem>>, vector<8x512xf32>
    %c0_142 = arith.constant 0 : index
    %c0_143 = arith.constant 0 : index
    %242 = vector.load %arg23[%c0_142, %c0_143] : memref<8x128xf32, #tpu.memory_space<vmem>>, vector<8x128xf32>
    %243 = arith.truncf %242 : vector<8x128xf32> to vector<8x128xbf16>
    %c0_144 = arith.constant 0 : index
    %c0_145 = arith.constant 0 : index
    %244 = vector.load %arg5[%c0_144, %c0_145] : memref<128x512xbf16, #tpu.memory_space<vmem>>, vector<128x512xbf16>
    %cst_146 = arith.constant dense<0.000000e+00> : vector<8x512xf32>
    %245 = tpu.matmul %243, %244, %cst_146 {dimension_numbers = #tpu.dot_dimension_numbers<[1], [0], [0], [1], [0, 0, 1, 1], [], []>} : vector<8x128xbf16>, vector<128x512xbf16>, vector<8x512xf32> -> vector<8x512xf32>
    %246 = arith.addf %241, %245 : vector<8x512xf32>
    %c0_147 = arith.constant 0 : index
    %c0_148 = arith.constant 0 : index
    %247 = vector.load %arg22[%c0_147, %c0_148] : memref<8x128xf32, #tpu.memory_space<vmem>>, vector<8x128xf32>
    %248 = vector.extract_strided_slice %240 {offsets = [0, 0], sizes = [8, 128], strides = [1, 1]} : vector<8x512xf32> to vector<8x128xf32>
    %249 = arith.negf %248 : vector<8x128xf32>
    %250 = math.exp %249 : vector<8x128xf32>
    %cst_149 = arith.constant 1.000000e+00 : f32
    %251 = vector.broadcast %cst_149 : f32 to vector<8x128xf32>
    %252 = arith.addf %251, %250 : vector<8x128xf32>
    %253 = arith.divf %251, %252 : vector<8x128xf32>
    %254 = vector.extract_strided_slice %240 {offsets = [0, 128], sizes = [8, 128], strides = [1, 1]} : vector<8x512xf32> to vector<8x128xf32>
    %255 = arith.negf %254 : vector<8x128xf32>
    %256 = math.exp %255 : vector<8x128xf32>
    %cst_150 = arith.constant 1.000000e+00 : f32
    %257 = vector.broadcast %cst_150 : f32 to vector<8x128xf32>
    %258 = arith.addf %257, %256 : vector<8x128xf32>
    %259 = arith.divf %257, %258 : vector<8x128xf32>
    %260 = vector.extract_strided_slice %240 {offsets = [0, 256], sizes = [8, 128], strides = [1, 1]} : vector<8x512xf32> to vector<8x128xf32>
    %261 = math.tanh %260 : vector<8x128xf32>
    %262 = vector.extract_strided_slice %240 {offsets = [0, 384], sizes = [8, 128], strides = [1, 1]} : vector<8x512xf32> to vector<8x128xf32>
    %263 = arith.negf %262 : vector<8x128xf32>
    %264 = math.exp %263 : vector<8x128xf32>
    %cst_151 = arith.constant 1.000000e+00 : f32
    %265 = vector.broadcast %cst_151 : f32 to vector<8x128xf32>
    %266 = arith.addf %265, %264 : vector<8x128xf32>
    %267 = arith.divf %265, %266 : vector<8x128xf32>
    %268 = arith.mulf %259, %247 : vector<8x128xf32>
    %269 = arith.mulf %253, %261 : vector<8x128xf32>
    %270 = arith.addf %268, %269 : vector<8x128xf32>
    %271 = math.tanh %270 : vector<8x128xf32>
    %272 = arith.mulf %267, %271 : vector<8x128xf32>
    %c0_152 = arith.constant 0 : index
    %c0_153 = arith.constant 0 : index
    %273 = vector.load %arg24[%c0_152, %c0_153] : memref<8x128xf32, #tpu.memory_space<vmem>>, vector<8x128xf32>
    %274 = vector.extract_strided_slice %246 {offsets = [0, 0], sizes = [8, 128], strides = [1, 1]} : vector<8x512xf32> to vector<8x128xf32>
    %275 = arith.negf %274 : vector<8x128xf32>
    %276 = math.exp %275 : vector<8x128xf32>
    %cst_154 = arith.constant 1.000000e+00 : f32
    %277 = vector.broadcast %cst_154 : f32 to vector<8x128xf32>
    %278 = arith.addf %277, %276 : vector<8x128xf32>
    %279 = arith.divf %277, %278 : vector<8x128xf32>
    %280 = vector.extract_strided_slice %246 {offsets = [0, 128], sizes = [8, 128], strides = [1, 1]} : vector<8x512xf32> to vector<8x128xf32>
    %281 = arith.negf %280 : vector<8x128xf32>
    %282 = math.exp %281 : vector<8x128xf32>
    %cst_155 = arith.constant 1.000000e+00 : f32
    %283 = vector.broadcast %cst_155 : f32 to vector<8x128xf32>
    %284 = arith.addf %283, %282 : vector<8x128xf32>
    %285 = arith.divf %283, %284 : vector<8x128xf32>
    %286 = vector.extract_strided_slice %246 {offsets = [0, 256], sizes = [8, 128], strides = [1, 1]} : vector<8x512xf32> to vector<8x128xf32>
    %287 = math.tanh %286 : vector<8x128xf32>
    %288 = vector.extract_strided_slice %246 {offsets = [0, 384], sizes = [8, 128], strides = [1, 1]} : vector<8x512xf32> to vector<8x128xf32>
    %289 = arith.negf %288 : vector<8x128xf32>
    %290 = math.exp %289 : vector<8x128xf32>
    %cst_156 = arith.constant 1.000000e+00 : f32
    %291 = vector.broadcast %cst_156 : f32 to vector<8x128xf32>
    %292 = arith.addf %291, %290 : vector<8x128xf32>
    %293 = arith.divf %291, %292 : vector<8x128xf32>
    %294 = arith.mulf %285, %273 : vector<8x128xf32>
    %295 = arith.mulf %279, %287 : vector<8x128xf32>
    %296 = arith.addf %294, %295 : vector<8x128xf32>
    %297 = math.tanh %296 : vector<8x128xf32>
    %298 = arith.mulf %293, %297 : vector<8x128xf32>
    %c0_157 = arith.constant 0 : index
    %c0_158 = arith.constant 0 : index
    %299 = vector.load %arg21[%c0_157, %c0_158] : memref<8x128xf32, #tpu.memory_space<vmem>>, vector<8x128xf32>
    tpu.vector_store %arg21[%c0_157, %c0_158], %272 {strides = array<i32>} : memref<8x128xf32, #tpu.memory_space<vmem>>, vector<8x128xf32>,
    %c0_159 = arith.constant 0 : index
    %c0_160 = arith.constant 0 : index
    %300 = vector.load %arg22[%c0_159, %c0_160] : memref<8x128xf32, #tpu.memory_space<vmem>>, vector<8x128xf32>
    tpu.vector_store %arg22[%c0_159, %c0_160], %270 {strides = array<i32>} : memref<8x128xf32, #tpu.memory_space<vmem>>, vector<8x128xf32>,
    %c0_161 = arith.constant 0 : index
    %c0_162 = arith.constant 0 : index
    %301 = vector.load %arg23[%c0_161, %c0_162] : memref<8x128xf32, #tpu.memory_space<vmem>>, vector<8x128xf32>
    tpu.vector_store %arg23[%c0_161, %c0_162], %298 {strides = array<i32>} : memref<8x128xf32, #tpu.memory_space<vmem>>, vector<8x128xf32>,
    %c0_163 = arith.constant 0 : index
    %c0_164 = arith.constant 0 : index
    %302 = vector.load %arg24[%c0_163, %c0_164] : memref<8x128xf32, #tpu.memory_space<vmem>>, vector<8x128xf32>
    tpu.vector_store %arg24[%c0_163, %c0_164], %296 {strides = array<i32>} : memref<8x128xf32, #tpu.memory_space<vmem>>, vector<8x128xf32>,
    %c24_165 = arith.constant 24 : index
    %c0_166 = arith.constant 0 : index
    %303 = vector.load %arg19[%c24_165, %c0_166] : memref<64x128xf32, #tpu.memory_space<vmem>>, vector<8x128xf32>
    tpu.vector_store %arg19[%c24_165, %c0_166], %272 {strides = array<i32>} : memref<64x128xf32, #tpu.memory_space<vmem>>, vector<8x128xf32>,
    %c32_167 = arith.constant 32 : index
    %c0_168 = arith.constant 0 : index
    %304 = vector.load %arg20[%c32_167, %c0_168] : memref<64x128xf32, #tpu.memory_space<vmem>>, vector<8x128xf32>
    tpu.vector_store %arg20[%c32_167, %c0_168], %298 {strides = array<i32>} : memref<64x128xf32, #tpu.memory_space<vmem>>, vector<8x128xf32>,
    %c32_169 = arith.constant 32 : index
    %c0_170 = arith.constant 0 : index
    %305 = vector.load %arg16[%c32_169, %c0_170] : memref<64x512xf32, #tpu.memory_space<vmem>>, vector<8x512xf32>
    %c0_171 = arith.constant 0 : index
    %c0_172 = arith.constant 0 : index
    %306 = vector.load %arg21[%c0_171, %c0_172] : memref<8x128xf32, #tpu.memory_space<vmem>>, vector<8x128xf32>
    %307 = arith.truncf %306 : vector<8x128xf32> to vector<8x128xbf16>
    %c0_173 = arith.constant 0 : index
    %c0_174 = arith.constant 0 : index
    %308 = vector.load %arg2[%c0_173, %c0_174] : memref<128x512xbf16, #tpu.memory_space<vmem>>, vector<128x512xbf16>
    %cst_175 = arith.constant dense<0.000000e+00> : vector<8x512xf32>
    %309 = tpu.matmul %307, %308, %cst_175 {dimension_numbers = #tpu.dot_dimension_numbers<[1], [0], [0], [1], [0, 0, 1, 1], [], []>} : vector<8x128xbf16>, vector<128x512xbf16>, vector<8x512xf32> -> vector<8x512xf32>
    %310 = arith.addf %305, %309 : vector<8x512xf32>
    %c24_176 = arith.constant 24 : index
    %c0_177 = arith.constant 0 : index
    %311 = vector.load %arg17[%c24_176, %c0_177] : memref<64x512xf32, #tpu.memory_space<vmem>>, vector<8x512xf32>
    %c0_178 = arith.constant 0 : index
    %c0_179 = arith.constant 0 : index
    %312 = vector.load %arg23[%c0_178, %c0_179] : memref<8x128xf32, #tpu.memory_space<vmem>>, vector<8x128xf32>
    %313 = arith.truncf %312 : vector<8x128xf32> to vector<8x128xbf16>
    %c0_180 = arith.constant 0 : index
    %c0_181 = arith.constant 0 : index
    %314 = vector.load %arg5[%c0_180, %c0_181] : memref<128x512xbf16, #tpu.memory_space<vmem>>, vector<128x512xbf16>
    %cst_182 = arith.constant dense<0.000000e+00> : vector<8x512xf32>
    %315 = tpu.matmul %313, %314, %cst_182 {dimension_numbers = #tpu.dot_dimension_numbers<[1], [0], [0], [1], [0, 0, 1, 1], [], []>} : vector<8x128xbf16>, vector<128x512xbf16>, vector<8x512xf32> -> vector<8x512xf32>
    %316 = arith.addf %311, %315 : vector<8x512xf32>
    %c0_183 = arith.constant 0 : index
    %c0_184 = arith.constant 0 : index
    %317 = vector.load %arg22[%c0_183, %c0_184] : memref<8x128xf32, #tpu.memory_space<vmem>>, vector<8x128xf32>
    %318 = vector.extract_strided_slice %310 {offsets = [0, 0], sizes = [8, 128], strides = [1, 1]} : vector<8x512xf32> to vector<8x128xf32>
    %319 = arith.negf %318 : vector<8x128xf32>
    %320 = math.exp %319 : vector<8x128xf32>
    %cst_185 = arith.constant 1.000000e+00 : f32
    %321 = vector.broadcast %cst_185 : f32 to vector<8x128xf32>
    %322 = arith.addf %321, %320 : vector<8x128xf32>
    %323 = arith.divf %321, %322 : vector<8x128xf32>
    %324 = vector.extract_strided_slice %310 {offsets = [0, 128], sizes = [8, 128], strides = [1, 1]} : vector<8x512xf32> to vector<8x128xf32>
    %325 = arith.negf %324 : vector<8x128xf32>
    %326 = math.exp %325 : vector<8x128xf32>
    %cst_186 = arith.constant 1.000000e+00 : f32
    %327 = vector.broadcast %cst_186 : f32 to vector<8x128xf32>
    %328 = arith.addf %327, %326 : vector<8x128xf32>
    %329 = arith.divf %327, %328 : vector<8x128xf32>
    %330 = vector.extract_strided_slice %310 {offsets = [0, 256], sizes = [8, 128], strides = [1, 1]} : vector<8x512xf32> to vector<8x128xf32>
    %331 = math.tanh %330 : vector<8x128xf32>
    %332 = vector.extract_strided_slice %310 {offsets = [0, 384], sizes = [8, 128], strides = [1, 1]} : vector<8x512xf32> to vector<8x128xf32>
    %333 = arith.negf %332 : vector<8x128xf32>
    %334 = math.exp %333 : vector<8x128xf32>
    %cst_187 = arith.constant 1.000000e+00 : f32
    %335 = vector.broadcast %cst_187 : f32 to vector<8x128xf32>
    %336 = arith.addf %335, %334 : vector<8x128xf32>
    %337 = arith.divf %335, %336 : vector<8x128xf32>
    %338 = arith.mulf %329, %317 : vector<8x128xf32>
    %339 = arith.mulf %323, %331 : vector<8x128xf32>
    %340 = arith.addf %338, %339 : vector<8x128xf32>
    %341 = math.tanh %340 : vector<8x128xf32>
    %342 = arith.mulf %337, %341 : vector<8x128xf32>
    %c0_188 = arith.constant 0 : index
    %c0_189 = arith.constant 0 : index
    %343 = vector.load %arg24[%c0_188, %c0_189] : memref<8x128xf32, #tpu.memory_space<vmem>>, vector<8x128xf32>
    %344 = vector.extract_strided_slice %316 {offsets = [0, 0], sizes = [8, 128], strides = [1, 1]} : vector<8x512xf32> to vector<8x128xf32>
    %345 = arith.negf %344 : vector<8x128xf32>
    %346 = math.exp %345 : vector<8x128xf32>
    %cst_190 = arith.constant 1.000000e+00 : f32
    %347 = vector.broadcast %cst_190 : f32 to vector<8x128xf32>
    %348 = arith.addf %347, %346 : vector<8x128xf32>
    %349 = arith.divf %347, %348 : vector<8x128xf32>
    %350 = vector.extract_strided_slice %316 {offsets = [0, 128], sizes = [8, 128], strides = [1, 1]} : vector<8x512xf32> to vector<8x128xf32>
    %351 = arith.negf %350 : vector<8x128xf32>
    %352 = math.exp %351 : vector<8x128xf32>
    %cst_191 = arith.constant 1.000000e+00 : f32
    %353 = vector.broadcast %cst_191 : f32 to vector<8x128xf32>
    %354 = arith.addf %353, %352 : vector<8x128xf32>
    %355 = arith.divf %353, %354 : vector<8x128xf32>
    %356 = vector.extract_strided_slice %316 {offsets = [0, 256], sizes = [8, 128], strides = [1, 1]} : vector<8x512xf32> to vector<8x128xf32>
    %357 = math.tanh %356 : vector<8x128xf32>
    %358 = vector.extract_strided_slice %316 {offsets = [0, 384], sizes = [8, 128], strides = [1, 1]} : vector<8x512xf32> to vector<8x128xf32>
    %359 = arith.negf %358 : vector<8x128xf32>
    %360 = math.exp %359 : vector<8x128xf32>
    %cst_192 = arith.constant 1.000000e+00 : f32
    %361 = vector.broadcast %cst_192 : f32 to vector<8x128xf32>
    %362 = arith.addf %361, %360 : vector<8x128xf32>
    %363 = arith.divf %361, %362 : vector<8x128xf32>
    %364 = arith.mulf %355, %343 : vector<8x128xf32>
    %365 = arith.mulf %349, %357 : vector<8x128xf32>
    %366 = arith.addf %364, %365 : vector<8x128xf32>
    %367 = math.tanh %366 : vector<8x128xf32>
    %368 = arith.mulf %363, %367 : vector<8x128xf32>
    %c0_193 = arith.constant 0 : index
    %c0_194 = arith.constant 0 : index
    %369 = vector.load %arg21[%c0_193, %c0_194] : memref<8x128xf32, #tpu.memory_space<vmem>>, vector<8x128xf32>
    tpu.vector_store %arg21[%c0_193, %c0_194], %342 {strides = array<i32>} : memref<8x128xf32, #tpu.memory_space<vmem>>, vector<8x128xf32>,
    %c0_195 = arith.constant 0 : index
    %c0_196 = arith.constant 0 : index
    %370 = vector.load %arg22[%c0_195, %c0_196] : memref<8x128xf32, #tpu.memory_space<vmem>>, vector<8x128xf32>
    tpu.vector_store %arg22[%c0_195, %c0_196], %340 {strides = array<i32>} : memref<8x128xf32, #tpu.memory_space<vmem>>, vector<8x128xf32>,
    %c0_197 = arith.constant 0 : index
    %c0_198 = arith.constant 0 : index
    %371 = vector.load %arg23[%c0_197, %c0_198] : memref<8x128xf32, #tpu.memory_space<vmem>>, vector<8x128xf32>
    tpu.vector_store %arg23[%c0_197, %c0_198], %368 {strides = array<i32>} : memref<8x128xf32, #tpu.memory_space<vmem>>, vector<8x128xf32>,
    %c0_199 = arith.constant 0 : index
    %c0_200 = arith.constant 0 : index
    %372 = vector.load %arg24[%c0_199, %c0_200] : memref<8x128xf32, #tpu.memory_space<vmem>>, vector<8x128xf32>
    tpu.vector_store %arg24[%c0_199, %c0_200], %366 {strides = array<i32>} : memref<8x128xf32, #tpu.memory_space<vmem>>, vector<8x128xf32>,
    %c32_201 = arith.constant 32 : index
    %c0_202 = arith.constant 0 : index
    %373 = vector.load %arg19[%c32_201, %c0_202] : memref<64x128xf32, #tpu.memory_space<vmem>>, vector<8x128xf32>
    tpu.vector_store %arg19[%c32_201, %c0_202], %342 {strides = array<i32>} : memref<64x128xf32, #tpu.memory_space<vmem>>, vector<8x128xf32>,
    %c24_203 = arith.constant 24 : index
    %c0_204 = arith.constant 0 : index
    %374 = vector.load %arg20[%c24_203, %c0_204] : memref<64x128xf32, #tpu.memory_space<vmem>>, vector<8x128xf32>
    tpu.vector_store %arg20[%c24_203, %c0_204], %368 {strides = array<i32>} : memref<64x128xf32, #tpu.memory_space<vmem>>, vector<8x128xf32>,
    %c40_205 = arith.constant 40 : index
    %c0_206 = arith.constant 0 : index
    %375 = vector.load %arg16[%c40_205, %c0_206] : memref<64x512xf32, #tpu.memory_space<vmem>>, vector<8x512xf32>
    %c0_207 = arith.constant 0 : index
    %c0_208 = arith.constant 0 : index
    %376 = vector.load %arg21[%c0_207, %c0_208] : memref<8x128xf32, #tpu.memory_space<vmem>>, vector<8x128xf32>
    %377 = arith.truncf %376 : vector<8x128xf32> to vector<8x128xbf16>
    %c0_209 = arith.constant 0 : index
    %c0_210 = arith.constant 0 : index
    %378 = vector.load %arg2[%c0_209, %c0_210] : memref<128x512xbf16, #tpu.memory_space<vmem>>, vector<128x512xbf16>
    %cst_211 = arith.constant dense<0.000000e+00> : vector<8x512xf32>
    %379 = tpu.matmul %377, %378, %cst_211 {dimension_numbers = #tpu.dot_dimension_numbers<[1], [0], [0], [1], [0, 0, 1, 1], [], []>} : vector<8x128xbf16>, vector<128x512xbf16>, vector<8x512xf32> -> vector<8x512xf32>
    %380 = arith.addf %375, %379 : vector<8x512xf32>
    %c16_212 = arith.constant 16 : index
    %c0_213 = arith.constant 0 : index
    %381 = vector.load %arg17[%c16_212, %c0_213] : memref<64x512xf32, #tpu.memory_space<vmem>>, vector<8x512xf32>
    %c0_214 = arith.constant 0 : index
    %c0_215 = arith.constant 0 : index
    %382 = vector.load %arg23[%c0_214, %c0_215] : memref<8x128xf32, #tpu.memory_space<vmem>>, vector<8x128xf32>
    %383 = arith.truncf %382 : vector<8x128xf32> to vector<8x128xbf16>
    %c0_216 = arith.constant 0 : index
    %c0_217 = arith.constant 0 : index
    %384 = vector.load %arg5[%c0_216, %c0_217] : memref<128x512xbf16, #tpu.memory_space<vmem>>, vector<128x512xbf16>
    %cst_218 = arith.constant dense<0.000000e+00> : vector<8x512xf32>
    %385 = tpu.matmul %383, %384, %cst_218 {dimension_numbers = #tpu.dot_dimension_numbers<[1], [0], [0], [1], [0, 0, 1, 1], [], []>} : vector<8x128xbf16>, vector<128x512xbf16>, vector<8x512xf32> -> vector<8x512xf32>
    %386 = arith.addf %381, %385 : vector<8x512xf32>
    %c0_219 = arith.constant 0 : index
    %c0_220 = arith.constant 0 : index
    %387 = vector.load %arg22[%c0_219, %c0_220] : memref<8x128xf32, #tpu.memory_space<vmem>>, vector<8x128xf32>
    %388 = vector.extract_strided_slice %380 {offsets = [0, 0], sizes = [8, 128], strides = [1, 1]} : vector<8x512xf32> to vector<8x128xf32>
    %389 = arith.negf %388 : vector<8x128xf32>
    %390 = math.exp %389 : vector<8x128xf32>
    %cst_221 = arith.constant 1.000000e+00 : f32
    %391 = vector.broadcast %cst_221 : f32 to vector<8x128xf32>
    %392 = arith.addf %391, %390 : vector<8x128xf32>
    %393 = arith.divf %391, %392 : vector<8x128xf32>
    %394 = vector.extract_strided_slice %380 {offsets = [0, 128], sizes = [8, 128], strides = [1, 1]} : vector<8x512xf32> to vector<8x128xf32>
    %395 = arith.negf %394 : vector<8x128xf32>
    %396 = math.exp %395 : vector<8x128xf32>
    %cst_222 = arith.constant 1.000000e+00 : f32
    %397 = vector.broadcast %cst_222 : f32 to vector<8x128xf32>
    %398 = arith.addf %397, %396 : vector<8x128xf32>
    %399 = arith.divf %397, %398 : vector<8x128xf32>
    %400 = vector.extract_strided_slice %380 {offsets = [0, 256], sizes = [8, 128], strides = [1, 1]} : vector<8x512xf32> to vector<8x128xf32>
    %401 = math.tanh %400 : vector<8x128xf32>
    %402 = vector.extract_strided_slice %380 {offsets = [0, 384], sizes = [8, 128], strides = [1, 1]} : vector<8x512xf32> to vector<8x128xf32>
    %403 = arith.negf %402 : vector<8x128xf32>
    %404 = math.exp %403 : vector<8x128xf32>
    %cst_223 = arith.constant 1.000000e+00 : f32
    %405 = vector.broadcast %cst_223 : f32 to vector<8x128xf32>
    %406 = arith.addf %405, %404 : vector<8x128xf32>
    %407 = arith.divf %405, %406 : vector<8x128xf32>
    %408 = arith.mulf %399, %387 : vector<8x128xf32>
    %409 = arith.mulf %393, %401 : vector<8x128xf32>
    %410 = arith.addf %408, %409 : vector<8x128xf32>
    %411 = math.tanh %410 : vector<8x128xf32>
    %412 = arith.mulf %407, %411 : vector<8x128xf32>
    %c0_224 = arith.constant 0 : index
    %c0_225 = arith.constant 0 : index
    %413 = vector.load %arg24[%c0_224, %c0_225] : memref<8x128xf32, #tpu.memory_space<vmem>>, vector<8x128xf32>
    %414 = vector.extract_strided_slice %386 {offsets = [0, 0], sizes = [8, 128], strides = [1, 1]} : vector<8x512xf32> to vector<8x128xf32>
    %415 = arith.negf %414 : vector<8x128xf32>
    %416 = math.exp %415 : vector<8x128xf32>
    %cst_226 = arith.constant 1.000000e+00 : f32
    %417 = vector.broadcast %cst_226 : f32 to vector<8x128xf32>
    %418 = arith.addf %417, %416 : vector<8x128xf32>
    %419 = arith.divf %417, %418 : vector<8x128xf32>
    %420 = vector.extract_strided_slice %386 {offsets = [0, 128], sizes = [8, 128], strides = [1, 1]} : vector<8x512xf32> to vector<8x128xf32>
    %421 = arith.negf %420 : vector<8x128xf32>
    %422 = math.exp %421 : vector<8x128xf32>
    %cst_227 = arith.constant 1.000000e+00 : f32
    %423 = vector.broadcast %cst_227 : f32 to vector<8x128xf32>
    %424 = arith.addf %423, %422 : vector<8x128xf32>
    %425 = arith.divf %423, %424 : vector<8x128xf32>
    %426 = vector.extract_strided_slice %386 {offsets = [0, 256], sizes = [8, 128], strides = [1, 1]} : vector<8x512xf32> to vector<8x128xf32>
    %427 = math.tanh %426 : vector<8x128xf32>
    %428 = vector.extract_strided_slice %386 {offsets = [0, 384], sizes = [8, 128], strides = [1, 1]} : vector<8x512xf32> to vector<8x128xf32>
    %429 = arith.negf %428 : vector<8x128xf32>
    %430 = math.exp %429 : vector<8x128xf32>
    %cst_228 = arith.constant 1.000000e+00 : f32
    %431 = vector.broadcast %cst_228 : f32 to vector<8x128xf32>
    %432 = arith.addf %431, %430 : vector<8x128xf32>
    %433 = arith.divf %431, %432 : vector<8x128xf32>
    %434 = arith.mulf %425, %413 : vector<8x128xf32>
    %435 = arith.mulf %419, %427 : vector<8x128xf32>
    %436 = arith.addf %434, %435 : vector<8x128xf32>
    %437 = math.tanh %436 : vector<8x128xf32>
    %438 = arith.mulf %433, %437 : vector<8x128xf32>
    %c0_229 = arith.constant 0 : index
    %c0_230 = arith.constant 0 : index
    %439 = vector.load %arg21[%c0_229, %c0_230] : memref<8x128xf32, #tpu.memory_space<vmem>>, vector<8x128xf32>
    tpu.vector_store %arg21[%c0_229, %c0_230], %412 {strides = array<i32>} : memref<8x128xf32, #tpu.memory_space<vmem>>, vector<8x128xf32>,
    %c0_231 = arith.constant 0 : index
    %c0_232 = arith.constant 0 : index
    %440 = vector.load %arg22[%c0_231, %c0_232] : memref<8x128xf32, #tpu.memory_space<vmem>>, vector<8x128xf32>
    tpu.vector_store %arg22[%c0_231, %c0_232], %410 {strides = array<i32>} : memref<8x128xf32, #tpu.memory_space<vmem>>, vector<8x128xf32>,
    %c0_233 = arith.constant 0 : index
    %c0_234 = arith.constant 0 : index
    %441 = vector.load %arg23[%c0_233, %c0_234] : memref<8x128xf32, #tpu.memory_space<vmem>>, vector<8x128xf32>
    tpu.vector_store %arg23[%c0_233, %c0_234], %438 {strides = array<i32>} : memref<8x128xf32, #tpu.memory_space<vmem>>, vector<8x128xf32>,
    %c0_235 = arith.constant 0 : index
    %c0_236 = arith.constant 0 : index
    %442 = vector.load %arg24[%c0_235, %c0_236] : memref<8x128xf32, #tpu.memory_space<vmem>>, vector<8x128xf32>
    tpu.vector_store %arg24[%c0_235, %c0_236], %436 {strides = array<i32>} : memref<8x128xf32, #tpu.memory_space<vmem>>, vector<8x128xf32>,
    %c40_237 = arith.constant 40 : index
    %c0_238 = arith.constant 0 : index
    %443 = vector.load %arg19[%c40_237, %c0_238] : memref<64x128xf32, #tpu.memory_space<vmem>>, vector<8x128xf32>
    tpu.vector_store %arg19[%c40_237, %c0_238], %412 {strides = array<i32>} : memref<64x128xf32, #tpu.memory_space<vmem>>, vector<8x128xf32>,
    %c16_239 = arith.constant 16 : index
    %c0_240 = arith.constant 0 : index
    %444 = vector.load %arg20[%c16_239, %c0_240] : memref<64x128xf32, #tpu.memory_space<vmem>>, vector<8x128xf32>
    tpu.vector_store %arg20[%c16_239, %c0_240], %438 {strides = array<i32>} : memref<64x128xf32, #tpu.memory_space<vmem>>, vector<8x128xf32>,
    %c48_241 = arith.constant 48 : index
    %c0_242 = arith.constant 0 : index
    %445 = vector.load %arg16[%c48_241, %c0_242] : memref<64x512xf32, #tpu.memory_space<vmem>>, vector<8x512xf32>
    %c0_243 = arith.constant 0 : index
    %c0_244 = arith.constant 0 : index
    %446 = vector.load %arg21[%c0_243, %c0_244] : memref<8x128xf32, #tpu.memory_space<vmem>>, vector<8x128xf32>
    %447 = arith.truncf %446 : vector<8x128xf32> to vector<8x128xbf16>
    %c0_245 = arith.constant 0 : index
    %c0_246 = arith.constant 0 : index
    %448 = vector.load %arg2[%c0_245, %c0_246] : memref<128x512xbf16, #tpu.memory_space<vmem>>, vector<128x512xbf16>
    %cst_247 = arith.constant dense<0.000000e+00> : vector<8x512xf32>
    %449 = tpu.matmul %447, %448, %cst_247 {dimension_numbers = #tpu.dot_dimension_numbers<[1], [0], [0], [1], [0, 0, 1, 1], [], []>} : vector<8x128xbf16>, vector<128x512xbf16>, vector<8x512xf32> -> vector<8x512xf32>
    %450 = arith.addf %445, %449 : vector<8x512xf32>
    %c8_248 = arith.constant 8 : index
    %c0_249 = arith.constant 0 : index
    %451 = vector.load %arg17[%c8_248, %c0_249] : memref<64x512xf32, #tpu.memory_space<vmem>>, vector<8x512xf32>
    %c0_250 = arith.constant 0 : index
    %c0_251 = arith.constant 0 : index
    %452 = vector.load %arg23[%c0_250, %c0_251] : memref<8x128xf32, #tpu.memory_space<vmem>>, vector<8x128xf32>
    %453 = arith.truncf %452 : vector<8x128xf32> to vector<8x128xbf16>
    %c0_252 = arith.constant 0 : index
    %c0_253 = arith.constant 0 : index
    %454 = vector.load %arg5[%c0_252, %c0_253] : memref<128x512xbf16, #tpu.memory_space<vmem>>, vector<128x512xbf16>
    %cst_254 = arith.constant dense<0.000000e+00> : vector<8x512xf32>
    %455 = tpu.matmul %453, %454, %cst_254 {dimension_numbers = #tpu.dot_dimension_numbers<[1], [0], [0], [1], [0, 0, 1, 1], [], []>} : vector<8x128xbf16>, vector<128x512xbf16>, vector<8x512xf32> -> vector<8x512xf32>
    %456 = arith.addf %451, %455 : vector<8x512xf32>
    %c0_255 = arith.constant 0 : index
    %c0_256 = arith.constant 0 : index
    %457 = vector.load %arg22[%c0_255, %c0_256] : memref<8x128xf32, #tpu.memory_space<vmem>>, vector<8x128xf32>
    %458 = vector.extract_strided_slice %450 {offsets = [0, 0], sizes = [8, 128], strides = [1, 1]} : vector<8x512xf32> to vector<8x128xf32>
    %459 = arith.negf %458 : vector<8x128xf32>
    %460 = math.exp %459 : vector<8x128xf32>
    %cst_257 = arith.constant 1.000000e+00 : f32
    %461 = vector.broadcast %cst_257 : f32 to vector<8x128xf32>
    %462 = arith.addf %461, %460 : vector<8x128xf32>
    %463 = arith.divf %461, %462 : vector<8x128xf32>
    %464 = vector.extract_strided_slice %450 {offsets = [0, 128], sizes = [8, 128], strides = [1, 1]} : vector<8x512xf32> to vector<8x128xf32>
    %465 = arith.negf %464 : vector<8x128xf32>
    %466 = math.exp %465 : vector<8x128xf32>
    %cst_258 = arith.constant 1.000000e+00 : f32
    %467 = vector.broadcast %cst_258 : f32 to vector<8x128xf32>
    %468 = arith.addf %467, %466 : vector<8x128xf32>
    %469 = arith.divf %467, %468 : vector<8x128xf32>
    %470 = vector.extract_strided_slice %450 {offsets = [0, 256], sizes = [8, 128], strides = [1, 1]} : vector<8x512xf32> to vector<8x128xf32>
    %471 = math.tanh %470 : vector<8x128xf32>
    %472 = vector.extract_strided_slice %450 {offsets = [0, 384], sizes = [8, 128], strides = [1, 1]} : vector<8x512xf32> to vector<8x128xf32>
    %473 = arith.negf %472 : vector<8x128xf32>
    %474 = math.exp %473 : vector<8x128xf32>
    %cst_259 = arith.constant 1.000000e+00 : f32
    %475 = vector.broadcast %cst_259 : f32 to vector<8x128xf32>
    %476 = arith.addf %475, %474 : vector<8x128xf32>
    %477 = arith.divf %475, %476 : vector<8x128xf32>
    %478 = arith.mulf %469, %457 : vector<8x128xf32>
    %479 = arith.mulf %463, %471 : vector<8x128xf32>
    %480 = arith.addf %478, %479 : vector<8x128xf32>
    %481 = math.tanh %480 : vector<8x128xf32>
    %482 = arith.mulf %477, %481 : vector<8x128xf32>
    %c0_260 = arith.constant 0 : index
    %c0_261 = arith.constant 0 : index
    %483 = vector.load %arg24[%c0_260, %c0_261] : memref<8x128xf32, #tpu.memory_space<vmem>>, vector<8x128xf32>
    %484 = vector.extract_strided_slice %456 {offsets = [0, 0], sizes = [8, 128], strides = [1, 1]} : vector<8x512xf32> to vector<8x128xf32>
    %485 = arith.negf %484 : vector<8x128xf32>
    %486 = math.exp %485 : vector<8x128xf32>
    %cst_262 = arith.constant 1.000000e+00 : f32
    %487 = vector.broadcast %cst_262 : f32 to vector<8x128xf32>
    %488 = arith.addf %487, %486 : vector<8x128xf32>
    %489 = arith.divf %487, %488 : vector<8x128xf32>
    %490 = vector.extract_strided_slice %456 {offsets = [0, 128], sizes = [8, 128], strides = [1, 1]} : vector<8x512xf32> to vector<8x128xf32>
    %491 = arith.negf %490 : vector<8x128xf32>
    %492 = math.exp %491 : vector<8x128xf32>
    %cst_263 = arith.constant 1.000000e+00 : f32
    %493 = vector.broadcast %cst_263 : f32 to vector<8x128xf32>
    %494 = arith.addf %493, %492 : vector<8x128xf32>
    %495 = arith.divf %493, %494 : vector<8x128xf32>
    %496 = vector.extract_strided_slice %456 {offsets = [0, 256], sizes = [8, 128], strides = [1, 1]} : vector<8x512xf32> to vector<8x128xf32>
    %497 = math.tanh %496 : vector<8x128xf32>
    %498 = vector.extract_strided_slice %456 {offsets = [0, 384], sizes = [8, 128], strides = [1, 1]} : vector<8x512xf32> to vector<8x128xf32>
    %499 = arith.negf %498 : vector<8x128xf32>
    %500 = math.exp %499 : vector<8x128xf32>
    %cst_264 = arith.constant 1.000000e+00 : f32
    %501 = vector.broadcast %cst_264 : f32 to vector<8x128xf32>
    %502 = arith.addf %501, %500 : vector<8x128xf32>
    %503 = arith.divf %501, %502 : vector<8x128xf32>
    %504 = arith.mulf %495, %483 : vector<8x128xf32>
    %505 = arith.mulf %489, %497 : vector<8x128xf32>
    %506 = arith.addf %504, %505 : vector<8x128xf32>
    %507 = math.tanh %506 : vector<8x128xf32>
    %508 = arith.mulf %503, %507 : vector<8x128xf32>
    %c0_265 = arith.constant 0 : index
    %c0_266 = arith.constant 0 : index
    %509 = vector.load %arg21[%c0_265, %c0_266] : memref<8x128xf32, #tpu.memory_space<vmem>>, vector<8x128xf32>
    tpu.vector_store %arg21[%c0_265, %c0_266], %482 {strides = array<i32>} : memref<8x128xf32, #tpu.memory_space<vmem>>, vector<8x128xf32>,
    %c0_267 = arith.constant 0 : index
    %c0_268 = arith.constant 0 : index
    %510 = vector.load %arg22[%c0_267, %c0_268] : memref<8x128xf32, #tpu.memory_space<vmem>>, vector<8x128xf32>
    tpu.vector_store %arg22[%c0_267, %c0_268], %480 {strides = array<i32>} : memref<8x128xf32, #tpu.memory_space<vmem>>, vector<8x128xf32>,
    %c0_269 = arith.constant 0 : index
    %c0_270 = arith.constant 0 : index
    %511 = vector.load %arg23[%c0_269, %c0_270] : memref<8x128xf32, #tpu.memory_space<vmem>>, vector<8x128xf32>
    tpu.vector_store %arg23[%c0_269, %c0_270], %508 {strides = array<i32>} : memref<8x128xf32, #tpu.memory_space<vmem>>, vector<8x128xf32>,
    %c0_271 = arith.constant 0 : index
    %c0_272 = arith.constant 0 : index
    %512 = vector.load %arg24[%c0_271, %c0_272] : memref<8x128xf32, #tpu.memory_space<vmem>>, vector<8x128xf32>
    tpu.vector_store %arg24[%c0_271, %c0_272], %506 {strides = array<i32>} : memref<8x128xf32, #tpu.memory_space<vmem>>, vector<8x128xf32>,
    %c48_273 = arith.constant 48 : index
    %c0_274 = arith.constant 0 : index
    %513 = vector.load %arg19[%c48_273, %c0_274] : memref<64x128xf32, #tpu.memory_space<vmem>>, vector<8x128xf32>
    tpu.vector_store %arg19[%c48_273, %c0_274], %482 {strides = array<i32>} : memref<64x128xf32, #tpu.memory_space<vmem>>, vector<8x128xf32>,
    %c8_275 = arith.constant 8 : index
    %c0_276 = arith.constant 0 : index
    %514 = vector.load %arg20[%c8_275, %c0_276] : memref<64x128xf32, #tpu.memory_space<vmem>>, vector<8x128xf32>
    tpu.vector_store %arg20[%c8_275, %c0_276], %508 {strides = array<i32>} : memref<64x128xf32, #tpu.memory_space<vmem>>, vector<8x128xf32>,
    %c56_277 = arith.constant 56 : index
    %c0_278 = arith.constant 0 : index
    %515 = vector.load %arg16[%c56_277, %c0_278] : memref<64x512xf32, #tpu.memory_space<vmem>>, vector<8x512xf32>
    %c0_279 = arith.constant 0 : index
    %c0_280 = arith.constant 0 : index
    %516 = vector.load %arg21[%c0_279, %c0_280] : memref<8x128xf32, #tpu.memory_space<vmem>>, vector<8x128xf32>
    %517 = arith.truncf %516 : vector<8x128xf32> to vector<8x128xbf16>
    %c0_281 = arith.constant 0 : index
    %c0_282 = arith.constant 0 : index
    %518 = vector.load %arg2[%c0_281, %c0_282] : memref<128x512xbf16, #tpu.memory_space<vmem>>, vector<128x512xbf16>
    %cst_283 = arith.constant dense<0.000000e+00> : vector<8x512xf32>
    %519 = tpu.matmul %517, %518, %cst_283 {dimension_numbers = #tpu.dot_dimension_numbers<[1], [0], [0], [1], [0, 0, 1, 1], [], []>} : vector<8x128xbf16>, vector<128x512xbf16>, vector<8x512xf32> -> vector<8x512xf32>
    %520 = arith.addf %515, %519 : vector<8x512xf32>
    %c0_284 = arith.constant 0 : index
    %c0_285 = arith.constant 0 : index
    %521 = vector.load %arg17[%c0_284, %c0_285] : memref<64x512xf32, #tpu.memory_space<vmem>>, vector<8x512xf32>
    %c0_286 = arith.constant 0 : index
    %c0_287 = arith.constant 0 : index
    %522 = vector.load %arg23[%c0_286, %c0_287] : memref<8x128xf32, #tpu.memory_space<vmem>>, vector<8x128xf32>
    %523 = arith.truncf %522 : vector<8x128xf32> to vector<8x128xbf16>
    %c0_288 = arith.constant 0 : index
    %c0_289 = arith.constant 0 : index
    %524 = vector.load %arg5[%c0_288, %c0_289] : memref<128x512xbf16, #tpu.memory_space<vmem>>, vector<128x512xbf16>
    %cst_290 = arith.constant dense<0.000000e+00> : vector<8x512xf32>
    %525 = tpu.matmul %523, %524, %cst_290 {dimension_numbers = #tpu.dot_dimension_numbers<[1], [0], [0], [1], [0, 0, 1, 1], [], []>} : vector<8x128xbf16>, vector<128x512xbf16>, vector<8x512xf32> -> vector<8x512xf32>
    %526 = arith.addf %521, %525 : vector<8x512xf32>
    %c0_291 = arith.constant 0 : index
    %c0_292 = arith.constant 0 : index
    %527 = vector.load %arg22[%c0_291, %c0_292] : memref<8x128xf32, #tpu.memory_space<vmem>>, vector<8x128xf32>
    %528 = vector.extract_strided_slice %520 {offsets = [0, 0], sizes = [8, 128], strides = [1, 1]} : vector<8x512xf32> to vector<8x128xf32>
    %529 = arith.negf %528 : vector<8x128xf32>
    %530 = math.exp %529 : vector<8x128xf32>
    %cst_293 = arith.constant 1.000000e+00 : f32
    %531 = vector.broadcast %cst_293 : f32 to vector<8x128xf32>
    %532 = arith.addf %531, %530 : vector<8x128xf32>
    %533 = arith.divf %531, %532 : vector<8x128xf32>
    %534 = vector.extract_strided_slice %520 {offsets = [0, 128], sizes = [8, 128], strides = [1, 1]} : vector<8x512xf32> to vector<8x128xf32>
    %535 = arith.negf %534 : vector<8x128xf32>
    %536 = math.exp %535 : vector<8x128xf32>
    %cst_294 = arith.constant 1.000000e+00 : f32
    %537 = vector.broadcast %cst_294 : f32 to vector<8x128xf32>
    %538 = arith.addf %537, %536 : vector<8x128xf32>
    %539 = arith.divf %537, %538 : vector<8x128xf32>
    %540 = vector.extract_strided_slice %520 {offsets = [0, 256], sizes = [8, 128], strides = [1, 1]} : vector<8x512xf32> to vector<8x128xf32>
    %541 = math.tanh %540 : vector<8x128xf32>
    %542 = vector.extract_strided_slice %520 {offsets = [0, 384], sizes = [8, 128], strides = [1, 1]} : vector<8x512xf32> to vector<8x128xf32>
    %543 = arith.negf %542 : vector<8x128xf32>
    %544 = math.exp %543 : vector<8x128xf32>
    %cst_295 = arith.constant 1.000000e+00 : f32
    %545 = vector.broadcast %cst_295 : f32 to vector<8x128xf32>
    %546 = arith.addf %545, %544 : vector<8x128xf32>
    %547 = arith.divf %545, %546 : vector<8x128xf32>
    %548 = arith.mulf %539, %527 : vector<8x128xf32>
    %549 = arith.mulf %533, %541 : vector<8x128xf32>
    %550 = arith.addf %548, %549 : vector<8x128xf32>
    %551 = math.tanh %550 : vector<8x128xf32>
    %552 = arith.mulf %547, %551 : vector<8x128xf32>
    %c0_296 = arith.constant 0 : index
    %c0_297 = arith.constant 0 : index
    %553 = vector.load %arg24[%c0_296, %c0_297] : memref<8x128xf32, #tpu.memory_space<vmem>>, vector<8x128xf32>
    %554 = vector.extract_strided_slice %526 {offsets = [0, 0], sizes = [8, 128], strides = [1, 1]} : vector<8x512xf32> to vector<8x128xf32>
    %555 = arith.negf %554 : vector<8x128xf32>
    %556 = math.exp %555 : vector<8x128xf32>
    %cst_298 = arith.constant 1.000000e+00 : f32
    %557 = vector.broadcast %cst_298 : f32 to vector<8x128xf32>
    %558 = arith.addf %557, %556 : vector<8x128xf32>
    %559 = arith.divf %557, %558 : vector<8x128xf32>
    %560 = vector.extract_strided_slice %526 {offsets = [0, 128], sizes = [8, 128], strides = [1, 1]} : vector<8x512xf32> to vector<8x128xf32>
    %561 = arith.negf %560 : vector<8x128xf32>
    %562 = math.exp %561 : vector<8x128xf32>
    %cst_299 = arith.constant 1.000000e+00 : f32
    %563 = vector.broadcast %cst_299 : f32 to vector<8x128xf32>
    %564 = arith.addf %563, %562 : vector<8x128xf32>
    %565 = arith.divf %563, %564 : vector<8x128xf32>
    %566 = vector.extract_strided_slice %526 {offsets = [0, 256], sizes = [8, 128], strides = [1, 1]} : vector<8x512xf32> to vector<8x128xf32>
    %567 = math.tanh %566 : vector<8x128xf32>
    %568 = vector.extract_strided_slice %526 {offsets = [0, 384], sizes = [8, 128], strides = [1, 1]} : vector<8x512xf32> to vector<8x128xf32>
    %569 = arith.negf %568 : vector<8x128xf32>
    %570 = math.exp %569 : vector<8x128xf32>
    %cst_300 = arith.constant 1.000000e+00 : f32
    %571 = vector.broadcast %cst_300 : f32 to vector<8x128xf32>
    %572 = arith.addf %571, %570 : vector<8x128xf32>
    %573 = arith.divf %571, %572 : vector<8x128xf32>
    %574 = arith.mulf %565, %553 : vector<8x128xf32>
    %575 = arith.mulf %559, %567 : vector<8x128xf32>
    %576 = arith.addf %574, %575 : vector<8x128xf32>
    %577 = math.tanh %576 : vector<8x128xf32>
    %578 = arith.mulf %573, %577 : vector<8x128xf32>
    %c0_301 = arith.constant 0 : index
    %c0_302 = arith.constant 0 : index
    %579 = vector.load %arg21[%c0_301, %c0_302] : memref<8x128xf32, #tpu.memory_space<vmem>>, vector<8x128xf32>
    tpu.vector_store %arg21[%c0_301, %c0_302], %552 {strides = array<i32>} : memref<8x128xf32, #tpu.memory_space<vmem>>, vector<8x128xf32>,
    %c0_303 = arith.constant 0 : index
    %c0_304 = arith.constant 0 : index
    %580 = vector.load %arg22[%c0_303, %c0_304] : memref<8x128xf32, #tpu.memory_space<vmem>>, vector<8x128xf32>
    tpu.vector_store %arg22[%c0_303, %c0_304], %550 {strides = array<i32>} : memref<8x128xf32, #tpu.memory_space<vmem>>, vector<8x128xf32>,
    %c0_305 = arith.constant 0 : index
    %c0_306 = arith.constant 0 : index
    %581 = vector.load %arg23[%c0_305, %c0_306] : memref<8x128xf32, #tpu.memory_space<vmem>>, vector<8x128xf32>
    tpu.vector_store %arg23[%c0_305, %c0_306], %578 {strides = array<i32>} : memref<8x128xf32, #tpu.memory_space<vmem>>, vector<8x128xf32>,
    %c0_307 = arith.constant 0 : index
    %c0_308 = arith.constant 0 : index
    %582 = vector.load %arg24[%c0_307, %c0_308] : memref<8x128xf32, #tpu.memory_space<vmem>>, vector<8x128xf32>
    tpu.vector_store %arg24[%c0_307, %c0_308], %576 {strides = array<i32>} : memref<8x128xf32, #tpu.memory_space<vmem>>, vector<8x128xf32>,
    %c56_309 = arith.constant 56 : index
    %c0_310 = arith.constant 0 : index
    %583 = vector.load %arg19[%c56_309, %c0_310] : memref<64x128xf32, #tpu.memory_space<vmem>>, vector<8x128xf32>
    tpu.vector_store %arg19[%c56_309, %c0_310], %552 {strides = array<i32>} : memref<64x128xf32, #tpu.memory_space<vmem>>, vector<8x128xf32>,
    %c0_311 = arith.constant 0 : index
    %c0_312 = arith.constant 0 : index
    %584 = vector.load %arg20[%c0_311, %c0_312] : memref<64x128xf32, #tpu.memory_space<vmem>>, vector<8x128xf32>
    tpu.vector_store %arg20[%c0_311, %c0_312], %578 {strides = array<i32>} : memref<64x128xf32, #tpu.memory_space<vmem>>, vector<8x128xf32>,
    %c0_313 = arith.constant 0 : index
    %c0_314 = arith.constant 0 : index
    %585 = vector.load %arg19[%c0_313, %c0_314] : memref<64x128xf32, #tpu.memory_space<vmem>>, vector<64x128xf32>
    %586 = arith.truncf %585 : vector<64x128xf32> to vector<64x128xbf16>
    %c0_315 = arith.constant 0 : index
    %c0_316 = arith.constant 0 : index
    %587 = vector.load %arg7[%c0_315, %c0_316] : memref<128x512xbf16, #tpu.memory_space<vmem>>, vector<128x512xbf16>
    %cst_317 = arith.constant dense<0.000000e+00> : vector<64x512xf32>
    %588 = tpu.matmul %586, %587, %cst_317 {dimension_numbers = #tpu.dot_dimension_numbers<[1], [0], [0], [1], [0, 0, 1, 1], [], []>} : vector<64x128xbf16>, vector<128x512xbf16>, vector<64x512xf32> -> vector<64x512xf32>
    %c0_318 = arith.constant 0 : index
    %c0_319 = arith.constant 0 : index
    %589 = vector.load %arg20[%c0_318, %c0_319] : memref<64x128xf32, #tpu.memory_space<vmem>>, vector<64x128xf32>
    %590 = arith.truncf %589 : vector<64x128xf32> to vector<64x128xbf16>
    %c0_320 = arith.constant 0 : index
    %c0_321 = arith.constant 0 : index
    %591 = vector.load %arg8[%c0_320, %c0_321] : memref<128x512xbf16, #tpu.memory_space<vmem>>, vector<128x512xbf16>
    %cst_322 = arith.constant dense<0.000000e+00> : vector<64x512xf32>
    %592 = tpu.matmul %590, %591, %cst_322 {dimension_numbers = #tpu.dot_dimension_numbers<[1], [0], [0], [1], [0, 0, 1, 1], [], []>} : vector<64x128xbf16>, vector<128x512xbf16>, vector<64x512xf32> -> vector<64x512xf32>
    %593 = arith.addf %588, %592 : vector<64x512xf32>
    %c0_323 = arith.constant 0 : index
    %c0_324 = arith.constant 0 : index
    %594 = vector.load %arg10[%c0_323, %c0_324] : memref<1x512xf32, #tpu.memory_space<vmem>>, vector<1x512xf32>
    %595 = vector.broadcast %594 : vector<1x512xf32> to vector<64x512xf32>
    %596 = arith.addf %593, %595 : vector<64x512xf32>
    %c0_325 = arith.constant 0 : index
    %c0_326 = arith.constant 0 : index
    %597 = vector.load %arg18[%c0_325, %c0_326] : memref<64x512xf32, #tpu.memory_space<vmem>>, vector<64x512xf32>
    tpu.vector_store %arg18[%c0_325, %c0_326], %596 {strides = array<i32>} : memref<64x512xf32, #tpu.memory_space<vmem>>, vector<64x512xf32>,
    %c0_327 = arith.constant 0 : index
    %c0_328 = arith.constant 0 : index
    %598 = vector.load %arg18[%c0_327, %c0_328] : memref<64x512xf32, #tpu.memory_space<vmem>>, vector<8x512xf32>
    %c0_329 = arith.constant 0 : index
    %c0_330 = arith.constant 0 : index
    %599 = vector.load %arg25[%c0_329, %c0_330] : memref<8x128xf32, #tpu.memory_space<vmem>>, vector<8x128xf32>
    %600 = arith.truncf %599 : vector<8x128xf32> to vector<8x128xbf16>
    %c0_331 = arith.constant 0 : index
    %c0_332 = arith.constant 0 : index
    %601 = vector.load %arg9[%c0_331, %c0_332] : memref<128x512xbf16, #tpu.memory_space<vmem>>, vector<128x512xbf16>
    %cst_333 = arith.constant dense<0.000000e+00> : vector<8x512xf32>
    %602 = tpu.matmul %600, %601, %cst_333 {dimension_numbers = #tpu.dot_dimension_numbers<[1], [0], [0], [1], [0, 0, 1, 1], [], []>} : vector<8x128xbf16>, vector<128x512xbf16>, vector<8x512xf32> -> vector<8x512xf32>
    %603 = arith.addf %598, %602 : vector<8x512xf32>
    %c0_334 = arith.constant 0 : index
    %c0_335 = arith.constant 0 : index
    %604 = vector.load %arg26[%c0_334, %c0_335] : memref<8x128xf32, #tpu.memory_space<vmem>>, vector<8x128xf32>
    %605 = vector.extract_strided_slice %603 {offsets = [0, 0], sizes = [8, 128], strides = [1, 1]} : vector<8x512xf32> to vector<8x128xf32>
    %606 = arith.negf %605 : vector<8x128xf32>
    %607 = math.exp %606 : vector<8x128xf32>
    %cst_336 = arith.constant 1.000000e+00 : f32
    %608 = vector.broadcast %cst_336 : f32 to vector<8x128xf32>
    %609 = arith.addf %608, %607 : vector<8x128xf32>
    %610 = arith.divf %608, %609 : vector<8x128xf32>
    %611 = vector.extract_strided_slice %603 {offsets = [0, 128], sizes = [8, 128], strides = [1, 1]} : vector<8x512xf32> to vector<8x128xf32>
    %612 = arith.negf %611 : vector<8x128xf32>
    %613 = math.exp %612 : vector<8x128xf32>
    %cst_337 = arith.constant 1.000000e+00 : f32
    %614 = vector.broadcast %cst_337 : f32 to vector<8x128xf32>
    %615 = arith.addf %614, %613 : vector<8x128xf32>
    %616 = arith.divf %614, %615 : vector<8x128xf32>
    %617 = vector.extract_strided_slice %603 {offsets = [0, 256], sizes = [8, 128], strides = [1, 1]} : vector<8x512xf32> to vector<8x128xf32>
    %618 = math.tanh %617 : vector<8x128xf32>
    %619 = vector.extract_strided_slice %603 {offsets = [0, 384], sizes = [8, 128], strides = [1, 1]} : vector<8x512xf32> to vector<8x128xf32>
    %620 = arith.negf %619 : vector<8x128xf32>
    %621 = math.exp %620 : vector<8x128xf32>
    %cst_338 = arith.constant 1.000000e+00 : f32
    %622 = vector.broadcast %cst_338 : f32 to vector<8x128xf32>
    %623 = arith.addf %622, %621 : vector<8x128xf32>
    %624 = arith.divf %622, %623 : vector<8x128xf32>
    %625 = arith.mulf %616, %604 : vector<8x128xf32>
    %626 = arith.mulf %610, %618 : vector<8x128xf32>
    %627 = arith.addf %625, %626 : vector<8x128xf32>
    %628 = math.tanh %627 : vector<8x128xf32>
    %629 = arith.mulf %624, %628 : vector<8x128xf32>
    %c0_339 = arith.constant 0 : index
    %c0_340 = arith.constant 0 : index
    %630 = vector.load %arg25[%c0_339, %c0_340] : memref<8x128xf32, #tpu.memory_space<vmem>>, vector<8x128xf32>
    tpu.vector_store %arg25[%c0_339, %c0_340], %629 {strides = array<i32>} : memref<8x128xf32, #tpu.memory_space<vmem>>, vector<8x128xf32>,
    %c0_341 = arith.constant 0 : index
    %c0_342 = arith.constant 0 : index
    %631 = vector.load %arg26[%c0_341, %c0_342] : memref<8x128xf32, #tpu.memory_space<vmem>>, vector<8x128xf32>
    tpu.vector_store %arg26[%c0_341, %c0_342], %627 {strides = array<i32>} : memref<8x128xf32, #tpu.memory_space<vmem>>, vector<8x128xf32>,
    %c8_343 = arith.constant 8 : index
    %c0_344 = arith.constant 0 : index
    %632 = vector.load %arg18[%c8_343, %c0_344] : memref<64x512xf32, #tpu.memory_space<vmem>>, vector<8x512xf32>
    %c0_345 = arith.constant 0 : index
    %c0_346 = arith.constant 0 : index
    %633 = vector.load %arg25[%c0_345, %c0_346] : memref<8x128xf32, #tpu.memory_space<vmem>>, vector<8x128xf32>
    %634 = arith.truncf %633 : vector<8x128xf32> to vector<8x128xbf16>
    %c0_347 = arith.constant 0 : index
    %c0_348 = arith.constant 0 : index
    %635 = vector.load %arg9[%c0_347, %c0_348] : memref<128x512xbf16, #tpu.memory_space<vmem>>, vector<128x512xbf16>
    %cst_349 = arith.constant dense<0.000000e+00> : vector<8x512xf32>
    %636 = tpu.matmul %634, %635, %cst_349 {dimension_numbers = #tpu.dot_dimension_numbers<[1], [0], [0], [1], [0, 0, 1, 1], [], []>} : vector<8x128xbf16>, vector<128x512xbf16>, vector<8x512xf32> -> vector<8x512xf32>
    %637 = arith.addf %632, %636 : vector<8x512xf32>
    %c0_350 = arith.constant 0 : index
    %c0_351 = arith.constant 0 : index
    %638 = vector.load %arg26[%c0_350, %c0_351] : memref<8x128xf32, #tpu.memory_space<vmem>>, vector<8x128xf32>
    %639 = vector.extract_strided_slice %637 {offsets = [0, 0], sizes = [8, 128], strides = [1, 1]} : vector<8x512xf32> to vector<8x128xf32>
    %640 = arith.negf %639 : vector<8x128xf32>
    %641 = math.exp %640 : vector<8x128xf32>
    %cst_352 = arith.constant 1.000000e+00 : f32
    %642 = vector.broadcast %cst_352 : f32 to vector<8x128xf32>
    %643 = arith.addf %642, %641 : vector<8x128xf32>
    %644 = arith.divf %642, %643 : vector<8x128xf32>
    %645 = vector.extract_strided_slice %637 {offsets = [0, 128], sizes = [8, 128], strides = [1, 1]} : vector<8x512xf32> to vector<8x128xf32>
    %646 = arith.negf %645 : vector<8x128xf32>
    %647 = math.exp %646 : vector<8x128xf32>
    %cst_353 = arith.constant 1.000000e+00 : f32
    %648 = vector.broadcast %cst_353 : f32 to vector<8x128xf32>
    %649 = arith.addf %648, %647 : vector<8x128xf32>
    %650 = arith.divf %648, %649 : vector<8x128xf32>
    %651 = vector.extract_strided_slice %637 {offsets = [0, 256], sizes = [8, 128], strides = [1, 1]} : vector<8x512xf32> to vector<8x128xf32>
    %652 = math.tanh %651 : vector<8x128xf32>
    %653 = vector.extract_strided_slice %637 {offsets = [0, 384], sizes = [8, 128], strides = [1, 1]} : vector<8x512xf32> to vector<8x128xf32>
    %654 = arith.negf %653 : vector<8x128xf32>
    %655 = math.exp %654 : vector<8x128xf32>
    %cst_354 = arith.constant 1.000000e+00 : f32
    %656 = vector.broadcast %cst_354 : f32 to vector<8x128xf32>
    %657 = arith.addf %656, %655 : vector<8x128xf32>
    %658 = arith.divf %656, %657 : vector<8x128xf32>
    %659 = arith.mulf %650, %638 : vector<8x128xf32>
    %660 = arith.mulf %644, %652 : vector<8x128xf32>
    %661 = arith.addf %659, %660 : vector<8x128xf32>
    %662 = math.tanh %661 : vector<8x128xf32>
    %663 = arith.mulf %658, %662 : vector<8x128xf32>
    %c0_355 = arith.constant 0 : index
    %c0_356 = arith.constant 0 : index
    %664 = vector.load %arg25[%c0_355, %c0_356] : memref<8x128xf32, #tpu.memory_space<vmem>>, vector<8x128xf32>
    tpu.vector_store %arg25[%c0_355, %c0_356], %663 {strides = array<i32>} : memref<8x128xf32, #tpu.memory_space<vmem>>, vector<8x128xf32>,
    %c0_357 = arith.constant 0 : index
    %c0_358 = arith.constant 0 : index
    %665 = vector.load %arg26[%c0_357, %c0_358] : memref<8x128xf32, #tpu.memory_space<vmem>>, vector<8x128xf32>
    tpu.vector_store %arg26[%c0_357, %c0_358], %661 {strides = array<i32>} : memref<8x128xf32, #tpu.memory_space<vmem>>, vector<8x128xf32>,
    %c16_359 = arith.constant 16 : index
    %c0_360 = arith.constant 0 : index
    %666 = vector.load %arg18[%c16_359, %c0_360] : memref<64x512xf32, #tpu.memory_space<vmem>>, vector<8x512xf32>
    %c0_361 = arith.constant 0 : index
    %c0_362 = arith.constant 0 : index
    %667 = vector.load %arg25[%c0_361, %c0_362] : memref<8x128xf32, #tpu.memory_space<vmem>>, vector<8x128xf32>
    %668 = arith.truncf %667 : vector<8x128xf32> to vector<8x128xbf16>
    %c0_363 = arith.constant 0 : index
    %c0_364 = arith.constant 0 : index
    %669 = vector.load %arg9[%c0_363, %c0_364] : memref<128x512xbf16, #tpu.memory_space<vmem>>, vector<128x512xbf16>
    %cst_365 = arith.constant dense<0.000000e+00> : vector<8x512xf32>
    %670 = tpu.matmul %668, %669, %cst_365 {dimension_numbers = #tpu.dot_dimension_numbers<[1], [0], [0], [1], [0, 0, 1, 1], [], []>} : vector<8x128xbf16>, vector<128x512xbf16>, vector<8x512xf32> -> vector<8x512xf32>
    %671 = arith.addf %666, %670 : vector<8x512xf32>
    %c0_366 = arith.constant 0 : index
    %c0_367 = arith.constant 0 : index
    %672 = vector.load %arg26[%c0_366, %c0_367] : memref<8x128xf32, #tpu.memory_space<vmem>>, vector<8x128xf32>
    %673 = vector.extract_strided_slice %671 {offsets = [0, 0], sizes = [8, 128], strides = [1, 1]} : vector<8x512xf32> to vector<8x128xf32>
    %674 = arith.negf %673 : vector<8x128xf32>
    %675 = math.exp %674 : vector<8x128xf32>
    %cst_368 = arith.constant 1.000000e+00 : f32
    %676 = vector.broadcast %cst_368 : f32 to vector<8x128xf32>
    %677 = arith.addf %676, %675 : vector<8x128xf32>
    %678 = arith.divf %676, %677 : vector<8x128xf32>
    %679 = vector.extract_strided_slice %671 {offsets = [0, 128], sizes = [8, 128], strides = [1, 1]} : vector<8x512xf32> to vector<8x128xf32>
    %680 = arith.negf %679 : vector<8x128xf32>
    %681 = math.exp %680 : vector<8x128xf32>
    %cst_369 = arith.constant 1.000000e+00 : f32
    %682 = vector.broadcast %cst_369 : f32 to vector<8x128xf32>
    %683 = arith.addf %682, %681 : vector<8x128xf32>
    %684 = arith.divf %682, %683 : vector<8x128xf32>
    %685 = vector.extract_strided_slice %671 {offsets = [0, 256], sizes = [8, 128], strides = [1, 1]} : vector<8x512xf32> to vector<8x128xf32>
    %686 = math.tanh %685 : vector<8x128xf32>
    %687 = vector.extract_strided_slice %671 {offsets = [0, 384], sizes = [8, 128], strides = [1, 1]} : vector<8x512xf32> to vector<8x128xf32>
    %688 = arith.negf %687 : vector<8x128xf32>
    %689 = math.exp %688 : vector<8x128xf32>
    %cst_370 = arith.constant 1.000000e+00 : f32
    %690 = vector.broadcast %cst_370 : f32 to vector<8x128xf32>
    %691 = arith.addf %690, %689 : vector<8x128xf32>
    %692 = arith.divf %690, %691 : vector<8x128xf32>
    %693 = arith.mulf %684, %672 : vector<8x128xf32>
    %694 = arith.mulf %678, %686 : vector<8x128xf32>
    %695 = arith.addf %693, %694 : vector<8x128xf32>
    %696 = math.tanh %695 : vector<8x128xf32>
    %697 = arith.mulf %692, %696 : vector<8x128xf32>
    %c0_371 = arith.constant 0 : index
    %c0_372 = arith.constant 0 : index
    %698 = vector.load %arg25[%c0_371, %c0_372] : memref<8x128xf32, #tpu.memory_space<vmem>>, vector<8x128xf32>
    tpu.vector_store %arg25[%c0_371, %c0_372], %697 {strides = array<i32>} : memref<8x128xf32, #tpu.memory_space<vmem>>, vector<8x128xf32>,
    %c0_373 = arith.constant 0 : index
    %c0_374 = arith.constant 0 : index
    %699 = vector.load %arg26[%c0_373, %c0_374] : memref<8x128xf32, #tpu.memory_space<vmem>>, vector<8x128xf32>
    tpu.vector_store %arg26[%c0_373, %c0_374], %695 {strides = array<i32>} : memref<8x128xf32, #tpu.memory_space<vmem>>, vector<8x128xf32>,
    %c24_375 = arith.constant 24 : index
    %c0_376 = arith.constant 0 : index
    %700 = vector.load %arg18[%c24_375, %c0_376] : memref<64x512xf32, #tpu.memory_space<vmem>>, vector<8x512xf32>
    %c0_377 = arith.constant 0 : index
    %c0_378 = arith.constant 0 : index
    %701 = vector.load %arg25[%c0_377, %c0_378] : memref<8x128xf32, #tpu.memory_space<vmem>>, vector<8x128xf32>
    %702 = arith.truncf %701 : vector<8x128xf32> to vector<8x128xbf16>
    %c0_379 = arith.constant 0 : index
    %c0_380 = arith.constant 0 : index
    %703 = vector.load %arg9[%c0_379, %c0_380] : memref<128x512xbf16, #tpu.memory_space<vmem>>, vector<128x512xbf16>
    %cst_381 = arith.constant dense<0.000000e+00> : vector<8x512xf32>
    %704 = tpu.matmul %702, %703, %cst_381 {dimension_numbers = #tpu.dot_dimension_numbers<[1], [0], [0], [1], [0, 0, 1, 1], [], []>} : vector<8x128xbf16>, vector<128x512xbf16>, vector<8x512xf32> -> vector<8x512xf32>
    %705 = arith.addf %700, %704 : vector<8x512xf32>
    %c0_382 = arith.constant 0 : index
    %c0_383 = arith.constant 0 : index
    %706 = vector.load %arg26[%c0_382, %c0_383] : memref<8x128xf32, #tpu.memory_space<vmem>>, vector<8x128xf32>
    %707 = vector.extract_strided_slice %705 {offsets = [0, 0], sizes = [8, 128], strides = [1, 1]} : vector<8x512xf32> to vector<8x128xf32>
    %708 = arith.negf %707 : vector<8x128xf32>
    %709 = math.exp %708 : vector<8x128xf32>
    %cst_384 = arith.constant 1.000000e+00 : f32
    %710 = vector.broadcast %cst_384 : f32 to vector<8x128xf32>
    %711 = arith.addf %710, %709 : vector<8x128xf32>
    %712 = arith.divf %710, %711 : vector<8x128xf32>
    %713 = vector.extract_strided_slice %705 {offsets = [0, 128], sizes = [8, 128], strides = [1, 1]} : vector<8x512xf32> to vector<8x128xf32>
    %714 = arith.negf %713 : vector<8x128xf32>
    %715 = math.exp %714 : vector<8x128xf32>
    %cst_385 = arith.constant 1.000000e+00 : f32
    %716 = vector.broadcast %cst_385 : f32 to vector<8x128xf32>
    %717 = arith.addf %716, %715 : vector<8x128xf32>
    %718 = arith.divf %716, %717 : vector<8x128xf32>
    %719 = vector.extract_strided_slice %705 {offsets = [0, 256], sizes = [8, 128], strides = [1, 1]} : vector<8x512xf32> to vector<8x128xf32>
    %720 = math.tanh %719 : vector<8x128xf32>
    %721 = vector.extract_strided_slice %705 {offsets = [0, 384], sizes = [8, 128], strides = [1, 1]} : vector<8x512xf32> to vector<8x128xf32>
    %722 = arith.negf %721 : vector<8x128xf32>
    %723 = math.exp %722 : vector<8x128xf32>
    %cst_386 = arith.constant 1.000000e+00 : f32
    %724 = vector.broadcast %cst_386 : f32 to vector<8x128xf32>
    %725 = arith.addf %724, %723 : vector<8x128xf32>
    %726 = arith.divf %724, %725 : vector<8x128xf32>
    %727 = arith.mulf %718, %706 : vector<8x128xf32>
    %728 = arith.mulf %712, %720 : vector<8x128xf32>
    %729 = arith.addf %727, %728 : vector<8x128xf32>
    %730 = math.tanh %729 : vector<8x128xf32>
    %731 = arith.mulf %726, %730 : vector<8x128xf32>
    %c0_387 = arith.constant 0 : index
    %c0_388 = arith.constant 0 : index
    %732 = vector.load %arg25[%c0_387, %c0_388] : memref<8x128xf32, #tpu.memory_space<vmem>>, vector<8x128xf32>
    tpu.vector_store %arg25[%c0_387, %c0_388], %731 {strides = array<i32>} : memref<8x128xf32, #tpu.memory_space<vmem>>, vector<8x128xf32>,
    %c0_389 = arith.constant 0 : index
    %c0_390 = arith.constant 0 : index
    %733 = vector.load %arg26[%c0_389, %c0_390] : memref<8x128xf32, #tpu.memory_space<vmem>>, vector<8x128xf32>
    tpu.vector_store %arg26[%c0_389, %c0_390], %729 {strides = array<i32>} : memref<8x128xf32, #tpu.memory_space<vmem>>, vector<8x128xf32>,
    %c32_391 = arith.constant 32 : index
    %c0_392 = arith.constant 0 : index
    %734 = vector.load %arg18[%c32_391, %c0_392] : memref<64x512xf32, #tpu.memory_space<vmem>>, vector<8x512xf32>
    %c0_393 = arith.constant 0 : index
    %c0_394 = arith.constant 0 : index
    %735 = vector.load %arg25[%c0_393, %c0_394] : memref<8x128xf32, #tpu.memory_space<vmem>>, vector<8x128xf32>
    %736 = arith.truncf %735 : vector<8x128xf32> to vector<8x128xbf16>
    %c0_395 = arith.constant 0 : index
    %c0_396 = arith.constant 0 : index
    %737 = vector.load %arg9[%c0_395, %c0_396] : memref<128x512xbf16, #tpu.memory_space<vmem>>, vector<128x512xbf16>
    %cst_397 = arith.constant dense<0.000000e+00> : vector<8x512xf32>
    %738 = tpu.matmul %736, %737, %cst_397 {dimension_numbers = #tpu.dot_dimension_numbers<[1], [0], [0], [1], [0, 0, 1, 1], [], []>} : vector<8x128xbf16>, vector<128x512xbf16>, vector<8x512xf32> -> vector<8x512xf32>
    %739 = arith.addf %734, %738 : vector<8x512xf32>
    %c0_398 = arith.constant 0 : index
    %c0_399 = arith.constant 0 : index
    %740 = vector.load %arg26[%c0_398, %c0_399] : memref<8x128xf32, #tpu.memory_space<vmem>>, vector<8x128xf32>
    %741 = vector.extract_strided_slice %739 {offsets = [0, 0], sizes = [8, 128], strides = [1, 1]} : vector<8x512xf32> to vector<8x128xf32>
    %742 = arith.negf %741 : vector<8x128xf32>
    %743 = math.exp %742 : vector<8x128xf32>
    %cst_400 = arith.constant 1.000000e+00 : f32
    %744 = vector.broadcast %cst_400 : f32 to vector<8x128xf32>
    %745 = arith.addf %744, %743 : vector<8x128xf32>
    %746 = arith.divf %744, %745 : vector<8x128xf32>
    %747 = vector.extract_strided_slice %739 {offsets = [0, 128], sizes = [8, 128], strides = [1, 1]} : vector<8x512xf32> to vector<8x128xf32>
    %748 = arith.negf %747 : vector<8x128xf32>
    %749 = math.exp %748 : vector<8x128xf32>
    %cst_401 = arith.constant 1.000000e+00 : f32
    %750 = vector.broadcast %cst_401 : f32 to vector<8x128xf32>
    %751 = arith.addf %750, %749 : vector<8x128xf32>
    %752 = arith.divf %750, %751 : vector<8x128xf32>
    %753 = vector.extract_strided_slice %739 {offsets = [0, 256], sizes = [8, 128], strides = [1, 1]} : vector<8x512xf32> to vector<8x128xf32>
    %754 = math.tanh %753 : vector<8x128xf32>
    %755 = vector.extract_strided_slice %739 {offsets = [0, 384], sizes = [8, 128], strides = [1, 1]} : vector<8x512xf32> to vector<8x128xf32>
    %756 = arith.negf %755 : vector<8x128xf32>
    %757 = math.exp %756 : vector<8x128xf32>
    %cst_402 = arith.constant 1.000000e+00 : f32
    %758 = vector.broadcast %cst_402 : f32 to vector<8x128xf32>
    %759 = arith.addf %758, %757 : vector<8x128xf32>
    %760 = arith.divf %758, %759 : vector<8x128xf32>
    %761 = arith.mulf %752, %740 : vector<8x128xf32>
    %762 = arith.mulf %746, %754 : vector<8x128xf32>
    %763 = arith.addf %761, %762 : vector<8x128xf32>
    %764 = math.tanh %763 : vector<8x128xf32>
    %765 = arith.mulf %760, %764 : vector<8x128xf32>
    %c0_403 = arith.constant 0 : index
    %c0_404 = arith.constant 0 : index
    %766 = vector.load %arg25[%c0_403, %c0_404] : memref<8x128xf32, #tpu.memory_space<vmem>>, vector<8x128xf32>
    tpu.vector_store %arg25[%c0_403, %c0_404], %765 {strides = array<i32>} : memref<8x128xf32, #tpu.memory_space<vmem>>, vector<8x128xf32>,
    %c0_405 = arith.constant 0 : index
    %c0_406 = arith.constant 0 : index
    %767 = vector.load %arg26[%c0_405, %c0_406] : memref<8x128xf32, #tpu.memory_space<vmem>>, vector<8x128xf32>
    tpu.vector_store %arg26[%c0_405, %c0_406], %763 {strides = array<i32>} : memref<8x128xf32, #tpu.memory_space<vmem>>, vector<8x128xf32>,
    %c40_407 = arith.constant 40 : index
    %c0_408 = arith.constant 0 : index
    %768 = vector.load %arg18[%c40_407, %c0_408] : memref<64x512xf32, #tpu.memory_space<vmem>>, vector<8x512xf32>
    %c0_409 = arith.constant 0 : index
    %c0_410 = arith.constant 0 : index
    %769 = vector.load %arg25[%c0_409, %c0_410] : memref<8x128xf32, #tpu.memory_space<vmem>>, vector<8x128xf32>
    %770 = arith.truncf %769 : vector<8x128xf32> to vector<8x128xbf16>
    %c0_411 = arith.constant 0 : index
    %c0_412 = arith.constant 0 : index
    %771 = vector.load %arg9[%c0_411, %c0_412] : memref<128x512xbf16, #tpu.memory_space<vmem>>, vector<128x512xbf16>
    %cst_413 = arith.constant dense<0.000000e+00> : vector<8x512xf32>
    %772 = tpu.matmul %770, %771, %cst_413 {dimension_numbers = #tpu.dot_dimension_numbers<[1], [0], [0], [1], [0, 0, 1, 1], [], []>} : vector<8x128xbf16>, vector<128x512xbf16>, vector<8x512xf32> -> vector<8x512xf32>
    %773 = arith.addf %768, %772 : vector<8x512xf32>
    %c0_414 = arith.constant 0 : index
    %c0_415 = arith.constant 0 : index
    %774 = vector.load %arg26[%c0_414, %c0_415] : memref<8x128xf32, #tpu.memory_space<vmem>>, vector<8x128xf32>
    %775 = vector.extract_strided_slice %773 {offsets = [0, 0], sizes = [8, 128], strides = [1, 1]} : vector<8x512xf32> to vector<8x128xf32>
    %776 = arith.negf %775 : vector<8x128xf32>
    %777 = math.exp %776 : vector<8x128xf32>
    %cst_416 = arith.constant 1.000000e+00 : f32
    %778 = vector.broadcast %cst_416 : f32 to vector<8x128xf32>
    %779 = arith.addf %778, %777 : vector<8x128xf32>
    %780 = arith.divf %778, %779 : vector<8x128xf32>
    %781 = vector.extract_strided_slice %773 {offsets = [0, 128], sizes = [8, 128], strides = [1, 1]} : vector<8x512xf32> to vector<8x128xf32>
    %782 = arith.negf %781 : vector<8x128xf32>
    %783 = math.exp %782 : vector<8x128xf32>
    %cst_417 = arith.constant 1.000000e+00 : f32
    %784 = vector.broadcast %cst_417 : f32 to vector<8x128xf32>
    %785 = arith.addf %784, %783 : vector<8x128xf32>
    %786 = arith.divf %784, %785 : vector<8x128xf32>
    %787 = vector.extract_strided_slice %773 {offsets = [0, 256], sizes = [8, 128], strides = [1, 1]} : vector<8x512xf32> to vector<8x128xf32>
    %788 = math.tanh %787 : vector<8x128xf32>
    %789 = vector.extract_strided_slice %773 {offsets = [0, 384], sizes = [8, 128], strides = [1, 1]} : vector<8x512xf32> to vector<8x128xf32>
    %790 = arith.negf %789 : vector<8x128xf32>
    %791 = math.exp %790 : vector<8x128xf32>
    %cst_418 = arith.constant 1.000000e+00 : f32
    %792 = vector.broadcast %cst_418 : f32 to vector<8x128xf32>
    %793 = arith.addf %792, %791 : vector<8x128xf32>
    %794 = arith.divf %792, %793 : vector<8x128xf32>
    %795 = arith.mulf %786, %774 : vector<8x128xf32>
    %796 = arith.mulf %780, %788 : vector<8x128xf32>
    %797 = arith.addf %795, %796 : vector<8x128xf32>
    %798 = math.tanh %797 : vector<8x128xf32>
    %799 = arith.mulf %794, %798 : vector<8x128xf32>
    %c0_419 = arith.constant 0 : index
    %c0_420 = arith.constant 0 : index
    %800 = vector.load %arg25[%c0_419, %c0_420] : memref<8x128xf32, #tpu.memory_space<vmem>>, vector<8x128xf32>
    tpu.vector_store %arg25[%c0_419, %c0_420], %799 {strides = array<i32>} : memref<8x128xf32, #tpu.memory_space<vmem>>, vector<8x128xf32>,
    %c0_421 = arith.constant 0 : index
    %c0_422 = arith.constant 0 : index
    %801 = vector.load %arg26[%c0_421, %c0_422] : memref<8x128xf32, #tpu.memory_space<vmem>>, vector<8x128xf32>
    tpu.vector_store %arg26[%c0_421, %c0_422], %797 {strides = array<i32>} : memref<8x128xf32, #tpu.memory_space<vmem>>, vector<8x128xf32>,
    %c48_423 = arith.constant 48 : index
    %c0_424 = arith.constant 0 : index
    %802 = vector.load %arg18[%c48_423, %c0_424] : memref<64x512xf32, #tpu.memory_space<vmem>>, vector<8x512xf32>
    %c0_425 = arith.constant 0 : index
    %c0_426 = arith.constant 0 : index
    %803 = vector.load %arg25[%c0_425, %c0_426] : memref<8x128xf32, #tpu.memory_space<vmem>>, vector<8x128xf32>
    %804 = arith.truncf %803 : vector<8x128xf32> to vector<8x128xbf16>
    %c0_427 = arith.constant 0 : index
    %c0_428 = arith.constant 0 : index
    %805 = vector.load %arg9[%c0_427, %c0_428] : memref<128x512xbf16, #tpu.memory_space<vmem>>, vector<128x512xbf16>
    %cst_429 = arith.constant dense<0.000000e+00> : vector<8x512xf32>
    %806 = tpu.matmul %804, %805, %cst_429 {dimension_numbers = #tpu.dot_dimension_numbers<[1], [0], [0], [1], [0, 0, 1, 1], [], []>} : vector<8x128xbf16>, vector<128x512xbf16>, vector<8x512xf32> -> vector<8x512xf32>
    %807 = arith.addf %802, %806 : vector<8x512xf32>
    %c0_430 = arith.constant 0 : index
    %c0_431 = arith.constant 0 : index
    %808 = vector.load %arg26[%c0_430, %c0_431] : memref<8x128xf32, #tpu.memory_space<vmem>>, vector<8x128xf32>
    %809 = vector.extract_strided_slice %807 {offsets = [0, 0], sizes = [8, 128], strides = [1, 1]} : vector<8x512xf32> to vector<8x128xf32>
    %810 = arith.negf %809 : vector<8x128xf32>
    %811 = math.exp %810 : vector<8x128xf32>
    %cst_432 = arith.constant 1.000000e+00 : f32
    %812 = vector.broadcast %cst_432 : f32 to vector<8x128xf32>
    %813 = arith.addf %812, %811 : vector<8x128xf32>
    %814 = arith.divf %812, %813 : vector<8x128xf32>
    %815 = vector.extract_strided_slice %807 {offsets = [0, 128], sizes = [8, 128], strides = [1, 1]} : vector<8x512xf32> to vector<8x128xf32>
    %816 = arith.negf %815 : vector<8x128xf32>
    %817 = math.exp %816 : vector<8x128xf32>
    %cst_433 = arith.constant 1.000000e+00 : f32
    %818 = vector.broadcast %cst_433 : f32 to vector<8x128xf32>
    %819 = arith.addf %818, %817 : vector<8x128xf32>
    %820 = arith.divf %818, %819 : vector<8x128xf32>
    %821 = vector.extract_strided_slice %807 {offsets = [0, 256], sizes = [8, 128], strides = [1, 1]} : vector<8x512xf32> to vector<8x128xf32>
    %822 = math.tanh %821 : vector<8x128xf32>
    %823 = vector.extract_strided_slice %807 {offsets = [0, 384], sizes = [8, 128], strides = [1, 1]} : vector<8x512xf32> to vector<8x128xf32>
    %824 = arith.negf %823 : vector<8x128xf32>
    %825 = math.exp %824 : vector<8x128xf32>
    %cst_434 = arith.constant 1.000000e+00 : f32
    %826 = vector.broadcast %cst_434 : f32 to vector<8x128xf32>
    %827 = arith.addf %826, %825 : vector<8x128xf32>
    %828 = arith.divf %826, %827 : vector<8x128xf32>
    %829 = arith.mulf %820, %808 : vector<8x128xf32>
    %830 = arith.mulf %814, %822 : vector<8x128xf32>
    %831 = arith.addf %829, %830 : vector<8x128xf32>
    %832 = math.tanh %831 : vector<8x128xf32>
    %833 = arith.mulf %828, %832 : vector<8x128xf32>
    %c0_435 = arith.constant 0 : index
    %c0_436 = arith.constant 0 : index
    %834 = vector.load %arg25[%c0_435, %c0_436] : memref<8x128xf32, #tpu.memory_space<vmem>>, vector<8x128xf32>
    tpu.vector_store %arg25[%c0_435, %c0_436], %833 {strides = array<i32>} : memref<8x128xf32, #tpu.memory_space<vmem>>, vector<8x128xf32>,
    %c0_437 = arith.constant 0 : index
    %c0_438 = arith.constant 0 : index
    %835 = vector.load %arg26[%c0_437, %c0_438] : memref<8x128xf32, #tpu.memory_space<vmem>>, vector<8x128xf32>
    tpu.vector_store %arg26[%c0_437, %c0_438], %831 {strides = array<i32>} : memref<8x128xf32, #tpu.memory_space<vmem>>, vector<8x128xf32>,
    %c56_439 = arith.constant 56 : index
    %c0_440 = arith.constant 0 : index
    %836 = vector.load %arg18[%c56_439, %c0_440] : memref<64x512xf32, #tpu.memory_space<vmem>>, vector<8x512xf32>
    %c0_441 = arith.constant 0 : index
    %c0_442 = arith.constant 0 : index
    %837 = vector.load %arg25[%c0_441, %c0_442] : memref<8x128xf32, #tpu.memory_space<vmem>>, vector<8x128xf32>
    %838 = arith.truncf %837 : vector<8x128xf32> to vector<8x128xbf16>
    %c0_443 = arith.constant 0 : index
    %c0_444 = arith.constant 0 : index
    %839 = vector.load %arg9[%c0_443, %c0_444] : memref<128x512xbf16, #tpu.memory_space<vmem>>, vector<128x512xbf16>
    %cst_445 = arith.constant dense<0.000000e+00> : vector<8x512xf32>
    %840 = tpu.matmul %838, %839, %cst_445 {dimension_numbers = #tpu.dot_dimension_numbers<[1], [0], [0], [1], [0, 0, 1, 1], [], []>} : vector<8x128xbf16>, vector<128x512xbf16>, vector<8x512xf32> -> vector<8x512xf32>
    %841 = arith.addf %836, %840 : vector<8x512xf32>
    %c0_446 = arith.constant 0 : index
    %c0_447 = arith.constant 0 : index
    %842 = vector.load %arg26[%c0_446, %c0_447] : memref<8x128xf32, #tpu.memory_space<vmem>>, vector<8x128xf32>
    %843 = vector.extract_strided_slice %841 {offsets = [0, 0], sizes = [8, 128], strides = [1, 1]} : vector<8x512xf32> to vector<8x128xf32>
    %844 = arith.negf %843 : vector<8x128xf32>
    %845 = math.exp %844 : vector<8x128xf32>
    %cst_448 = arith.constant 1.000000e+00 : f32
    %846 = vector.broadcast %cst_448 : f32 to vector<8x128xf32>
    %847 = arith.addf %846, %845 : vector<8x128xf32>
    %848 = arith.divf %846, %847 : vector<8x128xf32>
    %849 = vector.extract_strided_slice %841 {offsets = [0, 128], sizes = [8, 128], strides = [1, 1]} : vector<8x512xf32> to vector<8x128xf32>
    %850 = arith.negf %849 : vector<8x128xf32>
    %851 = math.exp %850 : vector<8x128xf32>
    %cst_449 = arith.constant 1.000000e+00 : f32
    %852 = vector.broadcast %cst_449 : f32 to vector<8x128xf32>
    %853 = arith.addf %852, %851 : vector<8x128xf32>
    %854 = arith.divf %852, %853 : vector<8x128xf32>
    %855 = vector.extract_strided_slice %841 {offsets = [0, 256], sizes = [8, 128], strides = [1, 1]} : vector<8x512xf32> to vector<8x128xf32>
    %856 = math.tanh %855 : vector<8x128xf32>
    %857 = vector.extract_strided_slice %841 {offsets = [0, 384], sizes = [8, 128], strides = [1, 1]} : vector<8x512xf32> to vector<8x128xf32>
    %858 = arith.negf %857 : vector<8x128xf32>
    %859 = math.exp %858 : vector<8x128xf32>
    %cst_450 = arith.constant 1.000000e+00 : f32
    %860 = vector.broadcast %cst_450 : f32 to vector<8x128xf32>
    %861 = arith.addf %860, %859 : vector<8x128xf32>
    %862 = arith.divf %860, %861 : vector<8x128xf32>
    %863 = arith.mulf %854, %842 : vector<8x128xf32>
    %864 = arith.mulf %848, %856 : vector<8x128xf32>
    %865 = arith.addf %863, %864 : vector<8x128xf32>
    %866 = math.tanh %865 : vector<8x128xf32>
    %867 = arith.mulf %862, %866 : vector<8x128xf32>
    %c0_451 = arith.constant 0 : index
    %c0_452 = arith.constant 0 : index
    %868 = vector.load %arg25[%c0_451, %c0_452] : memref<8x128xf32, #tpu.memory_space<vmem>>, vector<8x128xf32>
    tpu.vector_store %arg25[%c0_451, %c0_452], %867 {strides = array<i32>} : memref<8x128xf32, #tpu.memory_space<vmem>>, vector<8x128xf32>,
    %c0_453 = arith.constant 0 : index
    %c0_454 = arith.constant 0 : index
    %869 = vector.load %arg26[%c0_453, %c0_454] : memref<8x128xf32, #tpu.memory_space<vmem>>, vector<8x128xf32>
    tpu.vector_store %arg26[%c0_453, %c0_454], %865 {strides = array<i32>} : memref<8x128xf32, #tpu.memory_space<vmem>>, vector<8x128xf32>,
    %c0_455 = arith.constant 0 : index
    %c0_456 = arith.constant 0 : index
    %870 = vector.load %arg25[%c0_455, %c0_456] : memref<8x128xf32, #tpu.memory_space<vmem>>, vector<8x128xf32>
    %c0_457 = arith.constant 0 : index
    %c0_458 = arith.constant 0 : index
    %871 = vector.load %arg11[%c0_457, %c0_458] : memref<128x300xf32, #tpu.memory_space<vmem>>, vector<128x300xf32>
    %cst_459 = arith.constant dense<0.000000e+00> : vector<8x300xf32>
    %872 = tpu.matmul %870, %871, %cst_459 {dimension_numbers = #tpu.dot_dimension_numbers<[1], [0], [0], [1], [0, 0, 1, 1], [], []>} : vector<8x128xf32>, vector<128x300xf32>, vector<8x300xf32> -> vector<8x300xf32>
    %c0_460 = arith.constant 0 : index
    %c0_461 = arith.constant 0 : index
    %873 = vector.load %arg12[%c0_460, %c0_461] : memref<1x300xf32, #tpu.memory_space<vmem>>, vector<1x300xf32>
    %874 = vector.broadcast %873 : vector<1x300xf32> to vector<8x300xf32>
    %875 = arith.addf %872, %874 : vector<8x300xf32>
    %cst_462 = arith.constant 0.000000e+00 : f32
    %876 = vector.broadcast %cst_462 : f32 to vector<8x300xf32>
    %877 = arith.cmpf ogt, %875, %876 : vector<8x300xf32>
    %cst_463 = arith.constant 0.000000e+00 : f32
    %878 = vector.broadcast %cst_463 : f32 to vector<8x300xf32>
    %879 = arith.minimumf %875, %878 : vector<8x300xf32>
    %880 = math.exp %879 : vector<8x300xf32>
    %cst_464 = arith.constant 1.000000e+00 : f32
    %881 = vector.broadcast %cst_464 : f32 to vector<8x300xf32>
    %882 = arith.subf %880, %881 : vector<8x300xf32>
    %cst_465 = arith.constant 1.67326319 : f32
    %883 = vector.broadcast %cst_465 : f32 to vector<8x300xf32>
    %884 = arith.mulf %883, %882 : vector<8x300xf32>
    %885 = arith.select %877, %875, %884 : vector<8x300xi1>, vector<8x300xf32>
    %cst_466 = arith.constant 1.05070102 : f32
    %886 = vector.broadcast %cst_466 : f32 to vector<8x300xf32>
    %887 = arith.mulf %886, %885 : vector<8x300xf32>
    %c0_467 = arith.constant 0 : index
    %c0_468 = arith.constant 0 : index
    %888 = vector.load %arg13[%c0_467, %c0_468] : memref<300x1xf32, #tpu.memory_space<vmem>>, vector<300x1xf32>
    %cst_469 = arith.constant dense<0.000000e+00> : vector<8x1xf32>
    %889 = tpu.matmul %887, %888, %cst_469 {dimension_numbers = #tpu.dot_dimension_numbers<[1], [0], [0], [1], [0, 0, 1, 1], [], []>} : vector<8x300xf32>, vector<300x1xf32>, vector<8x1xf32> -> vector<8x1xf32>
    %c0_470 = arith.constant 0 : index
    %c0_471 = arith.constant 0 : index
    %890 = vector.load %arg14[%c0_470, %c0_471] : memref<1x1xf32, #tpu.memory_space<vmem>>, vector<1x1xf32>
    %891 = vector.broadcast %890 : vector<1x1xf32> to vector<8x1xf32>
    %892 = arith.addf %889, %891 : vector<8x1xf32>
    %c0_472 = arith.constant 0 : index
    %c0_473 = arith.constant 0 : index
    %893 = vector.load %arg15[%c0_472, %c0_473] : memref<8x1xf32, #tpu.memory_space<vmem>>, vector<8x1xf32>
    tpu.vector_store %arg15[%c0_472, %c0_473], %892 {strides = array<i32>} : memref<8x1xf32, #tpu.memory_space<vmem>>, vector<8x1xf32>,
    return
  }
}

</mosaic_0001>

<llo_original>
// kernel: lstm_model_forward.1
$region0: #{lstm_model_forward.1}
  #allocation0 [shape = 'u32[]', space=smem, size = 0x4, offset = 0x4, fixed_abs, tag = 'smem constant byte address 0x4 - core index']
  #allocation1 [shape = 'u32[72,128]{1,0:T(1,128)}', space=vmem, size = 0x9000, scoped, tag = 'internal scratch']
  #allocation2 [shape = 'f32[64,512]{1,0:T(8,128)}', space=vmem, size = 0x20000, scoped, tag = 'scratch operand']
  #allocation3 [shape = 'f32[64,512]{1,0:T(8,128)}', space=vmem, size = 0x20000, scoped, tag = 'scratch operand']
  #allocation4 [shape = 'f32[64,512]{1,0:T(8,128)}', space=vmem, size = 0x20000, scoped, tag = 'scratch operand']
  #allocation5 [shape = 'f32[64,128]{1,0:T(8,128)}', space=vmem, size = 0x8000, scoped, tag = 'scratch operand']
  #allocation6 [shape = 'f32[64,128]{1,0:T(8,128)}', space=vmem, size = 0x8000, scoped, tag = 'scratch operand']
  #allocation7 [shape = 'f32[8,128]{1,0:T(8,128)}', space=vmem, size = 0x1000, scoped, tag = 'scratch operand']
  #allocation8 [shape = 'f32[8,128]{1,0:T(8,128)}', space=vmem, size = 0x1000, scoped, tag = 'scratch operand']
  #allocation9 [shape = 'f32[8,128]{1,0:T(8,128)}', space=vmem, size = 0x1000, scoped, tag = 'scratch operand']
  #allocation10 [shape = 'f32[8,128]{1,0:T(8,128)}', space=vmem, size = 0x1000, scoped, tag = 'scratch operand']
  #allocation11 [shape = 'f32[8,128]{1,0:T(8,128)}', space=vmem, size = 0x1000, scoped, tag = 'scratch operand']
  #allocation12 [shape = 'f32[8,128]{1,0:T(8,128)}', space=vmem, size = 0x1000, scoped, tag = 'scratch operand']
  #allocation13 [shape = 'f32[1,1]{1,0:T(1,128)S(1)}', space=vmem, size = 0x200, scoped, tag = 'scoped memory for lstm_model_forward.1']
  %s0 = inlined_call_operand.vmem [shape: f32[64,1], index: 0, kind: input, shape index: {}]
  %s1 = inlined_call_operand.vmem [shape: f32[1,512], index: 1, kind: input, shape index: {}]
  %s2 = inlined_call_operand.vmem [shape: bf16[128,512], index: 2, kind: input, shape index: {}]
  %s3 = inlined_call_operand.vmem [shape: f32[1,512], index: 3, kind: input, shape index: {}]
  %s4 = inlined_call_operand.vmem [shape: f32[1,512], index: 4, kind: input, shape index: {}]
  %s5 = inlined_call_operand.vmem [shape: bf16[128,512], index: 5, kind: input, shape index: {}]
  %s6 = inlined_call_operand.vmem [shape: f32[1,512], index: 6, kind: input, shape index: {}]
  %s7 = inlined_call_operand.vmem [shape: bf16[128,512], index: 7, kind: input, shape index: {}]
  %s8 = inlined_call_operand.vmem [shape: bf16[128,512], index: 8, kind: input, shape index: {}]
  %s9 = inlined_call_operand.vmem [shape: bf16[128,512], index: 9, kind: input, shape index: {}]
  %s10 = inlined_call_operand.vmem [shape: f32[1,512], index: 10, kind: input, shape index: {}]
  %s11 = inlined_call_operand.vmem [shape: f32[128,300], index: 11, kind: input, shape index: {}]
  %s12 = inlined_call_operand.vmem [shape: f32[1,300], index: 12, kind: input, shape index: {}]
  %s13 = inlined_call_operand.vmem [shape: f32[300,1], index: 13, kind: input, shape index: {}]
  %s14 = inlined_call_operand.<no memory space> [shape: f32[1,1], index: 14, kind: input, shape index: {}]
  %s15 = inlined_call_operand.vmem [shape: f32[8,1], index: 15, kind: output, shape index: {}]
  %s16 = sld [smem:[#allocation0]]
  $region70: #{lstm_model_forward.1} parent=0
    _
  %s18 = ssub.s32 1, %s16
  %s19 = scalar_select 0, %s18, %s16
  %v20 = vstv %s14
  %21 = vst [vmem:[#allocation13] sm:$0x1] %v20
  // Predicated region
  $region2: #{lstm_model_forward.1} parent=0 // pred_check
    _
  $region3: #{lstm_model_forward.1} parent=0 // pred_check_branch
    %23 = sbr.rel (0) target = $region5
  $region4: #{lstm_model_forward.1} parent=0 // pred_region
    _
  $region5: #{lstm_model_forward.1} parent=0 // pred_fallthru
    _
  // Predicated region
  $region6: #{lstm_model_forward.1} parent=0 // pred_check
    _
  $region7: #{lstm_model_forward.1} parent=0 // pred_check_branch
    %25 = sbr.rel (0) target = $region9
  $region8: #{lstm_model_forward.1} parent=0 // pred_region
    _
  $region9: #{lstm_model_forward.1} parent=0 // pred_fallthru
    _
  // Predicated region
  $region10: #{lstm_model_forward.1} parent=0 // pred_check
    _
  $region11: #{lstm_model_forward.1} parent=0 // pred_check_branch
    %27 = sbr.rel (0) target = $region13
  $region12: #{lstm_model_forward.1} parent=0 // pred_region
    _
  $region13: #{lstm_model_forward.1} parent=0 // pred_fallthru
    _
  // Predicated region
  $region14: #{lstm_model_forward.1} parent=0 // pred_check
    _
  $region15: #{lstm_model_forward.1} parent=0 // pred_check_branch
    %29 = sbr.rel (0) target = $region17
  $region16: #{lstm_model_forward.1} parent=0 // pred_region
    _
  $region17: #{lstm_model_forward.1} parent=0 // pred_fallthru
    _
  // Predicated region
  $region18: #{lstm_model_forward.1} parent=0 // pred_check
    _
  $region19: #{lstm_model_forward.1} parent=0 // pred_check_branch
    %31 = sbr.rel (0) target = $region21
  $region20: #{lstm_model_forward.1} parent=0 // pred_region
    _
  $region21: #{lstm_model_forward.1} parent=0 // pred_fallthru
    _
  // Predicated region
  $region22: #{lstm_model_forward.1} parent=0 // pred_check
    _
  $region23: #{lstm_model_forward.1} parent=0 // pred_check_branch
    %33 = sbr.rel (0) target = $region25
  $region24: #{lstm_model_forward.1} parent=0 // pred_region
    _
  $region25: #{lstm_model_forward.1} parent=0 // pred_fallthru
    _
  // Predicated region
  $region26: #{lstm_model_forward.1} parent=0 // pred_check
    _
  $region27: #{lstm_model_forward.1} parent=0 // pred_check_branch
    %35 = sbr.rel (0) target = $region29
  $region28: #{lstm_model_forward.1} parent=0 // pred_region
    _
  $region29: #{lstm_model_forward.1} parent=0 // pred_fallthru
    _
  // Predicated region
  $region30: #{lstm_model_forward.1} parent=0 // pred_check
    _
  $region31: #{lstm_model_forward.1} parent=0 // pred_check_branch
    %37 = sbr.rel (0) target = $region33
  $region32: #{lstm_model_forward.1} parent=0 // pred_region
    _
  $region33: #{lstm_model_forward.1} parent=0 // pred_fallthru
    _
  // Predicated region
  $region34: #{lstm_model_forward.1} parent=0 // pred_check
    _
  $region35: #{lstm_model_forward.1} parent=0 // pred_check_branch
    %39 = sbr.rel (0) target = $region37
  $region36: #{lstm_model_forward.1} parent=0 // pred_region
    _
  $region37: #{lstm_model_forward.1} parent=0 // pred_fallthru
    _
  // Predicated region
  $region38: #{lstm_model_forward.1} parent=0 // pred_check
    _
  $region39: #{lstm_model_forward.1} parent=0 // pred_check_branch
    %41 = sbr.rel (0) target = $region41
  $region40: #{lstm_model_forward.1} parent=0 // pred_region
    _
  $region41: #{lstm_model_forward.1} parent=0 // pred_fallthru
    _
  // Predicated region
  $region42: #{lstm_model_forward.1} parent=0 // pred_check
    _
  $region43: #{lstm_model_forward.1} parent=0 // pred_check_branch
    %43 = sbr.rel (0) target = $region45
  $region44: #{lstm_model_forward.1} parent=0 // pred_region
    _
  $region45: #{lstm_model_forward.1} parent=0 // pred_fallthru
    _
  // Predicated region
  $region46: #{lstm_model_forward.1} parent=0 // pred_check
    _
  $region47: #{lstm_model_forward.1} parent=0 // pred_check_branch
    %45 = sbr.rel (0) target = $region49
  $region48: #{lstm_model_forward.1} parent=0 // pred_region
    _
  $region49: #{lstm_model_forward.1} parent=0 // pred_fallthru
    _
  // Predicated region
  $region50: #{lstm_model_forward.1} parent=0 // pred_check
    _
  $region51: #{lstm_model_forward.1} parent=0 // pred_check_branch
    %47 = sbr.rel (0) target = $region53
  $region52: #{lstm_model_forward.1} parent=0 // pred_region
    _
  $region53: #{lstm_model_forward.1} parent=0 // pred_fallthru
    _
  // Predicated region
  $region54: #{lstm_model_forward.1} parent=0 // pred_check
    _
  $region55: #{lstm_model_forward.1} parent=0 // pred_check_branch
    %49 = sbr.rel (0) target = $region57
  $region56: #{lstm_model_forward.1} parent=0 // pred_region
    _
  $region57: #{lstm_model_forward.1} parent=0 // pred_fallthru
    _
  // Predicated region
  $region58: #{lstm_model_forward.1} parent=0 // pred_check
    _
  $region59: #{lstm_model_forward.1} parent=0 // pred_check_branch
    %51 = sbr.rel (0) target = $region61
  $region60: #{lstm_model_forward.1} parent=0 // pred_region
    _
  $region61: #{lstm_model_forward.1} parent=0 // pred_fallthru
    _
  %v52 = vld [vmem:[%s0] sm:$0xff]
  %v53 = vld [vmem:[%s0 + $0x8] sm:$0xff]
  %v54 = vld [vmem:[%s0 + $0x10] sm:$0xff]
  %v55 = vld [vmem:[%s0 + $0x18] sm:$0xff]
  %v56 = vld [vmem:[%s0 + $0x20] sm:$0xff]
  %v57 = vld [vmem:[%s0 + $0x28] sm:$0xff]
  %v58 = vld [vmem:[%s0 + $0x30] sm:$0xff]
  %v59 = vld [vmem:[%s0 + $0x38] sm:$0xff]
  %v60 = vld [vmem:[%s1] sm:$0xf]
  %v61 = vld [vmem:[%s3] sm:$0xf]
  %v63 = vperm.slane %v61, 0
  %v64 = vperm.slane %v61, 1
  %v65 = vperm.slane %v61, 2
  %v66 = vperm.slane %v61, 3
  %v72 = vperm.slane %v60, 0
  %v73 = vperm.slane %v60, 1
  %v74 = vperm.slane %v60, 2
  %v75 = vperm.slane %v60, 3
  %vm76 = vcmask 7168
  %v78 = vsel %vm76, %v52, 0
  %v81 = vsel %vm76, %v53, 0
  %v84 = vsel %vm76, %v54, 0
  %v87 = vsel %vm76, %v55, 0
  %v90 = vsel %vm76, %v56, 0
  %v93 = vsel %vm76, %v57, 0
  %v96 = vsel %vm76, %v58, 0
  %v99 = vsel %vm76, %v59, 0
  %vm101 = vcmask 1040384
  %v102 = vsel %vm101, %v72, 0
  %v104 = vsel %vm101, %v73, 0
  %v106 = vsel %vm101, %v74, 0
  %v108 = vsel %vm101, %v75, 0
  %110 = vmatpush.msra.mxu0 0.0
  %111 = vmatpush.msra.mxu0 0.0
  %112 = vmatpush.msra.mxu0 0.0
  %113 = vmatpush.msra.mxu0 0.0
  %114 = vmatpush.msra.mxu0 0.0
  %115 = vmatpush.msra.mxu0 0.0
  %116 = vmatpush.msra.mxu0 0.0
  %117 = vmatpush.msra.mxu0 0.0
  %118 = vmatpush.msra.mxu0 0.0
  %119 = vmatpush.msra.mxu0 0.0
  %120 = vmatpush.msra.mxu0 0.0
  %121 = vmatpush.msra.mxu0 0.0
  %122 = vmatpush.msra.mxu0 0.0
  %123 = vmatpush.msra.mxu0 0.0
  %124 = vmatpush.msra.mxu0 0.0
  %125 = vmatpush.msra.mxu0 %v102
  %126 = vmatmul.f32.gmra.mxu0 %v78
  %v127 = vpop.f32.mrf.mxu0
  %v128 = vadd.f32 %v63, %v127
  %129 = vmatmul.f32.gmra.mxu0 %v81
  %v130 = vpop.f32.mrf.mxu0
  %v131 = vadd.f32 %v63, %v130
  %132 = vmatmul.f32.gmra.mxu0 %v84
  %v133 = vpop.f32.mrf.mxu0
  %v134 = vadd.f32 %v63, %v133
  %135 = vmatmul.f32.gmra.mxu0 %v87
  %v136 = vpop.f32.mrf.mxu0
  %v137 = vadd.f32 %v63, %v136
  %138 = vmatmul.f32.gmra.mxu0 %v90
  %v139 = vpop.f32.mrf.mxu0
  %v140 = vadd.f32 %v63, %v139
  %141 = vmatmul.f32.gmra.mxu0 %v93
  %v142 = vpop.f32.mrf.mxu0
  %v143 = vadd.f32 %v63, %v142
  %144 = vmatmul.f32.gmra.mxu0 %v96
  %v145 = vpop.f32.mrf.mxu0
  %v146 = vadd.f32 %v63, %v145
  %147 = vmatmul.f32.gmra.mxu0 %v99
  %v148 = vpop.f32.mrf.mxu0
  %v149 = vadd.f32 %v63, %v148
  %150 = vdwg.mxu0
  %151 = vmatpush.msra.mxu0 0.0
  %152 = vmatpush.msra.mxu0 0.0
  %153 = vmatpush.msra.mxu0 0.0
  %154 = vmatpush.msra.mxu0 0.0
  %155 = vmatpush.msra.mxu0 0.0
  %156 = vmatpush.msra.mxu0 0.0
  %157 = vmatpush.msra.mxu0 0.0
  %158 = vmatpush.msra.mxu0 0.0
  %159 = vmatpush.msra.mxu0 0.0
  %160 = vmatpush.msra.mxu0 0.0
  %161 = vmatpush.msra.mxu0 0.0
  %162 = vmatpush.msra.mxu0 0.0
  %163 = vmatpush.msra.mxu0 0.0
  %164 = vmatpush.msra.mxu0 0.0
  %165 = vmatpush.msra.mxu0 0.0
  %166 = vmatpush.msra.mxu0 %v104
  %167 = vmatmul.f32.gmra.mxu0 %v78
  %v168 = vpop.f32.mrf.mxu0
  %v169 = vadd.f32 %v64, %v168
  %170 = vmatmul.f32.gmra.mxu0 %v81
  %v171 = vpop.f32.mrf.mxu0
  %v172 = vadd.f32 %v64, %v171
  %173 = vmatmul.f32.gmra.mxu0 %v84
  %v174 = vpop.f32.mrf.mxu0
  %v175 = vadd.f32 %v64, %v174
  %176 = vmatmul.f32.gmra.mxu0 %v87
  %v177 = vpop.f32.mrf.mxu0
  %v178 = vadd.f32 %v64, %v177
  %179 = vmatmul.f32.gmra.mxu0 %v90
  %v180 = vpop.f32.mrf.mxu0
  %v181 = vadd.f32 %v64, %v180
  %182 = vmatmul.f32.gmra.mxu0 %v93
  %v183 = vpop.f32.mrf.mxu0
  %v184 = vadd.f32 %v64, %v183
  %185 = vmatmul.f32.gmra.mxu0 %v96
  %v186 = vpop.f32.mrf.mxu0
  %v187 = vadd.f32 %v64, %v186
  %188 = vmatmul.f32.gmra.mxu0 %v99
  %v189 = vpop.f32.mrf.mxu0
  %v190 = vadd.f32 %v64, %v189
  %191 = vdwg.mxu0
  %192 = vmatpush.msra.mxu0 0.0
  %193 = vmatpush.msra.mxu0 0.0
  %194 = vmatpush.msra.mxu0 0.0
  %195 = vmatpush.msra.mxu0 0.0
  %196 = vmatpush.msra.mxu0 0.0
  %197 = vmatpush.msra.mxu0 0.0
  %198 = vmatpush.msra.mxu0 0.0
  %199 = vmatpush.msra.mxu0 0.0
  %200 = vmatpush.msra.mxu0 0.0
  %201 = vmatpush.msra.mxu0 0.0
  %202 = vmatpush.msra.mxu0 0.0
  %203 = vmatpush.msra.mxu0 0.0
  %204 = vmatpush.msra.mxu0 0.0
  %205 = vmatpush.msra.mxu0 0.0
  %206 = vmatpush.msra.mxu0 0.0
  %207 = vmatpush.msra.mxu0 %v106
  %208 = vmatmul.f32.gmra.mxu0 %v78
  %v209 = vpop.f32.mrf.mxu0
  %v210 = vadd.f32 %v65, %v209
  %211 = vmatmul.f32.gmra.mxu0 %v81
  %v212 = vpop.f32.mrf.mxu0
  %v213 = vadd.f32 %v65, %v212
  %214 = vmatmul.f32.gmra.mxu0 %v84
  %v215 = vpop.f32.mrf.mxu0
  %v216 = vadd.f32 %v65, %v215
  %217 = vmatmul.f32.gmra.mxu0 %v87
  %v218 = vpop.f32.mrf.mxu0
  %v219 = vadd.f32 %v65, %v218
  %220 = vmatmul.f32.gmra.mxu0 %v90
  %v221 = vpop.f32.mrf.mxu0
  %v222 = vadd.f32 %v65, %v221
  %223 = vmatmul.f32.gmra.mxu0 %v93
  %v224 = vpop.f32.mrf.mxu0
  %v225 = vadd.f32 %v65, %v224
  %226 = vmatmul.f32.gmra.mxu0 %v96
  %v227 = vpop.f32.mrf.mxu0
  %v228 = vadd.f32 %v65, %v227
  %229 = vmatmul.f32.gmra.mxu0 %v99
  %v230 = vpop.f32.mrf.mxu0
  %v231 = vadd.f32 %v65, %v230
  %232 = vdwg.mxu0
  %233 = vmatpush.msra.mxu0 0.0
  %234 = vmatpush.msra.mxu0 0.0
  %235 = vmatpush.msra.mxu0 0.0
  %236 = vmatpush.msra.mxu0 0.0
  %237 = vmatpush.msra.mxu0 0.0
  %238 = vmatpush.msra.mxu0 0.0
  %239 = vmatpush.msra.mxu0 0.0
  %240 = vmatpush.msra.mxu0 0.0
  %241 = vmatpush.msra.mxu0 0.0
  %242 = vmatpush.msra.mxu0 0.0
  %243 = vmatpush.msra.mxu0 0.0
  %244 = vmatpush.msra.mxu0 0.0
  %245 = vmatpush.msra.mxu0 0.0
  %246 = vmatpush.msra.mxu0 0.0
  %247 = vmatpush.msra.mxu0 0.0
  %248 = vmatpush.msra.mxu0 %v108
  %249 = vmatmul.f32.gmra.mxu0 %v78
  %v250 = vpop.f32.mrf.mxu0
  %v251 = vadd.f32 %v66, %v250
  %252 = vmatmul.f32.gmra.mxu0 %v81
  %v253 = vpop.f32.mrf.mxu0
  %v254 = vadd.f32 %v66, %v253
  %255 = vmatmul.f32.gmra.mxu0 %v84
  %v256 = vpop.f32.mrf.mxu0
  %v257 = vadd.f32 %v66, %v256
  %258 = vmatmul.f32.gmra.mxu0 %v87
  %v259 = vpop.f32.mrf.mxu0
  %v260 = vadd.f32 %v66, %v259
  %261 = vmatmul.f32.gmra.mxu0 %v90
  %v262 = vpop.f32.mrf.mxu0
  %v263 = vadd.f32 %v66, %v262
  %264 = vmatmul.f32.gmra.mxu0 %v93
  %v265 = vpop.f32.mrf.mxu0
  %v266 = vadd.f32 %v66, %v265
  %267 = vmatmul.f32.gmra.mxu0 %v96
  %v268 = vpop.f32.mrf.mxu0
  %v269 = vadd.f32 %v66, %v268
  %270 = vmatmul.f32.gmra.mxu0 %v99
  %v271 = vpop.f32.mrf.mxu0
  %v272 = vadd.f32 %v66, %v271
  %273 = vdwg.mxu0
  %274 = vst [vmem:[#allocation2] sm:$0xff] %v128
  %275 = vst [vmem:[#allocation2 + $0x8] sm:$0xff] %v169
  %276 = vst [vmem:[#allocation2 + $0x10] sm:$0xff] %v210
  %277 = vst [vmem:[#allocation2 + $0x18] sm:$0xff] %v251
  %278 = vst [vmem:[#allocation2 + $0x20] sm:$0xff] %v131
  %279 = vst [vmem:[#allocation2 + $0x28] sm:$0xff] %v172
  %280 = vst [vmem:[#allocation2 + $0x30] sm:$0xff] %v213
  %281 = vst [vmem:[#allocation2 + $0x38] sm:$0xff] %v254
  %282 = vst [vmem:[#allocation2 + $0x40] sm:$0xff] %v134
  %283 = vst [vmem:[#allocation2 + $0x48] sm:$0xff] %v175
  %284 = vst [vmem:[#allocation2 + $0x50] sm:$0xff] %v216
  %285 = vst [vmem:[#allocation2 + $0x58] sm:$0xff] %v257
  %286 = vst [vmem:[#allocation2 + $0x60] sm:$0xff] %v137
  %287 = vst [vmem:[#allocation2 + $0x68] sm:$0xff] %v178
  %288 = vst [vmem:[#allocation2 + $0x70] sm:$0xff] %v219
  %289 = vst [vmem:[#allocation2 + $0x78] sm:$0xff] %v260
  %290 = vst [vmem:[#allocation2 + $0x80] sm:$0xff] %v140
  %291 = vst [vmem:[#allocation2 + $0x88] sm:$0xff] %v181
  %292 = vst [vmem:[#allocation2 + $0x90] sm:$0xff] %v222
  %293 = vst [vmem:[#allocation2 + $0x98] sm:$0xff] %v263
  %294 = vst [vmem:[#allocation2 + $0xa0] sm:$0xff] %v143
  %295 = vst [vmem:[#allocation2 + $0xa8] sm:$0xff] %v184
  %296 = vst [vmem:[#allocation2 + $0xb0] sm:$0xff] %v225
  %297 = vst [vmem:[#allocation2 + $0xb8] sm:$0xff] %v266
  %298 = vst [vmem:[#allocation2 + $0xc0] sm:$0xff] %v146
  %299 = vst [vmem:[#allocation2 + $0xc8] sm:$0xff] %v187
  %300 = vst [vmem:[#allocation2 + $0xd0] sm:$0xff] %v228
  %301 = vst [vmem:[#allocation2 + $0xd8] sm:$0xff] %v269
  %302 = vst [vmem:[#allocation2 + $0xe0] sm:$0xff] %v149
  %303 = vst [vmem:[#allocation2 + $0xe8] sm:$0xff] %v190
  %304 = vst [vmem:[#allocation2 + $0xf0] sm:$0xff] %v231
  %305 = vst [vmem:[#allocation2 + $0xf8] sm:$0xff] %v272
  %v306 = vld [vmem:[%s4] sm:$0xf]
  %v307 = vld [vmem:[%s6] sm:$0xf]
  %v309 = vperm.slane %v307, 0
  %v310 = vperm.slane %v307, 1
  %v311 = vperm.slane %v307, 2
  %v312 = vperm.slane %v307, 3
  %v318 = vperm.slane %v306, 0
  %v319 = vperm.slane %v306, 1
  %v320 = vperm.slane %v306, 2
  %v321 = vperm.slane %v306, 3
  %v322 = vsel %vm101, %v318, 0
  %v324 = vsel %vm101, %v319, 0
  %v326 = vsel %vm101, %v320, 0
  %v328 = vsel %vm101, %v321, 0
  %330 = vmatpush.msra.mxu0 0.0
  %331 = vmatpush.msra.mxu0 0.0
  %332 = vmatpush.msra.mxu0 0.0
  %333 = vmatpush.msra.mxu0 0.0
  %334 = vmatpush.msra.mxu0 0.0
  %335 = vmatpush.msra.mxu0 0.0
  %336 = vmatpush.msra.mxu0 0.0
  %337 = vmatpush.msra.mxu0 0.0
  %338 = vmatpush.msra.mxu0 0.0
  %339 = vmatpush.msra.mxu0 0.0
  %340 = vmatpush.msra.mxu0 0.0
  %341 = vmatpush.msra.mxu0 0.0
  %342 = vmatpush.msra.mxu0 0.0
  %343 = vmatpush.msra.mxu0 0.0
  %344 = vmatpush.msra.mxu0 0.0
  %345 = vmatpush.msra.mxu0 %v322
  %346 = vmatmul.f32.gmra.mxu0 %v78
  %v347 = vpop.f32.mrf.mxu0
  %v348 = vadd.f32 %v309, %v347
  %349 = vmatmul.f32.gmra.mxu0 %v81
  %v350 = vpop.f32.mrf.mxu0
  %v351 = vadd.f32 %v309, %v350
  %352 = vmatmul.f32.gmra.mxu0 %v84
  %v353 = vpop.f32.mrf.mxu0
  %v354 = vadd.f32 %v309, %v353
  %355 = vmatmul.f32.gmra.mxu0 %v87
  %v356 = vpop.f32.mrf.mxu0
  %v357 = vadd.f32 %v309, %v356
  %358 = vmatmul.f32.gmra.mxu0 %v90
  %v359 = vpop.f32.mrf.mxu0
  %v360 = vadd.f32 %v309, %v359
  %361 = vmatmul.f32.gmra.mxu0 %v93
  %v362 = vpop.f32.mrf.mxu0
  %v363 = vadd.f32 %v309, %v362
  %364 = vmatmul.f32.gmra.mxu0 %v96
  %v365 = vpop.f32.mrf.mxu0
  %v366 = vadd.f32 %v309, %v365
  %367 = vmatmul.f32.gmra.mxu0 %v99
  %v368 = vpop.f32.mrf.mxu0
  %v369 = vadd.f32 %v309, %v368
  %370 = vdwg.mxu0
  %371 = vmatpush.msra.mxu0 0.0
  %372 = vmatpush.msra.mxu0 0.0
  %373 = vmatpush.msra.mxu0 0.0
  %374 = vmatpush.msra.mxu0 0.0
  %375 = vmatpush.msra.mxu0 0.0
  %376 = vmatpush.msra.mxu0 0.0
  %377 = vmatpush.msra.mxu0 0.0
  %378 = vmatpush.msra.mxu0 0.0
  %379 = vmatpush.msra.mxu0 0.0
  %380 = vmatpush.msra.mxu0 0.0
  %381 = vmatpush.msra.mxu0 0.0
  %382 = vmatpush.msra.mxu0 0.0
  %383 = vmatpush.msra.mxu0 0.0
  %384 = vmatpush.msra.mxu0 0.0
  %385 = vmatpush.msra.mxu0 0.0
  %386 = vmatpush.msra.mxu0 %v324
  %387 = vmatmul.f32.gmra.mxu0 %v78
  %v388 = vpop.f32.mrf.mxu0
  %v389 = vadd.f32 %v310, %v388
  %390 = vmatmul.f32.gmra.mxu0 %v81
  %v391 = vpop.f32.mrf.mxu0
  %v392 = vadd.f32 %v310, %v391
  %393 = vmatmul.f32.gmra.mxu0 %v84
  %v394 = vpop.f32.mrf.mxu0
  %v395 = vadd.f32 %v310, %v394
  %396 = vmatmul.f32.gmra.mxu0 %v87
  %v397 = vpop.f32.mrf.mxu0
  %v398 = vadd.f32 %v310, %v397
  %399 = vmatmul.f32.gmra.mxu0 %v90
  %v400 = vpop.f32.mrf.mxu0
  %v401 = vadd.f32 %v310, %v400
  %402 = vmatmul.f32.gmra.mxu0 %v93
  %v403 = vpop.f32.mrf.mxu0
  %v404 = vadd.f32 %v310, %v403
  %405 = vmatmul.f32.gmra.mxu0 %v96
  %v406 = vpop.f32.mrf.mxu0
  %v407 = vadd.f32 %v310, %v406
  %408 = vmatmul.f32.gmra.mxu0 %v99
  %v409 = vpop.f32.mrf.mxu0
  %v410 = vadd.f32 %v310, %v409
  %411 = vdwg.mxu0
  %412 = vmatpush.msra.mxu0 0.0
  %413 = vmatpush.msra.mxu0 0.0
  %414 = vmatpush.msra.mxu0 0.0
  %415 = vmatpush.msra.mxu0 0.0
  %416 = vmatpush.msra.mxu0 0.0
  %417 = vmatpush.msra.mxu0 0.0
  %418 = vmatpush.msra.mxu0 0.0
  %419 = vmatpush.msra.mxu0 0.0
  %420 = vmatpush.msra.mxu0 0.0
  %421 = vmatpush.msra.mxu0 0.0
  %422 = vmatpush.msra.mxu0 0.0
  %423 = vmatpush.msra.mxu0 0.0
  %424 = vmatpush.msra.mxu0 0.0
  %425 = vmatpush.msra.mxu0 0.0
  %426 = vmatpush.msra.mxu0 0.0
  %427 = vmatpush.msra.mxu0 %v326
  %428 = vmatmul.f32.gmra.mxu0 %v78
  %v429 = vpop.f32.mrf.mxu0
  %v430 = vadd.f32 %v311, %v429
  %431 = vmatmul.f32.gmra.mxu0 %v81
  %v432 = vpop.f32.mrf.mxu0
  %v433 = vadd.f32 %v311, %v432
  %434 = vmatmul.f32.gmra.mxu0 %v84
  %v435 = vpop.f32.mrf.mxu0
  %v436 = vadd.f32 %v311, %v435
  %437 = vmatmul.f32.gmra.mxu0 %v87
  %v438 = vpop.f32.mrf.mxu0
  %v439 = vadd.f32 %v311, %v438
  %440 = vmatmul.f32.gmra.mxu0 %v90
  %v441 = vpop.f32.mrf.mxu0
  %v442 = vadd.f32 %v311, %v441
  %443 = vmatmul.f32.gmra.mxu0 %v93
  %v444 = vpop.f32.mrf.mxu0
  %v445 = vadd.f32 %v311, %v444
  %446 = vmatmul.f32.gmra.mxu0 %v96
  %v447 = vpop.f32.mrf.mxu0
  %v448 = vadd.f32 %v311, %v447
  %449 = vmatmul.f32.gmra.mxu0 %v99
  %v450 = vpop.f32.mrf.mxu0
  %v451 = vadd.f32 %v311, %v450
  %452 = vdwg.mxu0
  %453 = vmatpush.msra.mxu0 0.0
  %454 = vmatpush.msra.mxu0 0.0
  %455 = vmatpush.msra.mxu0 0.0
  %456 = vmatpush.msra.mxu0 0.0
  %457 = vmatpush.msra.mxu0 0.0
  %458 = vmatpush.msra.mxu0 0.0
  %459 = vmatpush.msra.mxu0 0.0
  %460 = vmatpush.msra.mxu0 0.0
  %461 = vmatpush.msra.mxu0 0.0
  %462 = vmatpush.msra.mxu0 0.0
  %463 = vmatpush.msra.mxu0 0.0
  %464 = vmatpush.msra.mxu0 0.0
  %465 = vmatpush.msra.mxu0 0.0
  %466 = vmatpush.msra.mxu0 0.0
  %467 = vmatpush.msra.mxu0 0.0
  %468 = vmatpush.msra.mxu0 %v328
  %469 = vmatmul.f32.gmra.mxu0 %v78
  %v470 = vpop.f32.mrf.mxu0
  %v471 = vadd.f32 %v312, %v470
  %472 = vmatmul.f32.gmra.mxu0 %v81
  %v473 = vpop.f32.mrf.mxu0
  %v474 = vadd.f32 %v312, %v473
  %475 = vmatmul.f32.gmra.mxu0 %v84
  %v476 = vpop.f32.mrf.mxu0
  %v477 = vadd.f32 %v312, %v476
  %478 = vmatmul.f32.gmra.mxu0 %v87
  %v479 = vpop.f32.mrf.mxu0
  %v480 = vadd.f32 %v312, %v479
  %481 = vmatmul.f32.gmra.mxu0 %v90
  %v482 = vpop.f32.mrf.mxu0
  %v483 = vadd.f32 %v312, %v482
  %484 = vmatmul.f32.gmra.mxu0 %v93
  %v485 = vpop.f32.mrf.mxu0
  %v486 = vadd.f32 %v312, %v485
  %487 = vmatmul.f32.gmra.mxu0 %v96
  %v488 = vpop.f32.mrf.mxu0
  %v489 = vadd.f32 %v312, %v488
  %490 = vmatmul.f32.gmra.mxu0 %v99
  %v491 = vpop.f32.mrf.mxu0
  %v492 = vadd.f32 %v312, %v491
  %493 = vdwg.mxu0
  %494 = vst [vmem:[#allocation3] sm:$0xff] %v348
  %495 = vst [vmem:[#allocation3 + $0x8] sm:$0xff] %v389
  %496 = vst [vmem:[#allocation3 + $0x10] sm:$0xff] %v430
  %497 = vst [vmem:[#allocation3 + $0x18] sm:$0xff] %v471
  %498 = vst [vmem:[#allocation3 + $0x20] sm:$0xff] %v351
  %499 = vst [vmem:[#allocation3 + $0x28] sm:$0xff] %v392
  %500 = vst [vmem:[#allocation3 + $0x30] sm:$0xff] %v433
  %501 = vst [vmem:[#allocation3 + $0x38] sm:$0xff] %v474
  %502 = vst [vmem:[#allocation3 + $0x40] sm:$0xff] %v354
  %503 = vst [vmem:[#allocation3 + $0x48] sm:$0xff] %v395
  %504 = vst [vmem:[#allocation3 + $0x50] sm:$0xff] %v436
  %505 = vst [vmem:[#allocation3 + $0x58] sm:$0xff] %v477
  %506 = vst [vmem:[#allocation3 + $0x60] sm:$0xff] %v357
  %507 = vst [vmem:[#allocation3 + $0x68] sm:$0xff] %v398
  %508 = vst [vmem:[#allocation3 + $0x70] sm:$0xff] %v439
  %509 = vst [vmem:[#allocation3 + $0x78] sm:$0xff] %v480
  %510 = vst [vmem:[#allocation3 + $0x80] sm:$0xff] %v360
  %511 = vst [vmem:[#allocation3 + $0x88] sm:$0xff] %v401
  %512 = vst [vmem:[#allocation3 + $0x90] sm:$0xff] %v442
  %513 = vst [vmem:[#allocation3 + $0x98] sm:$0xff] %v483
  %514 = vst [vmem:[#allocation3 + $0xa0] sm:$0xff] %v363
  %515 = vst [vmem:[#allocation3 + $0xa8] sm:$0xff] %v404
  %516 = vst [vmem:[#allocation3 + $0xb0] sm:$0xff] %v445
  %517 = vst [vmem:[#allocation3 + $0xb8] sm:$0xff] %v486
  %518 = vst [vmem:[#allocation3 + $0xc0] sm:$0xff] %v366
  %519 = vst [vmem:[#allocation3 + $0xc8] sm:$0xff] %v407
  %520 = vst [vmem:[#allocation3 + $0xd0] sm:$0xff] %v448
  %521 = vst [vmem:[#allocation3 + $0xd8] sm:$0xff] %v489
  %522 = vst [vmem:[#allocation3 + $0xe0] sm:$0xff] %v369
  %523 = vst [vmem:[#allocation3 + $0xe8] sm:$0xff] %v410
  %524 = vst [vmem:[#allocation3 + $0xf0] sm:$0xff] %v451
  %525 = vst [vmem:[#allocation3 + $0xf8] sm:$0xff] %v492
  %526 = vst [vmem:[#allocation7] sm:$0xff] 0.0
  %527 = vst [vmem:[#allocation8] sm:$0xff] 0.0
  %528 = vst [vmem:[#allocation9] sm:$0xff] 0.0
  %529 = vst [vmem:[#allocation10] sm:$0xff] 0.0
  %530 = vst [vmem:[#allocation11] sm:$0xff] 0.0
  %531 = vst [vmem:[#allocation12] sm:$0xff] 0.0
  %v532 = vld [vmem:[#allocation2] sm:$0xff]
  %v533 = vld [vmem:[#allocation2 + $0x8] sm:$0xff]
  %v534 = vld [vmem:[#allocation2 + $0x10] sm:$0xff]
  %v535 = vld [vmem:[#allocation2 + $0x18] sm:$0xff]
  %v536 = vld [vmem:[#allocation7] sm:$0xff]
  %v537 = vpack.c.bf16 %v536, %v536
  %v538 = vld [vmem:[%s2] sm:$0xff]
  %v539 = vld [vmem:[%s2 + $0x8] sm:$0xff]
  %v540 = vld [vmem:[%s2 + $0x10] sm:$0xff]
  %v541 = vld [vmem:[%s2 + $0x18] sm:$0xff]
  %v542 = vld [vmem:[%s2 + $0x20] sm:$0xff]
  %v543 = vld [vmem:[%s2 + $0x28] sm:$0xff]
  %v544 = vld [vmem:[%s2 + $0x30] sm:$0xff]
  %v545 = vld [vmem:[%s2 + $0x38] sm:$0xff]
  %v546 = vld [vmem:[%s2 + $0x40] sm:$0xff]
  %v547 = vld [vmem:[%s2 + $0x48] sm:$0xff]
  %v548 = vld [vmem:[%s2 + $0x50] sm:$0xff]
  %v549 = vld [vmem:[%s2 + $0x58] sm:$0xff]
  %v550 = vld [vmem:[%s2 + $0x60] sm:$0xff]
  %v551 = vld [vmem:[%s2 + $0x68] sm:$0xff]
  %v552 = vld [vmem:[%s2 + $0x70] sm:$0xff]
  %v553 = vld [vmem:[%s2 + $0x78] sm:$0xff]
  %v554 = vld [vmem:[%s2 + $0x80] sm:$0xff]
  %v555 = vld [vmem:[%s2 + $0x88] sm:$0xff]
  %v556 = vld [vmem:[%s2 + $0x90] sm:$0xff]
  %v557 = vld [vmem:[%s2 + $0x98] sm:$0xff]
  %v558 = vld [vmem:[%s2 + $0xa0] sm:$0xff]
  %v559 = vld [vmem:[%s2 + $0xa8] sm:$0xff]
  %v560 = vld [vmem:[%s2 + $0xb0] sm:$0xff]
  %v561 = vld [vmem:[%s2 + $0xb8] sm:$0xff]
  %v562 = vld [vmem:[%s2 + $0xc0] sm:$0xff]
  %v563 = vld [vmem:[%s2 + $0xc8] sm:$0xff]
  %v564 = vld [vmem:[%s2 + $0xd0] sm:$0xff]
  %v565 = vld [vmem:[%s2 + $0xd8] sm:$0xff]
  %v566 = vld [vmem:[%s2 + $0xe0] sm:$0xff]
  %v567 = vld [vmem:[%s2 + $0xe8] sm:$0xff]
  %v568 = vld [vmem:[%s2 + $0xf0] sm:$0xff]
  %v569 = vld [vmem:[%s2 + $0xf8] sm:$0xff]
  %v602 = vunpack.c.l.b16 %v538
  %v603 = vunpack.c.h.b16 %v538
  %v604 = vunpack.c.l.b16 %v539
  %v605 = vunpack.c.h.b16 %v539
  %v606 = vunpack.c.l.b16 %v540
  %v607 = vunpack.c.h.b16 %v540
  %v608 = vunpack.c.l.b16 %v541
  %v609 = vunpack.c.h.b16 %v541
  %v610 = vunpack.c.l.b16 %v542
  %v611 = vunpack.c.h.b16 %v542
  %v612 = vunpack.c.l.b16 %v543
  %v613 = vunpack.c.h.b16 %v543
  %v614 = vunpack.c.l.b16 %v544
  %v615 = vunpack.c.h.b16 %v544
  %v616 = vunpack.c.l.b16 %v545
  %v617 = vunpack.c.h.b16 %v545
  %v618 = vunpack.c.l.b16 %v546
  %v619 = vunpack.c.h.b16 %v546
  %v620 = vunpack.c.l.b16 %v547
  %v621 = vunpack.c.h.b16 %v547
  %v622 = vunpack.c.l.b16 %v548
  %v623 = vunpack.c.h.b16 %v548
  %v624 = vunpack.c.l.b16 %v549
  %v625 = vunpack.c.h.b16 %v549
  %v626 = vunpack.c.l.b16 %v550
  %v627 = vunpack.c.h.b16 %v550
  %v628 = vunpack.c.l.b16 %v551
  %v629 = vunpack.c.h.b16 %v551
  %v630 = vunpack.c.l.b16 %v552
  %v631 = vunpack.c.h.b16 %v552
  %v632 = vunpack.c.l.b16 %v553
  %v633 = vunpack.c.h.b16 %v553
  %v634 = vunpack.c.l.b16 %v554
  %v635 = vunpack.c.h.b16 %v554
  %v636 = vunpack.c.l.b16 %v555
  %v637 = vunpack.c.h.b16 %v555
  %v638 = vunpack.c.l.b16 %v556
  %v639 = vunpack.c.h.b16 %v556
  %v640 = vunpack.c.l.b16 %v557
  %v641 = vunpack.c.h.b16 %v557
  %v642 = vunpack.c.l.b16 %v558
  %v643 = vunpack.c.h.b16 %v558
  %v644 = vunpack.c.l.b16 %v559
  %v645 = vunpack.c.h.b16 %v559
  %v646 = vunpack.c.l.b16 %v560
  %v647 = vunpack.c.h.b16 %v560
  %v648 = vunpack.c.l.b16 %v561
  %v649 = vunpack.c.h.b16 %v561
  %v650 = vunpack.c.l.b16 %v562
  %v651 = vunpack.c.h.b16 %v562
  %v652 = vunpack.c.l.b16 %v563
  %v653 = vunpack.c.h.b16 %v563
  %v654 = vunpack.c.l.b16 %v564
  %v655 = vunpack.c.h.b16 %v564
  %v656 = vunpack.c.l.b16 %v565
  %v657 = vunpack.c.h.b16 %v565
  %v658 = vunpack.c.l.b16 %v566
  %v659 = vunpack.c.h.b16 %v566
  %v660 = vunpack.c.l.b16 %v567
  %v661 = vunpack.c.h.b16 %v567
  %v662 = vunpack.c.l.b16 %v568
  %v663 = vunpack.c.h.b16 %v568
  %v664 = vunpack.c.l.b16 %v569
  %v665 = vunpack.c.h.b16 %v569
  %v666 = vpack.c.b16 %v606, %v602
  %v667 = vpack.c.b16 %v607, %v603
  %v668 = vpack.c.b16 %v608, %v604
  %v669 = vpack.c.b16 %v609, %v605
  %v670 = vpack.c.b16 %v614, %v610
  %v671 = vpack.c.b16 %v615, %v611
  %v672 = vpack.c.b16 %v616, %v612
  %v673 = vpack.c.b16 %v617, %v613
  %v674 = vpack.c.b16 %v622, %v618
  %v675 = vpack.c.b16 %v623, %v619
  %v676 = vpack.c.b16 %v624, %v620
  %v677 = vpack.c.b16 %v625, %v621
  %v678 = vpack.c.b16 %v630, %v626
  %v679 = vpack.c.b16 %v631, %v627
  %v680 = vpack.c.b16 %v632, %v628
  %v681 = vpack.c.b16 %v633, %v629
  %v682 = vpack.c.b16 %v638, %v634
  %v683 = vpack.c.b16 %v639, %v635
  %v684 = vpack.c.b16 %v640, %v636
  %v685 = vpack.c.b16 %v641, %v637
  %v686 = vpack.c.b16 %v646, %v642
  %v687 = vpack.c.b16 %v647, %v643
  %v688 = vpack.c.b16 %v648, %v644
  %v689 = vpack.c.b16 %v649, %v645
  %v690 = vpack.c.b16 %v654, %v650
  %v691 = vpack.c.b16 %v655, %v651
  %v692 = vpack.c.b16 %v656, %v652
  %v693 = vpack.c.b16 %v657, %v653
  %v694 = vpack.c.b16 %v662, %v658
  %v695 = vpack.c.b16 %v663, %v659
  %v696 = vpack.c.b16 %v664, %v660
  %v697 = vpack.c.b16 %v665, %v661
  %730 = vmatpush.bf16.msra.mxu0 %v694
  %731 = vmatpush.bf16.msra.mxu0 %v690
  %732 = vmatpush.bf16.msra.mxu0 %v686
  %733 = vmatpush.bf16.msra.mxu0 %v682
  %734 = vmatpush.bf16.msra.mxu0 %v678
  %735 = vmatpush.bf16.msra.mxu0 %v674
  %736 = vmatpush.bf16.msra.mxu0 %v670
  %737 = vmatpush.bf16.msra.mxu0 %v666
  %738 = vmatmul.bf16.gmra.mxu0 %v537
  %v739 = vpop.f32.mrf.mxu0
  %v740 = vadd.f32 0.0, %v739
  %v741 = vpop.f32.mrf.mxu0
  %742 = vdwg.mxu0
  %743 = vmatpush.bf16.msra.mxu0 %v695
  %744 = vmatpush.bf16.msra.mxu0 %v691
  %745 = vmatpush.bf16.msra.mxu0 %v687
  %746 = vmatpush.bf16.msra.mxu0 %v683
  %747 = vmatpush.bf16.msra.mxu0 %v679
  %748 = vmatpush.bf16.msra.mxu0 %v675
  %749 = vmatpush.bf16.msra.mxu0 %v671
  %750 = vmatpush.bf16.msra.mxu0 %v667
  %751 = vmatmul.bf16.gmra.mxu0 %v537
  %v752 = vpop.f32.mrf.mxu0
  %v753 = vadd.f32 0.0, %v752
  %v754 = vpop.f32.mrf.mxu0
  %755 = vdwg.mxu0
  %756 = vmatpush.bf16.msra.mxu0 %v696
  %757 = vmatpush.bf16.msra.mxu0 %v692
  %758 = vmatpush.bf16.msra.mxu0 %v688
  %759 = vmatpush.bf16.msra.mxu0 %v684
  %760 = vmatpush.bf16.msra.mxu0 %v680
  %761 = vmatpush.bf16.msra.mxu0 %v676
  %762 = vmatpush.bf16.msra.mxu0 %v672
  %763 = vmatpush.bf16.msra.mxu0 %v668
  %764 = vmatmul.bf16.gmra.mxu0 %v537
  %v765 = vpop.f32.mrf.mxu0
  %v766 = vadd.f32 0.0, %v765
  %v767 = vpop.f32.mrf.mxu0
  %768 = vdwg.mxu0
  %769 = vmatpush.bf16.msra.mxu0 %v697
  %770 = vmatpush.bf16.msra.mxu0 %v693
  %771 = vmatpush.bf16.msra.mxu0 %v689
  %772 = vmatpush.bf16.msra.mxu0 %v685
  %773 = vmatpush.bf16.msra.mxu0 %v681
  %774 = vmatpush.bf16.msra.mxu0 %v677
  %775 = vmatpush.bf16.msra.mxu0 %v673
  %776 = vmatpush.bf16.msra.mxu0 %v669
  %777 = vmatmul.bf16.gmra.mxu0 %v537
  %v778 = vpop.f32.mrf.mxu0
  %v779 = vadd.f32 0.0, %v778
  %v780 = vpop.f32.mrf.mxu0
  %781 = vdwg.mxu0
  %v782 = vadd.f32 %v532, %v740
  %v783 = vadd.f32 %v533, %v753
  %v784 = vadd.f32 %v534, %v766
  %v785 = vadd.f32 %v535, %v779
  %v786 = vld [vmem:[#allocation3 + $0xe0] sm:$0xff]
  %v787 = vld [vmem:[#allocation3 + $0xe8] sm:$0xff]
  %v788 = vld [vmem:[#allocation3 + $0xf0] sm:$0xff]
  %v789 = vld [vmem:[#allocation3 + $0xf8] sm:$0xff]
  %v790 = vld [vmem:[#allocation9] sm:$0xff]
  %v791 = vpack.c.bf16 %v790, %v790
  %v792 = vld [vmem:[%s5] sm:$0xff]
  %v793 = vld [vmem:[%s5 + $0x8] sm:$0xff]
  %v794 = vld [vmem:[%s5 + $0x10] sm:$0xff]
  %v795 = vld [vmem:[%s5 + $0x18] sm:$0xff]
  %v796 = vld [vmem:[%s5 + $0x20] sm:$0xff]
  %v797 = vld [vmem:[%s5 + $0x28] sm:$0xff]
  %v798 = vld [vmem:[%s5 + $0x30] sm:$0xff]
  %v799 = vld [vmem:[%s5 + $0x38] sm:$0xff]
  %v800 = vld [vmem:[%s5 + $0x40] sm:$0xff]
  %v801 = vld [vmem:[%s5 + $0x48] sm:$0xff]
  %v802 = vld [vmem:[%s5 + $0x50] sm:$0xff]
  %v803 = vld [vmem:[%s5 + $0x58] sm:$0xff]
  %v804 = vld [vmem:[%s5 + $0x60] sm:$0xff]
  %v805 = vld [vmem:[%s5 + $0x68] sm:$0xff]
  %v806 = vld [vmem:[%s5 + $0x70] sm:$0xff]
  %v807 = vld [vmem:[%s5 + $0x78] sm:$0xff]
  %v808 = vld [vmem:[%s5 + $0x80] sm:$0xff]
  %v809 = vld [vmem:[%s5 + $0x88] sm:$0xff]
  %v810 = vld [vmem:[%s5 + $0x90] sm:$0xff]
  %v811 = vld [vmem:[%s5 + $0x98] sm:$0xff]
  %v812 = vld [vmem:[%s5 + $0xa0] sm:$0xff]
  %v813 = vld [vmem:[%s5 + $0xa8] sm:$0xff]
  %v814 = vld [vmem:[%s5 + $0xb0] sm:$0xff]
  %v815 = vld [vmem:[%s5 + $0xb8] sm:$0xff]
  %v816 = vld [vmem:[%s5 + $0xc0] sm:$0xff]
  %v817 = vld [vmem:[%s5 + $0xc8] sm:$0xff]
  %v818 = vld [vmem:[%s5 + $0xd0] sm:$0xff]
  %v819 = vld [vmem:[%s5 + $0xd8] sm:$0xff]
  %v820 = vld [vmem:[%s5 + $0xe0] sm:$0xff]
  %v821 = vld [vmem:[%s5 + $0xe8] sm:$0xff]
  %v822 = vld [vmem:[%s5 + $0xf0] sm:$0xff]
  %v823 = vld [vmem:[%s5 + $0xf8] sm:$0xff]
  %v856 = vunpack.c.l.b16 %v792
  %v857 = vunpack.c.h.b16 %v792
  %v858 = vunpack.c.l.b16 %v793
  %v859 = vunpack.c.h.b16 %v793
  %v860 = vunpack.c.l.b16 %v794
  %v861 = vunpack.c.h.b16 %v794
  %v862 = vunpack.c.l.b16 %v795
  %v863 = vunpack.c.h.b16 %v795
  %v864 = vunpack.c.l.b16 %v796
  %v865 = vunpack.c.h.b16 %v796
  %v866 = vunpack.c.l.b16 %v797
  %v867 = vunpack.c.h.b16 %v797
  %v868 = vunpack.c.l.b16 %v798
  %v869 = vunpack.c.h.b16 %v798
  %v870 = vunpack.c.l.b16 %v799
  %v871 = vunpack.c.h.b16 %v799
  %v872 = vunpack.c.l.b16 %v800
  %v873 = vunpack.c.h.b16 %v800
  %v874 = vunpack.c.l.b16 %v801
  %v875 = vunpack.c.h.b16 %v801
  %v876 = vunpack.c.l.b16 %v802
  %v877 = vunpack.c.h.b16 %v802
  %v878 = vunpack.c.l.b16 %v803
  %v879 = vunpack.c.h.b16 %v803
  %v880 = vunpack.c.l.b16 %v804
  %v881 = vunpack.c.h.b16 %v804
  %v882 = vunpack.c.l.b16 %v805
  %v883 = vunpack.c.h.b16 %v805
  %v884 = vunpack.c.l.b16 %v806
  %v885 = vunpack.c.h.b16 %v806
  %v886 = vunpack.c.l.b16 %v807
  %v887 = vunpack.c.h.b16 %v807
  %v888 = vunpack.c.l.b16 %v808
  %v889 = vunpack.c.h.b16 %v808
  %v890 = vunpack.c.l.b16 %v809
  %v891 = vunpack.c.h.b16 %v809
  %v892 = vunpack.c.l.b16 %v810
  %v893 = vunpack.c.h.b16 %v810
  %v894 = vunpack.c.l.b16 %v811
  %v895 = vunpack.c.h.b16 %v811
  %v896 = vunpack.c.l.b16 %v812
  %v897 = vunpack.c.h.b16 %v812
  %v898 = vunpack.c.l.b16 %v813
  %v899 = vunpack.c.h.b16 %v813
  %v900 = vunpack.c.l.b16 %v814
  %v901 = vunpack.c.h.b16 %v814
  %v902 = vunpack.c.l.b16 %v815
  %v903 = vunpack.c.h.b16 %v815
  %v904 = vunpack.c.l.b16 %v816
  %v905 = vunpack.c.h.b16 %v816
  %v906 = vunpack.c.l.b16 %v817
  %v907 = vunpack.c.h.b16 %v817
  %v908 = vunpack.c.l.b16 %v818
  %v909 = vunpack.c.h.b16 %v818
  %v910 = vunpack.c.l.b16 %v819
  %v911 = vunpack.c.h.b16 %v819
  %v912 = vunpack.c.l.b16 %v820
  %v913 = vunpack.c.h.b16 %v820
  %v914 = vunpack.c.l.b16 %v821
  %v915 = vunpack.c.h.b16 %v821
  %v916 = vunpack.c.l.b16 %v822
  %v917 = vunpack.c.h.b16 %v822
  %v918 = vunpack.c.l.b16 %v823
  %v919 = vunpack.c.h.b16 %v823
  %v920 = vpack.c.b16 %v860, %v856
  %v921 = vpack.c.b16 %v861, %v857
  %v922 = vpack.c.b16 %v862, %v858
  %v923 = vpack.c.b16 %v863, %v859
  %v924 = vpack.c.b16 %v868, %v864
  %v925 = vpack.c.b16 %v869, %v865
  %v926 = vpack.c.b16 %v870, %v866
  %v927 = vpack.c.b16 %v871, %v867
  %v928 = vpack.c.b16 %v876, %v872
  %v929 = vpack.c.b16 %v877, %v873
  %v930 = vpack.c.b16 %v878, %v874
  %v931 = vpack.c.b16 %v879, %v875
  %v932 = vpack.c.b16 %v884, %v880
  %v933 = vpack.c.b16 %v885, %v881
  %v934 = vpack.c.b16 %v886, %v882
  %v935 = vpack.c.b16 %v887, %v883
  %v936 = vpack.c.b16 %v892, %v888
  %v937 = vpack.c.b16 %v893, %v889
  %v938 = vpack.c.b16 %v894, %v890
  %v939 = vpack.c.b16 %v895, %v891
  %v940 = vpack.c.b16 %v900, %v896
  %v941 = vpack.c.b16 %v901, %v897
  %v942 = vpack.c.b16 %v902, %v898
  %v943 = vpack.c.b16 %v903, %v899
  %v944 = vpack.c.b16 %v908, %v904
  %v945 = vpack.c.b16 %v909, %v905
  %v946 = vpack.c.b16 %v910, %v906
  %v947 = vpack.c.b16 %v911, %v907
  %v948 = vpack.c.b16 %v916, %v912
  %v949 = vpack.c.b16 %v917, %v913
  %v950 = vpack.c.b16 %v918, %v914
  %v951 = vpack.c.b16 %v919, %v915
  %984 = vmatpush.bf16.msra.mxu0 %v948
  %985 = vmatpush.bf16.msra.mxu0 %v944
  %986 = vmatpush.bf16.msra.mxu0 %v940
  %987 = vmatpush.bf16.msra.mxu0 %v936
  %988 = vmatpush.bf16.msra.mxu0 %v932
  %989 = vmatpush.bf16.msra.mxu0 %v928
  %990 = vmatpush.bf16.msra.mxu0 %v924
  %991 = vmatpush.bf16.msra.mxu0 %v920
  %992 = vmatmul.bf16.gmra.mxu0 %v791
  %v993 = vpop.f32.mrf.mxu0
  %v994 = vadd.f32 0.0, %v993
  %v995 = vpop.f32.mrf.mxu0
  %996 = vdwg.mxu0
  %997 = vmatpush.bf16.msra.mxu0 %v949
  %998 = vmatpush.bf16.msra.mxu0 %v945
  %999 = vmatpush.bf16.msra.mxu0 %v941
  %1000 = vmatpush.bf16.msra.mxu0 %v937
  %1001 = vmatpush.bf16.msra.mxu0 %v933
  %1002 = vmatpush.bf16.msra.mxu0 %v929
  %1003 = vmatpush.bf16.msra.mxu0 %v925
  %1004 = vmatpush.bf16.msra.mxu0 %v921
  %1005 = vmatmul.bf16.gmra.mxu0 %v791
  %v1006 = vpop.f32.mrf.mxu0
  %v1007 = vadd.f32 0.0, %v1006
  %v1008 = vpop.f32.mrf.mxu0
  %1009 = vdwg.mxu0
  %1010 = vmatpush.bf16.msra.mxu0 %v950
  %1011 = vmatpush.bf16.msra.mxu0 %v946
  %1012 = vmatpush.bf16.msra.mxu0 %v942
  %1013 = vmatpush.bf16.msra.mxu0 %v938
  %1014 = vmatpush.bf16.msra.mxu0 %v934
  %1015 = vmatpush.bf16.msra.mxu0 %v930
  %1016 = vmatpush.bf16.msra.mxu0 %v926
  %1017 = vmatpush.bf16.msra.mxu0 %v922
  %1018 = vmatmul.bf16.gmra.mxu0 %v791
  %v1019 = vpop.f32.mrf.mxu0
  %v1020 = vadd.f32 0.0, %v1019
  %v1021 = vpop.f32.mrf.mxu0
  %1022 = vdwg.mxu0
  %1023 = vmatpush.bf16.msra.mxu0 %v951
  %1024 = vmatpush.bf16.msra.mxu0 %v947
  %1025 = vmatpush.bf16.msra.mxu0 %v943
  %1026 = vmatpush.bf16.msra.mxu0 %v939
  %1027 = vmatpush.bf16.msra.mxu0 %v935
  %1028 = vmatpush.bf16.msra.mxu0 %v931
  %1029 = vmatpush.bf16.msra.mxu0 %v927
  %1030 = vmatpush.bf16.msra.mxu0 %v923
  %1031 = vmatmul.bf16.gmra.mxu0 %v791
  %v1032 = vpop.f32.mrf.mxu0
  %v1033 = vadd.f32 0.0, %v1032
  %v1034 = vpop.f32.mrf.mxu0
  %1035 = vdwg.mxu0
  %v1036 = vadd.f32 %v786, %v994
  %v1037 = vadd.f32 %v787, %v1007
  %v1038 = vadd.f32 %v788, %v1020
  %v1039 = vadd.f32 %v789, %v1033
  %v1040 = vld [vmem:[#allocation8] sm:$0xff]
  %v1041 = vxor.u32 %v782, 2147483648
  %v1042 = vmul.f32 %v1041, 1.442695
  %v1043 = vpow.pop %v1042
  %v1044 = vadd.f32 %v1043, 1.0
  %v1045 = vrcp.pop %v1044
  %v1046 = vmul.f32 %v1044, %v1045
  %v1047 = vsub.f32 1.0, %v1046
  %v1048 = vmul.f32 %v1045, %v1047
  %v1049 = vadd.f32 %v1045, %v1048
  %vm1050 = vweird.f32 %v1044
  %vm1051 = vweird.f32 %v1045
  %vm1052 = vmor %vm1050, %vm1051
  %v1053 = vsel %vm1052, %v1045, %v1049
  %v1054 = vand.u32 2147483647, %v1044
  %vm1055 = vcmp.eq.f32.partialorder %v1054, 8.507059e+37
  %v1056 = vand.u32 %v1044, 2147483648
  %v1057 = vor.u32 1.1754944e-38, %v1056
  %v1058 = vsel %vm1055, %v1057, %v1053
  %v1059 = vmul.f32 1.0, %v1058
  %v1060 = vxor.u32 %v783, 2147483648
  %v1061 = vmul.f32 %v1060, 1.442695
  %v1062 = vpow.pop %v1061
  %v1063 = vadd.f32 %v1062, 1.0
  %v1064 = vrcp.pop %v1063
  %v1065 = vmul.f32 %v1063, %v1064
  %v1066 = vsub.f32 1.0, %v1065
  %v1067 = vmul.f32 %v1064, %v1066
  %v1068 = vadd.f32 %v1064, %v1067
  %vm1069 = vweird.f32 %v1063
  %vm1070 = vweird.f32 %v1064
  %vm1071 = vmor %vm1069, %vm1070
  %v1072 = vsel %vm1071, %v1064, %v1068
  %v1073 = vand.u32 2147483647, %v1063
  %vm1074 = vcmp.eq.f32.partialorder %v1073, 8.507059e+37
  %v1075 = vand.u32 %v1063, 2147483648
  %v1076 = vor.u32 1.1754944e-38, %v1075
  %v1077 = vsel %vm1074, %v1076, %v1072
  %v1078 = vmul.f32 1.0, %v1077
  %v1079 = vtanh.pop %v784
  %v1080 = vxor.u32 %v785, 2147483648
  %v1081 = vmul.f32 %v1080, 1.442695
  %v1082 = vpow.pop %v1081
  %v1083 = vadd.f32 %v1082, 1.0
  %v1084 = vrcp.pop %v1083
  %v1085 = vmul.f32 %v1083, %v1084
  %v1086 = vsub.f32 1.0, %v1085
  %v1087 = vmul.f32 %v1084, %v1086
  %v1088 = vadd.f32 %v1084, %v1087
  %vm1089 = vweird.f32 %v1083
  %vm1090 = vweird.f32 %v1084
  %vm1091 = vmor %vm1089, %vm1090
  %v1092 = vsel %vm1091, %v1084, %v1088
  %v1093 = vand.u32 2147483647, %v1083
  %vm1094 = vcmp.eq.f32.partialorder %v1093, 8.507059e+37
  %v1095 = vand.u32 %v1083, 2147483648
  %v1096 = vor.u32 1.1754944e-38, %v1095
  %v1097 = vsel %vm1094, %v1096, %v1092
  %v1098 = vmul.f32 1.0, %v1097
  %v1099 = vmul.f32 %v1078, %v1040
  %v1100 = vmul.f32 %v1059, %v1079
  %v1101 = vadd.f32 %v1099, %v1100
  %v1102 = vtanh.pop %v1101
  %v1103 = vmul.f32 %v1098, %v1102
  %v1104 = vld [vmem:[#allocation10] sm:$0xff]
  %v1105 = vxor.u32 %v1036, 2147483648
  %v1106 = vmul.f32 %v1105, 1.442695
  %v1107 = vpow.pop %v1106
  %v1108 = vadd.f32 %v1107, 1.0
  %v1109 = vrcp.pop %v1108
  %v1110 = vmul.f32 %v1108, %v1109
  %v1111 = vsub.f32 1.0, %v1110
  %v1112 = vmul.f32 %v1109, %v1111
  %v1113 = vadd.f32 %v1109, %v1112
  %vm1114 = vweird.f32 %v1108
  %vm1115 = vweird.f32 %v1109
  %vm1116 = vmor %vm1114, %vm1115
  %v1117 = vsel %vm1116, %v1109, %v1113
  %v1118 = vand.u32 2147483647, %v1108
  %vm1119 = vcmp.eq.f32.partialorder %v1118, 8.507059e+37
  %v1120 = vand.u32 %v1108, 2147483648
  %v1121 = vor.u32 1.1754944e-38, %v1120
  %v1122 = vsel %vm1119, %v1121, %v1117
  %v1123 = vmul.f32 1.0, %v1122
  %v1124 = vxor.u32 %v1037, 2147483648
  %v1125 = vmul.f32 %v1124, 1.442695
  %v1126 = vpow.pop %v1125
  %v1127 = vadd.f32 %v1126, 1.0
  %v1128 = vrcp.pop %v1127
  %v1129 = vmul.f32 %v1127, %v1128
  %v1130 = vsub.f32 1.0, %v1129
  %v1131 = vmul.f32 %v1128, %v1130
  %v1132 = vadd.f32 %v1128, %v1131
  %vm1133 = vweird.f32 %v1127
  %vm1134 = vweird.f32 %v1128
  %vm1135 = vmor %vm1133, %vm1134
  %v1136 = vsel %vm1135, %v1128, %v1132
  %v1137 = vand.u32 2147483647, %v1127
  %vm1138 = vcmp.eq.f32.partialorder %v1137, 8.507059e+37
  %v1139 = vand.u32 %v1127, 2147483648
  %v1140 = vor.u32 1.1754944e-38, %v1139
  %v1141 = vsel %vm1138, %v1140, %v1136
  %v1142 = vmul.f32 1.0, %v1141
  %v1143 = vtanh.pop %v1038
  %v1144 = vxor.u32 %v1039, 2147483648
  %v1145 = vmul.f32 %v1144, 1.442695
  %v1146 = vpow.pop %v1145
  %v1147 = vadd.f32 %v1146, 1.0
  %v1148 = vrcp.pop %v1147
  %v1149 = vmul.f32 %v1147, %v1148
  %v1150 = vsub.f32 1.0, %v1149
  %v1151 = vmul.f32 %v1148, %v1150
  %v1152 = vadd.f32 %v1148, %v1151
  %vm1153 = vweird.f32 %v1147
  %vm1154 = vweird.f32 %v1148
  %vm1155 = vmor %vm1153, %vm1154
  %v1156 = vsel %vm1155, %v1148, %v1152
  %v1157 = vand.u32 2147483647, %v1147
  %vm1158 = vcmp.eq.f32.partialorder %v1157, 8.507059e+37
  %v1159 = vand.u32 %v1147, 2147483648
  %v1160 = vor.u32 1.1754944e-38, %v1159
  %v1161 = vsel %vm1158, %v1160, %v1156
  %v1162 = vmul.f32 1.0, %v1161
  %v1163 = vmul.f32 %v1142, %v1104
  %v1164 = vmul.f32 %v1123, %v1143
  %v1165 = vadd.f32 %v1163, %v1164
  %v1166 = vtanh.pop %v1165
  %v1167 = vmul.f32 %v1162, %v1166
  %1168 = vst [vmem:[#allocation7] sm:$0xff] %v1103
  %1169 = vst [vmem:[#allocation8] sm:$0xff] %v1101
  %1170 = vst [vmem:[#allocation9] sm:$0xff] %v1167
  %1171 = vst [vmem:[#allocation10] sm:$0xff] %v1165
  %1172 = vst [vmem:[#allocation5] sm:$0xff] %v1103
  %1173 = vst [vmem:[#allocation6 + $0x38] sm:$0xff] %v1167
  %v1174 = vld [vmem:[#allocation2 + $0x20] sm:$0xff]
  %v1175 = vld [vmem:[#allocation2 + $0x28] sm:$0xff]
  %v1176 = vld [vmem:[#allocation2 + $0x30] sm:$0xff]
  %v1177 = vld [vmem:[#allocation2 + $0x38] sm:$0xff]
  %v1178 = vld [vmem:[#allocation7] sm:$0xff]
  %v1179 = vpack.c.bf16 %v1178, %v1178
  %v1180 = vld [vmem:[%s2] sm:$0xff]
  %v1181 = vld [vmem:[%s2 + $0x8] sm:$0xff]
  %v1182 = vld [vmem:[%s2 + $0x10] sm:$0xff]
  %v1183 = vld [vmem:[%s2 + $0x18] sm:$0xff]
  %v1184 = vld [vmem:[%s2 + $0x20] sm:$0xff]
  %v1185 = vld [vmem:[%s2 + $0x28] sm:$0xff]
  %v1186 = vld [vmem:[%s2 + $0x30] sm:$0xff]
  %v1187 = vld [vmem:[%s2 + $0x38] sm:$0xff]
  %v1188 = vld [vmem:[%s2 + $0x40] sm:$0xff]
  %v1189 = vld [vmem:[%s2 + $0x48] sm:$0xff]
  %v1190 = vld [vmem:[%s2 + $0x50] sm:$0xff]
  %v1191 = vld [vmem:[%s2 + $0x58] sm:$0xff]
  %v1192 = vld [vmem:[%s2 + $0x60] sm:$0xff]
  %v1193 = vld [vmem:[%s2 + $0x68] sm:$0xff]
  %v1194 = vld [vmem:[%s2 + $0x70] sm:$0xff]
  %v1195 = vld [vmem:[%s2 + $0x78] sm:$0xff]
  %v1196 = vld [vmem:[%s2 + $0x80] sm:$0xff]
  %v1197 = vld [vmem:[%s2 + $0x88] sm:$0xff]
  %v1198 = vld [vmem:[%s2 + $0x90] sm:$0xff]
  %v1199 = vld [vmem:[%s2 + $0x98] sm:$0xff]
  %v1200 = vld [vmem:[%s2 + $0xa0] sm:$0xff]
  %v1201 = vld [vmem:[%s2 + $0xa8] sm:$0xff]
  %v1202 = vld [vmem:[%s2 + $0xb0] sm:$0xff]
  %v1203 = vld [vmem:[%s2 + $0xb8] sm:$0xff]
  %v1204 = vld [vmem:[%s2 + $0xc0] sm:$0xff]
  %v1205 = vld [vmem:[%s2 + $0xc8] sm:$0xff]
  %v1206 = vld [vmem:[%s2 + $0xd0] sm:$0xff]
  %v1207 = vld [vmem:[%s2 + $0xd8] sm:$0xff]
  %v1208 = vld [vmem:[%s2 + $0xe0] sm:$0xff]
  %v1209 = vld [vmem:[%s2 + $0xe8] sm:$0xff]
  %v1210 = vld [vmem:[%s2 + $0xf0] sm:$0xff]
  %v1211 = vld [vmem:[%s2 + $0xf8] sm:$0xff]
  %v1244 = vunpack.c.l.b16 %v1180
  %v1245 = vunpack.c.h.b16 %v1180
  %v1246 = vunpack.c.l.b16 %v1181
  %v1247 = vunpack.c.h.b16 %v1181
  %v1248 = vunpack.c.l.b16 %v1182
  %v1249 = vunpack.c.h.b16 %v1182
  %v1250 = vunpack.c.l.b16 %v1183
  %v1251 = vunpack.c.h.b16 %v1183
  %v1252 = vunpack.c.l.b16 %v1184
  %v1253 = vunpack.c.h.b16 %v1184
  %v1254 = vunpack.c.l.b16 %v1185
  %v1255 = vunpack.c.h.b16 %v1185
  %v1256 = vunpack.c.l.b16 %v1186
  %v1257 = vunpack.c.h.b16 %v1186
  %v1258 = vunpack.c.l.b16 %v1187
  %v1259 = vunpack.c.h.b16 %v1187
  %v1260 = vunpack.c.l.b16 %v1188
  %v1261 = vunpack.c.h.b16 %v1188
  %v1262 = vunpack.c.l.b16 %v1189
  %v1263 = vunpack.c.h.b16 %v1189
  %v1264 = vunpack.c.l.b16 %v1190
  %v1265 = vunpack.c.h.b16 %v1190
  %v1266 = vunpack.c.l.b16 %v1191
  %v1267 = vunpack.c.h.b16 %v1191
  %v1268 = vunpack.c.l.b16 %v1192
  %v1269 = vunpack.c.h.b16 %v1192
  %v1270 = vunpack.c.l.b16 %v1193
  %v1271 = vunpack.c.h.b16 %v1193
  %v1272 = vunpack.c.l.b16 %v1194
  %v1273 = vunpack.c.h.b16 %v1194
  %v1274 = vunpack.c.l.b16 %v1195
  %v1275 = vunpack.c.h.b16 %v1195
  %v1276 = vunpack.c.l.b16 %v1196
  %v1277 = vunpack.c.h.b16 %v1196
  %v1278 = vunpack.c.l.b16 %v1197
  %v1279 = vunpack.c.h.b16 %v1197
  %v1280 = vunpack.c.l.b16 %v1198
  %v1281 = vunpack.c.h.b16 %v1198
  %v1282 = vunpack.c.l.b16 %v1199
  %v1283 = vunpack.c.h.b16 %v1199
  %v1284 = vunpack.c.l.b16 %v1200
  %v1285 = vunpack.c.h.b16 %v1200
  %v1286 = vunpack.c.l.b16 %v1201
  %v1287 = vunpack.c.h.b16 %v1201
  %v1288 = vunpack.c.l.b16 %v1202
  %v1289 = vunpack.c.h.b16 %v1202
  %v1290 = vunpack.c.l.b16 %v1203
  %v1291 = vunpack.c.h.b16 %v1203
  %v1292 = vunpack.c.l.b16 %v1204
  %v1293 = vunpack.c.h.b16 %v1204
  %v1294 = vunpack.c.l.b16 %v1205
  %v1295 = vunpack.c.h.b16 %v1205
  %v1296 = vunpack.c.l.b16 %v1206
  %v1297 = vunpack.c.h.b16 %v1206
  %v1298 = vunpack.c.l.b16 %v1207
  %v1299 = vunpack.c.h.b16 %v1207
  %v1300 = vunpack.c.l.b16 %v1208
  %v1301 = vunpack.c.h.b16 %v1208
  %v1302 = vunpack.c.l.b16 %v1209
  %v1303 = vunpack.c.h.b16 %v1209
  %v1304 = vunpack.c.l.b16 %v1210
  %v1305 = vunpack.c.h.b16 %v1210
  %v1306 = vunpack.c.l.b16 %v1211
  %v1307 = vunpack.c.h.b16 %v1211
  %v1308 = vpack.c.b16 %v1248, %v1244
  %v1309 = vpack.c.b16 %v1249, %v1245
  %v1310 = vpack.c.b16 %v1250, %v1246
  %v1311 = vpack.c.b16 %v1251, %v1247
  %v1312 = vpack.c.b16 %v1256, %v1252
  %v1313 = vpack.c.b16 %v1257, %v1253
  %v1314 = vpack.c.b16 %v1258, %v1254
  %v1315 = vpack.c.b16 %v1259, %v1255
  %v1316 = vpack.c.b16 %v1264, %v1260
  %v1317 = vpack.c.b16 %v1265, %v1261
  %v1318 = vpack.c.b16 %v1266, %v1262
  %v1319 = vpack.c.b16 %v1267, %v1263
  %v1320 = vpack.c.b16 %v1272, %v1268
  %v1321 = vpack.c.b16 %v1273, %v1269
  %v1322 = vpack.c.b16 %v1274, %v1270
  %v1323 = vpack.c.b16 %v1275, %v1271
  %v1324 = vpack.c.b16 %v1280, %v1276
  %v1325 = vpack.c.b16 %v1281, %v1277
  %v1326 = vpack.c.b16 %v1282, %v1278
  %v1327 = vpack.c.b16 %v1283, %v1279
  %v1328 = vpack.c.b16 %v1288, %v1284
  %v1329 = vpack.c.b16 %v1289, %v1285
  %v1330 = vpack.c.b16 %v1290, %v1286
  %v1331 = vpack.c.b16 %v1291, %v1287
  %v1332 = vpack.c.b16 %v1296, %v1292
  %v1333 = vpack.c.b16 %v1297, %v1293
  %v1334 = vpack.c.b16 %v1298, %v1294
  %v1335 = vpack.c.b16 %v1299, %v1295
  %v1336 = vpack.c.b16 %v1304, %v1300
  %v1337 = vpack.c.b16 %v1305, %v1301
  %v1338 = vpack.c.b16 %v1306, %v1302
  %v1339 = vpack.c.b16 %v1307, %v1303
  %1372 = vmatpush.bf16.msra.mxu0 %v1336
  %1373 = vmatpush.bf16.msra.mxu0 %v1332
  %1374 = vmatpush.bf16.msra.mxu0 %v1328
  %1375 = vmatpush.bf16.msra.mxu0 %v1324
  %1376 = vmatpush.bf16.msra.mxu0 %v1320
  %1377 = vmatpush.bf16.msra.mxu0 %v1316
  %1378 = vmatpush.bf16.msra.mxu0 %v1312
  %1379 = vmatpush.bf16.msra.mxu0 %v1308
  %1380 = vmatmul.bf16.gmra.mxu0 %v1179
  %v1381 = vpop.f32.mrf.mxu0
  %v1382 = vadd.f32 0.0, %v1381
  %v1383 = vpop.f32.mrf.mxu0
  %1384 = vdwg.mxu0
  %1385 = vmatpush.bf16.msra.mxu0 %v1337
  %1386 = vmatpush.bf16.msra.mxu0 %v1333
  %1387 = vmatpush.bf16.msra.mxu0 %v1329
  %1388 = vmatpush.bf16.msra.mxu0 %v1325
  %1389 = vmatpush.bf16.msra.mxu0 %v1321
  %1390 = vmatpush.bf16.msra.mxu0 %v1317
  %1391 = vmatpush.bf16.msra.mxu0 %v1313
  %1392 = vmatpush.bf16.msra.mxu0 %v1309
  %1393 = vmatmul.bf16.gmra.mxu0 %v1179
  %v1394 = vpop.f32.mrf.mxu0
  %v1395 = vadd.f32 0.0, %v1394
  %v1396 = vpop.f32.mrf.mxu0
  %1397 = vdwg.mxu0
  %1398 = vmatpush.bf16.msra.mxu0 %v1338
  %1399 = vmatpush.bf16.msra.mxu0 %v1334
  %1400 = vmatpush.bf16.msra.mxu0 %v1330
  %1401 = vmatpush.bf16.msra.mxu0 %v1326
  %1402 = vmatpush.bf16.msra.mxu0 %v1322
  %1403 = vmatpush.bf16.msra.mxu0 %v1318
  %1404 = vmatpush.bf16.msra.mxu0 %v1314
  %1405 = vmatpush.bf16.msra.mxu0 %v1310
  %1406 = vmatmul.bf16.gmra.mxu0 %v1179
  %v1407 = vpop.f32.mrf.mxu0
  %v1408 = vadd.f32 0.0, %v1407
  %v1409 = vpop.f32.mrf.mxu0
  %1410 = vdwg.mxu0
  %1411 = vmatpush.bf16.msra.mxu0 %v1339
  %1412 = vmatpush.bf16.msra.mxu0 %v1335
  %1413 = vmatpush.bf16.msra.mxu0 %v1331
  %1414 = vmatpush.bf16.msra.mxu0 %v1327
  %1415 = vmatpush.bf16.msra.mxu0 %v1323
  %1416 = vmatpush.bf16.msra.mxu0 %v1319
  %1417 = vmatpush.bf16.msra.mxu0 %v1315
  %1418 = vmatpush.bf16.msra.mxu0 %v1311
  %1419 = vmatmul.bf16.gmra.mxu0 %v1179
  %v1420 = vpop.f32.mrf.mxu0
  %v1421 = vadd.f32 0.0, %v1420
  %v1422 = vpop.f32.mrf.mxu0
  %1423 = vdwg.mxu0
  %v1424 = vadd.f32 %v1174, %v1382
  %v1425 = vadd.f32 %v1175, %v1395
  %v1426 = vadd.f32 %v1176, %v1408
  %v1427 = vadd.f32 %v1177, %v1421
  %v1428 = vld [vmem:[#allocation3 + $0xc0] sm:$0xff]
  %v1429 = vld [vmem:[#allocation3 + $0xc8] sm:$0xff]
  %v1430 = vld [vmem:[#allocation3 + $0xd0] sm:$0xff]
  %v1431 = vld [vmem:[#allocation3 + $0xd8] sm:$0xff]
  %v1432 = vld [vmem:[#allocation9] sm:$0xff]
  %v1433 = vpack.c.bf16 %v1432, %v1432
  %v1434 = vld [vmem:[%s5] sm:$0xff]
  %v1435 = vld [vmem:[%s5 + $0x8] sm:$0xff]
  %v1436 = vld [vmem:[%s5 + $0x10] sm:$0xff]
  %v1437 = vld [vmem:[%s5 + $0x18] sm:$0xff]
  %v1438 = vld [vmem:[%s5 + $0x20] sm:$0xff]
  %v1439 = vld [vmem:[%s5 + $0x28] sm:$0xff]
  %v1440 = vld [vmem:[%s5 + $0x30] sm:$0xff]
  %v1441 = vld [vmem:[%s5 + $0x38] sm:$0xff]
  %v1442 = vld [vmem:[%s5 + $0x40] sm:$0xff]
  %v1443 = vld [vmem:[%s5 + $0x48] sm:$0xff]
  %v1444 = vld [vmem:[%s5 + $0x50] sm:$0xff]
  %v1445 = vld [vmem:[%s5 + $0x58] sm:$0xff]
  %v1446 = vld [vmem:[%s5 + $0x60] sm:$0xff]
  %v1447 = vld [vmem:[%s5 + $0x68] sm:$0xff]
  %v1448 = vld [vmem:[%s5 + $0x70] sm:$0xff]
  %v1449 = vld [vmem:[%s5 + $0x78] sm:$0xff]
  %v1450 = vld [vmem:[%s5 + $0x80] sm:$0xff]
  %v1451 = vld [vmem:[%s5 + $0x88] sm:$0xff]
  %v1452 = vld [vmem:[%s5 + $0x90] sm:$0xff]
  %v1453 = vld [vmem:[%s5 + $0x98] sm:$0xff]
  %v1454 = vld [vmem:[%s5 + $0xa0] sm:$0xff]
  %v1455 = vld [vmem:[%s5 + $0xa8] sm:$0xff]
  %v1456 = vld [vmem:[%s5 + $0xb0] sm:$0xff]
  %v1457 = vld [vmem:[%s5 + $0xb8] sm:$0xff]
  %v1458 = vld [vmem:[%s5 + $0xc0] sm:$0xff]
  %v1459 = vld [vmem:[%s5 + $0xc8] sm:$0xff]
  %v1460 = vld [vmem:[%s5 + $0xd0] sm:$0xff]
  %v1461 = vld [vmem:[%s5 + $0xd8] sm:$0xff]
  %v1462 = vld [vmem:[%s5 + $0xe0] sm:$0xff]
  %v1463 = vld [vmem:[%s5 + $0xe8] sm:$0xff]
  %v1464 = vld [vmem:[%s5 + $0xf0] sm:$0xff]
  %v1465 = vld [vmem:[%s5 + $0xf8] sm:$0xff]
  %v1498 = vunpack.c.l.b16 %v1434
  %v1499 = vunpack.c.h.b16 %v1434
  %v1500 = vunpack.c.l.b16 %v1435
  %v1501 = vunpack.c.h.b16 %v1435
  %v1502 = vunpack.c.l.b16 %v1436
  %v1503 = vunpack.c.h.b16 %v1436
  %v1504 = vunpack.c.l.b16 %v1437
  %v1505 = vunpack.c.h.b16 %v1437
  %v1506 = vunpack.c.l.b16 %v1438
  %v1507 = vunpack.c.h.b16 %v1438
  %v1508 = vunpack.c.l.b16 %v1439
  %v1509 = vunpack.c.h.b16 %v1439
  %v1510 = vunpack.c.l.b16 %v1440
  %v1511 = vunpack.c.h.b16 %v1440
  %v1512 = vunpack.c.l.b16 %v1441
  %v1513 = vunpack.c.h.b16 %v1441
  %v1514 = vunpack.c.l.b16 %v1442
  %v1515 = vunpack.c.h.b16 %v1442
  %v1516 = vunpack.c.l.b16 %v1443
  %v1517 = vunpack.c.h.b16 %v1443
  %v1518 = vunpack.c.l.b16 %v1444
  %v1519 = vunpack.c.h.b16 %v1444
  %v1520 = vunpack.c.l.b16 %v1445
  %v1521 = vunpack.c.h.b16 %v1445
  %v1522 = vunpack.c.l.b16 %v1446
  %v1523 = vunpack.c.h.b16 %v1446
  %v1524 = vunpack.c.l.b16 %v1447
  %v1525 = vunpack.c.h.b16 %v1447
  %v1526 = vunpack.c.l.b16 %v1448
  %v1527 = vunpack.c.h.b16 %v1448
  %v1528 = vunpack.c.l.b16 %v1449
  %v1529 = vunpack.c.h.b16 %v1449
  %v1530 = vunpack.c.l.b16 %v1450
  %v1531 = vunpack.c.h.b16 %v1450
  %v1532 = vunpack.c.l.b16 %v1451
  %v1533 = vunpack.c.h.b16 %v1451
  %v1534 = vunpack.c.l.b16 %v1452
  %v1535 = vunpack.c.h.b16 %v1452
  %v1536 = vunpack.c.l.b16 %v1453
  %v1537 = vunpack.c.h.b16 %v1453
  %v1538 = vunpack.c.l.b16 %v1454
  %v1539 = vunpack.c.h.b16 %v1454
  %v1540 = vunpack.c.l.b16 %v1455
  %v1541 = vunpack.c.h.b16 %v1455
  %v1542 = vunpack.c.l.b16 %v1456
  %v1543 = vunpack.c.h.b16 %v1456
  %v1544 = vunpack.c.l.b16 %v1457
  %v1545 = vunpack.c.h.b16 %v1457
  %v1546 = vunpack.c.l.b16 %v1458
  %v1547 = vunpack.c.h.b16 %v1458
  %v1548 = vunpack.c.l.b16 %v1459
  %v1549 = vunpack.c.h.b16 %v1459
  %v1550 = vunpack.c.l.b16 %v1460
  %v1551 = vunpack.c.h.b16 %v1460
  %v1552 = vunpack.c.l.b16 %v1461
  %v1553 = vunpack.c.h.b16 %v1461
  %v1554 = vunpack.c.l.b16 %v1462
  %v1555 = vunpack.c.h.b16 %v1462
  %v1556 = vunpack.c.l.b16 %v1463
  %v1557 = vunpack.c.h.b16 %v1463
  %v1558 = vunpack.c.l.b16 %v1464
  %v1559 = vunpack.c.h.b16 %v1464
  %v1560 = vunpack.c.l.b16 %v1465
  %v1561 = vunpack.c.h.b16 %v1465
  %v1562 = vpack.c.b16 %v1502, %v1498
  %v1563 = vpack.c.b16 %v1503, %v1499
  %v1564 = vpack.c.b16 %v1504, %v1500
  %v1565 = vpack.c.b16 %v1505, %v1501
  %v1566 = vpack.c.b16 %v1510, %v1506
  %v1567 = vpack.c.b16 %v1511, %v1507
  %v1568 = vpack.c.b16 %v1512, %v1508
  %v1569 = vpack.c.b16 %v1513, %v1509
  %v1570 = vpack.c.b16 %v1518, %v1514
  %v1571 = vpack.c.b16 %v1519, %v1515
  %v1572 = vpack.c.b16 %v1520, %v1516
  %v1573 = vpack.c.b16 %v1521, %v1517
  %v1574 = vpack.c.b16 %v1526, %v1522
  %v1575 = vpack.c.b16 %v1527, %v1523
  %v1576 = vpack.c.b16 %v1528, %v1524
  %v1577 = vpack.c.b16 %v1529, %v1525
  %v1578 = vpack.c.b16 %v1534, %v1530
  %v1579 = vpack.c.b16 %v1535, %v1531
  %v1580 = vpack.c.b16 %v1536, %v1532
  %v1581 = vpack.c.b16 %v1537, %v1533
  %v1582 = vpack.c.b16 %v1542, %v1538
  %v1583 = vpack.c.b16 %v1543, %v1539
  %v1584 = vpack.c.b16 %v1544, %v1540
  %v1585 = vpack.c.b16 %v1545, %v1541
  %v1586 = vpack.c.b16 %v1550, %v1546
  %v1587 = vpack.c.b16 %v1551, %v1547
  %v1588 = vpack.c.b16 %v1552, %v1548
  %v1589 = vpack.c.b16 %v1553, %v1549
  %v1590 = vpack.c.b16 %v1558, %v1554
  %v1591 = vpack.c.b16 %v1559, %v1555
  %v1592 = vpack.c.b16 %v1560, %v1556
  %v1593 = vpack.c.b16 %v1561, %v1557
  %1626 = vmatpush.bf16.msra.mxu0 %v1590
  %1627 = vmatpush.bf16.msra.mxu0 %v1586
  %1628 = vmatpush.bf16.msra.mxu0 %v1582
  %1629 = vmatpush.bf16.msra.mxu0 %v1578
  %1630 = vmatpush.bf16.msra.mxu0 %v1574
  %1631 = vmatpush.bf16.msra.mxu0 %v1570
  %1632 = vmatpush.bf16.msra.mxu0 %v1566
  %1633 = vmatpush.bf16.msra.mxu0 %v1562
  %1634 = vmatmul.bf16.gmra.mxu0 %v1433
  %v1635 = vpop.f32.mrf.mxu0
  %v1636 = vadd.f32 0.0, %v1635
  %v1637 = vpop.f32.mrf.mxu0
  %1638 = vdwg.mxu0
  %1639 = vmatpush.bf16.msra.mxu0 %v1591
  %1640 = vmatpush.bf16.msra.mxu0 %v1587
  %1641 = vmatpush.bf16.msra.mxu0 %v1583
  %1642 = vmatpush.bf16.msra.mxu0 %v1579
  %1643 = vmatpush.bf16.msra.mxu0 %v1575
  %1644 = vmatpush.bf16.msra.mxu0 %v1571
  %1645 = vmatpush.bf16.msra.mxu0 %v1567
  %1646 = vmatpush.bf16.msra.mxu0 %v1563
  %1647 = vmatmul.bf16.gmra.mxu0 %v1433
  %v1648 = vpop.f32.mrf.mxu0
  %v1649 = vadd.f32 0.0, %v1648
  %v1650 = vpop.f32.mrf.mxu0
  %1651 = vdwg.mxu0
  %1652 = vmatpush.bf16.msra.mxu0 %v1592
  %1653 = vmatpush.bf16.msra.mxu0 %v1588
  %1654 = vmatpush.bf16.msra.mxu0 %v1584
  %1655 = vmatpush.bf16.msra.mxu0 %v1580
  %1656 = vmatpush.bf16.msra.mxu0 %v1576
  %1657 = vmatpush.bf16.msra.mxu0 %v1572
  %1658 = vmatpush.bf16.msra.mxu0 %v1568
  %1659 = vmatpush.bf16.msra.mxu0 %v1564
  %1660 = vmatmul.bf16.gmra.mxu0 %v1433
  %v1661 = vpop.f32.mrf.mxu0
  %v1662 = vadd.f32 0.0, %v1661
  %v1663 = vpop.f32.mrf.mxu0
  %1664 = vdwg.mxu0
  %1665 = vmatpush.bf16.msra.mxu0 %v1593
  %1666 = vmatpush.bf16.msra.mxu0 %v1589
  %1667 = vmatpush.bf16.msra.mxu0 %v1585
  %1668 = vmatpush.bf16.msra.mxu0 %v1581
  %1669 = vmatpush.bf16.msra.mxu0 %v1577
  %1670 = vmatpush.bf16.msra.mxu0 %v1573
  %1671 = vmatpush.bf16.msra.mxu0 %v1569
  %1672 = vmatpush.bf16.msra.mxu0 %v1565
  %1673 = vmatmul.bf16.gmra.mxu0 %v1433
  %v1674 = vpop.f32.mrf.mxu0
  %v1675 = vadd.f32 0.0, %v1674
  %v1676 = vpop.f32.mrf.mxu0
  %1677 = vdwg.mxu0
  %v1678 = vadd.f32 %v1428, %v1636
  %v1679 = vadd.f32 %v1429, %v1649
  %v1680 = vadd.f32 %v1430, %v1662
  %v1681 = vadd.f32 %v1431, %v1675
  %v1682 = vld [vmem:[#allocation8] sm:$0xff]
  %v1683 = vxor.u32 %v1424, 2147483648
  %v1684 = vmul.f32 %v1683, 1.442695
  %v1685 = vpow.pop %v1684
  %v1686 = vadd.f32 %v1685, 1.0
  %v1687 = vrcp.pop %v1686
  %v1688 = vmul.f32 %v1686, %v1687
  %v1689 = vsub.f32 1.0, %v1688
  %v1690 = vmul.f32 %v1687, %v1689
  %v1691 = vadd.f32 %v1687, %v1690
  %vm1692 = vweird.f32 %v1686
  %vm1693 = vweird.f32 %v1687
  %vm1694 = vmor %vm1692, %vm1693
  %v1695 = vsel %vm1694, %v1687, %v1691
  %v1696 = vand.u32 2147483647, %v1686
  %vm1697 = vcmp.eq.f32.partialorder %v1696, 8.507059e+37
  %v1698 = vand.u32 %v1686, 2147483648
  %v1699 = vor.u32 1.1754944e-38, %v1698
  %v1700 = vsel %vm1697, %v1699, %v1695
  %v1701 = vmul.f32 1.0, %v1700
  %v1702 = vxor.u32 %v1425, 2147483648
  %v1703 = vmul.f32 %v1702, 1.442695
  %v1704 = vpow.pop %v1703
  %v1705 = vadd.f32 %v1704, 1.0
  %v1706 = vrcp.pop %v1705
  %v1707 = vmul.f32 %v1705, %v1706
  %v1708 = vsub.f32 1.0, %v1707
  %v1709 = vmul.f32 %v1706, %v1708
  %v1710 = vadd.f32 %v1706, %v1709
  %vm1711 = vweird.f32 %v1705
  %vm1712 = vweird.f32 %v1706
  %vm1713 = vmor %vm1711, %vm1712
  %v1714 = vsel %vm1713, %v1706, %v1710
  %v1715 = vand.u32 2147483647, %v1705
  %vm1716 = vcmp.eq.f32.partialorder %v1715, 8.507059e+37
  %v1717 = vand.u32 %v1705, 2147483648
  %v1718 = vor.u32 1.1754944e-38, %v1717
  %v1719 = vsel %vm1716, %v1718, %v1714
  %v1720 = vmul.f32 1.0, %v1719
  %v1721 = vtanh.pop %v1426
  %v1722 = vxor.u32 %v1427, 2147483648
  %v1723 = vmul.f32 %v1722, 1.442695
  %v1724 = vpow.pop %v1723
  %v1725 = vadd.f32 %v1724, 1.0
  %v1726 = vrcp.pop %v1725
  %v1727 = vmul.f32 %v1725, %v1726
  %v1728 = vsub.f32 1.0, %v1727
  %v1729 = vmul.f32 %v1726, %v1728
  %v1730 = vadd.f32 %v1726, %v1729
  %vm1731 = vweird.f32 %v1725
  %vm1732 = vweird.f32 %v1726
  %vm1733 = vmor %vm1731, %vm1732
  %v1734 = vsel %vm1733, %v1726, %v1730
  %v1735 = vand.u32 2147483647, %v1725
  %vm1736 = vcmp.eq.f32.partialorder %v1735, 8.507059e+37
  %v1737 = vand.u32 %v1725, 2147483648
  %v1738 = vor.u32 1.1754944e-38, %v1737
  %v1739 = vsel %vm1736, %v1738, %v1734
  %v1740 = vmul.f32 1.0, %v1739
  %v1741 = vmul.f32 %v1720, %v1682
  %v1742 = vmul.f32 %v1701, %v1721
  %v1743 = vadd.f32 %v1741, %v1742
  %v1744 = vtanh.pop %v1743
  %v1745 = vmul.f32 %v1740, %v1744
  %v1746 = vld [vmem:[#allocation10] sm:$0xff]
  %v1747 = vxor.u32 %v1678, 2147483648
  %v1748 = vmul.f32 %v1747, 1.442695
  %v1749 = vpow.pop %v1748
  %v1750 = vadd.f32 %v1749, 1.0
  %v1751 = vrcp.pop %v1750
  %v1752 = vmul.f32 %v1750, %v1751
  %v1753 = vsub.f32 1.0, %v1752
  %v1754 = vmul.f32 %v1751, %v1753
  %v1755 = vadd.f32 %v1751, %v1754
  %vm1756 = vweird.f32 %v1750
  %vm1757 = vweird.f32 %v1751
  %vm1758 = vmor %vm1756, %vm1757
  %v1759 = vsel %vm1758, %v1751, %v1755
  %v1760 = vand.u32 2147483647, %v1750
  %vm1761 = vcmp.eq.f32.partialorder %v1760, 8.507059e+37
  %v1762 = vand.u32 %v1750, 2147483648
  %v1763 = vor.u32 1.1754944e-38, %v1762
  %v1764 = vsel %vm1761, %v1763, %v1759
  %v1765 = vmul.f32 1.0, %v1764
  %v1766 = vxor.u32 %v1679, 2147483648
  %v1767 = vmul.f32 %v1766, 1.442695
  %v1768 = vpow.pop %v1767
  %v1769 = vadd.f32 %v1768, 1.0
  %v1770 = vrcp.pop %v1769
  %v1771 = vmul.f32 %v1769, %v1770
  %v1772 = vsub.f32 1.0, %v1771
  %v1773 = vmul.f32 %v1770, %v1772
  %v1774 = vadd.f32 %v1770, %v1773
  %vm1775 = vweird.f32 %v1769
  %vm1776 = vweird.f32 %v1770
  %vm1777 = vmor %vm1775, %vm1776
  %v1778 = vsel %vm1777, %v1770, %v1774
  %v1779 = vand.u32 2147483647, %v1769
  %vm1780 = vcmp.eq.f32.partialorder %v1779, 8.507059e+37
  %v1781 = vand.u32 %v1769, 2147483648
  %v1782 = vor.u32 1.1754944e-38, %v1781
  %v1783 = vsel %vm1780, %v1782, %v1778
  %v1784 = vmul.f32 1.0, %v1783
  %v1785 = vtanh.pop %v1680
  %v1786 = vxor.u32 %v1681, 2147483648
  %v1787 = vmul.f32 %v1786, 1.442695
  %v1788 = vpow.pop %v1787
  %v1789 = vadd.f32 %v1788, 1.0
  %v1790 = vrcp.pop %v1789
  %v1791 = vmul.f32 %v1789, %v1790
  %v1792 = vsub.f32 1.0, %v1791
  %v1793 = vmul.f32 %v1790, %v1792
  %v1794 = vadd.f32 %v1790, %v1793
  %vm1795 = vweird.f32 %v1789
  %vm1796 = vweird.f32 %v1790
  %vm1797 = vmor %vm1795, %vm1796
  %v1798 = vsel %vm1797, %v1790, %v1794
  %v1799 = vand.u32 2147483647, %v1789
  %vm1800 = vcmp.eq.f32.partialorder %v1799, 8.507059e+37
  %v1801 = vand.u32 %v1789, 2147483648
  %v1802 = vor.u32 1.1754944e-38, %v1801
  %v1803 = vsel %vm1800, %v1802, %v1798
  %v1804 = vmul.f32 1.0, %v1803
  %v1805 = vmul.f32 %v1784, %v1746
  %v1806 = vmul.f32 %v1765, %v1785
  %v1807 = vadd.f32 %v1805, %v1806
  %v1808 = vtanh.pop %v1807
  %v1809 = vmul.f32 %v1804, %v1808
  %1810 = vst [vmem:[#allocation7] sm:$0xff] %v1745
  %1811 = vst [vmem:[#allocation8] sm:$0xff] %v1743
  %1812 = vst [vmem:[#allocation9] sm:$0xff] %v1809
  %1813 = vst [vmem:[#allocation10] sm:$0xff] %v1807
  %1814 = vst [vmem:[#allocation5 + $0x8] sm:$0xff] %v1745
  %1815 = vst [vmem:[#allocation6 + $0x30] sm:$0xff] %v1809
  %v1816 = vld [vmem:[#allocation2 + $0x40] sm:$0xff]
  %v1817 = vld [vmem:[#allocation2 + $0x48] sm:$0xff]
  %v1818 = vld [vmem:[#allocation2 + $0x50] sm:$0xff]
  %v1819 = vld [vmem:[#allocation2 + $0x58] sm:$0xff]
  %v1820 = vld [vmem:[#allocation7] sm:$0xff]
  %v1821 = vpack.c.bf16 %v1820, %v1820
  %v1822 = vld [vmem:[%s2] sm:$0xff]
  %v1823 = vld [vmem:[%s2 + $0x8] sm:$0xff]
  %v1824 = vld [vmem:[%s2 + $0x10] sm:$0xff]
  %v1825 = vld [vmem:[%s2 + $0x18] sm:$0xff]
  %v1826 = vld [vmem:[%s2 + $0x20] sm:$0xff]
  %v1827 = vld [vmem:[%s2 + $0x28] sm:$0xff]
  %v1828 = vld [vmem:[%s2 + $0x30] sm:$0xff]
  %v1829 = vld [vmem:[%s2 + $0x38] sm:$0xff]
  %v1830 = vld [vmem:[%s2 + $0x40] sm:$0xff]
  %v1831 = vld [vmem:[%s2 + $0x48] sm:$0xff]
  %v1832 = vld [vmem:[%s2 + $0x50] sm:$0xff]
  %v1833 = vld [vmem:[%s2 + $0x58] sm:$0xff]
  %v1834 = vld [vmem:[%s2 + $0x60] sm:$0xff]
  %v1835 = vld [vmem:[%s2 + $0x68] sm:$0xff]
  %v1836 = vld [vmem:[%s2 + $0x70] sm:$0xff]
  %v1837 = vld [vmem:[%s2 + $0x78] sm:$0xff]
  %v1838 = vld [vmem:[%s2 + $0x80] sm:$0xff]
  %v1839 = vld [vmem:[%s2 + $0x88] sm:$0xff]
  %v1840 = vld [vmem:[%s2 + $0x90] sm:$0xff]
  %v1841 = vld [vmem:[%s2 + $0x98] sm:$0xff]
  %v1842 = vld [vmem:[%s2 + $0xa0] sm:$0xff]
  %v1843 = vld [vmem:[%s2 + $0xa8] sm:$0xff]
  %v1844 = vld [vmem:[%s2 + $0xb0] sm:$0xff]
  %v1845 = vld [vmem:[%s2 + $0xb8] sm:$0xff]
  %v1846 = vld [vmem:[%s2 + $0xc0] sm:$0xff]
  %v1847 = vld [vmem:[%s2 + $0xc8] sm:$0xff]
  %v1848 = vld [vmem:[%s2 + $0xd0] sm:$0xff]
  %v1849 = vld [vmem:[%s2 + $0xd8] sm:$0xff]
  %v1850 = vld [vmem:[%s2 + $0xe0] sm:$0xff]
  %v1851 = vld [vmem:[%s2 + $0xe8] sm:$0xff]
  %v1852 = vld [vmem:[%s2 + $0xf0] sm:$0xff]
  %v1853 = vld [vmem:[%s2 + $0xf8] sm:$0xff]
  %v1886 = vunpack.c.l.b16 %v1822
  %v1887 = vunpack.c.h.b16 %v1822
  %v1888 = vunpack.c.l.b16 %v1823
  %v1889 = vunpack.c.h.b16 %v1823
  %v1890 = vunpack.c.l.b16 %v1824
  %v1891 = vunpack.c.h.b16 %v1824
  %v1892 = vunpack.c.l.b16 %v1825
  %v1893 = vunpack.c.h.b16 %v1825
  %v1894 = vunpack.c.l.b16 %v1826
  %v1895 = vunpack.c.h.b16 %v1826
  %v1896 = vunpack.c.l.b16 %v1827
  %v1897 = vunpack.c.h.b16 %v1827
  %v1898 = vunpack.c.l.b16 %v1828
  %v1899 = vunpack.c.h.b16 %v1828
  %v1900 = vunpack.c.l.b16 %v1829
  %v1901 = vunpack.c.h.b16 %v1829
  %v1902 = vunpack.c.l.b16 %v1830
  %v1903 = vunpack.c.h.b16 %v1830
  %v1904 = vunpack.c.l.b16 %v1831
  %v1905 = vunpack.c.h.b16 %v1831
  %v1906 = vunpack.c.l.b16 %v1832
  %v1907 = vunpack.c.h.b16 %v1832
  %v1908 = vunpack.c.l.b16 %v1833
  %v1909 = vunpack.c.h.b16 %v1833
  %v1910 = vunpack.c.l.b16 %v1834
  %v1911 = vunpack.c.h.b16 %v1834
  %v1912 = vunpack.c.l.b16 %v1835
  %v1913 = vunpack.c.h.b16 %v1835
  %v1914 = vunpack.c.l.b16 %v1836
  %v1915 = vunpack.c.h.b16 %v1836
  %v1916 = vunpack.c.l.b16 %v1837
  %v1917 = vunpack.c.h.b16 %v1837
  %v1918 = vunpack.c.l.b16 %v1838
  %v1919 = vunpack.c.h.b16 %v1838
  %v1920 = vunpack.c.l.b16 %v1839
  %v1921 = vunpack.c.h.b16 %v1839
  %v1922 = vunpack.c.l.b16 %v1840
  %v1923 = vunpack.c.h.b16 %v1840
  %v1924 = vunpack.c.l.b16 %v1841
  %v1925 = vunpack.c.h.b16 %v1841
  %v1926 = vunpack.c.l.b16 %v1842
  %v1927 = vunpack.c.h.b16 %v1842
  %v1928 = vunpack.c.l.b16 %v1843
  %v1929 = vunpack.c.h.b16 %v1843
  %v1930 = vunpack.c.l.b16 %v1844
  %v1931 = vunpack.c.h.b16 %v1844
  %v1932 = vunpack.c.l.b16 %v1845
  %v1933 = vunpack.c.h.b16 %v1845
  %v1934 = vunpack.c.l.b16 %v1846
  %v1935 = vunpack.c.h.b16 %v1846
  %v1936 = vunpack.c.l.b16 %v1847
  %v1937 = vunpack.c.h.b16 %v1847
  %v1938 = vunpack.c.l.b16 %v1848
  %v1939 = vunpack.c.h.b16 %v1848
  %v1940 = vunpack.c.l.b16 %v1849
  %v1941 = vunpack.c.h.b16 %v1849
  %v1942 = vunpack.c.l.b16 %v1850
  %v1943 = vunpack.c.h.b16 %v1850
  %v1944 = vunpack.c.l.b16 %v1851
  %v1945 = vunpack.c.h.b16 %v1851
  %v1946 = vunpack.c.l.b16 %v1852
  %v1947 = vunpack.c.h.b16 %v1852
  %v1948 = vunpack.c.l.b16 %v1853
  %v1949 = vunpack.c.h.b16 %v1853
  %v1950 = vpack.c.b16 %v1890, %v1886
  %v1951 = vpack.c.b16 %v1891, %v1887
  %v1952 = vpack.c.b16 %v1892, %v1888
  %v1953 = vpack.c.b16 %v1893, %v1889
  %v1954 = vpack.c.b16 %v1898, %v1894
  %v1955 = vpack.c.b16 %v1899, %v1895
  %v1956 = vpack.c.b16 %v1900, %v1896
  %v1957 = vpack.c.b16 %v1901, %v1897
  %v1958 = vpack.c.b16 %v1906, %v1902
  %v1959 = vpack.c.b16 %v1907, %v1903
  %v1960 = vpack.c.b16 %v1908, %v1904
  %v1961 = vpack.c.b16 %v1909, %v1905
  %v1962 = vpack.c.b16 %v1914, %v1910
  %v1963 = vpack.c.b16 %v1915, %v1911
  %v1964 = vpack.c.b16 %v1916, %v1912
  %v1965 = vpack.c.b16 %v1917, %v1913
  %v1966 = vpack.c.b16 %v1922, %v1918
  %v1967 = vpack.c.b16 %v1923, %v1919
  %v1968 = vpack.c.b16 %v1924, %v1920
  %v1969 = vpack.c.b16 %v1925, %v1921
  %v1970 = vpack.c.b16 %v1930, %v1926
  %v1971 = vpack.c.b16 %v1931, %v1927
  %v1972 = vpack.c.b16 %v1932, %v1928
  %v1973 = vpack.c.b16 %v1933, %v1929
  %v1974 = vpack.c.b16 %v1938, %v1934
  %v1975 = vpack.c.b16 %v1939, %v1935
  %v1976 = vpack.c.b16 %v1940, %v1936
  %v1977 = vpack.c.b16 %v1941, %v1937
  %v1978 = vpack.c.b16 %v1946, %v1942
  %v1979 = vpack.c.b16 %v1947, %v1943
  %v1980 = vpack.c.b16 %v1948, %v1944
  %v1981 = vpack.c.b16 %v1949, %v1945
  %2014 = vmatpush.bf16.msra.mxu0 %v1978
  %2015 = vmatpush.bf16.msra.mxu0 %v1974
  %2016 = vmatpush.bf16.msra.mxu0 %v1970
  %2017 = vmatpush.bf16.msra.mxu0 %v1966
  %2018 = vmatpush.bf16.msra.mxu0 %v1962
  %2019 = vmatpush.bf16.msra.mxu0 %v1958
  %2020 = vmatpush.bf16.msra.mxu0 %v1954
  %2021 = vmatpush.bf16.msra.mxu0 %v1950
  %2022 = vmatmul.bf16.gmra.mxu0 %v1821
  %v2023 = vpop.f32.mrf.mxu0
  %v2024 = vadd.f32 0.0, %v2023
  %v2025 = vpop.f32.mrf.mxu0
  %2026 = vdwg.mxu0
  %2027 = vmatpush.bf16.msra.mxu0 %v1979
  %2028 = vmatpush.bf16.msra.mxu0 %v1975
  %2029 = vmatpush.bf16.msra.mxu0 %v1971
  %2030 = vmatpush.bf16.msra.mxu0 %v1967
  %2031 = vmatpush.bf16.msra.mxu0 %v1963
  %2032 = vmatpush.bf16.msra.mxu0 %v1959
  %2033 = vmatpush.bf16.msra.mxu0 %v1955
  %2034 = vmatpush.bf16.msra.mxu0 %v1951
  %2035 = vmatmul.bf16.gmra.mxu0 %v1821
  %v2036 = vpop.f32.mrf.mxu0
  %v2037 = vadd.f32 0.0, %v2036
  %v2038 = vpop.f32.mrf.mxu0
  %2039 = vdwg.mxu0
  %2040 = vmatpush.bf16.msra.mxu0 %v1980
  %2041 = vmatpush.bf16.msra.mxu0 %v1976
  %2042 = vmatpush.bf16.msra.mxu0 %v1972
  %2043 = vmatpush.bf16.msra.mxu0 %v1968
  %2044 = vmatpush.bf16.msra.mxu0 %v1964
  %2045 = vmatpush.bf16.msra.mxu0 %v1960
  %2046 = vmatpush.bf16.msra.mxu0 %v1956
  %2047 = vmatpush.bf16.msra.mxu0 %v1952
  %2048 = vmatmul.bf16.gmra.mxu0 %v1821
  %v2049 = vpop.f32.mrf.mxu0
  %v2050 = vadd.f32 0.0, %v2049
  %v2051 = vpop.f32.mrf.mxu0
  %2052 = vdwg.mxu0
  %2053 = vmatpush.bf16.msra.mxu0 %v1981
  %2054 = vmatpush.bf16.msra.mxu0 %v1977
  %2055 = vmatpush.bf16.msra.mxu0 %v1973
  %2056 = vmatpush.bf16.msra.mxu0 %v1969
  %2057 = vmatpush.bf16.msra.mxu0 %v1965
  %2058 = vmatpush.bf16.msra.mxu0 %v1961
  %2059 = vmatpush.bf16.msra.mxu0 %v1957
  %2060 = vmatpush.bf16.msra.mxu0 %v1953
  %2061 = vmatmul.bf16.gmra.mxu0 %v1821
  %v2062 = vpop.f32.mrf.mxu0
  %v2063 = vadd.f32 0.0, %v2062
  %v2064 = vpop.f32.mrf.mxu0
  %2065 = vdwg.mxu0
  %v2066 = vadd.f32 %v1816, %v2024
  %v2067 = vadd.f32 %v1817, %v2037
  %v2068 = vadd.f32 %v1818, %v2050
  %v2069 = vadd.f32 %v1819, %v2063
  %v2070 = vld [vmem:[#allocation3 + $0xa0] sm:$0xff]
  %v2071 = vld [vmem:[#allocation3 + $0xa8] sm:$0xff]
  %v2072 = vld [vmem:[#allocation3 + $0xb0] sm:$0xff]
  %v2073 = vld [vmem:[#allocation3 + $0xb8] sm:$0xff]
  %v2074 = vld [vmem:[#allocation9] sm:$0xff]
  %v2075 = vpack.c.bf16 %v2074, %v2074
  %v2076 = vld [vmem:[%s5] sm:$0xff]
  %v2077 = vld [vmem:[%s5 + $0x8] sm:$0xff]
  %v2078 = vld [vmem:[%s5 + $0x10] sm:$0xff]
  %v2079 = vld [vmem:[%s5 + $0x18] sm:$0xff]
  %v2080 = vld [vmem:[%s5 + $0x20] sm:$0xff]
  %v2081 = vld [vmem:[%s5 + $0x28] sm:$0xff]
  %v2082 = vld [vmem:[%s5 + $0x30] sm:$0xff]
  %v2083 = vld [vmem:[%s5 + $0x38] sm:$0xff]
  %v2084 = vld [vmem:[%s5 + $0x40] sm:$0xff]
  %v2085 = vld [vmem:[%s5 + $0x48] sm:$0xff]
  %v2086 = vld [vmem:[%s5 + $0x50] sm:$0xff]
  %v2087 = vld [vmem:[%s5 + $0x58] sm:$0xff]
  %v2088 = vld [vmem:[%s5 + $0x60] sm:$0xff]
  %v2089 = vld [vmem:[%s5 + $0x68] sm:$0xff]
  %v2090 = vld [vmem:[%s5 + $0x70] sm:$0xff]
  %v2091 = vld [vmem:[%s5 + $0x78] sm:$0xff]
  %v2092 = vld [vmem:[%s5 + $0x80] sm:$0xff]
  %v2093 = vld [vmem:[%s5 + $0x88] sm:$0xff]
  %v2094 = vld [vmem:[%s5 + $0x90] sm:$0xff]
  %v2095 = vld [vmem:[%s5 + $0x98] sm:$0xff]
  %v2096 = vld [vmem:[%s5 + $0xa0] sm:$0xff]
  %v2097 = vld [vmem:[%s5 + $0xa8] sm:$0xff]
  %v2098 = vld [vmem:[%s5 + $0xb0] sm:$0xff]
  %v2099 = vld [vmem:[%s5 + $0xb8] sm:$0xff]
  %v2100 = vld [vmem:[%s5 + $0xc0] sm:$0xff]
  %v2101 = vld [vmem:[%s5 + $0xc8] sm:$0xff]
  %v2102 = vld [vmem:[%s5 + $0xd0] sm:$0xff]
  %v2103 = vld [vmem:[%s5 + $0xd8] sm:$0xff]
  %v2104 = vld [vmem:[%s5 + $0xe0] sm:$0xff]
  %v2105 = vld [vmem:[%s5 + $0xe8] sm:$0xff]
  %v2106 = vld [vmem:[%s5 + $0xf0] sm:$0xff]
  %v2107 = vld [vmem:[%s5 + $0xf8] sm:$0xff]
  %v2140 = vunpack.c.l.b16 %v2076
  %v2141 = vunpack.c.h.b16 %v2076
  %v2142 = vunpack.c.l.b16 %v2077
  %v2143 = vunpack.c.h.b16 %v2077
  %v2144 = vunpack.c.l.b16 %v2078
  %v2145 = vunpack.c.h.b16 %v2078
  %v2146 = vunpack.c.l.b16 %v2079
  %v2147 = vunpack.c.h.b16 %v2079
  %v2148 = vunpack.c.l.b16 %v2080
  %v2149 = vunpack.c.h.b16 %v2080
  %v2150 = vunpack.c.l.b16 %v2081
  %v2151 = vunpack.c.h.b16 %v2081
  %v2152 = vunpack.c.l.b16 %v2082
  %v2153 = vunpack.c.h.b16 %v2082
  %v2154 = vunpack.c.l.b16 %v2083
  %v2155 = vunpack.c.h.b16 %v2083
  %v2156 = vunpack.c.l.b16 %v2084
  %v2157 = vunpack.c.h.b16 %v2084
  %v2158 = vunpack.c.l.b16 %v2085
  %v2159 = vunpack.c.h.b16 %v2085
  %v2160 = vunpack.c.l.b16 %v2086
  %v2161 = vunpack.c.h.b16 %v2086
  %v2162 = vunpack.c.l.b16 %v2087
  %v2163 = vunpack.c.h.b16 %v2087
  %v2164 = vunpack.c.l.b16 %v2088
  %v2165 = vunpack.c.h.b16 %v2088
  %v2166 = vunpack.c.l.b16 %v2089
  %v2167 = vunpack.c.h.b16 %v2089
  %v2168 = vunpack.c.l.b16 %v2090
  %v2169 = vunpack.c.h.b16 %v2090
  %v2170 = vunpack.c.l.b16 %v2091
  %v2171 = vunpack.c.h.b16 %v2091
  %v2172 = vunpack.c.l.b16 %v2092
  %v2173 = vunpack.c.h.b16 %v2092
  %v2174 = vunpack.c.l.b16 %v2093
  %v2175 = vunpack.c.h.b16 %v2093
  %v2176 = vunpack.c.l.b16 %v2094
  %v2177 = vunpack.c.h.b16 %v2094
  %v2178 = vunpack.c.l.b16 %v2095
  %v2179 = vunpack.c.h.b16 %v2095
  %v2180 = vunpack.c.l.b16 %v2096
  %v2181 = vunpack.c.h.b16 %v2096
  %v2182 = vunpack.c.l.b16 %v2097
  %v2183 = vunpack.c.h.b16 %v2097
  %v2184 = vunpack.c.l.b16 %v2098
  %v2185 = vunpack.c.h.b16 %v2098
  %v2186 = vunpack.c.l.b16 %v2099
  %v2187 = vunpack.c.h.b16 %v2099
  %v2188 = vunpack.c.l.b16 %v2100
  %v2189 = vunpack.c.h.b16 %v2100
  %v2190 = vunpack.c.l.b16 %v2101
  %v2191 = vunpack.c.h.b16 %v2101
  %v2192 = vunpack.c.l.b16 %v2102
  %v2193 = vunpack.c.h.b16 %v2102
  %v2194 = vunpack.c.l.b16 %v2103
  %v2195 = vunpack.c.h.b16 %v2103
  %v2196 = vunpack.c.l.b16 %v2104
  %v2197 = vunpack.c.h.b16 %v2104
  %v2198 = vunpack.c.l.b16 %v2105
  %v2199 = vunpack.c.h.b16 %v2105
  %v2200 = vunpack.c.l.b16 %v2106
  %v2201 = vunpack.c.h.b16 %v2106
  %v2202 = vunpack.c.l.b16 %v2107
  %v2203 = vunpack.c.h.b16 %v2107
  %v2204 = vpack.c.b16 %v2144, %v2140
  %v2205 = vpack.c.b16 %v2145, %v2141
  %v2206 = vpack.c.b16 %v2146, %v2142
  %v2207 = vpack.c.b16 %v2147, %v2143
  %v2208 = vpack.c.b16 %v2152, %v2148
  %v2209 = vpack.c.b16 %v2153, %v2149
  %v2210 = vpack.c.b16 %v2154, %v2150
  %v2211 = vpack.c.b16 %v2155, %v2151
  %v2212 = vpack.c.b16 %v2160, %v2156
  %v2213 = vpack.c.b16 %v2161, %v2157
  %v2214 = vpack.c.b16 %v2162, %v2158
  %v2215 = vpack.c.b16 %v2163, %v2159
  %v2216 = vpack.c.b16 %v2168, %v2164
  %v2217 = vpack.c.b16 %v2169, %v2165
  %v2218 = vpack.c.b16 %v2170, %v2166
  %v2219 = vpack.c.b16 %v2171, %v2167
  %v2220 = vpack.c.b16 %v2176, %v2172
  %v2221 = vpack.c.b16 %v2177, %v2173
  %v2222 = vpack.c.b16 %v2178, %v2174
  %v2223 = vpack.c.b16 %v2179, %v2175
  %v2224 = vpack.c.b16 %v2184, %v2180
  %v2225 = vpack.c.b16 %v2185, %v2181
  %v2226 = vpack.c.b16 %v2186, %v2182
  %v2227 = vpack.c.b16 %v2187, %v2183
  %v2228 = vpack.c.b16 %v2192, %v2188
  %v2229 = vpack.c.b16 %v2193, %v2189
  %v2230 = vpack.c.b16 %v2194, %v2190
  %v2231 = vpack.c.b16 %v2195, %v2191
  %v2232 = vpack.c.b16 %v2200, %v2196
  %v2233 = vpack.c.b16 %v2201, %v2197
  %v2234 = vpack.c.b16 %v2202, %v2198
  %v2235 = vpack.c.b16 %v2203, %v2199
  %2268 = vmatpush.bf16.msra.mxu0 %v2232
  %2269 = vmatpush.bf16.msra.mxu0 %v2228
  %2270 = vmatpush.bf16.msra.mxu0 %v2224
  %2271 = vmatpush.bf16.msra.mxu0 %v2220
  %2272 = vmatpush.bf16.msra.mxu0 %v2216
  %2273 = vmatpush.bf16.msra.mxu0 %v2212
  %2274 = vmatpush.bf16.msra.mxu0 %v2208
  %2275 = vmatpush.bf16.msra.mxu0 %v2204
  %2276 = vmatmul.bf16.gmra.mxu0 %v2075
  %v2277 = vpop.f32.mrf.mxu0
  %v2278 = vadd.f32 0.0, %v2277
  %v2279 = vpop.f32.mrf.mxu0
  %2280 = vdwg.mxu0
  %2281 = vmatpush.bf16.msra.mxu0 %v2233
  %2282 = vmatpush.bf16.msra.mxu0 %v2229
  %2283 = vmatpush.bf16.msra.mxu0 %v2225
  %2284 = vmatpush.bf16.msra.mxu0 %v2221
  %2285 = vmatpush.bf16.msra.mxu0 %v2217
  %2286 = vmatpush.bf16.msra.mxu0 %v2213
  %2287 = vmatpush.bf16.msra.mxu0 %v2209
  %2288 = vmatpush.bf16.msra.mxu0 %v2205
  %2289 = vmatmul.bf16.gmra.mxu0 %v2075
  %v2290 = vpop.f32.mrf.mxu0
  %v2291 = vadd.f32 0.0, %v2290
  %v2292 = vpop.f32.mrf.mxu0
  %2293 = vdwg.mxu0
  %2294 = vmatpush.bf16.msra.mxu0 %v2234
  %2295 = vmatpush.bf16.msra.mxu0 %v2230
  %2296 = vmatpush.bf16.msra.mxu0 %v2226
  %2297 = vmatpush.bf16.msra.mxu0 %v2222
  %2298 = vmatpush.bf16.msra.mxu0 %v2218
  %2299 = vmatpush.bf16.msra.mxu0 %v2214
  %2300 = vmatpush.bf16.msra.mxu0 %v2210
  %2301 = vmatpush.bf16.msra.mxu0 %v2206
  %2302 = vmatmul.bf16.gmra.mxu0 %v2075
  %v2303 = vpop.f32.mrf.mxu0
  %v2304 = vadd.f32 0.0, %v2303
  %v2305 = vpop.f32.mrf.mxu0
  %2306 = vdwg.mxu0
  %2307 = vmatpush.bf16.msra.mxu0 %v2235
  %2308 = vmatpush.bf16.msra.mxu0 %v2231
  %2309 = vmatpush.bf16.msra.mxu0 %v2227
  %2310 = vmatpush.bf16.msra.mxu0 %v2223
  %2311 = vmatpush.bf16.msra.mxu0 %v2219
  %2312 = vmatpush.bf16.msra.mxu0 %v2215
  %2313 = vmatpush.bf16.msra.mxu0 %v2211
  %2314 = vmatpush.bf16.msra.mxu0 %v2207
  %2315 = vmatmul.bf16.gmra.mxu0 %v2075
  %v2316 = vpop.f32.mrf.mxu0
  %v2317 = vadd.f32 0.0, %v2316
  %v2318 = vpop.f32.mrf.mxu0
  %2319 = vdwg.mxu0
  %v2320 = vadd.f32 %v2070, %v2278
  %v2321 = vadd.f32 %v2071, %v2291
  %v2322 = vadd.f32 %v2072, %v2304
  %v2323 = vadd.f32 %v2073, %v2317
  %v2324 = vld [vmem:[#allocation8] sm:$0xff]
  %v2325 = vxor.u32 %v2066, 2147483648
  %v2326 = vmul.f32 %v2325, 1.442695
  %v2327 = vpow.pop %v2326
  %v2328 = vadd.f32 %v2327, 1.0
  %v2329 = vrcp.pop %v2328
  %v2330 = vmul.f32 %v2328, %v2329
  %v2331 = vsub.f32 1.0, %v2330
  %v2332 = vmul.f32 %v2329, %v2331
  %v2333 = vadd.f32 %v2329, %v2332
  %vm2334 = vweird.f32 %v2328
  %vm2335 = vweird.f32 %v2329
  %vm2336 = vmor %vm2334, %vm2335
  %v2337 = vsel %vm2336, %v2329, %v2333
  %v2338 = vand.u32 2147483647, %v2328
  %vm2339 = vcmp.eq.f32.partialorder %v2338, 8.507059e+37
  %v2340 = vand.u32 %v2328, 2147483648
  %v2341 = vor.u32 1.1754944e-38, %v2340
  %v2342 = vsel %vm2339, %v2341, %v2337
  %v2343 = vmul.f32 1.0, %v2342
  %v2344 = vxor.u32 %v2067, 2147483648
  %v2345 = vmul.f32 %v2344, 1.442695
  %v2346 = vpow.pop %v2345
  %v2347 = vadd.f32 %v2346, 1.0
  %v2348 = vrcp.pop %v2347
  %v2349 = vmul.f32 %v2347, %v2348
  %v2350 = vsub.f32 1.0, %v2349
  %v2351 = vmul.f32 %v2348, %v2350
  %v2352 = vadd.f32 %v2348, %v2351
  %vm2353 = vweird.f32 %v2347
  %vm2354 = vweird.f32 %v2348
  %vm2355 = vmor %vm2353, %vm2354
  %v2356 = vsel %vm2355, %v2348, %v2352
  %v2357 = vand.u32 2147483647, %v2347
  %vm2358 = vcmp.eq.f32.partialorder %v2357, 8.507059e+37
  %v2359 = vand.u32 %v2347, 2147483648
  %v2360 = vor.u32 1.1754944e-38, %v2359
  %v2361 = vsel %vm2358, %v2360, %v2356
  %v2362 = vmul.f32 1.0, %v2361
  %v2363 = vtanh.pop %v2068
  %v2364 = vxor.u32 %v2069, 2147483648
  %v2365 = vmul.f32 %v2364, 1.442695
  %v2366 = vpow.pop %v2365
  %v2367 = vadd.f32 %v2366, 1.0
  %v2368 = vrcp.pop %v2367
  %v2369 = vmul.f32 %v2367, %v2368
  %v2370 = vsub.f32 1.0, %v2369
  %v2371 = vmul.f32 %v2368, %v2370
  %v2372 = vadd.f32 %v2368, %v2371
  %vm2373 = vweird.f32 %v2367
  %vm2374 = vweird.f32 %v2368
  %vm2375 = vmor %vm2373, %vm2374
  %v2376 = vsel %vm2375, %v2368, %v2372
  %v2377 = vand.u32 2147483647, %v2367
  %vm2378 = vcmp.eq.f32.partialorder %v2377, 8.507059e+37
  %v2379 = vand.u32 %v2367, 2147483648
  %v2380 = vor.u32 1.1754944e-38, %v2379
  %v2381 = vsel %vm2378, %v2380, %v2376
  %v2382 = vmul.f32 1.0, %v2381
  %v2383 = vmul.f32 %v2362, %v2324
  %v2384 = vmul.f32 %v2343, %v2363
  %v2385 = vadd.f32 %v2383, %v2384
  %v2386 = vtanh.pop %v2385
  %v2387 = vmul.f32 %v2382, %v2386
  %v2388 = vld [vmem:[#allocation10] sm:$0xff]
  %v2389 = vxor.u32 %v2320, 2147483648
  %v2390 = vmul.f32 %v2389, 1.442695
  %v2391 = vpow.pop %v2390
  %v2392 = vadd.f32 %v2391, 1.0
  %v2393 = vrcp.pop %v2392
  %v2394 = vmul.f32 %v2392, %v2393
  %v2395 = vsub.f32 1.0, %v2394
  %v2396 = vmul.f32 %v2393, %v2395
  %v2397 = vadd.f32 %v2393, %v2396
  %vm2398 = vweird.f32 %v2392
  %vm2399 = vweird.f32 %v2393
  %vm2400 = vmor %vm2398, %vm2399
  %v2401 = vsel %vm2400, %v2393, %v2397
  %v2402 = vand.u32 2147483647, %v2392
  %vm2403 = vcmp.eq.f32.partialorder %v2402, 8.507059e+37
  %v2404 = vand.u32 %v2392, 2147483648
  %v2405 = vor.u32 1.1754944e-38, %v2404
  %v2406 = vsel %vm2403, %v2405, %v2401
  %v2407 = vmul.f32 1.0, %v2406
  %v2408 = vxor.u32 %v2321, 2147483648
  %v2409 = vmul.f32 %v2408, 1.442695
  %v2410 = vpow.pop %v2409
  %v2411 = vadd.f32 %v2410, 1.0
  %v2412 = vrcp.pop %v2411
  %v2413 = vmul.f32 %v2411, %v2412
  %v2414 = vsub.f32 1.0, %v2413
  %v2415 = vmul.f32 %v2412, %v2414
  %v2416 = vadd.f32 %v2412, %v2415
  %vm2417 = vweird.f32 %v2411
  %vm2418 = vweird.f32 %v2412
  %vm2419 = vmor %vm2417, %vm2418
  %v2420 = vsel %vm2419, %v2412, %v2416
  %v2421 = vand.u32 2147483647, %v2411
  %vm2422 = vcmp.eq.f32.partialorder %v2421, 8.507059e+37
  %v2423 = vand.u32 %v2411, 2147483648
  %v2424 = vor.u32 1.1754944e-38, %v2423
  %v2425 = vsel %vm2422, %v2424, %v2420
  %v2426 = vmul.f32 1.0, %v2425
  %v2427 = vtanh.pop %v2322
  %v2428 = vxor.u32 %v2323, 2147483648
  %v2429 = vmul.f32 %v2428, 1.442695
  %v2430 = vpow.pop %v2429
  %v2431 = vadd.f32 %v2430, 1.0
  %v2432 = vrcp.pop %v2431
  %v2433 = vmul.f32 %v2431, %v2432
  %v2434 = vsub.f32 1.0, %v2433
  %v2435 = vmul.f32 %v2432, %v2434
  %v2436 = vadd.f32 %v2432, %v2435
  %vm2437 = vweird.f32 %v2431
  %vm2438 = vweird.f32 %v2432
  %vm2439 = vmor %vm2437, %vm2438
  %v2440 = vsel %vm2439, %v2432, %v2436
  %v2441 = vand.u32 2147483647, %v2431
  %vm2442 = vcmp.eq.f32.partialorder %v2441, 8.507059e+37
  %v2443 = vand.u32 %v2431, 2147483648
  %v2444 = vor.u32 1.1754944e-38, %v2443
  %v2445 = vsel %vm2442, %v2444, %v2440
  %v2446 = vmul.f32 1.0, %v2445
  %v2447 = vmul.f32 %v2426, %v2388
  %v2448 = vmul.f32 %v2407, %v2427
  %v2449 = vadd.f32 %v2447, %v2448
  %v2450 = vtanh.pop %v2449
  %v2451 = vmul.f32 %v2446, %v2450
  %2452 = vst [vmem:[#allocation7] sm:$0xff] %v2387
  %2453 = vst [vmem:[#allocation8] sm:$0xff] %v2385
  %2454 = vst [vmem:[#allocation9] sm:$0xff] %v2451
  %2455 = vst [vmem:[#allocation10] sm:$0xff] %v2449
  %2456 = vst [vmem:[#allocation5 + $0x10] sm:$0xff] %v2387
  %2457 = vst [vmem:[#allocation6 + $0x28] sm:$0xff] %v2451
  %v2458 = vld [vmem:[#allocation2 + $0x60] sm:$0xff]
  %v2459 = vld [vmem:[#allocation2 + $0x68] sm:$0xff]
  %v2460 = vld [vmem:[#allocation2 + $0x70] sm:$0xff]
  %v2461 = vld [vmem:[#allocation2 + $0x78] sm:$0xff]
  %v2462 = vld [vmem:[#allocation7] sm:$0xff]
  %v2463 = vpack.c.bf16 %v2462, %v2462
  %v2464 = vld [vmem:[%s2] sm:$0xff]
  %v2465 = vld [vmem:[%s2 + $0x8] sm:$0xff]
  %v2466 = vld [vmem:[%s2 + $0x10] sm:$0xff]
  %v2467 = vld [vmem:[%s2 + $0x18] sm:$0xff]
  %v2468 = vld [vmem:[%s2 + $0x20] sm:$0xff]
  %v2469 = vld [vmem:[%s2 + $0x28] sm:$0xff]
  %v2470 = vld [vmem:[%s2 + $0x30] sm:$0xff]
  %v2471 = vld [vmem:[%s2 + $0x38] sm:$0xff]
  %v2472 = vld [vmem:[%s2 + $0x40] sm:$0xff]
  %v2473 = vld [vmem:[%s2 + $0x48] sm:$0xff]
  %v2474 = vld [vmem:[%s2 + $0x50] sm:$0xff]
  %v2475 = vld [vmem:[%s2 + $0x58] sm:$0xff]
  %v2476 = vld [vmem:[%s2 + $0x60] sm:$0xff]
  %v2477 = vld [vmem:[%s2 + $0x68] sm:$0xff]
  %v2478 = vld [vmem:[%s2 + $0x70] sm:$0xff]
  %v2479 = vld [vmem:[%s2 + $0x78] sm:$0xff]
  %v2480 = vld [vmem:[%s2 + $0x80] sm:$0xff]
  %v2481 = vld [vmem:[%s2 + $0x88] sm:$0xff]
  %v2482 = vld [vmem:[%s2 + $0x90] sm:$0xff]
  %v2483 = vld [vmem:[%s2 + $0x98] sm:$0xff]
  %v2484 = vld [vmem:[%s2 + $0xa0] sm:$0xff]
  %v2485 = vld [vmem:[%s2 + $0xa8] sm:$0xff]
  %v2486 = vld [vmem:[%s2 + $0xb0] sm:$0xff]
  %v2487 = vld [vmem:[%s2 + $0xb8] sm:$0xff]
  %v2488 = vld [vmem:[%s2 + $0xc0] sm:$0xff]
  %v2489 = vld [vmem:[%s2 + $0xc8] sm:$0xff]
  %v2490 = vld [vmem:[%s2 + $0xd0] sm:$0xff]
  %v2491 = vld [vmem:[%s2 + $0xd8] sm:$0xff]
  %v2492 = vld [vmem:[%s2 + $0xe0] sm:$0xff]
  %v2493 = vld [vmem:[%s2 + $0xe8] sm:$0xff]
  %v2494 = vld [vmem:[%s2 + $0xf0] sm:$0xff]
  %v2495 = vld [vmem:[%s2 + $0xf8] sm:$0xff]
  %v2528 = vunpack.c.l.b16 %v2464
  %v2529 = vunpack.c.h.b16 %v2464
  %v2530 = vunpack.c.l.b16 %v2465
  %v2531 = vunpack.c.h.b16 %v2465
  %v2532 = vunpack.c.l.b16 %v2466
  %v2533 = vunpack.c.h.b16 %v2466
  %v2534 = vunpack.c.l.b16 %v2467
  %v2535 = vunpack.c.h.b16 %v2467
  %v2536 = vunpack.c.l.b16 %v2468
  %v2537 = vunpack.c.h.b16 %v2468
  %v2538 = vunpack.c.l.b16 %v2469
  %v2539 = vunpack.c.h.b16 %v2469
  %v2540 = vunpack.c.l.b16 %v2470
  %v2541 = vunpack.c.h.b16 %v2470
  %v2542 = vunpack.c.l.b16 %v2471
  %v2543 = vunpack.c.h.b16 %v2471
  %v2544 = vunpack.c.l.b16 %v2472
  %v2545 = vunpack.c.h.b16 %v2472
  %v2546 = vunpack.c.l.b16 %v2473
  %v2547 = vunpack.c.h.b16 %v2473
  %v2548 = vunpack.c.l.b16 %v2474
  %v2549 = vunpack.c.h.b16 %v2474
  %v2550 = vunpack.c.l.b16 %v2475
  %v2551 = vunpack.c.h.b16 %v2475
  %v2552 = vunpack.c.l.b16 %v2476
  %v2553 = vunpack.c.h.b16 %v2476
  %v2554 = vunpack.c.l.b16 %v2477
  %v2555 = vunpack.c.h.b16 %v2477
  %v2556 = vunpack.c.l.b16 %v2478
  %v2557 = vunpack.c.h.b16 %v2478
  %v2558 = vunpack.c.l.b16 %v2479
  %v2559 = vunpack.c.h.b16 %v2479
  %v2560 = vunpack.c.l.b16 %v2480
  %v2561 = vunpack.c.h.b16 %v2480
  %v2562 = vunpack.c.l.b16 %v2481
  %v2563 = vunpack.c.h.b16 %v2481
  %v2564 = vunpack.c.l.b16 %v2482
  %v2565 = vunpack.c.h.b16 %v2482
  %v2566 = vunpack.c.l.b16 %v2483
  %v2567 = vunpack.c.h.b16 %v2483
  %v2568 = vunpack.c.l.b16 %v2484
  %v2569 = vunpack.c.h.b16 %v2484
  %v2570 = vunpack.c.l.b16 %v2485
  %v2571 = vunpack.c.h.b16 %v2485
  %v2572 = vunpack.c.l.b16 %v2486
  %v2573 = vunpack.c.h.b16 %v2486
  %v2574 = vunpack.c.l.b16 %v2487
  %v2575 = vunpack.c.h.b16 %v2487
  %v2576 = vunpack.c.l.b16 %v2488
  %v2577 = vunpack.c.h.b16 %v2488
  %v2578 = vunpack.c.l.b16 %v2489
  %v2579 = vunpack.c.h.b16 %v2489
  %v2580 = vunpack.c.l.b16 %v2490
  %v2581 = vunpack.c.h.b16 %v2490
  %v2582 = vunpack.c.l.b16 %v2491
  %v2583 = vunpack.c.h.b16 %v2491
  %v2584 = vunpack.c.l.b16 %v2492
  %v2585 = vunpack.c.h.b16 %v2492
  %v2586 = vunpack.c.l.b16 %v2493
  %v2587 = vunpack.c.h.b16 %v2493
  %v2588 = vunpack.c.l.b16 %v2494
  %v2589 = vunpack.c.h.b16 %v2494
  %v2590 = vunpack.c.l.b16 %v2495
  %v2591 = vunpack.c.h.b16 %v2495
  %v2592 = vpack.c.b16 %v2532, %v2528
  %v2593 = vpack.c.b16 %v2533, %v2529
  %v2594 = vpack.c.b16 %v2534, %v2530
  %v2595 = vpack.c.b16 %v2535, %v2531
  %v2596 = vpack.c.b16 %v2540, %v2536
  %v2597 = vpack.c.b16 %v2541, %v2537
  %v2598 = vpack.c.b16 %v2542, %v2538
  %v2599 = vpack.c.b16 %v2543, %v2539
  %v2600 = vpack.c.b16 %v2548, %v2544
  %v2601 = vpack.c.b16 %v2549, %v2545
  %v2602 = vpack.c.b16 %v2550, %v2546
  %v2603 = vpack.c.b16 %v2551, %v2547
  %v2604 = vpack.c.b16 %v2556, %v2552
  %v2605 = vpack.c.b16 %v2557, %v2553
  %v2606 = vpack.c.b16 %v2558, %v2554
  %v2607 = vpack.c.b16 %v2559, %v2555
  %v2608 = vpack.c.b16 %v2564, %v2560
  %v2609 = vpack.c.b16 %v2565, %v2561
  %v2610 = vpack.c.b16 %v2566, %v2562
  %v2611 = vpack.c.b16 %v2567, %v2563
  %v2612 = vpack.c.b16 %v2572, %v2568
  %v2613 = vpack.c.b16 %v2573, %v2569
  %v2614 = vpack.c.b16 %v2574, %v2570
  %v2615 = vpack.c.b16 %v2575, %v2571
  %v2616 = vpack.c.b16 %v2580, %v2576
  %v2617 = vpack.c.b16 %v2581, %v2577
  %v2618 = vpack.c.b16 %v2582, %v2578
  %v2619 = vpack.c.b16 %v2583, %v2579
  %v2620 = vpack.c.b16 %v2588, %v2584
  %v2621 = vpack.c.b16 %v2589, %v2585
  %v2622 = vpack.c.b16 %v2590, %v2586
  %v2623 = vpack.c.b16 %v2591, %v2587
  %2656 = vmatpush.bf16.msra.mxu0 %v2620
  %2657 = vmatpush.bf16.msra.mxu0 %v2616
  %2658 = vmatpush.bf16.msra.mxu0 %v2612
  %2659 = vmatpush.bf16.msra.mxu0 %v2608
  %2660 = vmatpush.bf16.msra.mxu0 %v2604
  %2661 = vmatpush.bf16.msra.mxu0 %v2600
  %2662 = vmatpush.bf16.msra.mxu0 %v2596
  %2663 = vmatpush.bf16.msra.mxu0 %v2592
  %2664 = vmatmul.bf16.gmra.mxu0 %v2463
  %v2665 = vpop.f32.mrf.mxu0
  %v2666 = vadd.f32 0.0, %v2665
  %v2667 = vpop.f32.mrf.mxu0
  %2668 = vdwg.mxu0
  %2669 = vmatpush.bf16.msra.mxu0 %v2621
  %2670 = vmatpush.bf16.msra.mxu0 %v2617
  %2671 = vmatpush.bf16.msra.mxu0 %v2613
  %2672 = vmatpush.bf16.msra.mxu0 %v2609
  %2673 = vmatpush.bf16.msra.mxu0 %v2605
  %2674 = vmatpush.bf16.msra.mxu0 %v2601
  %2675 = vmatpush.bf16.msra.mxu0 %v2597
  %2676 = vmatpush.bf16.msra.mxu0 %v2593
  %2677 = vmatmul.bf16.gmra.mxu0 %v2463
  %v2678 = vpop.f32.mrf.mxu0
  %v2679 = vadd.f32 0.0, %v2678
  %v2680 = vpop.f32.mrf.mxu0
  %2681 = vdwg.mxu0
  %2682 = vmatpush.bf16.msra.mxu0 %v2622
  %2683 = vmatpush.bf16.msra.mxu0 %v2618
  %2684 = vmatpush.bf16.msra.mxu0 %v2614
  %2685 = vmatpush.bf16.msra.mxu0 %v2610
  %2686 = vmatpush.bf16.msra.mxu0 %v2606
  %2687 = vmatpush.bf16.msra.mxu0 %v2602
  %2688 = vmatpush.bf16.msra.mxu0 %v2598
  %2689 = vmatpush.bf16.msra.mxu0 %v2594
  %2690 = vmatmul.bf16.gmra.mxu0 %v2463
  %v2691 = vpop.f32.mrf.mxu0
  %v2692 = vadd.f32 0.0, %v2691
  %v2693 = vpop.f32.mrf.mxu0
  %2694 = vdwg.mxu0
  %2695 = vmatpush.bf16.msra.mxu0 %v2623
  %2696 = vmatpush.bf16.msra.mxu0 %v2619
  %2697 = vmatpush.bf16.msra.mxu0 %v2615
  %2698 = vmatpush.bf16.msra.mxu0 %v2611
  %2699 = vmatpush.bf16.msra.mxu0 %v2607
  %2700 = vmatpush.bf16.msra.mxu0 %v2603
  %2701 = vmatpush.bf16.msra.mxu0 %v2599
  %2702 = vmatpush.bf16.msra.mxu0 %v2595
  %2703 = vmatmul.bf16.gmra.mxu0 %v2463
  %v2704 = vpop.f32.mrf.mxu0
  %v2705 = vadd.f32 0.0, %v2704
  %v2706 = vpop.f32.mrf.mxu0
  %2707 = vdwg.mxu0
  %v2708 = vadd.f32 %v2458, %v2666
  %v2709 = vadd.f32 %v2459, %v2679
  %v2710 = vadd.f32 %v2460, %v2692
  %v2711 = vadd.f32 %v2461, %v2705
  %v2712 = vld [vmem:[#allocation3 + $0x80] sm:$0xff]
  %v2713 = vld [vmem:[#allocation3 + $0x88] sm:$0xff]
  %v2714 = vld [vmem:[#allocation3 + $0x90] sm:$0xff]
  %v2715 = vld [vmem:[#allocation3 + $0x98] sm:$0xff]
  %v2716 = vld [vmem:[#allocation9] sm:$0xff]
  %v2717 = vpack.c.bf16 %v2716, %v2716
  %v2718 = vld [vmem:[%s5] sm:$0xff]
  %v2719 = vld [vmem:[%s5 + $0x8] sm:$0xff]
  %v2720 = vld [vmem:[%s5 + $0x10] sm:$0xff]
  %v2721 = vld [vmem:[%s5 + $0x18] sm:$0xff]
  %v2722 = vld [vmem:[%s5 + $0x20] sm:$0xff]
  %v2723 = vld [vmem:[%s5 + $0x28] sm:$0xff]
  %v2724 = vld [vmem:[%s5 + $0x30] sm:$0xff]
  %v2725 = vld [vmem:[%s5 + $0x38] sm:$0xff]
  %v2726 = vld [vmem:[%s5 + $0x40] sm:$0xff]
  %v2727 = vld [vmem:[%s5 + $0x48] sm:$0xff]
  %v2728 = vld [vmem:[%s5 + $0x50] sm:$0xff]
  %v2729 = vld [vmem:[%s5 + $0x58] sm:$0xff]
  %v2730 = vld [vmem:[%s5 + $0x60] sm:$0xff]
  %v2731 = vld [vmem:[%s5 + $0x68] sm:$0xff]
  %v2732 = vld [vmem:[%s5 + $0x70] sm:$0xff]
  %v2733 = vld [vmem:[%s5 + $0x78] sm:$0xff]
  %v2734 = vld [vmem:[%s5 + $0x80] sm:$0xff]
  %v2735 = vld [vmem:[%s5 + $0x88] sm:$0xff]
  %v2736 = vld [vmem:[%s5 + $0x90] sm:$0xff]
  %v2737 = vld [vmem:[%s5 + $0x98] sm:$0xff]
  %v2738 = vld [vmem:[%s5 + $0xa0] sm:$0xff]
  %v2739 = vld [vmem:[%s5 + $0xa8] sm:$0xff]
  %v2740 = vld [vmem:[%s5 + $0xb0] sm:$0xff]
  %v2741 = vld [vmem:[%s5 + $0xb8] sm:$0xff]
  %v2742 = vld [vmem:[%s5 + $0xc0] sm:$0xff]
  %v2743 = vld [vmem:[%s5 + $0xc8] sm:$0xff]
  %v2744 = vld [vmem:[%s5 + $0xd0] sm:$0xff]
  %v2745 = vld [vmem:[%s5 + $0xd8] sm:$0xff]
  %v2746 = vld [vmem:[%s5 + $0xe0] sm:$0xff]
  %v2747 = vld [vmem:[%s5 + $0xe8] sm:$0xff]
  %v2748 = vld [vmem:[%s5 + $0xf0] sm:$0xff]
  %v2749 = vld [vmem:[%s5 + $0xf8] sm:$0xff]
  %v2782 = vunpack.c.l.b16 %v2718
  %v2783 = vunpack.c.h.b16 %v2718
  %v2784 = vunpack.c.l.b16 %v2719
  %v2785 = vunpack.c.h.b16 %v2719
  %v2786 = vunpack.c.l.b16 %v2720
  %v2787 = vunpack.c.h.b16 %v2720
  %v2788 = vunpack.c.l.b16 %v2721
  %v2789 = vunpack.c.h.b16 %v2721
  %v2790 = vunpack.c.l.b16 %v2722
  %v2791 = vunpack.c.h.b16 %v2722
  %v2792 = vunpack.c.l.b16 %v2723
  %v2793 = vunpack.c.h.b16 %v2723
  %v2794 = vunpack.c.l.b16 %v2724
  %v2795 = vunpack.c.h.b16 %v2724
  %v2796 = vunpack.c.l.b16 %v2725
  %v2797 = vunpack.c.h.b16 %v2725
  %v2798 = vunpack.c.l.b16 %v2726
  %v2799 = vunpack.c.h.b16 %v2726
  %v2800 = vunpack.c.l.b16 %v2727
  %v2801 = vunpack.c.h.b16 %v2727
  %v2802 = vunpack.c.l.b16 %v2728
  %v2803 = vunpack.c.h.b16 %v2728
  %v2804 = vunpack.c.l.b16 %v2729
  %v2805 = vunpack.c.h.b16 %v2729
  %v2806 = vunpack.c.l.b16 %v2730
  %v2807 = vunpack.c.h.b16 %v2730
  %v2808 = vunpack.c.l.b16 %v2731
  %v2809 = vunpack.c.h.b16 %v2731
  %v2810 = vunpack.c.l.b16 %v2732
  %v2811 = vunpack.c.h.b16 %v2732
  %v2812 = vunpack.c.l.b16 %v2733
  %v2813 = vunpack.c.h.b16 %v2733
  %v2814 = vunpack.c.l.b16 %v2734
  %v2815 = vunpack.c.h.b16 %v2734
  %v2816 = vunpack.c.l.b16 %v2735
  %v2817 = vunpack.c.h.b16 %v2735
  %v2818 = vunpack.c.l.b16 %v2736
  %v2819 = vunpack.c.h.b16 %v2736
  %v2820 = vunpack.c.l.b16 %v2737
  %v2821 = vunpack.c.h.b16 %v2737
  %v2822 = vunpack.c.l.b16 %v2738
  %v2823 = vunpack.c.h.b16 %v2738
  %v2824 = vunpack.c.l.b16 %v2739
  %v2825 = vunpack.c.h.b16 %v2739
  %v2826 = vunpack.c.l.b16 %v2740
  %v2827 = vunpack.c.h.b16 %v2740
  %v2828 = vunpack.c.l.b16 %v2741
  %v2829 = vunpack.c.h.b16 %v2741
  %v2830 = vunpack.c.l.b16 %v2742
  %v2831 = vunpack.c.h.b16 %v2742
  %v2832 = vunpack.c.l.b16 %v2743
  %v2833 = vunpack.c.h.b16 %v2743
  %v2834 = vunpack.c.l.b16 %v2744
  %v2835 = vunpack.c.h.b16 %v2744
  %v2836 = vunpack.c.l.b16 %v2745
  %v2837 = vunpack.c.h.b16 %v2745
  %v2838 = vunpack.c.l.b16 %v2746
  %v2839 = vunpack.c.h.b16 %v2746
  %v2840 = vunpack.c.l.b16 %v2747
  %v2841 = vunpack.c.h.b16 %v2747
  %v2842 = vunpack.c.l.b16 %v2748
  %v2843 = vunpack.c.h.b16 %v2748
  %v2844 = vunpack.c.l.b16 %v2749
  %v2845 = vunpack.c.h.b16 %v2749
  %v2846 = vpack.c.b16 %v2786, %v2782
  %v2847 = vpack.c.b16 %v2787, %v2783
  %v2848 = vpack.c.b16 %v2788, %v2784
  %v2849 = vpack.c.b16 %v2789, %v2785
  %v2850 = vpack.c.b16 %v2794, %v2790
  %v2851 = vpack.c.b16 %v2795, %v2791
  %v2852 = vpack.c.b16 %v2796, %v2792
  %v2853 = vpack.c.b16 %v2797, %v2793
  %v2854 = vpack.c.b16 %v2802, %v2798
  %v2855 = vpack.c.b16 %v2803, %v2799
  %v2856 = vpack.c.b16 %v2804, %v2800
  %v2857 = vpack.c.b16 %v2805, %v2801
  %v2858 = vpack.c.b16 %v2810, %v2806
  %v2859 = vpack.c.b16 %v2811, %v2807
  %v2860 = vpack.c.b16 %v2812, %v2808
  %v2861 = vpack.c.b16 %v2813, %v2809
  %v2862 = vpack.c.b16 %v2818, %v2814
  %v2863 = vpack.c.b16 %v2819, %v2815
  %v2864 = vpack.c.b16 %v2820, %v2816
  %v2865 = vpack.c.b16 %v2821, %v2817
  %v2866 = vpack.c.b16 %v2826, %v2822
  %v2867 = vpack.c.b16 %v2827, %v2823
  %v2868 = vpack.c.b16 %v2828, %v2824
  %v2869 = vpack.c.b16 %v2829, %v2825
  %v2870 = vpack.c.b16 %v2834, %v2830
  %v2871 = vpack.c.b16 %v2835, %v2831
  %v2872 = vpack.c.b16 %v2836, %v2832
  %v2873 = vpack.c.b16 %v2837, %v2833
  %v2874 = vpack.c.b16 %v2842, %v2838
  %v2875 = vpack.c.b16 %v2843, %v2839
  %v2876 = vpack.c.b16 %v2844, %v2840
  %v2877 = vpack.c.b16 %v2845, %v2841
  %2910 = vmatpush.bf16.msra.mxu0 %v2874
  %2911 = vmatpush.bf16.msra.mxu0 %v2870
  %2912 = vmatpush.bf16.msra.mxu0 %v2866
  %2913 = vmatpush.bf16.msra.mxu0 %v2862
  %2914 = vmatpush.bf16.msra.mxu0 %v2858
  %2915 = vmatpush.bf16.msra.mxu0 %v2854
  %2916 = vmatpush.bf16.msra.mxu0 %v2850
  %2917 = vmatpush.bf16.msra.mxu0 %v2846
  %2918 = vmatmul.bf16.gmra.mxu0 %v2717
  %v2919 = vpop.f32.mrf.mxu0
  %v2920 = vadd.f32 0.0, %v2919
  %v2921 = vpop.f32.mrf.mxu0
  %2922 = vdwg.mxu0
  %2923 = vmatpush.bf16.msra.mxu0 %v2875
  %2924 = vmatpush.bf16.msra.mxu0 %v2871
  %2925 = vmatpush.bf16.msra.mxu0 %v2867
  %2926 = vmatpush.bf16.msra.mxu0 %v2863
  %2927 = vmatpush.bf16.msra.mxu0 %v2859
  %2928 = vmatpush.bf16.msra.mxu0 %v2855
  %2929 = vmatpush.bf16.msra.mxu0 %v2851
  %2930 = vmatpush.bf16.msra.mxu0 %v2847
  %2931 = vmatmul.bf16.gmra.mxu0 %v2717
  %v2932 = vpop.f32.mrf.mxu0
  %v2933 = vadd.f32 0.0, %v2932
  %v2934 = vpop.f32.mrf.mxu0
  %2935 = vdwg.mxu0
  %2936 = vmatpush.bf16.msra.mxu0 %v2876
  %2937 = vmatpush.bf16.msra.mxu0 %v2872
  %2938 = vmatpush.bf16.msra.mxu0 %v2868
  %2939 = vmatpush.bf16.msra.mxu0 %v2864
  %2940 = vmatpush.bf16.msra.mxu0 %v2860
  %2941 = vmatpush.bf16.msra.mxu0 %v2856
  %2942 = vmatpush.bf16.msra.mxu0 %v2852
  %2943 = vmatpush.bf16.msra.mxu0 %v2848
  %2944 = vmatmul.bf16.gmra.mxu0 %v2717
  %v2945 = vpop.f32.mrf.mxu0
  %v2946 = vadd.f32 0.0, %v2945
  %v2947 = vpop.f32.mrf.mxu0
  %2948 = vdwg.mxu0
  %2949 = vmatpush.bf16.msra.mxu0 %v2877
  %2950 = vmatpush.bf16.msra.mxu0 %v2873
  %2951 = vmatpush.bf16.msra.mxu0 %v2869
  %2952 = vmatpush.bf16.msra.mxu0 %v2865
  %2953 = vmatpush.bf16.msra.mxu0 %v2861
  %2954 = vmatpush.bf16.msra.mxu0 %v2857
  %2955 = vmatpush.bf16.msra.mxu0 %v2853
  %2956 = vmatpush.bf16.msra.mxu0 %v2849
  %2957 = vmatmul.bf16.gmra.mxu0 %v2717
  %v2958 = vpop.f32.mrf.mxu0
  %v2959 = vadd.f32 0.0, %v2958
  %v2960 = vpop.f32.mrf.mxu0
  %2961 = vdwg.mxu0
  %v2962 = vadd.f32 %v2712, %v2920
  %v2963 = vadd.f32 %v2713, %v2933
  %v2964 = vadd.f32 %v2714, %v2946
  %v2965 = vadd.f32 %v2715, %v2959
  %v2966 = vld [vmem:[#allocation8] sm:$0xff]
  %v2967 = vxor.u32 %v2708, 2147483648
  %v2968 = vmul.f32 %v2967, 1.442695
  %v2969 = vpow.pop %v2968
  %v2970 = vadd.f32 %v2969, 1.0
  %v2971 = vrcp.pop %v2970
  %v2972 = vmul.f32 %v2970, %v2971
  %v2973 = vsub.f32 1.0, %v2972
  %v2974 = vmul.f32 %v2971, %v2973
  %v2975 = vadd.f32 %v2971, %v2974
  %vm2976 = vweird.f32 %v2970
  %vm2977 = vweird.f32 %v2971
  %vm2978 = vmor %vm2976, %vm2977
  %v2979 = vsel %vm2978, %v2971, %v2975
  %v2980 = vand.u32 2147483647, %v2970
  %vm2981 = vcmp.eq.f32.partialorder %v2980, 8.507059e+37
  %v2982 = vand.u32 %v2970, 2147483648
  %v2983 = vor.u32 1.1754944e-38, %v2982
  %v2984 = vsel %vm2981, %v2983, %v2979
  %v2985 = vmul.f32 1.0, %v2984
  %v2986 = vxor.u32 %v2709, 2147483648
  %v2987 = vmul.f32 %v2986, 1.442695
  %v2988 = vpow.pop %v2987
  %v2989 = vadd.f32 %v2988, 1.0
  %v2990 = vrcp.pop %v2989
  %v2991 = vmul.f32 %v2989, %v2990
  %v2992 = vsub.f32 1.0, %v2991
  %v2993 = vmul.f32 %v2990, %v2992
  %v2994 = vadd.f32 %v2990, %v2993
  %vm2995 = vweird.f32 %v2989
  %vm2996 = vweird.f32 %v2990
  %vm2997 = vmor %vm2995, %vm2996
  %v2998 = vsel %vm2997, %v2990, %v2994
  %v2999 = vand.u32 2147483647, %v2989
  %vm3000 = vcmp.eq.f32.partialorder %v2999, 8.507059e+37
  %v3001 = vand.u32 %v2989, 2147483648
  %v3002 = vor.u32 1.1754944e-38, %v3001
  %v3003 = vsel %vm3000, %v3002, %v2998
  %v3004 = vmul.f32 1.0, %v3003
  %v3005 = vtanh.pop %v2710
  %v3006 = vxor.u32 %v2711, 2147483648
  %v3007 = vmul.f32 %v3006, 1.442695
  %v3008 = vpow.pop %v3007
  %v3009 = vadd.f32 %v3008, 1.0
  %v3010 = vrcp.pop %v3009
  %v3011 = vmul.f32 %v3009, %v3010
  %v3012 = vsub.f32 1.0, %v3011
  %v3013 = vmul.f32 %v3010, %v3012
  %v3014 = vadd.f32 %v3010, %v3013
  %vm3015 = vweird.f32 %v3009
  %vm3016 = vweird.f32 %v3010
  %vm3017 = vmor %vm3015, %vm3016
  %v3018 = vsel %vm3017, %v3010, %v3014
  %v3019 = vand.u32 2147483647, %v3009
  %vm3020 = vcmp.eq.f32.partialorder %v3019, 8.507059e+37
  %v3021 = vand.u32 %v3009, 2147483648
  %v3022 = vor.u32 1.1754944e-38, %v3021
  %v3023 = vsel %vm3020, %v3022, %v3018
  %v3024 = vmul.f32 1.0, %v3023
  %v3025 = vmul.f32 %v3004, %v2966
  %v3026 = vmul.f32 %v2985, %v3005
  %v3027 = vadd.f32 %v3025, %v3026
  %v3028 = vtanh.pop %v3027
  %v3029 = vmul.f32 %v3024, %v3028
  %v3030 = vld [vmem:[#allocation10] sm:$0xff]
  %v3031 = vxor.u32 %v2962, 2147483648
  %v3032 = vmul.f32 %v3031, 1.442695
  %v3033 = vpow.pop %v3032
  %v3034 = vadd.f32 %v3033, 1.0
  %v3035 = vrcp.pop %v3034
  %v3036 = vmul.f32 %v3034, %v3035
  %v3037 = vsub.f32 1.0, %v3036
  %v3038 = vmul.f32 %v3035, %v3037
  %v3039 = vadd.f32 %v3035, %v3038
  %vm3040 = vweird.f32 %v3034
  %vm3041 = vweird.f32 %v3035
  %vm3042 = vmor %vm3040, %vm3041
  %v3043 = vsel %vm3042, %v3035, %v3039
  %v3044 = vand.u32 2147483647, %v3034
  %vm3045 = vcmp.eq.f32.partialorder %v3044, 8.507059e+37
  %v3046 = vand.u32 %v3034, 2147483648
  %v3047 = vor.u32 1.1754944e-38, %v3046
  %v3048 = vsel %vm3045, %v3047, %v3043
  %v3049 = vmul.f32 1.0, %v3048
  %v3050 = vxor.u32 %v2963, 2147483648
  %v3051 = vmul.f32 %v3050, 1.442695
  %v3052 = vpow.pop %v3051
  %v3053 = vadd.f32 %v3052, 1.0
  %v3054 = vrcp.pop %v3053
  %v3055 = vmul.f32 %v3053, %v3054
  %v3056 = vsub.f32 1.0, %v3055
  %v3057 = vmul.f32 %v3054, %v3056
  %v3058 = vadd.f32 %v3054, %v3057
  %vm3059 = vweird.f32 %v3053
  %vm3060 = vweird.f32 %v3054
  %vm3061 = vmor %vm3059, %vm3060
  %v3062 = vsel %vm3061, %v3054, %v3058
  %v3063 = vand.u32 2147483647, %v3053
  %vm3064 = vcmp.eq.f32.partialorder %v3063, 8.507059e+37
  %v3065 = vand.u32 %v3053, 2147483648
  %v3066 = vor.u32 1.1754944e-38, %v3065
  %v3067 = vsel %vm3064, %v3066, %v3062
  %v3068 = vmul.f32 1.0, %v3067
  %v3069 = vtanh.pop %v2964
  %v3070 = vxor.u32 %v2965, 2147483648
  %v3071 = vmul.f32 %v3070, 1.442695
  %v3072 = vpow.pop %v3071
  %v3073 = vadd.f32 %v3072, 1.0
  %v3074 = vrcp.pop %v3073
  %v3075 = vmul.f32 %v3073, %v3074
  %v3076 = vsub.f32 1.0, %v3075
  %v3077 = vmul.f32 %v3074, %v3076
  %v3078 = vadd.f32 %v3074, %v3077
  %vm3079 = vweird.f32 %v3073
  %vm3080 = vweird.f32 %v3074
  %vm3081 = vmor %vm3079, %vm3080
  %v3082 = vsel %vm3081, %v3074, %v3078
  %v3083 = vand.u32 2147483647, %v3073
  %vm3084 = vcmp.eq.f32.partialorder %v3083, 8.507059e+37
  %v3085 = vand.u32 %v3073, 2147483648
  %v3086 = vor.u32 1.1754944e-38, %v3085
  %v3087 = vsel %vm3084, %v3086, %v3082
  %v3088 = vmul.f32 1.0, %v3087
  %v3089 = vmul.f32 %v3068, %v3030
  %v3090 = vmul.f32 %v3049, %v3069
  %v3091 = vadd.f32 %v3089, %v3090
  %v3092 = vtanh.pop %v3091
  %v3093 = vmul.f32 %v3088, %v3092
  %3094 = vst [vmem:[#allocation7] sm:$0xff] %v3029
  %3095 = vst [vmem:[#allocation8] sm:$0xff] %v3027
  %3096 = vst [vmem:[#allocation9] sm:$0xff] %v3093
  %3097 = vst [vmem:[#allocation10] sm:$0xff] %v3091
  %3098 = vst [vmem:[#allocation5 + $0x18] sm:$0xff] %v3029
  %3099 = vst [vmem:[#allocation6 + $0x20] sm:$0xff] %v3093
  %v3100 = vld [vmem:[#allocation2 + $0x80] sm:$0xff]
  %v3101 = vld [vmem:[#allocation2 + $0x88] sm:$0xff]
  %v3102 = vld [vmem:[#allocation2 + $0x90] sm:$0xff]
  %v3103 = vld [vmem:[#allocation2 + $0x98] sm:$0xff]
  %v3104 = vld [vmem:[#allocation7] sm:$0xff]
  %v3105 = vpack.c.bf16 %v3104, %v3104
  %v3106 = vld [vmem:[%s2] sm:$0xff]
  %v3107 = vld [vmem:[%s2 + $0x8] sm:$0xff]
  %v3108 = vld [vmem:[%s2 + $0x10] sm:$0xff]
  %v3109 = vld [vmem:[%s2 + $0x18] sm:$0xff]
  %v3110 = vld [vmem:[%s2 + $0x20] sm:$0xff]
  %v3111 = vld [vmem:[%s2 + $0x28] sm:$0xff]
  %v3112 = vld [vmem:[%s2 + $0x30] sm:$0xff]
  %v3113 = vld [vmem:[%s2 + $0x38] sm:$0xff]
  %v3114 = vld [vmem:[%s2 + $0x40] sm:$0xff]
  %v3115 = vld [vmem:[%s2 + $0x48] sm:$0xff]
  %v3116 = vld [vmem:[%s2 + $0x50] sm:$0xff]
  %v3117 = vld [vmem:[%s2 + $0x58] sm:$0xff]
  %v3118 = vld [vmem:[%s2 + $0x60] sm:$0xff]
  %v3119 = vld [vmem:[%s2 + $0x68] sm:$0xff]
  %v3120 = vld [vmem:[%s2 + $0x70] sm:$0xff]
  %v3121 = vld [vmem:[%s2 + $0x78] sm:$0xff]
  %v3122 = vld [vmem:[%s2 + $0x80] sm:$0xff]
  %v3123 = vld [vmem:[%s2 + $0x88] sm:$0xff]
  %v3124 = vld [vmem:[%s2 + $0x90] sm:$0xff]
  %v3125 = vld [vmem:[%s2 + $0x98] sm:$0xff]
  %v3126 = vld [vmem:[%s2 + $0xa0] sm:$0xff]
  %v3127 = vld [vmem:[%s2 + $0xa8] sm:$0xff]
  %v3128 = vld [vmem:[%s2 + $0xb0] sm:$0xff]
  %v3129 = vld [vmem:[%s2 + $0xb8] sm:$0xff]
  %v3130 = vld [vmem:[%s2 + $0xc0] sm:$0xff]
  %v3131 = vld [vmem:[%s2 + $0xc8] sm:$0xff]
  %v3132 = vld [vmem:[%s2 + $0xd0] sm:$0xff]
  %v3133 = vld [vmem:[%s2 + $0xd8] sm:$0xff]
  %v3134 = vld [vmem:[%s2 + $0xe0] sm:$0xff]
  %v3135 = vld [vmem:[%s2 + $0xe8] sm:$0xff]
  %v3136 = vld [vmem:[%s2 + $0xf0] sm:$0xff]
  %v3137 = vld [vmem:[%s2 + $0xf8] sm:$0xff]
  %v3170 = vunpack.c.l.b16 %v3106
  %v3171 = vunpack.c.h.b16 %v3106
  %v3172 = vunpack.c.l.b16 %v3107
  %v3173 = vunpack.c.h.b16 %v3107
  %v3174 = vunpack.c.l.b16 %v3108
  %v3175 = vunpack.c.h.b16 %v3108
  %v3176 = vunpack.c.l.b16 %v3109
  %v3177 = vunpack.c.h.b16 %v3109
  %v3178 = vunpack.c.l.b16 %v3110
  %v3179 = vunpack.c.h.b16 %v3110
  %v3180 = vunpack.c.l.b16 %v3111
  %v3181 = vunpack.c.h.b16 %v3111
  %v3182 = vunpack.c.l.b16 %v3112
  %v3183 = vunpack.c.h.b16 %v3112
  %v3184 = vunpack.c.l.b16 %v3113
  %v3185 = vunpack.c.h.b16 %v3113
  %v3186 = vunpack.c.l.b16 %v3114
  %v3187 = vunpack.c.h.b16 %v3114
  %v3188 = vunpack.c.l.b16 %v3115
  %v3189 = vunpack.c.h.b16 %v3115
  %v3190 = vunpack.c.l.b16 %v3116
  %v3191 = vunpack.c.h.b16 %v3116
  %v3192 = vunpack.c.l.b16 %v3117
  %v3193 = vunpack.c.h.b16 %v3117
  %v3194 = vunpack.c.l.b16 %v3118
  %v3195 = vunpack.c.h.b16 %v3118
  %v3196 = vunpack.c.l.b16 %v3119
  %v3197 = vunpack.c.h.b16 %v3119
  %v3198 = vunpack.c.l.b16 %v3120
  %v3199 = vunpack.c.h.b16 %v3120
  %v3200 = vunpack.c.l.b16 %v3121
  %v3201 = vunpack.c.h.b16 %v3121
  %v3202 = vunpack.c.l.b16 %v3122
  %v3203 = vunpack.c.h.b16 %v3122
  %v3204 = vunpack.c.l.b16 %v3123
  %v3205 = vunpack.c.h.b16 %v3123
  %v3206 = vunpack.c.l.b16 %v3124
  %v3207 = vunpack.c.h.b16 %v3124
  %v3208 = vunpack.c.l.b16 %v3125
  %v3209 = vunpack.c.h.b16 %v3125
  %v3210 = vunpack.c.l.b16 %v3126
  %v3211 = vunpack.c.h.b16 %v3126
  %v3212 = vunpack.c.l.b16 %v3127
  %v3213 = vunpack.c.h.b16 %v3127
  %v3214 = vunpack.c.l.b16 %v3128
  %v3215 = vunpack.c.h.b16 %v3128
  %v3216 = vunpack.c.l.b16 %v3129
  %v3217 = vunpack.c.h.b16 %v3129
  %v3218 = vunpack.c.l.b16 %v3130
  %v3219 = vunpack.c.h.b16 %v3130
  %v3220 = vunpack.c.l.b16 %v3131
  %v3221 = vunpack.c.h.b16 %v3131
  %v3222 = vunpack.c.l.b16 %v3132
  %v3223 = vunpack.c.h.b16 %v3132
  %v3224 = vunpack.c.l.b16 %v3133
  %v3225 = vunpack.c.h.b16 %v3133
  %v3226 = vunpack.c.l.b16 %v3134
  %v3227 = vunpack.c.h.b16 %v3134
  %v3228 = vunpack.c.l.b16 %v3135
  %v3229 = vunpack.c.h.b16 %v3135
  %v3230 = vunpack.c.l.b16 %v3136
  %v3231 = vunpack.c.h.b16 %v3136
  %v3232 = vunpack.c.l.b16 %v3137
  %v3233 = vunpack.c.h.b16 %v3137
  %v3234 = vpack.c.b16 %v3174, %v3170
  %v3235 = vpack.c.b16 %v3175, %v3171
  %v3236 = vpack.c.b16 %v3176, %v3172
  %v3237 = vpack.c.b16 %v3177, %v3173
  %v3238 = vpack.c.b16 %v3182, %v3178
  %v3239 = vpack.c.b16 %v3183, %v3179
  %v3240 = vpack.c.b16 %v3184, %v3180
  %v3241 = vpack.c.b16 %v3185, %v3181
  %v3242 = vpack.c.b16 %v3190, %v3186
  %v3243 = vpack.c.b16 %v3191, %v3187
  %v3244 = vpack.c.b16 %v3192, %v3188
  %v3245 = vpack.c.b16 %v3193, %v3189
  %v3246 = vpack.c.b16 %v3198, %v3194
  %v3247 = vpack.c.b16 %v3199, %v3195
  %v3248 = vpack.c.b16 %v3200, %v3196
  %v3249 = vpack.c.b16 %v3201, %v3197
  %v3250 = vpack.c.b16 %v3206, %v3202
  %v3251 = vpack.c.b16 %v3207, %v3203
  %v3252 = vpack.c.b16 %v3208, %v3204
  %v3253 = vpack.c.b16 %v3209, %v3205
  %v3254 = vpack.c.b16 %v3214, %v3210
  %v3255 = vpack.c.b16 %v3215, %v3211
  %v3256 = vpack.c.b16 %v3216, %v3212
  %v3257 = vpack.c.b16 %v3217, %v3213
  %v3258 = vpack.c.b16 %v3222, %v3218
  %v3259 = vpack.c.b16 %v3223, %v3219
  %v3260 = vpack.c.b16 %v3224, %v3220
  %v3261 = vpack.c.b16 %v3225, %v3221
  %v3262 = vpack.c.b16 %v3230, %v3226
  %v3263 = vpack.c.b16 %v3231, %v3227
  %v3264 = vpack.c.b16 %v3232, %v3228
  %v3265 = vpack.c.b16 %v3233, %v3229
  %3298 = vmatpush.bf16.msra.mxu0 %v3262
  %3299 = vmatpush.bf16.msra.mxu0 %v3258
  %3300 = vmatpush.bf16.msra.mxu0 %v3254
  %3301 = vmatpush.bf16.msra.mxu0 %v3250
  %3302 = vmatpush.bf16.msra.mxu0 %v3246
  %3303 = vmatpush.bf16.msra.mxu0 %v3242
  %3304 = vmatpush.bf16.msra.mxu0 %v3238
  %3305 = vmatpush.bf16.msra.mxu0 %v3234
  %3306 = vmatmul.bf16.gmra.mxu0 %v3105
  %v3307 = vpop.f32.mrf.mxu0
  %v3308 = vadd.f32 0.0, %v3307
  %v3309 = vpop.f32.mrf.mxu0
  %3310 = vdwg.mxu0
  %3311 = vmatpush.bf16.msra.mxu0 %v3263
  %3312 = vmatpush.bf16.msra.mxu0 %v3259
  %3313 = vmatpush.bf16.msra.mxu0 %v3255
  %3314 = vmatpush.bf16.msra.mxu0 %v3251
  %3315 = vmatpush.bf16.msra.mxu0 %v3247
  %3316 = vmatpush.bf16.msra.mxu0 %v3243
  %3317 = vmatpush.bf16.msra.mxu0 %v3239
  %3318 = vmatpush.bf16.msra.mxu0 %v3235
  %3319 = vmatmul.bf16.gmra.mxu0 %v3105
  %v3320 = vpop.f32.mrf.mxu0
  %v3321 = vadd.f32 0.0, %v3320
  %v3322 = vpop.f32.mrf.mxu0
  %3323 = vdwg.mxu0
  %3324 = vmatpush.bf16.msra.mxu0 %v3264
  %3325 = vmatpush.bf16.msra.mxu0 %v3260
  %3326 = vmatpush.bf16.msra.mxu0 %v3256
  %3327 = vmatpush.bf16.msra.mxu0 %v3252
  %3328 = vmatpush.bf16.msra.mxu0 %v3248
  %3329 = vmatpush.bf16.msra.mxu0 %v3244
  %3330 = vmatpush.bf16.msra.mxu0 %v3240
  %3331 = vmatpush.bf16.msra.mxu0 %v3236
  %3332 = vmatmul.bf16.gmra.mxu0 %v3105
  %v3333 = vpop.f32.mrf.mxu0
  %v3334 = vadd.f32 0.0, %v3333
  %v3335 = vpop.f32.mrf.mxu0
  %3336 = vdwg.mxu0
  %3337 = vmatpush.bf16.msra.mxu0 %v3265
  %3338 = vmatpush.bf16.msra.mxu0 %v3261
  %3339 = vmatpush.bf16.msra.mxu0 %v3257
  %3340 = vmatpush.bf16.msra.mxu0 %v3253
  %3341 = vmatpush.bf16.msra.mxu0 %v3249
  %3342 = vmatpush.bf16.msra.mxu0 %v3245
  %3343 = vmatpush.bf16.msra.mxu0 %v3241
  %3344 = vmatpush.bf16.msra.mxu0 %v3237
  %3345 = vmatmul.bf16.gmra.mxu0 %v3105
  %v3346 = vpop.f32.mrf.mxu0
  %v3347 = vadd.f32 0.0, %v3346
  %v3348 = vpop.f32.mrf.mxu0
  %3349 = vdwg.mxu0
  %v3350 = vadd.f32 %v3100, %v3308
  %v3351 = vadd.f32 %v3101, %v3321
  %v3352 = vadd.f32 %v3102, %v3334
  %v3353 = vadd.f32 %v3103, %v3347
  %v3354 = vld [vmem:[#allocation3 + $0x60] sm:$0xff]
  %v3355 = vld [vmem:[#allocation3 + $0x68] sm:$0xff]
  %v3356 = vld [vmem:[#allocation3 + $0x70] sm:$0xff]
  %v3357 = vld [vmem:[#allocation3 + $0x78] sm:$0xff]
  %v3358 = vld [vmem:[#allocation9] sm:$0xff]
  %v3359 = vpack.c.bf16 %v3358, %v3358
  %v3360 = vld [vmem:[%s5] sm:$0xff]
  %v3361 = vld [vmem:[%s5 + $0x8] sm:$0xff]
  %v3362 = vld [vmem:[%s5 + $0x10] sm:$0xff]
  %v3363 = vld [vmem:[%s5 + $0x18] sm:$0xff]
  %v3364 = vld [vmem:[%s5 + $0x20] sm:$0xff]
  %v3365 = vld [vmem:[%s5 + $0x28] sm:$0xff]
  %v3366 = vld [vmem:[%s5 + $0x30] sm:$0xff]
  %v3367 = vld [vmem:[%s5 + $0x38] sm:$0xff]
  %v3368 = vld [vmem:[%s5 + $0x40] sm:$0xff]
  %v3369 = vld [vmem:[%s5 + $0x48] sm:$0xff]
  %v3370 = vld [vmem:[%s5 + $0x50] sm:$0xff]
  %v3371 = vld [vmem:[%s5 + $0x58] sm:$0xff]
  %v3372 = vld [vmem:[%s5 + $0x60] sm:$0xff]
  %v3373 = vld [vmem:[%s5 + $0x68] sm:$0xff]
  %v3374 = vld [vmem:[%s5 + $0x70] sm:$0xff]
  %v3375 = vld [vmem:[%s5 + $0x78] sm:$0xff]
  %v3376 = vld [vmem:[%s5 + $0x80] sm:$0xff]
  %v3377 = vld [vmem:[%s5 + $0x88] sm:$0xff]
  %v3378 = vld [vmem:[%s5 + $0x90] sm:$0xff]
  %v3379 = vld [vmem:[%s5 + $0x98] sm:$0xff]
  %v3380 = vld [vmem:[%s5 + $0xa0] sm:$0xff]
  %v3381 = vld [vmem:[%s5 + $0xa8] sm:$0xff]
  %v3382 = vld [vmem:[%s5 + $0xb0] sm:$0xff]
  %v3383 = vld [vmem:[%s5 + $0xb8] sm:$0xff]
  %v3384 = vld [vmem:[%s5 + $0xc0] sm:$0xff]
  %v3385 = vld [vmem:[%s5 + $0xc8] sm:$0xff]
  %v3386 = vld [vmem:[%s5 + $0xd0] sm:$0xff]
  %v3387 = vld [vmem:[%s5 + $0xd8] sm:$0xff]
  %v3388 = vld [vmem:[%s5 + $0xe0] sm:$0xff]
  %v3389 = vld [vmem:[%s5 + $0xe8] sm:$0xff]
  %v3390 = vld [vmem:[%s5 + $0xf0] sm:$0xff]
  %v3391 = vld [vmem:[%s5 + $0xf8] sm:$0xff]
  %v3424 = vunpack.c.l.b16 %v3360
  %v3425 = vunpack.c.h.b16 %v3360
  %v3426 = vunpack.c.l.b16 %v3361
  %v3427 = vunpack.c.h.b16 %v3361
  %v3428 = vunpack.c.l.b16 %v3362
  %v3429 = vunpack.c.h.b16 %v3362
  %v3430 = vunpack.c.l.b16 %v3363
  %v3431 = vunpack.c.h.b16 %v3363
  %v3432 = vunpack.c.l.b16 %v3364
  %v3433 = vunpack.c.h.b16 %v3364
  %v3434 = vunpack.c.l.b16 %v3365
  %v3435 = vunpack.c.h.b16 %v3365
  %v3436 = vunpack.c.l.b16 %v3366
  %v3437 = vunpack.c.h.b16 %v3366
  %v3438 = vunpack.c.l.b16 %v3367
  %v3439 = vunpack.c.h.b16 %v3367
  %v3440 = vunpack.c.l.b16 %v3368
  %v3441 = vunpack.c.h.b16 %v3368
  %v3442 = vunpack.c.l.b16 %v3369
  %v3443 = vunpack.c.h.b16 %v3369
  %v3444 = vunpack.c.l.b16 %v3370
  %v3445 = vunpack.c.h.b16 %v3370
  %v3446 = vunpack.c.l.b16 %v3371
  %v3447 = vunpack.c.h.b16 %v3371
  %v3448 = vunpack.c.l.b16 %v3372
  %v3449 = vunpack.c.h.b16 %v3372
  %v3450 = vunpack.c.l.b16 %v3373
  %v3451 = vunpack.c.h.b16 %v3373
  %v3452 = vunpack.c.l.b16 %v3374
  %v3453 = vunpack.c.h.b16 %v3374
  %v3454 = vunpack.c.l.b16 %v3375
  %v3455 = vunpack.c.h.b16 %v3375
  %v3456 = vunpack.c.l.b16 %v3376
  %v3457 = vunpack.c.h.b16 %v3376
  %v3458 = vunpack.c.l.b16 %v3377
  %v3459 = vunpack.c.h.b16 %v3377
  %v3460 = vunpack.c.l.b16 %v3378
  %v3461 = vunpack.c.h.b16 %v3378
  %v3462 = vunpack.c.l.b16 %v3379
  %v3463 = vunpack.c.h.b16 %v3379
  %v3464 = vunpack.c.l.b16 %v3380
  %v3465 = vunpack.c.h.b16 %v3380
  %v3466 = vunpack.c.l.b16 %v3381
  %v3467 = vunpack.c.h.b16 %v3381
  %v3468 = vunpack.c.l.b16 %v3382
  %v3469 = vunpack.c.h.b16 %v3382
  %v3470 = vunpack.c.l.b16 %v3383
  %v3471 = vunpack.c.h.b16 %v3383
  %v3472 = vunpack.c.l.b16 %v3384
  %v3473 = vunpack.c.h.b16 %v3384
  %v3474 = vunpack.c.l.b16 %v3385
  %v3475 = vunpack.c.h.b16 %v3385
  %v3476 = vunpack.c.l.b16 %v3386
  %v3477 = vunpack.c.h.b16 %v3386
  %v3478 = vunpack.c.l.b16 %v3387
  %v3479 = vunpack.c.h.b16 %v3387
  %v3480 = vunpack.c.l.b16 %v3388
  %v3481 = vunpack.c.h.b16 %v3388
  %v3482 = vunpack.c.l.b16 %v3389
  %v3483 = vunpack.c.h.b16 %v3389
  %v3484 = vunpack.c.l.b16 %v3390
  %v3485 = vunpack.c.h.b16 %v3390
  %v3486 = vunpack.c.l.b16 %v3391
  %v3487 = vunpack.c.h.b16 %v3391
  %v3488 = vpack.c.b16 %v3428, %v3424
  %v3489 = vpack.c.b16 %v3429, %v3425
  %v3490 = vpack.c.b16 %v3430, %v3426
  %v3491 = vpack.c.b16 %v3431, %v3427
  %v3492 = vpack.c.b16 %v3436, %v3432
  %v3493 = vpack.c.b16 %v3437, %v3433
  %v3494 = vpack.c.b16 %v3438, %v3434
  %v3495 = vpack.c.b16 %v3439, %v3435
  %v3496 = vpack.c.b16 %v3444, %v3440
  %v3497 = vpack.c.b16 %v3445, %v3441
  %v3498 = vpack.c.b16 %v3446, %v3442
  %v3499 = vpack.c.b16 %v3447, %v3443
  %v3500 = vpack.c.b16 %v3452, %v3448
  %v3501 = vpack.c.b16 %v3453, %v3449
  %v3502 = vpack.c.b16 %v3454, %v3450
  %v3503 = vpack.c.b16 %v3455, %v3451
  %v3504 = vpack.c.b16 %v3460, %v3456
  %v3505 = vpack.c.b16 %v3461, %v3457
  %v3506 = vpack.c.b16 %v3462, %v3458
  %v3507 = vpack.c.b16 %v3463, %v3459
  %v3508 = vpack.c.b16 %v3468, %v3464
  %v3509 = vpack.c.b16 %v3469, %v3465
  %v3510 = vpack.c.b16 %v3470, %v3466
  %v3511 = vpack.c.b16 %v3471, %v3467
  %v3512 = vpack.c.b16 %v3476, %v3472
  %v3513 = vpack.c.b16 %v3477, %v3473
  %v3514 = vpack.c.b16 %v3478, %v3474
  %v3515 = vpack.c.b16 %v3479, %v3475
  %v3516 = vpack.c.b16 %v3484, %v3480
  %v3517 = vpack.c.b16 %v3485, %v3481
  %v3518 = vpack.c.b16 %v3486, %v3482
  %v3519 = vpack.c.b16 %v3487, %v3483
  %3552 = vmatpush.bf16.msra.mxu0 %v3516
  %3553 = vmatpush.bf16.msra.mxu0 %v3512
  %3554 = vmatpush.bf16.msra.mxu0 %v3508
  %3555 = vmatpush.bf16.msra.mxu0 %v3504
  %3556 = vmatpush.bf16.msra.mxu0 %v3500
  %3557 = vmatpush.bf16.msra.mxu0 %v3496
  %3558 = vmatpush.bf16.msra.mxu0 %v3492
  %3559 = vmatpush.bf16.msra.mxu0 %v3488
  %3560 = vmatmul.bf16.gmra.mxu0 %v3359
  %v3561 = vpop.f32.mrf.mxu0
  %v3562 = vadd.f32 0.0, %v3561
  %v3563 = vpop.f32.mrf.mxu0
  %3564 = vdwg.mxu0
  %3565 = vmatpush.bf16.msra.mxu0 %v3517
  %3566 = vmatpush.bf16.msra.mxu0 %v3513
  %3567 = vmatpush.bf16.msra.mxu0 %v3509
  %3568 = vmatpush.bf16.msra.mxu0 %v3505
  %3569 = vmatpush.bf16.msra.mxu0 %v3501
  %3570 = vmatpush.bf16.msra.mxu0 %v3497
  %3571 = vmatpush.bf16.msra.mxu0 %v3493
  %3572 = vmatpush.bf16.msra.mxu0 %v3489
  %3573 = vmatmul.bf16.gmra.mxu0 %v3359
  %v3574 = vpop.f32.mrf.mxu0
  %v3575 = vadd.f32 0.0, %v3574
  %v3576 = vpop.f32.mrf.mxu0
  %3577 = vdwg.mxu0
  %3578 = vmatpush.bf16.msra.mxu0 %v3518
  %3579 = vmatpush.bf16.msra.mxu0 %v3514
  %3580 = vmatpush.bf16.msra.mxu0 %v3510
  %3581 = vmatpush.bf16.msra.mxu0 %v3506
  %3582 = vmatpush.bf16.msra.mxu0 %v3502
  %3583 = vmatpush.bf16.msra.mxu0 %v3498
  %3584 = vmatpush.bf16.msra.mxu0 %v3494
  %3585 = vmatpush.bf16.msra.mxu0 %v3490
  %3586 = vmatmul.bf16.gmra.mxu0 %v3359
  %v3587 = vpop.f32.mrf.mxu0
  %v3588 = vadd.f32 0.0, %v3587
  %v3589 = vpop.f32.mrf.mxu0
  %3590 = vdwg.mxu0
  %3591 = vmatpush.bf16.msra.mxu0 %v3519
  %3592 = vmatpush.bf16.msra.mxu0 %v3515
  %3593 = vmatpush.bf16.msra.mxu0 %v3511
  %3594 = vmatpush.bf16.msra.mxu0 %v3507
  %3595 = vmatpush.bf16.msra.mxu0 %v3503
  %3596 = vmatpush.bf16.msra.mxu0 %v3499
  %3597 = vmatpush.bf16.msra.mxu0 %v3495
  %3598 = vmatpush.bf16.msra.mxu0 %v3491
  %3599 = vmatmul.bf16.gmra.mxu0 %v3359
  %v3600 = vpop.f32.mrf.mxu0
  %v3601 = vadd.f32 0.0, %v3600
  %v3602 = vpop.f32.mrf.mxu0
  %3603 = vdwg.mxu0
  %v3604 = vadd.f32 %v3354, %v3562
  %v3605 = vadd.f32 %v3355, %v3575
  %v3606 = vadd.f32 %v3356, %v3588
  %v3607 = vadd.f32 %v3357, %v3601
  %v3608 = vld [vmem:[#allocation8] sm:$0xff]
  %v3609 = vxor.u32 %v3350, 2147483648
  %v3610 = vmul.f32 %v3609, 1.442695
  %v3611 = vpow.pop %v3610
  %v3612 = vadd.f32 %v3611, 1.0
  %v3613 = vrcp.pop %v3612
  %v3614 = vmul.f32 %v3612, %v3613
  %v3615 = vsub.f32 1.0, %v3614
  %v3616 = vmul.f32 %v3613, %v3615
  %v3617 = vadd.f32 %v3613, %v3616
  %vm3618 = vweird.f32 %v3612
  %vm3619 = vweird.f32 %v3613
  %vm3620 = vmor %vm3618, %vm3619
  %v3621 = vsel %vm3620, %v3613, %v3617
  %v3622 = vand.u32 2147483647, %v3612
  %vm3623 = vcmp.eq.f32.partialorder %v3622, 8.507059e+37
  %v3624 = vand.u32 %v3612, 2147483648
  %v3625 = vor.u32 1.1754944e-38, %v3624
  %v3626 = vsel %vm3623, %v3625, %v3621
  %v3627 = vmul.f32 1.0, %v3626
  %v3628 = vxor.u32 %v3351, 2147483648
  %v3629 = vmul.f32 %v3628, 1.442695
  %v3630 = vpow.pop %v3629
  %v3631 = vadd.f32 %v3630, 1.0
  %v3632 = vrcp.pop %v3631
  %v3633 = vmul.f32 %v3631, %v3632
  %v3634 = vsub.f32 1.0, %v3633
  %v3635 = vmul.f32 %v3632, %v3634
  %v3636 = vadd.f32 %v3632, %v3635
  %vm3637 = vweird.f32 %v3631
  %vm3638 = vweird.f32 %v3632
  %vm3639 = vmor %vm3637, %vm3638
  %v3640 = vsel %vm3639, %v3632, %v3636
  %v3641 = vand.u32 2147483647, %v3631
  %vm3642 = vcmp.eq.f32.partialorder %v3641, 8.507059e+37
  %v3643 = vand.u32 %v3631, 2147483648
  %v3644 = vor.u32 1.1754944e-38, %v3643
  %v3645 = vsel %vm3642, %v3644, %v3640
  %v3646 = vmul.f32 1.0, %v3645
  %v3647 = vtanh.pop %v3352
  %v3648 = vxor.u32 %v3353, 2147483648
  %v3649 = vmul.f32 %v3648, 1.442695
  %v3650 = vpow.pop %v3649
  %v3651 = vadd.f32 %v3650, 1.0
  %v3652 = vrcp.pop %v3651
  %v3653 = vmul.f32 %v3651, %v3652
  %v3654 = vsub.f32 1.0, %v3653
  %v3655 = vmul.f32 %v3652, %v3654
  %v3656 = vadd.f32 %v3652, %v3655
  %vm3657 = vweird.f32 %v3651
  %vm3658 = vweird.f32 %v3652
  %vm3659 = vmor %vm3657, %vm3658
  %v3660 = vsel %vm3659, %v3652, %v3656
  %v3661 = vand.u32 2147483647, %v3651
  %vm3662 = vcmp.eq.f32.partialorder %v3661, 8.507059e+37
  %v3663 = vand.u32 %v3651, 2147483648
  %v3664 = vor.u32 1.1754944e-38, %v3663
  %v3665 = vsel %vm3662, %v3664, %v3660
  %v3666 = vmul.f32 1.0, %v3665
  %v3667 = vmul.f32 %v3646, %v3608
  %v3668 = vmul.f32 %v3627, %v3647
  %v3669 = vadd.f32 %v3667, %v3668
  %v3670 = vtanh.pop %v3669
  %v3671 = vmul.f32 %v3666, %v3670
  %v3672 = vld [vmem:[#allocation10] sm:$0xff]
  %v3673 = vxor.u32 %v3604, 2147483648
  %v3674 = vmul.f32 %v3673, 1.442695
  %v3675 = vpow.pop %v3674
  %v3676 = vadd.f32 %v3675, 1.0
  %v3677 = vrcp.pop %v3676
  %v3678 = vmul.f32 %v3676, %v3677
  %v3679 = vsub.f32 1.0, %v3678
  %v3680 = vmul.f32 %v3677, %v3679
  %v3681 = vadd.f32 %v3677, %v3680
  %vm3682 = vweird.f32 %v3676
  %vm3683 = vweird.f32 %v3677
  %vm3684 = vmor %vm3682, %vm3683
  %v3685 = vsel %vm3684, %v3677, %v3681
  %v3686 = vand.u32 2147483647, %v3676
  %vm3687 = vcmp.eq.f32.partialorder %v3686, 8.507059e+37
  %v3688 = vand.u32 %v3676, 2147483648
  %v3689 = vor.u32 1.1754944e-38, %v3688
  %v3690 = vsel %vm3687, %v3689, %v3685
  %v3691 = vmul.f32 1.0, %v3690
  %v3692 = vxor.u32 %v3605, 2147483648
  %v3693 = vmul.f32 %v3692, 1.442695
  %v3694 = vpow.pop %v3693
  %v3695 = vadd.f32 %v3694, 1.0
  %v3696 = vrcp.pop %v3695
  %v3697 = vmul.f32 %v3695, %v3696
  %v3698 = vsub.f32 1.0, %v3697
  %v3699 = vmul.f32 %v3696, %v3698
  %v3700 = vadd.f32 %v3696, %v3699
  %vm3701 = vweird.f32 %v3695
  %vm3702 = vweird.f32 %v3696
  %vm3703 = vmor %vm3701, %vm3702
  %v3704 = vsel %vm3703, %v3696, %v3700
  %v3705 = vand.u32 2147483647, %v3695
  %vm3706 = vcmp.eq.f32.partialorder %v3705, 8.507059e+37
  %v3707 = vand.u32 %v3695, 2147483648
  %v3708 = vor.u32 1.1754944e-38, %v3707
  %v3709 = vsel %vm3706, %v3708, %v3704
  %v3710 = vmul.f32 1.0, %v3709
  %v3711 = vtanh.pop %v3606
  %v3712 = vxor.u32 %v3607, 2147483648
  %v3713 = vmul.f32 %v3712, 1.442695
  %v3714 = vpow.pop %v3713
  %v3715 = vadd.f32 %v3714, 1.0
  %v3716 = vrcp.pop %v3715
  %v3717 = vmul.f32 %v3715, %v3716
  %v3718 = vsub.f32 1.0, %v3717
  %v3719 = vmul.f32 %v3716, %v3718
  %v3720 = vadd.f32 %v3716, %v3719
  %vm3721 = vweird.f32 %v3715
  %vm3722 = vweird.f32 %v3716
  %vm3723 = vmor %vm3721, %vm3722
  %v3724 = vsel %vm3723, %v3716, %v3720
  %v3725 = vand.u32 2147483647, %v3715
  %vm3726 = vcmp.eq.f32.partialorder %v3725, 8.507059e+37
  %v3727 = vand.u32 %v3715, 2147483648
  %v3728 = vor.u32 1.1754944e-38, %v3727
  %v3729 = vsel %vm3726, %v3728, %v3724
  %v3730 = vmul.f32 1.0, %v3729
  %v3731 = vmul.f32 %v3710, %v3672
  %v3732 = vmul.f32 %v3691, %v3711
  %v3733 = vadd.f32 %v3731, %v3732
  %v3734 = vtanh.pop %v3733
  %v3735 = vmul.f32 %v3730, %v3734
  %3736 = vst [vmem:[#allocation7] sm:$0xff] %v3671
  %3737 = vst [vmem:[#allocation8] sm:$0xff] %v3669
  %3738 = vst [vmem:[#allocation9] sm:$0xff] %v3735
  %3739 = vst [vmem:[#allocation10] sm:$0xff] %v3733
  %3740 = vst [vmem:[#allocation5 + $0x20] sm:$0xff] %v3671
  %3741 = vst [vmem:[#allocation6 + $0x18] sm:$0xff] %v3735
  %v3742 = vld [vmem:[#allocation2 + $0xa0] sm:$0xff]
  %v3743 = vld [vmem:[#allocation2 + $0xa8] sm:$0xff]
  %v3744 = vld [vmem:[#allocation2 + $0xb0] sm:$0xff]
  %v3745 = vld [vmem:[#allocation2 + $0xb8] sm:$0xff]
  %v3746 = vld [vmem:[#allocation7] sm:$0xff]
  %v3747 = vpack.c.bf16 %v3746, %v3746
  %v3748 = vld [vmem:[%s2] sm:$0xff]
  %v3749 = vld [vmem:[%s2 + $0x8] sm:$0xff]
  %v3750 = vld [vmem:[%s2 + $0x10] sm:$0xff]
  %v3751 = vld [vmem:[%s2 + $0x18] sm:$0xff]
  %v3752 = vld [vmem:[%s2 + $0x20] sm:$0xff]
  %v3753 = vld [vmem:[%s2 + $0x28] sm:$0xff]
  %v3754 = vld [vmem:[%s2 + $0x30] sm:$0xff]
  %v3755 = vld [vmem:[%s2 + $0x38] sm:$0xff]
  %v3756 = vld [vmem:[%s2 + $0x40] sm:$0xff]
  %v3757 = vld [vmem:[%s2 + $0x48] sm:$0xff]
  %v3758 = vld [vmem:[%s2 + $0x50] sm:$0xff]
  %v3759 = vld [vmem:[%s2 + $0x58] sm:$0xff]
  %v3760 = vld [vmem:[%s2 + $0x60] sm:$0xff]
  %v3761 = vld [vmem:[%s2 + $0x68] sm:$0xff]
  %v3762 = vld [vmem:[%s2 + $0x70] sm:$0xff]
  %v3763 = vld [vmem:[%s2 + $0x78] sm:$0xff]
  %v3764 = vld [vmem:[%s2 + $0x80] sm:$0xff]
  %v3765 = vld [vmem:[%s2 + $0x88] sm:$0xff]
  %v3766 = vld [vmem:[%s2 + $0x90] sm:$0xff]
  %v3767 = vld [vmem:[%s2 + $0x98] sm:$0xff]
  %v3768 = vld [vmem:[%s2 + $0xa0] sm:$0xff]
  %v3769 = vld [vmem:[%s2 + $0xa8] sm:$0xff]
  %v3770 = vld [vmem:[%s2 + $0xb0] sm:$0xff]
  %v3771 = vld [vmem:[%s2 + $0xb8] sm:$0xff]
  %v3772 = vld [vmem:[%s2 + $0xc0] sm:$0xff]
  %v3773 = vld [vmem:[%s2 + $0xc8] sm:$0xff]
  %v3774 = vld [vmem:[%s2 + $0xd0] sm:$0xff]
  %v3775 = vld [vmem:[%s2 + $0xd8] sm:$0xff]
  %v3776 = vld [vmem:[%s2 + $0xe0] sm:$0xff]
  %v3777 = vld [vmem:[%s2 + $0xe8] sm:$0xff]
  %v3778 = vld [vmem:[%s2 + $0xf0] sm:$0xff]
  %v3779 = vld [vmem:[%s2 + $0xf8] sm:$0xff]
  %v3812 = vunpack.c.l.b16 %v3748
  %v3813 = vunpack.c.h.b16 %v3748
  %v3814 = vunpack.c.l.b16 %v3749
  %v3815 = vunpack.c.h.b16 %v3749
  %v3816 = vunpack.c.l.b16 %v3750
  %v3817 = vunpack.c.h.b16 %v3750
  %v3818 = vunpack.c.l.b16 %v3751
  %v3819 = vunpack.c.h.b16 %v3751
  %v3820 = vunpack.c.l.b16 %v3752
  %v3821 = vunpack.c.h.b16 %v3752
  %v3822 = vunpack.c.l.b16 %v3753
  %v3823 = vunpack.c.h.b16 %v3753
  %v3824 = vunpack.c.l.b16 %v3754
  %v3825 = vunpack.c.h.b16 %v3754
  %v3826 = vunpack.c.l.b16 %v3755
  %v3827 = vunpack.c.h.b16 %v3755
  %v3828 = vunpack.c.l.b16 %v3756
  %v3829 = vunpack.c.h.b16 %v3756
  %v3830 = vunpack.c.l.b16 %v3757
  %v3831 = vunpack.c.h.b16 %v3757
  %v3832 = vunpack.c.l.b16 %v3758
  %v3833 = vunpack.c.h.b16 %v3758
  %v3834 = vunpack.c.l.b16 %v3759
  %v3835 = vunpack.c.h.b16 %v3759
  %v3836 = vunpack.c.l.b16 %v3760
  %v3837 = vunpack.c.h.b16 %v3760
  %v3838 = vunpack.c.l.b16 %v3761
  %v3839 = vunpack.c.h.b16 %v3761
  %v3840 = vunpack.c.l.b16 %v3762
  %v3841 = vunpack.c.h.b16 %v3762
  %v3842 = vunpack.c.l.b16 %v3763
  %v3843 = vunpack.c.h.b16 %v3763
  %v3844 = vunpack.c.l.b16 %v3764
  %v3845 = vunpack.c.h.b16 %v3764
  %v3846 = vunpack.c.l.b16 %v3765
  %v3847 = vunpack.c.h.b16 %v3765
  %v3848 = vunpack.c.l.b16 %v3766
  %v3849 = vunpack.c.h.b16 %v3766
  %v3850 = vunpack.c.l.b16 %v3767
  %v3851 = vunpack.c.h.b16 %v3767
  %v3852 = vunpack.c.l.b16 %v3768
  %v3853 = vunpack.c.h.b16 %v3768
  %v3854 = vunpack.c.l.b16 %v3769
  %v3855 = vunpack.c.h.b16 %v3769
  %v3856 = vunpack.c.l.b16 %v3770
  %v3857 = vunpack.c.h.b16 %v3770
  %v3858 = vunpack.c.l.b16 %v3771
  %v3859 = vunpack.c.h.b16 %v3771
  %v3860 = vunpack.c.l.b16 %v3772
  %v3861 = vunpack.c.h.b16 %v3772
  %v3862 = vunpack.c.l.b16 %v3773
  %v3863 = vunpack.c.h.b16 %v3773
  %v3864 = vunpack.c.l.b16 %v3774
  %v3865 = vunpack.c.h.b16 %v3774
  %v3866 = vunpack.c.l.b16 %v3775
  %v3867 = vunpack.c.h.b16 %v3775
  %v3868 = vunpack.c.l.b16 %v3776
  %v3869 = vunpack.c.h.b16 %v3776
  %v3870 = vunpack.c.l.b16 %v3777
  %v3871 = vunpack.c.h.b16 %v3777
  %v3872 = vunpack.c.l.b16 %v3778
  %v3873 = vunpack.c.h.b16 %v3778
  %v3874 = vunpack.c.l.b16 %v3779
  %v3875 = vunpack.c.h.b16 %v3779
  %v3876 = vpack.c.b16 %v3816, %v3812
  %v3877 = vpack.c.b16 %v3817, %v3813
  %v3878 = vpack.c.b16 %v3818, %v3814
  %v3879 = vpack.c.b16 %v3819, %v3815
  %v3880 = vpack.c.b16 %v3824, %v3820
  %v3881 = vpack.c.b16 %v3825, %v3821
  %v3882 = vpack.c.b16 %v3826, %v3822
  %v3883 = vpack.c.b16 %v3827, %v3823
  %v3884 = vpack.c.b16 %v3832, %v3828
  %v3885 = vpack.c.b16 %v3833, %v3829
  %v3886 = vpack.c.b16 %v3834, %v3830
  %v3887 = vpack.c.b16 %v3835, %v3831
  %v3888 = vpack.c.b16 %v3840, %v3836
  %v3889 = vpack.c.b16 %v3841, %v3837
  %v3890 = vpack.c.b16 %v3842, %v3838
  %v3891 = vpack.c.b16 %v3843, %v3839
  %v3892 = vpack.c.b16 %v3848, %v3844
  %v3893 = vpack.c.b16 %v3849, %v3845
  %v3894 = vpack.c.b16 %v3850, %v3846
  %v3895 = vpack.c.b16 %v3851, %v3847
  %v3896 = vpack.c.b16 %v3856, %v3852
  %v3897 = vpack.c.b16 %v3857, %v3853
  %v3898 = vpack.c.b16 %v3858, %v3854
  %v3899 = vpack.c.b16 %v3859, %v3855
  %v3900 = vpack.c.b16 %v3864, %v3860
  %v3901 = vpack.c.b16 %v3865, %v3861
  %v3902 = vpack.c.b16 %v3866, %v3862
  %v3903 = vpack.c.b16 %v3867, %v3863
  %v3904 = vpack.c.b16 %v3872, %v3868
  %v3905 = vpack.c.b16 %v3873, %v3869
  %v3906 = vpack.c.b16 %v3874, %v3870
  %v3907 = vpack.c.b16 %v3875, %v3871
  %3940 = vmatpush.bf16.msra.mxu0 %v3904
  %3941 = vmatpush.bf16.msra.mxu0 %v3900
  %3942 = vmatpush.bf16.msra.mxu0 %v3896
  %3943 = vmatpush.bf16.msra.mxu0 %v3892
  %3944 = vmatpush.bf16.msra.mxu0 %v3888
  %3945 = vmatpush.bf16.msra.mxu0 %v3884
  %3946 = vmatpush.bf16.msra.mxu0 %v3880
  %3947 = vmatpush.bf16.msra.mxu0 %v3876
  %3948 = vmatmul.bf16.gmra.mxu0 %v3747
  %v3949 = vpop.f32.mrf.mxu0
  %v3950 = vadd.f32 0.0, %v3949
  %v3951 = vpop.f32.mrf.mxu0
  %3952 = vdwg.mxu0
  %3953 = vmatpush.bf16.msra.mxu0 %v3905
  %3954 = vmatpush.bf16.msra.mxu0 %v3901
  %3955 = vmatpush.bf16.msra.mxu0 %v3897
  %3956 = vmatpush.bf16.msra.mxu0 %v3893
  %3957 = vmatpush.bf16.msra.mxu0 %v3889
  %3958 = vmatpush.bf16.msra.mxu0 %v3885
  %3959 = vmatpush.bf16.msra.mxu0 %v3881
  %3960 = vmatpush.bf16.msra.mxu0 %v3877
  %3961 = vmatmul.bf16.gmra.mxu0 %v3747
  %v3962 = vpop.f32.mrf.mxu0
  %v3963 = vadd.f32 0.0, %v3962
  %v3964 = vpop.f32.mrf.mxu0
  %3965 = vdwg.mxu0
  %3966 = vmatpush.bf16.msra.mxu0 %v3906
  %3967 = vmatpush.bf16.msra.mxu0 %v3902
  %3968 = vmatpush.bf16.msra.mxu0 %v3898
  %3969 = vmatpush.bf16.msra.mxu0 %v3894
  %3970 = vmatpush.bf16.msra.mxu0 %v3890
  %3971 = vmatpush.bf16.msra.mxu0 %v3886
  %3972 = vmatpush.bf16.msra.mxu0 %v3882
  %3973 = vmatpush.bf16.msra.mxu0 %v3878
  %3974 = vmatmul.bf16.gmra.mxu0 %v3747
  %v3975 = vpop.f32.mrf.mxu0
  %v3976 = vadd.f32 0.0, %v3975
  %v3977 = vpop.f32.mrf.mxu0
  %3978 = vdwg.mxu0
  %3979 = vmatpush.bf16.msra.mxu0 %v3907
  %3980 = vmatpush.bf16.msra.mxu0 %v3903
  %3981 = vmatpush.bf16.msra.mxu0 %v3899
  %3982 = vmatpush.bf16.msra.mxu0 %v3895
  %3983 = vmatpush.bf16.msra.mxu0 %v3891
  %3984 = vmatpush.bf16.msra.mxu0 %v3887
  %3985 = vmatpush.bf16.msra.mxu0 %v3883
  %3986 = vmatpush.bf16.msra.mxu0 %v3879
  %3987 = vmatmul.bf16.gmra.mxu0 %v3747
  %v3988 = vpop.f32.mrf.mxu0
  %v3989 = vadd.f32 0.0, %v3988
  %v3990 = vpop.f32.mrf.mxu0
  %3991 = vdwg.mxu0
  %v3992 = vadd.f32 %v3742, %v3950
  %v3993 = vadd.f32 %v3743, %v3963
  %v3994 = vadd.f32 %v3744, %v3976
  %v3995 = vadd.f32 %v3745, %v3989
  %v3996 = vld [vmem:[#allocation3 + $0x40] sm:$0xff]
  %v3997 = vld [vmem:[#allocation3 + $0x48] sm:$0xff]
  %v3998 = vld [vmem:[#allocation3 + $0x50] sm:$0xff]
  %v3999 = vld [vmem:[#allocation3 + $0x58] sm:$0xff]
  %v4000 = vld [vmem:[#allocation9] sm:$0xff]
  %v4001 = vpack.c.bf16 %v4000, %v4000
  %v4002 = vld [vmem:[%s5] sm:$0xff]
  %v4003 = vld [vmem:[%s5 + $0x8] sm:$0xff]
  %v4004 = vld [vmem:[%s5 + $0x10] sm:$0xff]
  %v4005 = vld [vmem:[%s5 + $0x18] sm:$0xff]
  %v4006 = vld [vmem:[%s5 + $0x20] sm:$0xff]
  %v4007 = vld [vmem:[%s5 + $0x28] sm:$0xff]
  %v4008 = vld [vmem:[%s5 + $0x30] sm:$0xff]
  %v4009 = vld [vmem:[%s5 + $0x38] sm:$0xff]
  %v4010 = vld [vmem:[%s5 + $0x40] sm:$0xff]
  %v4011 = vld [vmem:[%s5 + $0x48] sm:$0xff]
  %v4012 = vld [vmem:[%s5 + $0x50] sm:$0xff]
  %v4013 = vld [vmem:[%s5 + $0x58] sm:$0xff]
  %v4014 = vld [vmem:[%s5 + $0x60] sm:$0xff]
  %v4015 = vld [vmem:[%s5 + $0x68] sm:$0xff]
  %v4016 = vld [vmem:[%s5 + $0x70] sm:$0xff]
  %v4017 = vld [vmem:[%s5 + $0x78] sm:$0xff]
  %v4018 = vld [vmem:[%s5 + $0x80] sm:$0xff]
  %v4019 = vld [vmem:[%s5 + $0x88] sm:$0xff]
  %v4020 = vld [vmem:[%s5 + $0x90] sm:$0xff]
  %v4021 = vld [vmem:[%s5 + $0x98] sm:$0xff]
  %v4022 = vld [vmem:[%s5 + $0xa0] sm:$0xff]
  %v4023 = vld [vmem:[%s5 + $0xa8] sm:$0xff]
  %v4024 = vld [vmem:[%s5 + $0xb0] sm:$0xff]
  %v4025 = vld [vmem:[%s5 + $0xb8] sm:$0xff]
  %v4026 = vld [vmem:[%s5 + $0xc0] sm:$0xff]
  %v4027 = vld [vmem:[%s5 + $0xc8] sm:$0xff]
  %v4028 = vld [vmem:[%s5 + $0xd0] sm:$0xff]
  %v4029 = vld [vmem:[%s5 + $0xd8] sm:$0xff]
  %v4030 = vld [vmem:[%s5 + $0xe0] sm:$0xff]
  %v4031 = vld [vmem:[%s5 + $0xe8] sm:$0xff]
  %v4032 = vld [vmem:[%s5 + $0xf0] sm:$0xff]
  %v4033 = vld [vmem:[%s5 + $0xf8] sm:$0xff]
  %v4066 = vunpack.c.l.b16 %v4002
  %v4067 = vunpack.c.h.b16 %v4002
  %v4068 = vunpack.c.l.b16 %v4003
  %v4069 = vunpack.c.h.b16 %v4003
  %v4070 = vunpack.c.l.b16 %v4004
  %v4071 = vunpack.c.h.b16 %v4004
  %v4072 = vunpack.c.l.b16 %v4005
  %v4073 = vunpack.c.h.b16 %v4005
  %v4074 = vunpack.c.l.b16 %v4006
  %v4075 = vunpack.c.h.b16 %v4006
  %v4076 = vunpack.c.l.b16 %v4007
  %v4077 = vunpack.c.h.b16 %v4007
  %v4078 = vunpack.c.l.b16 %v4008
  %v4079 = vunpack.c.h.b16 %v4008
  %v4080 = vunpack.c.l.b16 %v4009
  %v4081 = vunpack.c.h.b16 %v4009
  %v4082 = vunpack.c.l.b16 %v4010
  %v4083 = vunpack.c.h.b16 %v4010
  %v4084 = vunpack.c.l.b16 %v4011
  %v4085 = vunpack.c.h.b16 %v4011
  %v4086 = vunpack.c.l.b16 %v4012
  %v4087 = vunpack.c.h.b16 %v4012
  %v4088 = vunpack.c.l.b16 %v4013
  %v4089 = vunpack.c.h.b16 %v4013
  %v4090 = vunpack.c.l.b16 %v4014
  %v4091 = vunpack.c.h.b16 %v4014
  %v4092 = vunpack.c.l.b16 %v4015
  %v4093 = vunpack.c.h.b16 %v4015
  %v4094 = vunpack.c.l.b16 %v4016
  %v4095 = vunpack.c.h.b16 %v4016
  %v4096 = vunpack.c.l.b16 %v4017
  %v4097 = vunpack.c.h.b16 %v4017
  %v4098 = vunpack.c.l.b16 %v4018
  %v4099 = vunpack.c.h.b16 %v4018
  %v4100 = vunpack.c.l.b16 %v4019
  %v4101 = vunpack.c.h.b16 %v4019
  %v4102 = vunpack.c.l.b16 %v4020
  %v4103 = vunpack.c.h.b16 %v4020
  %v4104 = vunpack.c.l.b16 %v4021
  %v4105 = vunpack.c.h.b16 %v4021
  %v4106 = vunpack.c.l.b16 %v4022
  %v4107 = vunpack.c.h.b16 %v4022
  %v4108 = vunpack.c.l.b16 %v4023
  %v4109 = vunpack.c.h.b16 %v4023
  %v4110 = vunpack.c.l.b16 %v4024
  %v4111 = vunpack.c.h.b16 %v4024
  %v4112 = vunpack.c.l.b16 %v4025
  %v4113 = vunpack.c.h.b16 %v4025
  %v4114 = vunpack.c.l.b16 %v4026
  %v4115 = vunpack.c.h.b16 %v4026
  %v4116 = vunpack.c.l.b16 %v4027
  %v4117 = vunpack.c.h.b16 %v4027
  %v4118 = vunpack.c.l.b16 %v4028
  %v4119 = vunpack.c.h.b16 %v4028
  %v4120 = vunpack.c.l.b16 %v4029
  %v4121 = vunpack.c.h.b16 %v4029
  %v4122 = vunpack.c.l.b16 %v4030
  %v4123 = vunpack.c.h.b16 %v4030
  %v4124 = vunpack.c.l.b16 %v4031
  %v4125 = vunpack.c.h.b16 %v4031
  %v4126 = vunpack.c.l.b16 %v4032
  %v4127 = vunpack.c.h.b16 %v4032
  %v4128 = vunpack.c.l.b16 %v4033
  %v4129 = vunpack.c.h.b16 %v4033
  %v4130 = vpack.c.b16 %v4070, %v4066
  %v4131 = vpack.c.b16 %v4071, %v4067
  %v4132 = vpack.c.b16 %v4072, %v4068
  %v4133 = vpack.c.b16 %v4073, %v4069
  %v4134 = vpack.c.b16 %v4078, %v4074
  %v4135 = vpack.c.b16 %v4079, %v4075
  %v4136 = vpack.c.b16 %v4080, %v4076
  %v4137 = vpack.c.b16 %v4081, %v4077
  %v4138 = vpack.c.b16 %v4086, %v4082
  %v4139 = vpack.c.b16 %v4087, %v4083
  %v4140 = vpack.c.b16 %v4088, %v4084
  %v4141 = vpack.c.b16 %v4089, %v4085
  %v4142 = vpack.c.b16 %v4094, %v4090
  %v4143 = vpack.c.b16 %v4095, %v4091
  %v4144 = vpack.c.b16 %v4096, %v4092
  %v4145 = vpack.c.b16 %v4097, %v4093
  %v4146 = vpack.c.b16 %v4102, %v4098
  %v4147 = vpack.c.b16 %v4103, %v4099
  %v4148 = vpack.c.b16 %v4104, %v4100
  %v4149 = vpack.c.b16 %v4105, %v4101
  %v4150 = vpack.c.b16 %v4110, %v4106
  %v4151 = vpack.c.b16 %v4111, %v4107
  %v4152 = vpack.c.b16 %v4112, %v4108
  %v4153 = vpack.c.b16 %v4113, %v4109
  %v4154 = vpack.c.b16 %v4118, %v4114
  %v4155 = vpack.c.b16 %v4119, %v4115
  %v4156 = vpack.c.b16 %v4120, %v4116
  %v4157 = vpack.c.b16 %v4121, %v4117
  %v4158 = vpack.c.b16 %v4126, %v4122
  %v4159 = vpack.c.b16 %v4127, %v4123
  %v4160 = vpack.c.b16 %v4128, %v4124
  %v4161 = vpack.c.b16 %v4129, %v4125
  %4194 = vmatpush.bf16.msra.mxu0 %v4158
  %4195 = vmatpush.bf16.msra.mxu0 %v4154
  %4196 = vmatpush.bf16.msra.mxu0 %v4150
  %4197 = vmatpush.bf16.msra.mxu0 %v4146
  %4198 = vmatpush.bf16.msra.mxu0 %v4142
  %4199 = vmatpush.bf16.msra.mxu0 %v4138
  %4200 = vmatpush.bf16.msra.mxu0 %v4134
  %4201 = vmatpush.bf16.msra.mxu0 %v4130
  %4202 = vmatmul.bf16.gmra.mxu0 %v4001
  %v4203 = vpop.f32.mrf.mxu0
  %v4204 = vadd.f32 0.0, %v4203
  %v4205 = vpop.f32.mrf.mxu0
  %4206 = vdwg.mxu0
  %4207 = vmatpush.bf16.msra.mxu0 %v4159
  %4208 = vmatpush.bf16.msra.mxu0 %v4155
  %4209 = vmatpush.bf16.msra.mxu0 %v4151
  %4210 = vmatpush.bf16.msra.mxu0 %v4147
  %4211 = vmatpush.bf16.msra.mxu0 %v4143
  %4212 = vmatpush.bf16.msra.mxu0 %v4139
  %4213 = vmatpush.bf16.msra.mxu0 %v4135
  %4214 = vmatpush.bf16.msra.mxu0 %v4131
  %4215 = vmatmul.bf16.gmra.mxu0 %v4001
  %v4216 = vpop.f32.mrf.mxu0
  %v4217 = vadd.f32 0.0, %v4216
  %v4218 = vpop.f32.mrf.mxu0
  %4219 = vdwg.mxu0
  %4220 = vmatpush.bf16.msra.mxu0 %v4160
  %4221 = vmatpush.bf16.msra.mxu0 %v4156
  %4222 = vmatpush.bf16.msra.mxu0 %v4152
  %4223 = vmatpush.bf16.msra.mxu0 %v4148
  %4224 = vmatpush.bf16.msra.mxu0 %v4144
  %4225 = vmatpush.bf16.msra.mxu0 %v4140
  %4226 = vmatpush.bf16.msra.mxu0 %v4136
  %4227 = vmatpush.bf16.msra.mxu0 %v4132
  %4228 = vmatmul.bf16.gmra.mxu0 %v4001
  %v4229 = vpop.f32.mrf.mxu0
  %v4230 = vadd.f32 0.0, %v4229
  %v4231 = vpop.f32.mrf.mxu0
  %4232 = vdwg.mxu0
  %4233 = vmatpush.bf16.msra.mxu0 %v4161
  %4234 = vmatpush.bf16.msra.mxu0 %v4157
  %4235 = vmatpush.bf16.msra.mxu0 %v4153
  %4236 = vmatpush.bf16.msra.mxu0 %v4149
  %4237 = vmatpush.bf16.msra.mxu0 %v4145
  %4238 = vmatpush.bf16.msra.mxu0 %v4141
  %4239 = vmatpush.bf16.msra.mxu0 %v4137
  %4240 = vmatpush.bf16.msra.mxu0 %v4133
  %4241 = vmatmul.bf16.gmra.mxu0 %v4001
  %v4242 = vpop.f32.mrf.mxu0
  %v4243 = vadd.f32 0.0, %v4242
  %v4244 = vpop.f32.mrf.mxu0
  %4245 = vdwg.mxu0
  %v4246 = vadd.f32 %v3996, %v4204
  %v4247 = vadd.f32 %v3997, %v4217
  %v4248 = vadd.f32 %v3998, %v4230
  %v4249 = vadd.f32 %v3999, %v4243
  %v4250 = vld [vmem:[#allocation8] sm:$0xff]
  %v4251 = vxor.u32 %v3992, 2147483648
  %v4252 = vmul.f32 %v4251, 1.442695
  %v4253 = vpow.pop %v4252
  %v4254 = vadd.f32 %v4253, 1.0
  %v4255 = vrcp.pop %v4254
  %v4256 = vmul.f32 %v4254, %v4255
  %v4257 = vsub.f32 1.0, %v4256
  %v4258 = vmul.f32 %v4255, %v4257
  %v4259 = vadd.f32 %v4255, %v4258
  %vm4260 = vweird.f32 %v4254
  %vm4261 = vweird.f32 %v4255
  %vm4262 = vmor %vm4260, %vm4261
  %v4263 = vsel %vm4262, %v4255, %v4259
  %v4264 = vand.u32 2147483647, %v4254
  %vm4265 = vcmp.eq.f32.partialorder %v4264, 8.507059e+37
  %v4266 = vand.u32 %v4254, 2147483648
  %v4267 = vor.u32 1.1754944e-38, %v4266
  %v4268 = vsel %vm4265, %v4267, %v4263
  %v4269 = vmul.f32 1.0, %v4268
  %v4270 = vxor.u32 %v3993, 2147483648
  %v4271 = vmul.f32 %v4270, 1.442695
  %v4272 = vpow.pop %v4271
  %v4273 = vadd.f32 %v4272, 1.0
  %v4274 = vrcp.pop %v4273
  %v4275 = vmul.f32 %v4273, %v4274
  %v4276 = vsub.f32 1.0, %v4275
  %v4277 = vmul.f32 %v4274, %v4276
  %v4278 = vadd.f32 %v4274, %v4277
  %vm4279 = vweird.f32 %v4273
  %vm4280 = vweird.f32 %v4274
  %vm4281 = vmor %vm4279, %vm4280
  %v4282 = vsel %vm4281, %v4274, %v4278
  %v4283 = vand.u32 2147483647, %v4273
  %vm4284 = vcmp.eq.f32.partialorder %v4283, 8.507059e+37
  %v4285 = vand.u32 %v4273, 2147483648
  %v4286 = vor.u32 1.1754944e-38, %v4285
  %v4287 = vsel %vm4284, %v4286, %v4282
  %v4288 = vmul.f32 1.0, %v4287
  %v4289 = vtanh.pop %v3994
  %v4290 = vxor.u32 %v3995, 2147483648
  %v4291 = vmul.f32 %v4290, 1.442695
  %v4292 = vpow.pop %v4291
  %v4293 = vadd.f32 %v4292, 1.0
  %v4294 = vrcp.pop %v4293
  %v4295 = vmul.f32 %v4293, %v4294
  %v4296 = vsub.f32 1.0, %v4295
  %v4297 = vmul.f32 %v4294, %v4296
  %v4298 = vadd.f32 %v4294, %v4297
  %vm4299 = vweird.f32 %v4293
  %vm4300 = vweird.f32 %v4294
  %vm4301 = vmor %vm4299, %vm4300
  %v4302 = vsel %vm4301, %v4294, %v4298
  %v4303 = vand.u32 2147483647, %v4293
  %vm4304 = vcmp.eq.f32.partialorder %v4303, 8.507059e+37
  %v4305 = vand.u32 %v4293, 2147483648
  %v4306 = vor.u32 1.1754944e-38, %v4305
  %v4307 = vsel %vm4304, %v4306, %v4302
  %v4308 = vmul.f32 1.0, %v4307
  %v4309 = vmul.f32 %v4288, %v4250
  %v4310 = vmul.f32 %v4269, %v4289
  %v4311 = vadd.f32 %v4309, %v4310
  %v4312 = vtanh.pop %v4311
  %v4313 = vmul.f32 %v4308, %v4312
  %v4314 = vld [vmem:[#allocation10] sm:$0xff]
  %v4315 = vxor.u32 %v4246, 2147483648
  %v4316 = vmul.f32 %v4315, 1.442695
  %v4317 = vpow.pop %v4316
  %v4318 = vadd.f32 %v4317, 1.0
  %v4319 = vrcp.pop %v4318
  %v4320 = vmul.f32 %v4318, %v4319
  %v4321 = vsub.f32 1.0, %v4320
  %v4322 = vmul.f32 %v4319, %v4321
  %v4323 = vadd.f32 %v4319, %v4322
  %vm4324 = vweird.f32 %v4318
  %vm4325 = vweird.f32 %v4319
  %vm4326 = vmor %vm4324, %vm4325
  %v4327 = vsel %vm4326, %v4319, %v4323
  %v4328 = vand.u32 2147483647, %v4318
  %vm4329 = vcmp.eq.f32.partialorder %v4328, 8.507059e+37
  %v4330 = vand.u32 %v4318, 2147483648
  %v4331 = vor.u32 1.1754944e-38, %v4330
  %v4332 = vsel %vm4329, %v4331, %v4327
  %v4333 = vmul.f32 1.0, %v4332
  %v4334 = vxor.u32 %v4247, 2147483648
  %v4335 = vmul.f32 %v4334, 1.442695
  %v4336 = vpow.pop %v4335
  %v4337 = vadd.f32 %v4336, 1.0
  %v4338 = vrcp.pop %v4337
  %v4339 = vmul.f32 %v4337, %v4338
  %v4340 = vsub.f32 1.0, %v4339
  %v4341 = vmul.f32 %v4338, %v4340
  %v4342 = vadd.f32 %v4338, %v4341
  %vm4343 = vweird.f32 %v4337
  %vm4344 = vweird.f32 %v4338
  %vm4345 = vmor %vm4343, %vm4344
  %v4346 = vsel %vm4345, %v4338, %v4342
  %v4347 = vand.u32 2147483647, %v4337
  %vm4348 = vcmp.eq.f32.partialorder %v4347, 8.507059e+37
  %v4349 = vand.u32 %v4337, 2147483648
  %v4350 = vor.u32 1.1754944e-38, %v4349
  %v4351 = vsel %vm4348, %v4350, %v4346
  %v4352 = vmul.f32 1.0, %v4351
  %v4353 = vtanh.pop %v4248
  %v4354 = vxor.u32 %v4249, 2147483648
  %v4355 = vmul.f32 %v4354, 1.442695
  %v4356 = vpow.pop %v4355
  %v4357 = vadd.f32 %v4356, 1.0
  %v4358 = vrcp.pop %v4357
  %v4359 = vmul.f32 %v4357, %v4358
  %v4360 = vsub.f32 1.0, %v4359
  %v4361 = vmul.f32 %v4358, %v4360
  %v4362 = vadd.f32 %v4358, %v4361
  %vm4363 = vweird.f32 %v4357
  %vm4364 = vweird.f32 %v4358
  %vm4365 = vmor %vm4363, %vm4364
  %v4366 = vsel %vm4365, %v4358, %v4362
  %v4367 = vand.u32 2147483647, %v4357
  %vm4368 = vcmp.eq.f32.partialorder %v4367, 8.507059e+37
  %v4369 = vand.u32 %v4357, 2147483648
  %v4370 = vor.u32 1.1754944e-38, %v4369
  %v4371 = vsel %vm4368, %v4370, %v4366
  %v4372 = vmul.f32 1.0, %v4371
  %v4373 = vmul.f32 %v4352, %v4314
  %v4374 = vmul.f32 %v4333, %v4353
  %v4375 = vadd.f32 %v4373, %v4374
  %v4376 = vtanh.pop %v4375
  %v4377 = vmul.f32 %v4372, %v4376
  %4378 = vst [vmem:[#allocation7] sm:$0xff] %v4313
  %4379 = vst [vmem:[#allocation8] sm:$0xff] %v4311
  %4380 = vst [vmem:[#allocation9] sm:$0xff] %v4377
  %4381 = vst [vmem:[#allocation10] sm:$0xff] %v4375
  %4382 = vst [vmem:[#allocation5 + $0x28] sm:$0xff] %v4313
  %4383 = vst [vmem:[#allocation6 + $0x10] sm:$0xff] %v4377
  %v4384 = vld [vmem:[#allocation2 + $0xc0] sm:$0xff]
  %v4385 = vld [vmem:[#allocation2 + $0xc8] sm:$0xff]
  %v4386 = vld [vmem:[#allocation2 + $0xd0] sm:$0xff]
  %v4387 = vld [vmem:[#allocation2 + $0xd8] sm:$0xff]
  %v4388 = vld [vmem:[#allocation7] sm:$0xff]
  %v4389 = vpack.c.bf16 %v4388, %v4388
  %v4390 = vld [vmem:[%s2] sm:$0xff]
  %v4391 = vld [vmem:[%s2 + $0x8] sm:$0xff]
  %v4392 = vld [vmem:[%s2 + $0x10] sm:$0xff]
  %v4393 = vld [vmem:[%s2 + $0x18] sm:$0xff]
  %v4394 = vld [vmem:[%s2 + $0x20] sm:$0xff]
  %v4395 = vld [vmem:[%s2 + $0x28] sm:$0xff]
  %v4396 = vld [vmem:[%s2 + $0x30] sm:$0xff]
  %v4397 = vld [vmem:[%s2 + $0x38] sm:$0xff]
  %v4398 = vld [vmem:[%s2 + $0x40] sm:$0xff]
  %v4399 = vld [vmem:[%s2 + $0x48] sm:$0xff]
  %v4400 = vld [vmem:[%s2 + $0x50] sm:$0xff]
  %v4401 = vld [vmem:[%s2 + $0x58] sm:$0xff]
  %v4402 = vld [vmem:[%s2 + $0x60] sm:$0xff]
  %v4403 = vld [vmem:[%s2 + $0x68] sm:$0xff]
  %v4404 = vld [vmem:[%s2 + $0x70] sm:$0xff]
  %v4405 = vld [vmem:[%s2 + $0x78] sm:$0xff]
  %v4406 = vld [vmem:[%s2 + $0x80] sm:$0xff]
  %v4407 = vld [vmem:[%s2 + $0x88] sm:$0xff]
  %v4408 = vld [vmem:[%s2 + $0x90] sm:$0xff]
  %v4409 = vld [vmem:[%s2 + $0x98] sm:$0xff]
  %v4410 = vld [vmem:[%s2 + $0xa0] sm:$0xff]
  %v4411 = vld [vmem:[%s2 + $0xa8] sm:$0xff]
  %v4412 = vld [vmem:[%s2 + $0xb0] sm:$0xff]
  %v4413 = vld [vmem:[%s2 + $0xb8] sm:$0xff]
  %v4414 = vld [vmem:[%s2 + $0xc0] sm:$0xff]
  %v4415 = vld [vmem:[%s2 + $0xc8] sm:$0xff]
  %v4416 = vld [vmem:[%s2 + $0xd0] sm:$0xff]
  %v4417 = vld [vmem:[%s2 + $0xd8] sm:$0xff]
  %v4418 = vld [vmem:[%s2 + $0xe0] sm:$0xff]
  %v4419 = vld [vmem:[%s2 + $0xe8] sm:$0xff]
  %v4420 = vld [vmem:[%s2 + $0xf0] sm:$0xff]
  %v4421 = vld [vmem:[%s2 + $0xf8] sm:$0xff]
  %v4454 = vunpack.c.l.b16 %v4390
  %v4455 = vunpack.c.h.b16 %v4390
  %v4456 = vunpack.c.l.b16 %v4391
  %v4457 = vunpack.c.h.b16 %v4391
  %v4458 = vunpack.c.l.b16 %v4392
  %v4459 = vunpack.c.h.b16 %v4392
  %v4460 = vunpack.c.l.b16 %v4393
  %v4461 = vunpack.c.h.b16 %v4393
  %v4462 = vunpack.c.l.b16 %v4394
  %v4463 = vunpack.c.h.b16 %v4394
  %v4464 = vunpack.c.l.b16 %v4395
  %v4465 = vunpack.c.h.b16 %v4395
  %v4466 = vunpack.c.l.b16 %v4396
  %v4467 = vunpack.c.h.b16 %v4396
  %v4468 = vunpack.c.l.b16 %v4397
  %v4469 = vunpack.c.h.b16 %v4397
  %v4470 = vunpack.c.l.b16 %v4398
  %v4471 = vunpack.c.h.b16 %v4398
  %v4472 = vunpack.c.l.b16 %v4399
  %v4473 = vunpack.c.h.b16 %v4399
  %v4474 = vunpack.c.l.b16 %v4400
  %v4475 = vunpack.c.h.b16 %v4400
  %v4476 = vunpack.c.l.b16 %v4401
  %v4477 = vunpack.c.h.b16 %v4401
  %v4478 = vunpack.c.l.b16 %v4402
  %v4479 = vunpack.c.h.b16 %v4402
  %v4480 = vunpack.c.l.b16 %v4403
  %v4481 = vunpack.c.h.b16 %v4403
  %v4482 = vunpack.c.l.b16 %v4404
  %v4483 = vunpack.c.h.b16 %v4404
  %v4484 = vunpack.c.l.b16 %v4405
  %v4485 = vunpack.c.h.b16 %v4405
  %v4486 = vunpack.c.l.b16 %v4406
  %v4487 = vunpack.c.h.b16 %v4406
  %v4488 = vunpack.c.l.b16 %v4407
  %v4489 = vunpack.c.h.b16 %v4407
  %v4490 = vunpack.c.l.b16 %v4408
  %v4491 = vunpack.c.h.b16 %v4408
  %v4492 = vunpack.c.l.b16 %v4409
  %v4493 = vunpack.c.h.b16 %v4409
  %v4494 = vunpack.c.l.b16 %v4410
  %v4495 = vunpack.c.h.b16 %v4410
  %v4496 = vunpack.c.l.b16 %v4411
  %v4497 = vunpack.c.h.b16 %v4411
  %v4498 = vunpack.c.l.b16 %v4412
  %v4499 = vunpack.c.h.b16 %v4412
  %v4500 = vunpack.c.l.b16 %v4413
  %v4501 = vunpack.c.h.b16 %v4413
  %v4502 = vunpack.c.l.b16 %v4414
  %v4503 = vunpack.c.h.b16 %v4414
  %v4504 = vunpack.c.l.b16 %v4415
  %v4505 = vunpack.c.h.b16 %v4415
  %v4506 = vunpack.c.l.b16 %v4416
  %v4507 = vunpack.c.h.b16 %v4416
  %v4508 = vunpack.c.l.b16 %v4417
  %v4509 = vunpack.c.h.b16 %v4417
  %v4510 = vunpack.c.l.b16 %v4418
  %v4511 = vunpack.c.h.b16 %v4418
  %v4512 = vunpack.c.l.b16 %v4419
  %v4513 = vunpack.c.h.b16 %v4419
  %v4514 = vunpack.c.l.b16 %v4420
  %v4515 = vunpack.c.h.b16 %v4420
  %v4516 = vunpack.c.l.b16 %v4421
  %v4517 = vunpack.c.h.b16 %v4421
  %v4518 = vpack.c.b16 %v4458, %v4454
  %v4519 = vpack.c.b16 %v4459, %v4455
  %v4520 = vpack.c.b16 %v4460, %v4456
  %v4521 = vpack.c.b16 %v4461, %v4457
  %v4522 = vpack.c.b16 %v4466, %v4462
  %v4523 = vpack.c.b16 %v4467, %v4463
  %v4524 = vpack.c.b16 %v4468, %v4464
  %v4525 = vpack.c.b16 %v4469, %v4465
  %v4526 = vpack.c.b16 %v4474, %v4470
  %v4527 = vpack.c.b16 %v4475, %v4471
  %v4528 = vpack.c.b16 %v4476, %v4472
  %v4529 = vpack.c.b16 %v4477, %v4473
  %v4530 = vpack.c.b16 %v4482, %v4478
  %v4531 = vpack.c.b16 %v4483, %v4479
  %v4532 = vpack.c.b16 %v4484, %v4480
  %v4533 = vpack.c.b16 %v4485, %v4481
  %v4534 = vpack.c.b16 %v4490, %v4486
  %v4535 = vpack.c.b16 %v4491, %v4487
  %v4536 = vpack.c.b16 %v4492, %v4488
  %v4537 = vpack.c.b16 %v4493, %v4489
  %v4538 = vpack.c.b16 %v4498, %v4494
  %v4539 = vpack.c.b16 %v4499, %v4495
  %v4540 = vpack.c.b16 %v4500, %v4496
  %v4541 = vpack.c.b16 %v4501, %v4497
  %v4542 = vpack.c.b16 %v4506, %v4502
  %v4543 = vpack.c.b16 %v4507, %v4503
  %v4544 = vpack.c.b16 %v4508, %v4504
  %v4545 = vpack.c.b16 %v4509, %v4505
  %v4546 = vpack.c.b16 %v4514, %v4510
  %v4547 = vpack.c.b16 %v4515, %v4511
  %v4548 = vpack.c.b16 %v4516, %v4512
  %v4549 = vpack.c.b16 %v4517, %v4513
  %4582 = vmatpush.bf16.msra.mxu0 %v4546
  %4583 = vmatpush.bf16.msra.mxu0 %v4542
  %4584 = vmatpush.bf16.msra.mxu0 %v4538
  %4585 = vmatpush.bf16.msra.mxu0 %v4534
  %4586 = vmatpush.bf16.msra.mxu0 %v4530
  %4587 = vmatpush.bf16.msra.mxu0 %v4526
  %4588 = vmatpush.bf16.msra.mxu0 %v4522
  %4589 = vmatpush.bf16.msra.mxu0 %v4518
  %4590 = vmatmul.bf16.gmra.mxu0 %v4389
  %v4591 = vpop.f32.mrf.mxu0
  %v4592 = vadd.f32 0.0, %v4591
  %v4593 = vpop.f32.mrf.mxu0
  %4594 = vdwg.mxu0
  %4595 = vmatpush.bf16.msra.mxu0 %v4547
  %4596 = vmatpush.bf16.msra.mxu0 %v4543
  %4597 = vmatpush.bf16.msra.mxu0 %v4539
  %4598 = vmatpush.bf16.msra.mxu0 %v4535
  %4599 = vmatpush.bf16.msra.mxu0 %v4531
  %4600 = vmatpush.bf16.msra.mxu0 %v4527
  %4601 = vmatpush.bf16.msra.mxu0 %v4523
  %4602 = vmatpush.bf16.msra.mxu0 %v4519
  %4603 = vmatmul.bf16.gmra.mxu0 %v4389
  %v4604 = vpop.f32.mrf.mxu0
  %v4605 = vadd.f32 0.0, %v4604
  %v4606 = vpop.f32.mrf.mxu0
  %4607 = vdwg.mxu0
  %4608 = vmatpush.bf16.msra.mxu0 %v4548
  %4609 = vmatpush.bf16.msra.mxu0 %v4544
  %4610 = vmatpush.bf16.msra.mxu0 %v4540
  %4611 = vmatpush.bf16.msra.mxu0 %v4536
  %4612 = vmatpush.bf16.msra.mxu0 %v4532
  %4613 = vmatpush.bf16.msra.mxu0 %v4528
  %4614 = vmatpush.bf16.msra.mxu0 %v4524
  %4615 = vmatpush.bf16.msra.mxu0 %v4520
  %4616 = vmatmul.bf16.gmra.mxu0 %v4389
  %v4617 = vpop.f32.mrf.mxu0
  %v4618 = vadd.f32 0.0, %v4617
  %v4619 = vpop.f32.mrf.mxu0
  %4620 = vdwg.mxu0
  %4621 = vmatpush.bf16.msra.mxu0 %v4549
  %4622 = vmatpush.bf16.msra.mxu0 %v4545
  %4623 = vmatpush.bf16.msra.mxu0 %v4541
  %4624 = vmatpush.bf16.msra.mxu0 %v4537
  %4625 = vmatpush.bf16.msra.mxu0 %v4533
  %4626 = vmatpush.bf16.msra.mxu0 %v4529
  %4627 = vmatpush.bf16.msra.mxu0 %v4525
  %4628 = vmatpush.bf16.msra.mxu0 %v4521
  %4629 = vmatmul.bf16.gmra.mxu0 %v4389
  %v4630 = vpop.f32.mrf.mxu0
  %v4631 = vadd.f32 0.0, %v4630
  %v4632 = vpop.f32.mrf.mxu0
  %4633 = vdwg.mxu0
  %v4634 = vadd.f32 %v4384, %v4592
  %v4635 = vadd.f32 %v4385, %v4605
  %v4636 = vadd.f32 %v4386, %v4618
  %v4637 = vadd.f32 %v4387, %v4631
  %v4638 = vld [vmem:[#allocation3 + $0x20] sm:$0xff]
  %v4639 = vld [vmem:[#allocation3 + $0x28] sm:$0xff]
  %v4640 = vld [vmem:[#allocation3 + $0x30] sm:$0xff]
  %v4641 = vld [vmem:[#allocation3 + $0x38] sm:$0xff]
  %v4642 = vld [vmem:[#allocation9] sm:$0xff]
  %v4643 = vpack.c.bf16 %v4642, %v4642
  %v4644 = vld [vmem:[%s5] sm:$0xff]
  %v4645 = vld [vmem:[%s5 + $0x8] sm:$0xff]
  %v4646 = vld [vmem:[%s5 + $0x10] sm:$0xff]
  %v4647 = vld [vmem:[%s5 + $0x18] sm:$0xff]
  %v4648 = vld [vmem:[%s5 + $0x20] sm:$0xff]
  %v4649 = vld [vmem:[%s5 + $0x28] sm:$0xff]
  %v4650 = vld [vmem:[%s5 + $0x30] sm:$0xff]
  %v4651 = vld [vmem:[%s5 + $0x38] sm:$0xff]
  %v4652 = vld [vmem:[%s5 + $0x40] sm:$0xff]
  %v4653 = vld [vmem:[%s5 + $0x48] sm:$0xff]
  %v4654 = vld [vmem:[%s5 + $0x50] sm:$0xff]
  %v4655 = vld [vmem:[%s5 + $0x58] sm:$0xff]
  %v4656 = vld [vmem:[%s5 + $0x60] sm:$0xff]
  %v4657 = vld [vmem:[%s5 + $0x68] sm:$0xff]
  %v4658 = vld [vmem:[%s5 + $0x70] sm:$0xff]
  %v4659 = vld [vmem:[%s5 + $0x78] sm:$0xff]
  %v4660 = vld [vmem:[%s5 + $0x80] sm:$0xff]
  %v4661 = vld [vmem:[%s5 + $0x88] sm:$0xff]
  %v4662 = vld [vmem:[%s5 + $0x90] sm:$0xff]
  %v4663 = vld [vmem:[%s5 + $0x98] sm:$0xff]
  %v4664 = vld [vmem:[%s5 + $0xa0] sm:$0xff]
  %v4665 = vld [vmem:[%s5 + $0xa8] sm:$0xff]
  %v4666 = vld [vmem:[%s5 + $0xb0] sm:$0xff]
  %v4667 = vld [vmem:[%s5 + $0xb8] sm:$0xff]
  %v4668 = vld [vmem:[%s5 + $0xc0] sm:$0xff]
  %v4669 = vld [vmem:[%s5 + $0xc8] sm:$0xff]
  %v4670 = vld [vmem:[%s5 + $0xd0] sm:$0xff]
  %v4671 = vld [vmem:[%s5 + $0xd8] sm:$0xff]
  %v4672 = vld [vmem:[%s5 + $0xe0] sm:$0xff]
  %v4673 = vld [vmem:[%s5 + $0xe8] sm:$0xff]
  %v4674 = vld [vmem:[%s5 + $0xf0] sm:$0xff]
  %v4675 = vld [vmem:[%s5 + $0xf8] sm:$0xff]
  %v4708 = vunpack.c.l.b16 %v4644
  %v4709 = vunpack.c.h.b16 %v4644
  %v4710 = vunpack.c.l.b16 %v4645
  %v4711 = vunpack.c.h.b16 %v4645
  %v4712 = vunpack.c.l.b16 %v4646
  %v4713 = vunpack.c.h.b16 %v4646
  %v4714 = vunpack.c.l.b16 %v4647
  %v4715 = vunpack.c.h.b16 %v4647
  %v4716 = vunpack.c.l.b16 %v4648
  %v4717 = vunpack.c.h.b16 %v4648
  %v4718 = vunpack.c.l.b16 %v4649
  %v4719 = vunpack.c.h.b16 %v4649
  %v4720 = vunpack.c.l.b16 %v4650
  %v4721 = vunpack.c.h.b16 %v4650
  %v4722 = vunpack.c.l.b16 %v4651
  %v4723 = vunpack.c.h.b16 %v4651
  %v4724 = vunpack.c.l.b16 %v4652
  %v4725 = vunpack.c.h.b16 %v4652
  %v4726 = vunpack.c.l.b16 %v4653
  %v4727 = vunpack.c.h.b16 %v4653
  %v4728 = vunpack.c.l.b16 %v4654
  %v4729 = vunpack.c.h.b16 %v4654
  %v4730 = vunpack.c.l.b16 %v4655
  %v4731 = vunpack.c.h.b16 %v4655
  %v4732 = vunpack.c.l.b16 %v4656
  %v4733 = vunpack.c.h.b16 %v4656
  %v4734 = vunpack.c.l.b16 %v4657
  %v4735 = vunpack.c.h.b16 %v4657
  %v4736 = vunpack.c.l.b16 %v4658
  %v4737 = vunpack.c.h.b16 %v4658
  %v4738 = vunpack.c.l.b16 %v4659
  %v4739 = vunpack.c.h.b16 %v4659
  %v4740 = vunpack.c.l.b16 %v4660
  %v4741 = vunpack.c.h.b16 %v4660
  %v4742 = vunpack.c.l.b16 %v4661
  %v4743 = vunpack.c.h.b16 %v4661
  %v4744 = vunpack.c.l.b16 %v4662
  %v4745 = vunpack.c.h.b16 %v4662
  %v4746 = vunpack.c.l.b16 %v4663
  %v4747 = vunpack.c.h.b16 %v4663
  %v4748 = vunpack.c.l.b16 %v4664
  %v4749 = vunpack.c.h.b16 %v4664
  %v4750 = vunpack.c.l.b16 %v4665
  %v4751 = vunpack.c.h.b16 %v4665
  %v4752 = vunpack.c.l.b16 %v4666
  %v4753 = vunpack.c.h.b16 %v4666
  %v4754 = vunpack.c.l.b16 %v4667
  %v4755 = vunpack.c.h.b16 %v4667
  %v4756 = vunpack.c.l.b16 %v4668
  %v4757 = vunpack.c.h.b16 %v4668
  %v4758 = vunpack.c.l.b16 %v4669
  %v4759 = vunpack.c.h.b16 %v4669
  %v4760 = vunpack.c.l.b16 %v4670
  %v4761 = vunpack.c.h.b16 %v4670
  %v4762 = vunpack.c.l.b16 %v4671
  %v4763 = vunpack.c.h.b16 %v4671
  %v4764 = vunpack.c.l.b16 %v4672
  %v4765 = vunpack.c.h.b16 %v4672
  %v4766 = vunpack.c.l.b16 %v4673
  %v4767 = vunpack.c.h.b16 %v4673
  %v4768 = vunpack.c.l.b16 %v4674
  %v4769 = vunpack.c.h.b16 %v4674
  %v4770 = vunpack.c.l.b16 %v4675
  %v4771 = vunpack.c.h.b16 %v4675
  %v4772 = vpack.c.b16 %v4712, %v4708
  %v4773 = vpack.c.b16 %v4713, %v4709
  %v4774 = vpack.c.b16 %v4714, %v4710
  %v4775 = vpack.c.b16 %v4715, %v4711
  %v4776 = vpack.c.b16 %v4720, %v4716
  %v4777 = vpack.c.b16 %v4721, %v4717
  %v4778 = vpack.c.b16 %v4722, %v4718
  %v4779 = vpack.c.b16 %v4723, %v4719
  %v4780 = vpack.c.b16 %v4728, %v4724
  %v4781 = vpack.c.b16 %v4729, %v4725
  %v4782 = vpack.c.b16 %v4730, %v4726
  %v4783 = vpack.c.b16 %v4731, %v4727
  %v4784 = vpack.c.b16 %v4736, %v4732
  %v4785 = vpack.c.b16 %v4737, %v4733
  %v4786 = vpack.c.b16 %v4738, %v4734
  %v4787 = vpack.c.b16 %v4739, %v4735
  %v4788 = vpack.c.b16 %v4744, %v4740
  %v4789 = vpack.c.b16 %v4745, %v4741
  %v4790 = vpack.c.b16 %v4746, %v4742
  %v4791 = vpack.c.b16 %v4747, %v4743
  %v4792 = vpack.c.b16 %v4752, %v4748
  %v4793 = vpack.c.b16 %v4753, %v4749
  %v4794 = vpack.c.b16 %v4754, %v4750
  %v4795 = vpack.c.b16 %v4755, %v4751
  %v4796 = vpack.c.b16 %v4760, %v4756
  %v4797 = vpack.c.b16 %v4761, %v4757
  %v4798 = vpack.c.b16 %v4762, %v4758
  %v4799 = vpack.c.b16 %v4763, %v4759
  %v4800 = vpack.c.b16 %v4768, %v4764
  %v4801 = vpack.c.b16 %v4769, %v4765
  %v4802 = vpack.c.b16 %v4770, %v4766
  %v4803 = vpack.c.b16 %v4771, %v4767
  %4836 = vmatpush.bf16.msra.mxu0 %v4800
  %4837 = vmatpush.bf16.msra.mxu0 %v4796
  %4838 = vmatpush.bf16.msra.mxu0 %v4792
  %4839 = vmatpush.bf16.msra.mxu0 %v4788
  %4840 = vmatpush.bf16.msra.mxu0 %v4784
  %4841 = vmatpush.bf16.msra.mxu0 %v4780
  %4842 = vmatpush.bf16.msra.mxu0 %v4776
  %4843 = vmatpush.bf16.msra.mxu0 %v4772
  %4844 = vmatmul.bf16.gmra.mxu0 %v4643
  %v4845 = vpop.f32.mrf.mxu0
  %v4846 = vadd.f32 0.0, %v4845
  %v4847 = vpop.f32.mrf.mxu0
  %4848 = vdwg.mxu0
  %4849 = vmatpush.bf16.msra.mxu0 %v4801
  %4850 = vmatpush.bf16.msra.mxu0 %v4797
  %4851 = vmatpush.bf16.msra.mxu0 %v4793
  %4852 = vmatpush.bf16.msra.mxu0 %v4789
  %4853 = vmatpush.bf16.msra.mxu0 %v4785
  %4854 = vmatpush.bf16.msra.mxu0 %v4781
  %4855 = vmatpush.bf16.msra.mxu0 %v4777
  %4856 = vmatpush.bf16.msra.mxu0 %v4773
  %4857 = vmatmul.bf16.gmra.mxu0 %v4643
  %v4858 = vpop.f32.mrf.mxu0
  %v4859 = vadd.f32 0.0, %v4858
  %v4860 = vpop.f32.mrf.mxu0
  %4861 = vdwg.mxu0
  %4862 = vmatpush.bf16.msra.mxu0 %v4802
  %4863 = vmatpush.bf16.msra.mxu0 %v4798
  %4864 = vmatpush.bf16.msra.mxu0 %v4794
  %4865 = vmatpush.bf16.msra.mxu0 %v4790
  %4866 = vmatpush.bf16.msra.mxu0 %v4786
  %4867 = vmatpush.bf16.msra.mxu0 %v4782
  %4868 = vmatpush.bf16.msra.mxu0 %v4778
  %4869 = vmatpush.bf16.msra.mxu0 %v4774
  %4870 = vmatmul.bf16.gmra.mxu0 %v4643
  %v4871 = vpop.f32.mrf.mxu0
  %v4872 = vadd.f32 0.0, %v4871
  %v4873 = vpop.f32.mrf.mxu0
  %4874 = vdwg.mxu0
  %4875 = vmatpush.bf16.msra.mxu0 %v4803
  %4876 = vmatpush.bf16.msra.mxu0 %v4799
  %4877 = vmatpush.bf16.msra.mxu0 %v4795
  %4878 = vmatpush.bf16.msra.mxu0 %v4791
  %4879 = vmatpush.bf16.msra.mxu0 %v4787
  %4880 = vmatpush.bf16.msra.mxu0 %v4783
  %4881 = vmatpush.bf16.msra.mxu0 %v4779
  %4882 = vmatpush.bf16.msra.mxu0 %v4775
  %4883 = vmatmul.bf16.gmra.mxu0 %v4643
  %v4884 = vpop.f32.mrf.mxu0
  %v4885 = vadd.f32 0.0, %v4884
  %v4886 = vpop.f32.mrf.mxu0
  %4887 = vdwg.mxu0
  %v4888 = vadd.f32 %v4638, %v4846
  %v4889 = vadd.f32 %v4639, %v4859
  %v4890 = vadd.f32 %v4640, %v4872
  %v4891 = vadd.f32 %v4641, %v4885
  %v4892 = vld [vmem:[#allocation8] sm:$0xff]
  %v4893 = vxor.u32 %v4634, 2147483648
  %v4894 = vmul.f32 %v4893, 1.442695
  %v4895 = vpow.pop %v4894
  %v4896 = vadd.f32 %v4895, 1.0
  %v4897 = vrcp.pop %v4896
  %v4898 = vmul.f32 %v4896, %v4897
  %v4899 = vsub.f32 1.0, %v4898
  %v4900 = vmul.f32 %v4897, %v4899
  %v4901 = vadd.f32 %v4897, %v4900
  %vm4902 = vweird.f32 %v4896
  %vm4903 = vweird.f32 %v4897
  %vm4904 = vmor %vm4902, %vm4903
  %v4905 = vsel %vm4904, %v4897, %v4901
  %v4906 = vand.u32 2147483647, %v4896
  %vm4907 = vcmp.eq.f32.partialorder %v4906, 8.507059e+37
  %v4908 = vand.u32 %v4896, 2147483648
  %v4909 = vor.u32 1.1754944e-38, %v4908
  %v4910 = vsel %vm4907, %v4909, %v4905
  %v4911 = vmul.f32 1.0, %v4910
  %v4912 = vxor.u32 %v4635, 2147483648
  %v4913 = vmul.f32 %v4912, 1.442695
  %v4914 = vpow.pop %v4913
  %v4915 = vadd.f32 %v4914, 1.0
  %v4916 = vrcp.pop %v4915
  %v4917 = vmul.f32 %v4915, %v4916
  %v4918 = vsub.f32 1.0, %v4917
  %v4919 = vmul.f32 %v4916, %v4918
  %v4920 = vadd.f32 %v4916, %v4919
  %vm4921 = vweird.f32 %v4915
  %vm4922 = vweird.f32 %v4916
  %vm4923 = vmor %vm4921, %vm4922
  %v4924 = vsel %vm4923, %v4916, %v4920
  %v4925 = vand.u32 2147483647, %v4915
  %vm4926 = vcmp.eq.f32.partialorder %v4925, 8.507059e+37
  %v4927 = vand.u32 %v4915, 2147483648
  %v4928 = vor.u32 1.1754944e-38, %v4927
  %v4929 = vsel %vm4926, %v4928, %v4924
  %v4930 = vmul.f32 1.0, %v4929
  %v4931 = vtanh.pop %v4636
  %v4932 = vxor.u32 %v4637, 2147483648
  %v4933 = vmul.f32 %v4932, 1.442695
  %v4934 = vpow.pop %v4933
  %v4935 = vadd.f32 %v4934, 1.0
  %v4936 = vrcp.pop %v4935
  %v4937 = vmul.f32 %v4935, %v4936
  %v4938 = vsub.f32 1.0, %v4937
  %v4939 = vmul.f32 %v4936, %v4938
  %v4940 = vadd.f32 %v4936, %v4939
  %vm4941 = vweird.f32 %v4935
  %vm4942 = vweird.f32 %v4936
  %vm4943 = vmor %vm4941, %vm4942
  %v4944 = vsel %vm4943, %v4936, %v4940
  %v4945 = vand.u32 2147483647, %v4935
  %vm4946 = vcmp.eq.f32.partialorder %v4945, 8.507059e+37
  %v4947 = vand.u32 %v4935, 2147483648
  %v4948 = vor.u32 1.1754944e-38, %v4947
  %v4949 = vsel %vm4946, %v4948, %v4944
  %v4950 = vmul.f32 1.0, %v4949
  %v4951 = vmul.f32 %v4930, %v4892
  %v4952 = vmul.f32 %v4911, %v4931
  %v4953 = vadd.f32 %v4951, %v4952
  %v4954 = vtanh.pop %v4953
  %v4955 = vmul.f32 %v4950, %v4954
  %v4956 = vld [vmem:[#allocation10] sm:$0xff]
  %v4957 = vxor.u32 %v4888, 2147483648
  %v4958 = vmul.f32 %v4957, 1.442695
  %v4959 = vpow.pop %v4958
  %v4960 = vadd.f32 %v4959, 1.0
  %v4961 = vrcp.pop %v4960
  %v4962 = vmul.f32 %v4960, %v4961
  %v4963 = vsub.f32 1.0, %v4962
  %v4964 = vmul.f32 %v4961, %v4963
  %v4965 = vadd.f32 %v4961, %v4964
  %vm4966 = vweird.f32 %v4960
  %vm4967 = vweird.f32 %v4961
  %vm4968 = vmor %vm4966, %vm4967
  %v4969 = vsel %vm4968, %v4961, %v4965
  %v4970 = vand.u32 2147483647, %v4960
  %vm4971 = vcmp.eq.f32.partialorder %v4970, 8.507059e+37
  %v4972 = vand.u32 %v4960, 2147483648
  %v4973 = vor.u32 1.1754944e-38, %v4972
  %v4974 = vsel %vm4971, %v4973, %v4969
  %v4975 = vmul.f32 1.0, %v4974
  %v4976 = vxor.u32 %v4889, 2147483648
  %v4977 = vmul.f32 %v4976, 1.442695
  %v4978 = vpow.pop %v4977
  %v4979 = vadd.f32 %v4978, 1.0
  %v4980 = vrcp.pop %v4979
  %v4981 = vmul.f32 %v4979, %v4980
  %v4982 = vsub.f32 1.0, %v4981
  %v4983 = vmul.f32 %v4980, %v4982
  %v4984 = vadd.f32 %v4980, %v4983
  %vm4985 = vweird.f32 %v4979
  %vm4986 = vweird.f32 %v4980
  %vm4987 = vmor %vm4985, %vm4986
  %v4988 = vsel %vm4987, %v4980, %v4984
  %v4989 = vand.u32 2147483647, %v4979
  %vm4990 = vcmp.eq.f32.partialorder %v4989, 8.507059e+37
  %v4991 = vand.u32 %v4979, 2147483648
  %v4992 = vor.u32 1.1754944e-38, %v4991
  %v4993 = vsel %vm4990, %v4992, %v4988
  %v4994 = vmul.f32 1.0, %v4993
  %v4995 = vtanh.pop %v4890
  %v4996 = vxor.u32 %v4891, 2147483648
  %v4997 = vmul.f32 %v4996, 1.442695
  %v4998 = vpow.pop %v4997
  %v4999 = vadd.f32 %v4998, 1.0
  %v5000 = vrcp.pop %v4999
  %v5001 = vmul.f32 %v4999, %v5000
  %v5002 = vsub.f32 1.0, %v5001
  %v5003 = vmul.f32 %v5000, %v5002
  %v5004 = vadd.f32 %v5000, %v5003
  %vm5005 = vweird.f32 %v4999
  %vm5006 = vweird.f32 %v5000
  %vm5007 = vmor %vm5005, %vm5006
  %v5008 = vsel %vm5007, %v5000, %v5004
  %v5009 = vand.u32 2147483647, %v4999
  %vm5010 = vcmp.eq.f32.partialorder %v5009, 8.507059e+37
  %v5011 = vand.u32 %v4999, 2147483648
  %v5012 = vor.u32 1.1754944e-38, %v5011
  %v5013 = vsel %vm5010, %v5012, %v5008
  %v5014 = vmul.f32 1.0, %v5013
  %v5015 = vmul.f32 %v4994, %v4956
  %v5016 = vmul.f32 %v4975, %v4995
  %v5017 = vadd.f32 %v5015, %v5016
  %v5018 = vtanh.pop %v5017
  %v5019 = vmul.f32 %v5014, %v5018
  %5020 = vst [vmem:[#allocation7] sm:$0xff] %v4955
  %5021 = vst [vmem:[#allocation8] sm:$0xff] %v4953
  %5022 = vst [vmem:[#allocation9] sm:$0xff] %v5019
  %5023 = vst [vmem:[#allocation10] sm:$0xff] %v5017
  %5024 = vst [vmem:[#allocation5 + $0x30] sm:$0xff] %v4955
  %5025 = vst [vmem:[#allocation6 + $0x8] sm:$0xff] %v5019
  %v5026 = vld [vmem:[#allocation2 + $0xe0] sm:$0xff]
  %v5027 = vld [vmem:[#allocation2 + $0xe8] sm:$0xff]
  %v5028 = vld [vmem:[#allocation2 + $0xf0] sm:$0xff]
  %v5029 = vld [vmem:[#allocation2 + $0xf8] sm:$0xff]
  %v5030 = vld [vmem:[#allocation7] sm:$0xff]
  %v5031 = vpack.c.bf16 %v5030, %v5030
  %v5032 = vld [vmem:[%s2] sm:$0xff]
  %v5033 = vld [vmem:[%s2 + $0x8] sm:$0xff]
  %v5034 = vld [vmem:[%s2 + $0x10] sm:$0xff]
  %v5035 = vld [vmem:[%s2 + $0x18] sm:$0xff]
  %v5036 = vld [vmem:[%s2 + $0x20] sm:$0xff]
  %v5037 = vld [vmem:[%s2 + $0x28] sm:$0xff]
  %v5038 = vld [vmem:[%s2 + $0x30] sm:$0xff]
  %v5039 = vld [vmem:[%s2 + $0x38] sm:$0xff]
  %v5040 = vld [vmem:[%s2 + $0x40] sm:$0xff]
  %v5041 = vld [vmem:[%s2 + $0x48] sm:$0xff]
  %v5042 = vld [vmem:[%s2 + $0x50] sm:$0xff]
  %v5043 = vld [vmem:[%s2 + $0x58] sm:$0xff]
  %v5044 = vld [vmem:[%s2 + $0x60] sm:$0xff]
  %v5045 = vld [vmem:[%s2 + $0x68] sm:$0xff]
  %v5046 = vld [vmem:[%s2 + $0x70] sm:$0xff]
  %v5047 = vld [vmem:[%s2 + $0x78] sm:$0xff]
  %v5048 = vld [vmem:[%s2 + $0x80] sm:$0xff]
  %v5049 = vld [vmem:[%s2 + $0x88] sm:$0xff]
  %v5050 = vld [vmem:[%s2 + $0x90] sm:$0xff]
  %v5051 = vld [vmem:[%s2 + $0x98] sm:$0xff]
  %v5052 = vld [vmem:[%s2 + $0xa0] sm:$0xff]
  %v5053 = vld [vmem:[%s2 + $0xa8] sm:$0xff]
  %v5054 = vld [vmem:[%s2 + $0xb0] sm:$0xff]
  %v5055 = vld [vmem:[%s2 + $0xb8] sm:$0xff]
  %v5056 = vld [vmem:[%s2 + $0xc0] sm:$0xff]
  %v5057 = vld [vmem:[%s2 + $0xc8] sm:$0xff]
  %v5058 = vld [vmem:[%s2 + $0xd0] sm:$0xff]
  %v5059 = vld [vmem:[%s2 + $0xd8] sm:$0xff]
  %v5060 = vld [vmem:[%s2 + $0xe0] sm:$0xff]
  %v5061 = vld [vmem:[%s2 + $0xe8] sm:$0xff]
  %v5062 = vld [vmem:[%s2 + $0xf0] sm:$0xff]
  %v5063 = vld [vmem:[%s2 + $0xf8] sm:$0xff]
  %v5096 = vunpack.c.l.b16 %v5032
  %v5097 = vunpack.c.h.b16 %v5032
  %v5098 = vunpack.c.l.b16 %v5033
  %v5099 = vunpack.c.h.b16 %v5033
  %v5100 = vunpack.c.l.b16 %v5034
  %v5101 = vunpack.c.h.b16 %v5034
  %v5102 = vunpack.c.l.b16 %v5035
  %v5103 = vunpack.c.h.b16 %v5035
  %v5104 = vunpack.c.l.b16 %v5036
  %v5105 = vunpack.c.h.b16 %v5036
  %v5106 = vunpack.c.l.b16 %v5037
  %v5107 = vunpack.c.h.b16 %v5037
  %v5108 = vunpack.c.l.b16 %v5038
  %v5109 = vunpack.c.h.b16 %v5038
  %v5110 = vunpack.c.l.b16 %v5039
  %v5111 = vunpack.c.h.b16 %v5039
  %v5112 = vunpack.c.l.b16 %v5040
  %v5113 = vunpack.c.h.b16 %v5040
  %v5114 = vunpack.c.l.b16 %v5041
  %v5115 = vunpack.c.h.b16 %v5041
  %v5116 = vunpack.c.l.b16 %v5042
  %v5117 = vunpack.c.h.b16 %v5042
  %v5118 = vunpack.c.l.b16 %v5043
  %v5119 = vunpack.c.h.b16 %v5043
  %v5120 = vunpack.c.l.b16 %v5044
  %v5121 = vunpack.c.h.b16 %v5044
  %v5122 = vunpack.c.l.b16 %v5045
  %v5123 = vunpack.c.h.b16 %v5045
  %v5124 = vunpack.c.l.b16 %v5046
  %v5125 = vunpack.c.h.b16 %v5046
  %v5126 = vunpack.c.l.b16 %v5047
  %v5127 = vunpack.c.h.b16 %v5047
  %v5128 = vunpack.c.l.b16 %v5048
  %v5129 = vunpack.c.h.b16 %v5048
  %v5130 = vunpack.c.l.b16 %v5049
  %v5131 = vunpack.c.h.b16 %v5049
  %v5132 = vunpack.c.l.b16 %v5050
  %v5133 = vunpack.c.h.b16 %v5050
  %v5134 = vunpack.c.l.b16 %v5051
  %v5135 = vunpack.c.h.b16 %v5051
  %v5136 = vunpack.c.l.b16 %v5052
  %v5137 = vunpack.c.h.b16 %v5052
  %v5138 = vunpack.c.l.b16 %v5053
  %v5139 = vunpack.c.h.b16 %v5053
  %v5140 = vunpack.c.l.b16 %v5054
  %v5141 = vunpack.c.h.b16 %v5054
  %v5142 = vunpack.c.l.b16 %v5055
  %v5143 = vunpack.c.h.b16 %v5055
  %v5144 = vunpack.c.l.b16 %v5056
  %v5145 = vunpack.c.h.b16 %v5056
  %v5146 = vunpack.c.l.b16 %v5057
  %v5147 = vunpack.c.h.b16 %v5057
  %v5148 = vunpack.c.l.b16 %v5058
  %v5149 = vunpack.c.h.b16 %v5058
  %v5150 = vunpack.c.l.b16 %v5059
  %v5151 = vunpack.c.h.b16 %v5059
  %v5152 = vunpack.c.l.b16 %v5060
  %v5153 = vunpack.c.h.b16 %v5060
  %v5154 = vunpack.c.l.b16 %v5061
  %v5155 = vunpack.c.h.b16 %v5061
  %v5156 = vunpack.c.l.b16 %v5062
  %v5157 = vunpack.c.h.b16 %v5062
  %v5158 = vunpack.c.l.b16 %v5063
  %v5159 = vunpack.c.h.b16 %v5063
  %v5160 = vpack.c.b16 %v5100, %v5096
  %v5161 = vpack.c.b16 %v5101, %v5097
  %v5162 = vpack.c.b16 %v5102, %v5098
  %v5163 = vpack.c.b16 %v5103, %v5099
  %v5164 = vpack.c.b16 %v5108, %v5104
  %v5165 = vpack.c.b16 %v5109, %v5105
  %v5166 = vpack.c.b16 %v5110, %v5106
  %v5167 = vpack.c.b16 %v5111, %v5107
  %v5168 = vpack.c.b16 %v5116, %v5112
  %v5169 = vpack.c.b16 %v5117, %v5113
  %v5170 = vpack.c.b16 %v5118, %v5114
  %v5171 = vpack.c.b16 %v5119, %v5115
  %v5172 = vpack.c.b16 %v5124, %v5120
  %v5173 = vpack.c.b16 %v5125, %v5121
  %v5174 = vpack.c.b16 %v5126, %v5122
  %v5175 = vpack.c.b16 %v5127, %v5123
  %v5176 = vpack.c.b16 %v5132, %v5128
  %v5177 = vpack.c.b16 %v5133, %v5129
  %v5178 = vpack.c.b16 %v5134, %v5130
  %v5179 = vpack.c.b16 %v5135, %v5131
  %v5180 = vpack.c.b16 %v5140, %v5136
  %v5181 = vpack.c.b16 %v5141, %v5137
  %v5182 = vpack.c.b16 %v5142, %v5138
  %v5183 = vpack.c.b16 %v5143, %v5139
  %v5184 = vpack.c.b16 %v5148, %v5144
  %v5185 = vpack.c.b16 %v5149, %v5145
  %v5186 = vpack.c.b16 %v5150, %v5146
  %v5187 = vpack.c.b16 %v5151, %v5147
  %v5188 = vpack.c.b16 %v5156, %v5152
  %v5189 = vpack.c.b16 %v5157, %v5153
  %v5190 = vpack.c.b16 %v5158, %v5154
  %v5191 = vpack.c.b16 %v5159, %v5155
  %5224 = vmatpush.bf16.msra.mxu0 %v5188
  %5225 = vmatpush.bf16.msra.mxu0 %v5184
  %5226 = vmatpush.bf16.msra.mxu0 %v5180
  %5227 = vmatpush.bf16.msra.mxu0 %v5176
  %5228 = vmatpush.bf16.msra.mxu0 %v5172
  %5229 = vmatpush.bf16.msra.mxu0 %v5168
  %5230 = vmatpush.bf16.msra.mxu0 %v5164
  %5231 = vmatpush.bf16.msra.mxu0 %v5160
  %5232 = vmatmul.bf16.gmra.mxu0 %v5031
  %v5233 = vpop.f32.mrf.mxu0
  %v5234 = vadd.f32 0.0, %v5233
  %v5235 = vpop.f32.mrf.mxu0
  %5236 = vdwg.mxu0
  %5237 = vmatpush.bf16.msra.mxu0 %v5189
  %5238 = vmatpush.bf16.msra.mxu0 %v5185
  %5239 = vmatpush.bf16.msra.mxu0 %v5181
  %5240 = vmatpush.bf16.msra.mxu0 %v5177
  %5241 = vmatpush.bf16.msra.mxu0 %v5173
  %5242 = vmatpush.bf16.msra.mxu0 %v5169
  %5243 = vmatpush.bf16.msra.mxu0 %v5165
  %5244 = vmatpush.bf16.msra.mxu0 %v5161
  %5245 = vmatmul.bf16.gmra.mxu0 %v5031
  %v5246 = vpop.f32.mrf.mxu0
  %v5247 = vadd.f32 0.0, %v5246
  %v5248 = vpop.f32.mrf.mxu0
  %5249 = vdwg.mxu0
  %5250 = vmatpush.bf16.msra.mxu0 %v5190
  %5251 = vmatpush.bf16.msra.mxu0 %v5186
  %5252 = vmatpush.bf16.msra.mxu0 %v5182
  %5253 = vmatpush.bf16.msra.mxu0 %v5178
  %5254 = vmatpush.bf16.msra.mxu0 %v5174
  %5255 = vmatpush.bf16.msra.mxu0 %v5170
  %5256 = vmatpush.bf16.msra.mxu0 %v5166
  %5257 = vmatpush.bf16.msra.mxu0 %v5162
  %5258 = vmatmul.bf16.gmra.mxu0 %v5031
  %v5259 = vpop.f32.mrf.mxu0
  %v5260 = vadd.f32 0.0, %v5259
  %v5261 = vpop.f32.mrf.mxu0
  %5262 = vdwg.mxu0
  %5263 = vmatpush.bf16.msra.mxu0 %v5191
  %5264 = vmatpush.bf16.msra.mxu0 %v5187
  %5265 = vmatpush.bf16.msra.mxu0 %v5183
  %5266 = vmatpush.bf16.msra.mxu0 %v5179
  %5267 = vmatpush.bf16.msra.mxu0 %v5175
  %5268 = vmatpush.bf16.msra.mxu0 %v5171
  %5269 = vmatpush.bf16.msra.mxu0 %v5167
  %5270 = vmatpush.bf16.msra.mxu0 %v5163
  %5271 = vmatmul.bf16.gmra.mxu0 %v5031
  %v5272 = vpop.f32.mrf.mxu0
  %v5273 = vadd.f32 0.0, %v5272
  %v5274 = vpop.f32.mrf.mxu0
  %5275 = vdwg.mxu0
  %v5276 = vadd.f32 %v5026, %v5234
  %v5277 = vadd.f32 %v5027, %v5247
  %v5278 = vadd.f32 %v5028, %v5260
  %v5279 = vadd.f32 %v5029, %v5273
  %v5280 = vld [vmem:[#allocation3] sm:$0xff]
  %v5281 = vld [vmem:[#allocation3 + $0x8] sm:$0xff]
  %v5282 = vld [vmem:[#allocation3 + $0x10] sm:$0xff]
  %v5283 = vld [vmem:[#allocation3 + $0x18] sm:$0xff]
  %v5284 = vld [vmem:[#allocation9] sm:$0xff]
  %v5285 = vpack.c.bf16 %v5284, %v5284
  %v5286 = vld [vmem:[%s5] sm:$0xff]
  %v5287 = vld [vmem:[%s5 + $0x8] sm:$0xff]
  %v5288 = vld [vmem:[%s5 + $0x10] sm:$0xff]
  %v5289 = vld [vmem:[%s5 + $0x18] sm:$0xff]
  %v5290 = vld [vmem:[%s5 + $0x20] sm:$0xff]
  %v5291 = vld [vmem:[%s5 + $0x28] sm:$0xff]
  %v5292 = vld [vmem:[%s5 + $0x30] sm:$0xff]
  %v5293 = vld [vmem:[%s5 + $0x38] sm:$0xff]
  %v5294 = vld [vmem:[%s5 + $0x40] sm:$0xff]
  %v5295 = vld [vmem:[%s5 + $0x48] sm:$0xff]
  %v5296 = vld [vmem:[%s5 + $0x50] sm:$0xff]
  %v5297 = vld [vmem:[%s5 + $0x58] sm:$0xff]
  %v5298 = vld [vmem:[%s5 + $0x60] sm:$0xff]
  %v5299 = vld [vmem:[%s5 + $0x68] sm:$0xff]
  %v5300 = vld [vmem:[%s5 + $0x70] sm:$0xff]
  %v5301 = vld [vmem:[%s5 + $0x78] sm:$0xff]
  %v5302 = vld [vmem:[%s5 + $0x80] sm:$0xff]
  %v5303 = vld [vmem:[%s5 + $0x88] sm:$0xff]
  %v5304 = vld [vmem:[%s5 + $0x90] sm:$0xff]
  %v5305 = vld [vmem:[%s5 + $0x98] sm:$0xff]
  %v5306 = vld [vmem:[%s5 + $0xa0] sm:$0xff]
  %v5307 = vld [vmem:[%s5 + $0xa8] sm:$0xff]
  %v5308 = vld [vmem:[%s5 + $0xb0] sm:$0xff]
  %v5309 = vld [vmem:[%s5 + $0xb8] sm:$0xff]
  %v5310 = vld [vmem:[%s5 + $0xc0] sm:$0xff]
  %v5311 = vld [vmem:[%s5 + $0xc8] sm:$0xff]
  %v5312 = vld [vmem:[%s5 + $0xd0] sm:$0xff]
  %v5313 = vld [vmem:[%s5 + $0xd8] sm:$0xff]
  %v5314 = vld [vmem:[%s5 + $0xe0] sm:$0xff]
  %v5315 = vld [vmem:[%s5 + $0xe8] sm:$0xff]
  %v5316 = vld [vmem:[%s5 + $0xf0] sm:$0xff]
  %v5317 = vld [vmem:[%s5 + $0xf8] sm:$0xff]
  %v5350 = vunpack.c.l.b16 %v5286
  %v5351 = vunpack.c.h.b16 %v5286
  %v5352 = vunpack.c.l.b16 %v5287
  %v5353 = vunpack.c.h.b16 %v5287
  %v5354 = vunpack.c.l.b16 %v5288
  %v5355 = vunpack.c.h.b16 %v5288
  %v5356 = vunpack.c.l.b16 %v5289
  %v5357 = vunpack.c.h.b16 %v5289
  %v5358 = vunpack.c.l.b16 %v5290
  %v5359 = vunpack.c.h.b16 %v5290
  %v5360 = vunpack.c.l.b16 %v5291
  %v5361 = vunpack.c.h.b16 %v5291
  %v5362 = vunpack.c.l.b16 %v5292
  %v5363 = vunpack.c.h.b16 %v5292
  %v5364 = vunpack.c.l.b16 %v5293
  %v5365 = vunpack.c.h.b16 %v5293
  %v5366 = vunpack.c.l.b16 %v5294
  %v5367 = vunpack.c.h.b16 %v5294
  %v5368 = vunpack.c.l.b16 %v5295
  %v5369 = vunpack.c.h.b16 %v5295
  %v5370 = vunpack.c.l.b16 %v5296
  %v5371 = vunpack.c.h.b16 %v5296
  %v5372 = vunpack.c.l.b16 %v5297
  %v5373 = vunpack.c.h.b16 %v5297
  %v5374 = vunpack.c.l.b16 %v5298
  %v5375 = vunpack.c.h.b16 %v5298
  %v5376 = vunpack.c.l.b16 %v5299
  %v5377 = vunpack.c.h.b16 %v5299
  %v5378 = vunpack.c.l.b16 %v5300
  %v5379 = vunpack.c.h.b16 %v5300
  %v5380 = vunpack.c.l.b16 %v5301
  %v5381 = vunpack.c.h.b16 %v5301
  %v5382 = vunpack.c.l.b16 %v5302
  %v5383 = vunpack.c.h.b16 %v5302
  %v5384 = vunpack.c.l.b16 %v5303
  %v5385 = vunpack.c.h.b16 %v5303
  %v5386 = vunpack.c.l.b16 %v5304
  %v5387 = vunpack.c.h.b16 %v5304
  %v5388 = vunpack.c.l.b16 %v5305
  %v5389 = vunpack.c.h.b16 %v5305
  %v5390 = vunpack.c.l.b16 %v5306
  %v5391 = vunpack.c.h.b16 %v5306
  %v5392 = vunpack.c.l.b16 %v5307
  %v5393 = vunpack.c.h.b16 %v5307
  %v5394 = vunpack.c.l.b16 %v5308
  %v5395 = vunpack.c.h.b16 %v5308
  %v5396 = vunpack.c.l.b16 %v5309
  %v5397 = vunpack.c.h.b16 %v5309
  %v5398 = vunpack.c.l.b16 %v5310
  %v5399 = vunpack.c.h.b16 %v5310
  %v5400 = vunpack.c.l.b16 %v5311
  %v5401 = vunpack.c.h.b16 %v5311
  %v5402 = vunpack.c.l.b16 %v5312
  %v5403 = vunpack.c.h.b16 %v5312
  %v5404 = vunpack.c.l.b16 %v5313
  %v5405 = vunpack.c.h.b16 %v5313
  %v5406 = vunpack.c.l.b16 %v5314
  %v5407 = vunpack.c.h.b16 %v5314
  %v5408 = vunpack.c.l.b16 %v5315
  %v5409 = vunpack.c.h.b16 %v5315
  %v5410 = vunpack.c.l.b16 %v5316
  %v5411 = vunpack.c.h.b16 %v5316
  %v5412 = vunpack.c.l.b16 %v5317
  %v5413 = vunpack.c.h.b16 %v5317
  %v5414 = vpack.c.b16 %v5354, %v5350
  %v5415 = vpack.c.b16 %v5355, %v5351
  %v5416 = vpack.c.b16 %v5356, %v5352
  %v5417 = vpack.c.b16 %v5357, %v5353
  %v5418 = vpack.c.b16 %v5362, %v5358
  %v5419 = vpack.c.b16 %v5363, %v5359
  %v5420 = vpack.c.b16 %v5364, %v5360
  %v5421 = vpack.c.b16 %v5365, %v5361
  %v5422 = vpack.c.b16 %v5370, %v5366
  %v5423 = vpack.c.b16 %v5371, %v5367
  %v5424 = vpack.c.b16 %v5372, %v5368
  %v5425 = vpack.c.b16 %v5373, %v5369
  %v5426 = vpack.c.b16 %v5378, %v5374
  %v5427 = vpack.c.b16 %v5379, %v5375
  %v5428 = vpack.c.b16 %v5380, %v5376
  %v5429 = vpack.c.b16 %v5381, %v5377
  %v5430 = vpack.c.b16 %v5386, %v5382
  %v5431 = vpack.c.b16 %v5387, %v5383
  %v5432 = vpack.c.b16 %v5388, %v5384
  %v5433 = vpack.c.b16 %v5389, %v5385
  %v5434 = vpack.c.b16 %v5394, %v5390
  %v5435 = vpack.c.b16 %v5395, %v5391
  %v5436 = vpack.c.b16 %v5396, %v5392
  %v5437 = vpack.c.b16 %v5397, %v5393
  %v5438 = vpack.c.b16 %v5402, %v5398
  %v5439 = vpack.c.b16 %v5403, %v5399
  %v5440 = vpack.c.b16 %v5404, %v5400
  %v5441 = vpack.c.b16 %v5405, %v5401
  %v5442 = vpack.c.b16 %v5410, %v5406
  %v5443 = vpack.c.b16 %v5411, %v5407
  %v5444 = vpack.c.b16 %v5412, %v5408
  %v5445 = vpack.c.b16 %v5413, %v5409
  %5478 = vmatpush.bf16.msra.mxu0 %v5442
  %5479 = vmatpush.bf16.msra.mxu0 %v5438
  %5480 = vmatpush.bf16.msra.mxu0 %v5434
  %5481 = vmatpush.bf16.msra.mxu0 %v5430
  %5482 = vmatpush.bf16.msra.mxu0 %v5426
  %5483 = vmatpush.bf16.msra.mxu0 %v5422
  %5484 = vmatpush.bf16.msra.mxu0 %v5418
  %5485 = vmatpush.bf16.msra.mxu0 %v5414
  %5486 = vmatmul.bf16.gmra.mxu0 %v5285
  %v5487 = vpop.f32.mrf.mxu0
  %v5488 = vadd.f32 0.0, %v5487
  %v5489 = vpop.f32.mrf.mxu0
  %5490 = vdwg.mxu0
  %5491 = vmatpush.bf16.msra.mxu0 %v5443
  %5492 = vmatpush.bf16.msra.mxu0 %v5439
  %5493 = vmatpush.bf16.msra.mxu0 %v5435
  %5494 = vmatpush.bf16.msra.mxu0 %v5431
  %5495 = vmatpush.bf16.msra.mxu0 %v5427
  %5496 = vmatpush.bf16.msra.mxu0 %v5423
  %5497 = vmatpush.bf16.msra.mxu0 %v5419
  %5498 = vmatpush.bf16.msra.mxu0 %v5415
  %5499 = vmatmul.bf16.gmra.mxu0 %v5285
  %v5500 = vpop.f32.mrf.mxu0
  %v5501 = vadd.f32 0.0, %v5500
  %v5502 = vpop.f32.mrf.mxu0
  %5503 = vdwg.mxu0
  %5504 = vmatpush.bf16.msra.mxu0 %v5444
  %5505 = vmatpush.bf16.msra.mxu0 %v5440
  %5506 = vmatpush.bf16.msra.mxu0 %v5436
  %5507 = vmatpush.bf16.msra.mxu0 %v5432
  %5508 = vmatpush.bf16.msra.mxu0 %v5428
  %5509 = vmatpush.bf16.msra.mxu0 %v5424
  %5510 = vmatpush.bf16.msra.mxu0 %v5420
  %5511 = vmatpush.bf16.msra.mxu0 %v5416
  %5512 = vmatmul.bf16.gmra.mxu0 %v5285
  %v5513 = vpop.f32.mrf.mxu0
  %v5514 = vadd.f32 0.0, %v5513
  %v5515 = vpop.f32.mrf.mxu0
  %5516 = vdwg.mxu0
  %5517 = vmatpush.bf16.msra.mxu0 %v5445
  %5518 = vmatpush.bf16.msra.mxu0 %v5441
  %5519 = vmatpush.bf16.msra.mxu0 %v5437
  %5520 = vmatpush.bf16.msra.mxu0 %v5433
  %5521 = vmatpush.bf16.msra.mxu0 %v5429
  %5522 = vmatpush.bf16.msra.mxu0 %v5425
  %5523 = vmatpush.bf16.msra.mxu0 %v5421
  %5524 = vmatpush.bf16.msra.mxu0 %v5417
  %5525 = vmatmul.bf16.gmra.mxu0 %v5285
  %v5526 = vpop.f32.mrf.mxu0
  %v5527 = vadd.f32 0.0, %v5526
  %v5528 = vpop.f32.mrf.mxu0
  %5529 = vdwg.mxu0
  %v5530 = vadd.f32 %v5280, %v5488
  %v5531 = vadd.f32 %v5281, %v5501
  %v5532 = vadd.f32 %v5282, %v5514
  %v5533 = vadd.f32 %v5283, %v5527
  %v5534 = vld [vmem:[#allocation8] sm:$0xff]
  %v5535 = vxor.u32 %v5276, 2147483648
  %v5536 = vmul.f32 %v5535, 1.442695
  %v5537 = vpow.pop %v5536
  %v5538 = vadd.f32 %v5537, 1.0
  %v5539 = vrcp.pop %v5538
  %v5540 = vmul.f32 %v5538, %v5539
  %v5541 = vsub.f32 1.0, %v5540
  %v5542 = vmul.f32 %v5539, %v5541
  %v5543 = vadd.f32 %v5539, %v5542
  %vm5544 = vweird.f32 %v5538
  %vm5545 = vweird.f32 %v5539
  %vm5546 = vmor %vm5544, %vm5545
  %v5547 = vsel %vm5546, %v5539, %v5543
  %v5548 = vand.u32 2147483647, %v5538
  %vm5549 = vcmp.eq.f32.partialorder %v5548, 8.507059e+37
  %v5550 = vand.u32 %v5538, 2147483648
  %v5551 = vor.u32 1.1754944e-38, %v5550
  %v5552 = vsel %vm5549, %v5551, %v5547
  %v5553 = vmul.f32 1.0, %v5552
  %v5554 = vxor.u32 %v5277, 2147483648
  %v5555 = vmul.f32 %v5554, 1.442695
  %v5556 = vpow.pop %v5555
  %v5557 = vadd.f32 %v5556, 1.0
  %v5558 = vrcp.pop %v5557
  %v5559 = vmul.f32 %v5557, %v5558
  %v5560 = vsub.f32 1.0, %v5559
  %v5561 = vmul.f32 %v5558, %v5560
  %v5562 = vadd.f32 %v5558, %v5561
  %vm5563 = vweird.f32 %v5557
  %vm5564 = vweird.f32 %v5558
  %vm5565 = vmor %vm5563, %vm5564
  %v5566 = vsel %vm5565, %v5558, %v5562
  %v5567 = vand.u32 2147483647, %v5557
  %vm5568 = vcmp.eq.f32.partialorder %v5567, 8.507059e+37
  %v5569 = vand.u32 %v5557, 2147483648
  %v5570 = vor.u32 1.1754944e-38, %v5569
  %v5571 = vsel %vm5568, %v5570, %v5566
  %v5572 = vmul.f32 1.0, %v5571
  %v5573 = vtanh.pop %v5278
  %v5574 = vxor.u32 %v5279, 2147483648
  %v5575 = vmul.f32 %v5574, 1.442695
  %v5576 = vpow.pop %v5575
  %v5577 = vadd.f32 %v5576, 1.0
  %v5578 = vrcp.pop %v5577
  %v5579 = vmul.f32 %v5577, %v5578
  %v5580 = vsub.f32 1.0, %v5579
  %v5581 = vmul.f32 %v5578, %v5580
  %v5582 = vadd.f32 %v5578, %v5581
  %vm5583 = vweird.f32 %v5577
  %vm5584 = vweird.f32 %v5578
  %vm5585 = vmor %vm5583, %vm5584
  %v5586 = vsel %vm5585, %v5578, %v5582
  %v5587 = vand.u32 2147483647, %v5577
  %vm5588 = vcmp.eq.f32.partialorder %v5587, 8.507059e+37
  %v5589 = vand.u32 %v5577, 2147483648
  %v5590 = vor.u32 1.1754944e-38, %v5589
  %v5591 = vsel %vm5588, %v5590, %v5586
  %v5592 = vmul.f32 1.0, %v5591
  %v5593 = vmul.f32 %v5572, %v5534
  %v5594 = vmul.f32 %v5553, %v5573
  %v5595 = vadd.f32 %v5593, %v5594
  %v5596 = vtanh.pop %v5595
  %v5597 = vmul.f32 %v5592, %v5596
  %v5598 = vld [vmem:[#allocation10] sm:$0xff]
  %v5599 = vxor.u32 %v5530, 2147483648
  %v5600 = vmul.f32 %v5599, 1.442695
  %v5601 = vpow.pop %v5600
  %v5602 = vadd.f32 %v5601, 1.0
  %v5603 = vrcp.pop %v5602
  %v5604 = vmul.f32 %v5602, %v5603
  %v5605 = vsub.f32 1.0, %v5604
  %v5606 = vmul.f32 %v5603, %v5605
  %v5607 = vadd.f32 %v5603, %v5606
  %vm5608 = vweird.f32 %v5602
  %vm5609 = vweird.f32 %v5603
  %vm5610 = vmor %vm5608, %vm5609
  %v5611 = vsel %vm5610, %v5603, %v5607
  %v5612 = vand.u32 2147483647, %v5602
  %vm5613 = vcmp.eq.f32.partialorder %v5612, 8.507059e+37
  %v5614 = vand.u32 %v5602, 2147483648
  %v5615 = vor.u32 1.1754944e-38, %v5614
  %v5616 = vsel %vm5613, %v5615, %v5611
  %v5617 = vmul.f32 1.0, %v5616
  %v5618 = vxor.u32 %v5531, 2147483648
  %v5619 = vmul.f32 %v5618, 1.442695
  %v5620 = vpow.pop %v5619
  %v5621 = vadd.f32 %v5620, 1.0
  %v5622 = vrcp.pop %v5621
  %v5623 = vmul.f32 %v5621, %v5622
  %v5624 = vsub.f32 1.0, %v5623
  %v5625 = vmul.f32 %v5622, %v5624
  %v5626 = vadd.f32 %v5622, %v5625
  %vm5627 = vweird.f32 %v5621
  %vm5628 = vweird.f32 %v5622
  %vm5629 = vmor %vm5627, %vm5628
  %v5630 = vsel %vm5629, %v5622, %v5626
  %v5631 = vand.u32 2147483647, %v5621
  %vm5632 = vcmp.eq.f32.partialorder %v5631, 8.507059e+37
  %v5633 = vand.u32 %v5621, 2147483648
  %v5634 = vor.u32 1.1754944e-38, %v5633
  %v5635 = vsel %vm5632, %v5634, %v5630
  %v5636 = vmul.f32 1.0, %v5635
  %v5637 = vtanh.pop %v5532
  %v5638 = vxor.u32 %v5533, 2147483648
  %v5639 = vmul.f32 %v5638, 1.442695
  %v5640 = vpow.pop %v5639
  %v5641 = vadd.f32 %v5640, 1.0
  %v5642 = vrcp.pop %v5641
  %v5643 = vmul.f32 %v5641, %v5642
  %v5644 = vsub.f32 1.0, %v5643
  %v5645 = vmul.f32 %v5642, %v5644
  %v5646 = vadd.f32 %v5642, %v5645
  %vm5647 = vweird.f32 %v5641
  %vm5648 = vweird.f32 %v5642
  %vm5649 = vmor %vm5647, %vm5648
  %v5650 = vsel %vm5649, %v5642, %v5646
  %v5651 = vand.u32 2147483647, %v5641
  %vm5652 = vcmp.eq.f32.partialorder %v5651, 8.507059e+37
  %v5653 = vand.u32 %v5641, 2147483648
  %v5654 = vor.u32 1.1754944e-38, %v5653
  %v5655 = vsel %vm5652, %v5654, %v5650
  %v5656 = vmul.f32 1.0, %v5655
  %v5657 = vmul.f32 %v5636, %v5598
  %v5658 = vmul.f32 %v5617, %v5637
  %v5659 = vadd.f32 %v5657, %v5658
  %v5660 = vtanh.pop %v5659
  %v5661 = vmul.f32 %v5656, %v5660
  %5662 = vst [vmem:[#allocation7] sm:$0xff] %v5597
  %5663 = vst [vmem:[#allocation8] sm:$0xff] %v5595
  %5664 = vst [vmem:[#allocation9] sm:$0xff] %v5661
  %5665 = vst [vmem:[#allocation10] sm:$0xff] %v5659
  %5666 = vst [vmem:[#allocation5 + $0x38] sm:$0xff] %v5597
  %5667 = vst [vmem:[#allocation6] sm:$0xff] %v5661
  %v5668 = vld [vmem:[#allocation5] sm:$0xff]
  %v5669 = vld [vmem:[#allocation5 + $0x8] sm:$0xff]
  %v5670 = vld [vmem:[#allocation5 + $0x10] sm:$0xff]
  %v5671 = vld [vmem:[#allocation5 + $0x18] sm:$0xff]
  %v5672 = vld [vmem:[#allocation5 + $0x20] sm:$0xff]
  %v5673 = vld [vmem:[#allocation5 + $0x28] sm:$0xff]
  %v5674 = vld [vmem:[#allocation5 + $0x30] sm:$0xff]
  %v5675 = vld [vmem:[#allocation5 + $0x38] sm:$0xff]
  %v5676 = vpack.c.bf16 %v5669, %v5668
  %v5677 = vpack.c.bf16 %v5671, %v5670
  %v5678 = vpack.c.bf16 %v5673, %v5672
  %v5679 = vpack.c.bf16 %v5675, %v5674
  %v5680 = vld [vmem:[%s7] sm:$0xff]
  %v5681 = vld [vmem:[%s7 + $0x8] sm:$0xff]
  %v5682 = vld [vmem:[%s7 + $0x10] sm:$0xff]
  %v5683 = vld [vmem:[%s7 + $0x18] sm:$0xff]
  %v5684 = vld [vmem:[%s7 + $0x20] sm:$0xff]
  %v5685 = vld [vmem:[%s7 + $0x28] sm:$0xff]
  %v5686 = vld [vmem:[%s7 + $0x30] sm:$0xff]
  %v5687 = vld [vmem:[%s7 + $0x38] sm:$0xff]
  %v5688 = vld [vmem:[%s7 + $0x40] sm:$0xff]
  %v5689 = vld [vmem:[%s7 + $0x48] sm:$0xff]
  %v5690 = vld [vmem:[%s7 + $0x50] sm:$0xff]
  %v5691 = vld [vmem:[%s7 + $0x58] sm:$0xff]
  %v5692 = vld [vmem:[%s7 + $0x60] sm:$0xff]
  %v5693 = vld [vmem:[%s7 + $0x68] sm:$0xff]
  %v5694 = vld [vmem:[%s7 + $0x70] sm:$0xff]
  %v5695 = vld [vmem:[%s7 + $0x78] sm:$0xff]
  %v5696 = vld [vmem:[%s7 + $0x80] sm:$0xff]
  %v5697 = vld [vmem:[%s7 + $0x88] sm:$0xff]
  %v5698 = vld [vmem:[%s7 + $0x90] sm:$0xff]
  %v5699 = vld [vmem:[%s7 + $0x98] sm:$0xff]
  %v5700 = vld [vmem:[%s7 + $0xa0] sm:$0xff]
  %v5701 = vld [vmem:[%s7 + $0xa8] sm:$0xff]
  %v5702 = vld [vmem:[%s7 + $0xb0] sm:$0xff]
  %v5703 = vld [vmem:[%s7 + $0xb8] sm:$0xff]
  %v5704 = vld [vmem:[%s7 + $0xc0] sm:$0xff]
  %v5705 = vld [vmem:[%s7 + $0xc8] sm:$0xff]
  %v5706 = vld [vmem:[%s7 + $0xd0] sm:$0xff]
  %v5707 = vld [vmem:[%s7 + $0xd8] sm:$0xff]
  %v5708 = vld [vmem:[%s7 + $0xe0] sm:$0xff]
  %v5709 = vld [vmem:[%s7 + $0xe8] sm:$0xff]
  %v5710 = vld [vmem:[%s7 + $0xf0] sm:$0xff]
  %v5711 = vld [vmem:[%s7 + $0xf8] sm:$0xff]
  %v5712 = vld [vmem:[#allocation6] sm:$0xff]
  %v5713 = vld [vmem:[#allocation6 + $0x8] sm:$0xff]
  %v5714 = vld [vmem:[#allocation6 + $0x10] sm:$0xff]
  %v5715 = vld [vmem:[#allocation6 + $0x18] sm:$0xff]
  %v5716 = vld [vmem:[#allocation6 + $0x20] sm:$0xff]
  %v5717 = vld [vmem:[#allocation6 + $0x28] sm:$0xff]
  %v5718 = vld [vmem:[#allocation6 + $0x30] sm:$0xff]
  %v5719 = vld [vmem:[#allocation6 + $0x38] sm:$0xff]
  %v5720 = vpack.c.bf16 %v5713, %v5712
  %v5721 = vpack.c.bf16 %v5715, %v5714
  %v5722 = vpack.c.bf16 %v5717, %v5716
  %v5723 = vpack.c.bf16 %v5719, %v5718
  %v5724 = vld [vmem:[%s8] sm:$0xff]
  %v5725 = vld [vmem:[%s8 + $0x8] sm:$0xff]
  %v5726 = vld [vmem:[%s8 + $0x10] sm:$0xff]
  %v5727 = vld [vmem:[%s8 + $0x18] sm:$0xff]
  %v5728 = vld [vmem:[%s8 + $0x20] sm:$0xff]
  %v5729 = vld [vmem:[%s8 + $0x28] sm:$0xff]
  %v5730 = vld [vmem:[%s8 + $0x30] sm:$0xff]
  %v5731 = vld [vmem:[%s8 + $0x38] sm:$0xff]
  %v5732 = vld [vmem:[%s8 + $0x40] sm:$0xff]
  %v5733 = vld [vmem:[%s8 + $0x48] sm:$0xff]
  %v5734 = vld [vmem:[%s8 + $0x50] sm:$0xff]
  %v5735 = vld [vmem:[%s8 + $0x58] sm:$0xff]
  %v5736 = vld [vmem:[%s8 + $0x60] sm:$0xff]
  %v5737 = vld [vmem:[%s8 + $0x68] sm:$0xff]
  %v5738 = vld [vmem:[%s8 + $0x70] sm:$0xff]
  %v5739 = vld [vmem:[%s8 + $0x78] sm:$0xff]
  %v5740 = vld [vmem:[%s8 + $0x80] sm:$0xff]
  %v5741 = vld [vmem:[%s8 + $0x88] sm:$0xff]
  %v5742 = vld [vmem:[%s8 + $0x90] sm:$0xff]
  %v5743 = vld [vmem:[%s8 + $0x98] sm:$0xff]
  %v5744 = vld [vmem:[%s8 + $0xa0] sm:$0xff]
  %v5745 = vld [vmem:[%s8 + $0xa8] sm:$0xff]
  %v5746 = vld [vmem:[%s8 + $0xb0] sm:$0xff]
  %v5747 = vld [vmem:[%s8 + $0xb8] sm:$0xff]
  %v5748 = vld [vmem:[%s8 + $0xc0] sm:$0xff]
  %v5749 = vld [vmem:[%s8 + $0xc8] sm:$0xff]
  %v5750 = vld [vmem:[%s8 + $0xd0] sm:$0xff]
  %v5751 = vld [vmem:[%s8 + $0xd8] sm:$0xff]
  %v5752 = vld [vmem:[%s8 + $0xe0] sm:$0xff]
  %v5753 = vld [vmem:[%s8 + $0xe8] sm:$0xff]
  %v5754 = vld [vmem:[%s8 + $0xf0] sm:$0xff]
  %v5755 = vld [vmem:[%s8 + $0xf8] sm:$0xff]
  %v5788 = vunpack.c.l.b16 %v5724
  %v5789 = vunpack.c.h.b16 %v5724
  %v5790 = vunpack.c.l.b16 %v5725
  %v5791 = vunpack.c.h.b16 %v5725
  %v5792 = vunpack.c.l.b16 %v5726
  %v5793 = vunpack.c.h.b16 %v5726
  %v5794 = vunpack.c.l.b16 %v5727
  %v5795 = vunpack.c.h.b16 %v5727
  %v5796 = vunpack.c.l.b16 %v5728
  %v5797 = vunpack.c.h.b16 %v5728
  %v5798 = vunpack.c.l.b16 %v5729
  %v5799 = vunpack.c.h.b16 %v5729
  %v5800 = vunpack.c.l.b16 %v5730
  %v5801 = vunpack.c.h.b16 %v5730
  %v5802 = vunpack.c.l.b16 %v5731
  %v5803 = vunpack.c.h.b16 %v5731
  %v5804 = vunpack.c.l.b16 %v5732
  %v5805 = vunpack.c.h.b16 %v5732
  %v5806 = vunpack.c.l.b16 %v5733
  %v5807 = vunpack.c.h.b16 %v5733
  %v5808 = vunpack.c.l.b16 %v5734
  %v5809 = vunpack.c.h.b16 %v5734
  %v5810 = vunpack.c.l.b16 %v5735
  %v5811 = vunpack.c.h.b16 %v5735
  %v5812 = vunpack.c.l.b16 %v5736
  %v5813 = vunpack.c.h.b16 %v5736
  %v5814 = vunpack.c.l.b16 %v5737
  %v5815 = vunpack.c.h.b16 %v5737
  %v5816 = vunpack.c.l.b16 %v5738
  %v5817 = vunpack.c.h.b16 %v5738
  %v5818 = vunpack.c.l.b16 %v5739
  %v5819 = vunpack.c.h.b16 %v5739
  %v5820 = vunpack.c.l.b16 %v5740
  %v5821 = vunpack.c.h.b16 %v5740
  %v5822 = vunpack.c.l.b16 %v5741
  %v5823 = vunpack.c.h.b16 %v5741
  %v5824 = vunpack.c.l.b16 %v5742
  %v5825 = vunpack.c.h.b16 %v5742
  %v5826 = vunpack.c.l.b16 %v5743
  %v5827 = vunpack.c.h.b16 %v5743
  %v5828 = vunpack.c.l.b16 %v5744
  %v5829 = vunpack.c.h.b16 %v5744
  %v5830 = vunpack.c.l.b16 %v5745
  %v5831 = vunpack.c.h.b16 %v5745
  %v5832 = vunpack.c.l.b16 %v5746
  %v5833 = vunpack.c.h.b16 %v5746
  %v5834 = vunpack.c.l.b16 %v5747
  %v5835 = vunpack.c.h.b16 %v5747
  %v5836 = vunpack.c.l.b16 %v5748
  %v5837 = vunpack.c.h.b16 %v5748
  %v5838 = vunpack.c.l.b16 %v5749
  %v5839 = vunpack.c.h.b16 %v5749
  %v5840 = vunpack.c.l.b16 %v5750
  %v5841 = vunpack.c.h.b16 %v5750
  %v5842 = vunpack.c.l.b16 %v5751
  %v5843 = vunpack.c.h.b16 %v5751
  %v5844 = vunpack.c.l.b16 %v5752
  %v5845 = vunpack.c.h.b16 %v5752
  %v5846 = vunpack.c.l.b16 %v5753
  %v5847 = vunpack.c.h.b16 %v5753
  %v5848 = vunpack.c.l.b16 %v5754
  %v5849 = vunpack.c.h.b16 %v5754
  %v5850 = vunpack.c.l.b16 %v5755
  %v5851 = vunpack.c.h.b16 %v5755
  %v5852 = vpack.c.b16 %v5792, %v5788
  %v5853 = vpack.c.b16 %v5793, %v5789
  %v5854 = vpack.c.b16 %v5794, %v5790
  %v5855 = vpack.c.b16 %v5795, %v5791
  %v5856 = vpack.c.b16 %v5800, %v5796
  %v5857 = vpack.c.b16 %v5801, %v5797
  %v5858 = vpack.c.b16 %v5802, %v5798
  %v5859 = vpack.c.b16 %v5803, %v5799
  %v5860 = vpack.c.b16 %v5808, %v5804
  %v5861 = vpack.c.b16 %v5809, %v5805
  %v5862 = vpack.c.b16 %v5810, %v5806
  %v5863 = vpack.c.b16 %v5811, %v5807
  %v5864 = vpack.c.b16 %v5816, %v5812
  %v5865 = vpack.c.b16 %v5817, %v5813
  %v5866 = vpack.c.b16 %v5818, %v5814
  %v5867 = vpack.c.b16 %v5819, %v5815
  %v5868 = vpack.c.b16 %v5824, %v5820
  %v5869 = vpack.c.b16 %v5825, %v5821
  %v5870 = vpack.c.b16 %v5826, %v5822
  %v5871 = vpack.c.b16 %v5827, %v5823
  %v5872 = vpack.c.b16 %v5832, %v5828
  %v5873 = vpack.c.b16 %v5833, %v5829
  %v5874 = vpack.c.b16 %v5834, %v5830
  %v5875 = vpack.c.b16 %v5835, %v5831
  %v5876 = vpack.c.b16 %v5840, %v5836
  %v5877 = vpack.c.b16 %v5841, %v5837
  %v5878 = vpack.c.b16 %v5842, %v5838
  %v5879 = vpack.c.b16 %v5843, %v5839
  %v5880 = vpack.c.b16 %v5848, %v5844
  %v5881 = vpack.c.b16 %v5849, %v5845
  %v5882 = vpack.c.b16 %v5850, %v5846
  %v5883 = vpack.c.b16 %v5851, %v5847
  %5916 = vmatpush.bf16.msra.mxu0 %v5880
  %5917 = vmatpush.bf16.msra.mxu0 %v5876
  %5918 = vmatpush.bf16.msra.mxu0 %v5872
  %5919 = vmatpush.bf16.msra.mxu0 %v5868
  %5920 = vmatpush.bf16.msra.mxu0 %v5864
  %5921 = vmatpush.bf16.msra.mxu0 %v5860
  %5922 = vmatpush.bf16.msra.mxu0 %v5856
  %5923 = vmatpush.bf16.msra.mxu0 %v5852
  %5924 = vmatmul.bf16.gmra.mxu0 %v5720
  %v5925 = vpop.f32.mrf.mxu0
  %v5926 = vadd.f32 0.0, %v5925
  %v5927 = vpop.f32.mrf.mxu0
  %v5928 = vadd.f32 0.0, %v5927
  %5929 = vmatmul.bf16.gmra.mxu0 %v5721
  %v5930 = vpop.f32.mrf.mxu0
  %v5931 = vadd.f32 0.0, %v5930
  %v5932 = vpop.f32.mrf.mxu0
  %v5933 = vadd.f32 0.0, %v5932
  %5934 = vmatmul.bf16.gmra.mxu0 %v5722
  %v5935 = vpop.f32.mrf.mxu0
  %v5936 = vadd.f32 0.0, %v5935
  %v5937 = vpop.f32.mrf.mxu0
  %v5938 = vadd.f32 0.0, %v5937
  %5939 = vmatmul.bf16.gmra.mxu0 %v5723
  %v5940 = vpop.f32.mrf.mxu0
  %v5941 = vadd.f32 0.0, %v5940
  %v5942 = vpop.f32.mrf.mxu0
  %v5943 = vadd.f32 0.0, %v5942
  %5944 = vdwg.mxu0
  %5945 = vmatpush.bf16.msra.mxu0 %v5881
  %5946 = vmatpush.bf16.msra.mxu0 %v5877
  %5947 = vmatpush.bf16.msra.mxu0 %v5873
  %5948 = vmatpush.bf16.msra.mxu0 %v5869
  %5949 = vmatpush.bf16.msra.mxu0 %v5865
  %5950 = vmatpush.bf16.msra.mxu0 %v5861
  %5951 = vmatpush.bf16.msra.mxu0 %v5857
  %5952 = vmatpush.bf16.msra.mxu0 %v5853
  %5953 = vmatmul.bf16.gmra.mxu0 %v5720
  %v5954 = vpop.f32.mrf.mxu0
  %v5955 = vadd.f32 0.0, %v5954
  %v5956 = vpop.f32.mrf.mxu0
  %v5957 = vadd.f32 0.0, %v5956
  %5958 = vmatmul.bf16.gmra.mxu0 %v5721
  %v5959 = vpop.f32.mrf.mxu0
  %v5960 = vadd.f32 0.0, %v5959
  %v5961 = vpop.f32.mrf.mxu0
  %v5962 = vadd.f32 0.0, %v5961
  %5963 = vmatmul.bf16.gmra.mxu0 %v5722
  %v5964 = vpop.f32.mrf.mxu0
  %v5965 = vadd.f32 0.0, %v5964
  %v5966 = vpop.f32.mrf.mxu0
  %v5967 = vadd.f32 0.0, %v5966
  %5968 = vmatmul.bf16.gmra.mxu0 %v5723
  %v5969 = vpop.f32.mrf.mxu0
  %v5970 = vadd.f32 0.0, %v5969
  %v5971 = vpop.f32.mrf.mxu0
  %v5972 = vadd.f32 0.0, %v5971
  %5973 = vdwg.mxu0
  %5974 = vmatpush.bf16.msra.mxu0 %v5882
  %5975 = vmatpush.bf16.msra.mxu0 %v5878
  %5976 = vmatpush.bf16.msra.mxu0 %v5874
  %5977 = vmatpush.bf16.msra.mxu0 %v5870
  %5978 = vmatpush.bf16.msra.mxu0 %v5866
  %5979 = vmatpush.bf16.msra.mxu0 %v5862
  %5980 = vmatpush.bf16.msra.mxu0 %v5858
  %5981 = vmatpush.bf16.msra.mxu0 %v5854
  %5982 = vmatmul.bf16.gmra.mxu0 %v5720
  %v5983 = vpop.f32.mrf.mxu0
  %v5984 = vadd.f32 0.0, %v5983
  %v5985 = vpop.f32.mrf.mxu0
  %v5986 = vadd.f32 0.0, %v5985
  %5987 = vmatmul.bf16.gmra.mxu0 %v5721
  %v5988 = vpop.f32.mrf.mxu0
  %v5989 = vadd.f32 0.0, %v5988
  %v5990 = vpop.f32.mrf.mxu0
  %v5991 = vadd.f32 0.0, %v5990
  %5992 = vmatmul.bf16.gmra.mxu0 %v5722
  %v5993 = vpop.f32.mrf.mxu0
  %v5994 = vadd.f32 0.0, %v5993
  %v5995 = vpop.f32.mrf.mxu0
  %v5996 = vadd.f32 0.0, %v5995
  %5997 = vmatmul.bf16.gmra.mxu0 %v5723
  %v5998 = vpop.f32.mrf.mxu0
  %v5999 = vadd.f32 0.0, %v5998
  %v6000 = vpop.f32.mrf.mxu0
  %v6001 = vadd.f32 0.0, %v6000
  %6002 = vdwg.mxu0
  %6003 = vmatpush.bf16.msra.mxu0 %v5883
  %6004 = vmatpush.bf16.msra.mxu0 %v5879
  %6005 = vmatpush.bf16.msra.mxu0 %v5875
  %6006 = vmatpush.bf16.msra.mxu0 %v5871
  %6007 = vmatpush.bf16.msra.mxu0 %v5867
  %6008 = vmatpush.bf16.msra.mxu0 %v5863
  %6009 = vmatpush.bf16.msra.mxu0 %v5859
  %6010 = vmatpush.bf16.msra.mxu0 %v5855
  %6011 = vmatmul.bf16.gmra.mxu0 %v5720
  %v6012 = vpop.f32.mrf.mxu0
  %v6013 = vadd.f32 0.0, %v6012
  %v6014 = vpop.f32.mrf.mxu0
  %v6015 = vadd.f32 0.0, %v6014
  %6016 = vmatmul.bf16.gmra.mxu0 %v5721
  %v6017 = vpop.f32.mrf.mxu0
  %v6018 = vadd.f32 0.0, %v6017
  %v6019 = vpop.f32.mrf.mxu0
  %v6020 = vadd.f32 0.0, %v6019
  %6021 = vmatmul.bf16.gmra.mxu0 %v5722
  %v6022 = vpop.f32.mrf.mxu0
  %v6023 = vadd.f32 0.0, %v6022
  %v6024 = vpop.f32.mrf.mxu0
  %v6025 = vadd.f32 0.0, %v6024
  %6026 = vmatmul.bf16.gmra.mxu0 %v5723
  %v6027 = vpop.f32.mrf.mxu0
  %v6028 = vadd.f32 0.0, %v6027
  %v6029 = vpop.f32.mrf.mxu0
  %v6030 = vadd.f32 0.0, %v6029
  %6031 = vdwg.mxu0
  %v6064 = vunpack.c.l.b16 %v5680
  %v6065 = vunpack.c.h.b16 %v5680
  %v6066 = vunpack.c.l.b16 %v5681
  %v6067 = vunpack.c.h.b16 %v5681
  %v6068 = vunpack.c.l.b16 %v5682
  %v6069 = vunpack.c.h.b16 %v5682
  %v6070 = vunpack.c.l.b16 %v5683
  %v6071 = vunpack.c.h.b16 %v5683
  %v6072 = vunpack.c.l.b16 %v5684
  %v6073 = vunpack.c.h.b16 %v5684
  %v6074 = vunpack.c.l.b16 %v5685
  %v6075 = vunpack.c.h.b16 %v5685
  %v6076 = vunpack.c.l.b16 %v5686
  %v6077 = vunpack.c.h.b16 %v5686
  %v6078 = vunpack.c.l.b16 %v5687
  %v6079 = vunpack.c.h.b16 %v5687
  %v6080 = vunpack.c.l.b16 %v5688
  %v6081 = vunpack.c.h.b16 %v5688
  %v6082 = vunpack.c.l.b16 %v5689
  %v6083 = vunpack.c.h.b16 %v5689
  %v6084 = vunpack.c.l.b16 %v5690
  %v6085 = vunpack.c.h.b16 %v5690
  %v6086 = vunpack.c.l.b16 %v5691
  %v6087 = vunpack.c.h.b16 %v5691
  %v6088 = vunpack.c.l.b16 %v5692
  %v6089 = vunpack.c.h.b16 %v5692
  %v6090 = vunpack.c.l.b16 %v5693
  %v6091 = vunpack.c.h.b16 %v5693
  %v6092 = vunpack.c.l.b16 %v5694
  %v6093 = vunpack.c.h.b16 %v5694
  %v6094 = vunpack.c.l.b16 %v5695
  %v6095 = vunpack.c.h.b16 %v5695
  %v6096 = vunpack.c.l.b16 %v5696
  %v6097 = vunpack.c.h.b16 %v5696
  %v6098 = vunpack.c.l.b16 %v5697
  %v6099 = vunpack.c.h.b16 %v5697
  %v6100 = vunpack.c.l.b16 %v5698
  %v6101 = vunpack.c.h.b16 %v5698
  %v6102 = vunpack.c.l.b16 %v5699
  %v6103 = vunpack.c.h.b16 %v5699
  %v6104 = vunpack.c.l.b16 %v5700
  %v6105 = vunpack.c.h.b16 %v5700
  %v6106 = vunpack.c.l.b16 %v5701
  %v6107 = vunpack.c.h.b16 %v5701
  %v6108 = vunpack.c.l.b16 %v5702
  %v6109 = vunpack.c.h.b16 %v5702
  %v6110 = vunpack.c.l.b16 %v5703
  %v6111 = vunpack.c.h.b16 %v5703
  %v6112 = vunpack.c.l.b16 %v5704
  %v6113 = vunpack.c.h.b16 %v5704
  %v6114 = vunpack.c.l.b16 %v5705
  %v6115 = vunpack.c.h.b16 %v5705
  %v6116 = vunpack.c.l.b16 %v5706
  %v6117 = vunpack.c.h.b16 %v5706
  %v6118 = vunpack.c.l.b16 %v5707
  %v6119 = vunpack.c.h.b16 %v5707
  %v6120 = vunpack.c.l.b16 %v5708
  %v6121 = vunpack.c.h.b16 %v5708
  %v6122 = vunpack.c.l.b16 %v5709
  %v6123 = vunpack.c.h.b16 %v5709
  %v6124 = vunpack.c.l.b16 %v5710
  %v6125 = vunpack.c.h.b16 %v5710
  %v6126 = vunpack.c.l.b16 %v5711
  %v6127 = vunpack.c.h.b16 %v5711
  %v6128 = vpack.c.b16 %v6068, %v6064
  %v6129 = vpack.c.b16 %v6069, %v6065
  %v6130 = vpack.c.b16 %v6070, %v6066
  %v6131 = vpack.c.b16 %v6071, %v6067
  %v6132 = vpack.c.b16 %v6076, %v6072
  %v6133 = vpack.c.b16 %v6077, %v6073
  %v6134 = vpack.c.b16 %v6078, %v6074
  %v6135 = vpack.c.b16 %v6079, %v6075
  %v6136 = vpack.c.b16 %v6084, %v6080
  %v6137 = vpack.c.b16 %v6085, %v6081
  %v6138 = vpack.c.b16 %v6086, %v6082
  %v6139 = vpack.c.b16 %v6087, %v6083
  %v6140 = vpack.c.b16 %v6092, %v6088
  %v6141 = vpack.c.b16 %v6093, %v6089
  %v6142 = vpack.c.b16 %v6094, %v6090
  %v6143 = vpack.c.b16 %v6095, %v6091
  %v6144 = vpack.c.b16 %v6100, %v6096
  %v6145 = vpack.c.b16 %v6101, %v6097
  %v6146 = vpack.c.b16 %v6102, %v6098
  %v6147 = vpack.c.b16 %v6103, %v6099
  %v6148 = vpack.c.b16 %v6108, %v6104
  %v6149 = vpack.c.b16 %v6109, %v6105
  %v6150 = vpack.c.b16 %v6110, %v6106
  %v6151 = vpack.c.b16 %v6111, %v6107
  %v6152 = vpack.c.b16 %v6116, %v6112
  %v6153 = vpack.c.b16 %v6117, %v6113
  %v6154 = vpack.c.b16 %v6118, %v6114
  %v6155 = vpack.c.b16 %v6119, %v6115
  %v6156 = vpack.c.b16 %v6124, %v6120
  %v6157 = vpack.c.b16 %v6125, %v6121
  %v6158 = vpack.c.b16 %v6126, %v6122
  %v6159 = vpack.c.b16 %v6127, %v6123
  %6192 = vmatpush.bf16.msra.mxu0 %v6156
  %6193 = vmatpush.bf16.msra.mxu0 %v6152
  %6194 = vmatpush.bf16.msra.mxu0 %v6148
  %6195 = vmatpush.bf16.msra.mxu0 %v6144
  %6196 = vmatpush.bf16.msra.mxu0 %v6140
  %6197 = vmatpush.bf16.msra.mxu0 %v6136
  %6198 = vmatpush.bf16.msra.mxu0 %v6132
  %6199 = vmatpush.bf16.msra.mxu0 %v6128
  %6200 = vmatmul.bf16.gmra.mxu0 %v5676
  %v6201 = vpop.f32.mrf.mxu0
  %v6202 = vadd.f32 %v5926, %v6201
  %v6203 = vpop.f32.mrf.mxu0
  %v6204 = vadd.f32 %v5928, %v6203
  %6205 = vmatmul.bf16.gmra.mxu0 %v5677
  %v6206 = vpop.f32.mrf.mxu0
  %v6207 = vadd.f32 %v5931, %v6206
  %v6208 = vpop.f32.mrf.mxu0
  %v6209 = vadd.f32 %v5933, %v6208
  %6210 = vmatmul.bf16.gmra.mxu0 %v5678
  %v6211 = vpop.f32.mrf.mxu0
  %v6212 = vadd.f32 %v5936, %v6211
  %v6213 = vpop.f32.mrf.mxu0
  %v6214 = vadd.f32 %v5938, %v6213
  %6215 = vmatmul.bf16.gmra.mxu0 %v5679
  %v6216 = vpop.f32.mrf.mxu0
  %v6217 = vadd.f32 %v5941, %v6216
  %v6218 = vpop.f32.mrf.mxu0
  %v6219 = vadd.f32 %v5943, %v6218
  %6220 = vdwg.mxu0
  %6221 = vmatpush.bf16.msra.mxu0 %v6157
  %6222 = vmatpush.bf16.msra.mxu0 %v6153
  %6223 = vmatpush.bf16.msra.mxu0 %v6149
  %6224 = vmatpush.bf16.msra.mxu0 %v6145
  %6225 = vmatpush.bf16.msra.mxu0 %v6141
  %6226 = vmatpush.bf16.msra.mxu0 %v6137
  %6227 = vmatpush.bf16.msra.mxu0 %v6133
  %6228 = vmatpush.bf16.msra.mxu0 %v6129
  %6229 = vmatmul.bf16.gmra.mxu0 %v5676
  %v6230 = vpop.f32.mrf.mxu0
  %v6231 = vadd.f32 %v5955, %v6230
  %v6232 = vpop.f32.mrf.mxu0
  %v6233 = vadd.f32 %v5957, %v6232
  %6234 = vmatmul.bf16.gmra.mxu0 %v5677
  %v6235 = vpop.f32.mrf.mxu0
  %v6236 = vadd.f32 %v5960, %v6235
  %v6237 = vpop.f32.mrf.mxu0
  %v6238 = vadd.f32 %v5962, %v6237
  %6239 = vmatmul.bf16.gmra.mxu0 %v5678
  %v6240 = vpop.f32.mrf.mxu0
  %v6241 = vadd.f32 %v5965, %v6240
  %v6242 = vpop.f32.mrf.mxu0
  %v6243 = vadd.f32 %v5967, %v6242
  %6244 = vmatmul.bf16.gmra.mxu0 %v5679
  %v6245 = vpop.f32.mrf.mxu0
  %v6246 = vadd.f32 %v5970, %v6245
  %v6247 = vpop.f32.mrf.mxu0
  %v6248 = vadd.f32 %v5972, %v6247
  %6249 = vdwg.mxu0
  %6250 = vmatpush.bf16.msra.mxu0 %v6158
  %6251 = vmatpush.bf16.msra.mxu0 %v6154
  %6252 = vmatpush.bf16.msra.mxu0 %v6150
  %6253 = vmatpush.bf16.msra.mxu0 %v6146
  %6254 = vmatpush.bf16.msra.mxu0 %v6142
  %6255 = vmatpush.bf16.msra.mxu0 %v6138
  %6256 = vmatpush.bf16.msra.mxu0 %v6134
  %6257 = vmatpush.bf16.msra.mxu0 %v6130
  %6258 = vmatmul.bf16.gmra.mxu0 %v5676
  %v6259 = vpop.f32.mrf.mxu0
  %v6260 = vadd.f32 %v5984, %v6259
  %v6261 = vpop.f32.mrf.mxu0
  %v6262 = vadd.f32 %v5986, %v6261
  %6263 = vmatmul.bf16.gmra.mxu0 %v5677
  %v6264 = vpop.f32.mrf.mxu0
  %v6265 = vadd.f32 %v5989, %v6264
  %v6266 = vpop.f32.mrf.mxu0
  %v6267 = vadd.f32 %v5991, %v6266
  %6268 = vmatmul.bf16.gmra.mxu0 %v5678
  %v6269 = vpop.f32.mrf.mxu0
  %v6270 = vadd.f32 %v5994, %v6269
  %v6271 = vpop.f32.mrf.mxu0
  %v6272 = vadd.f32 %v5996, %v6271
  %6273 = vmatmul.bf16.gmra.mxu0 %v5679
  %v6274 = vpop.f32.mrf.mxu0
  %v6275 = vadd.f32 %v5999, %v6274
  %v6276 = vpop.f32.mrf.mxu0
  %v6277 = vadd.f32 %v6001, %v6276
  %6278 = vdwg.mxu0
  %6279 = vmatpush.bf16.msra.mxu0 %v6159
  %6280 = vmatpush.bf16.msra.mxu0 %v6155
  %6281 = vmatpush.bf16.msra.mxu0 %v6151
  %6282 = vmatpush.bf16.msra.mxu0 %v6147
  %6283 = vmatpush.bf16.msra.mxu0 %v6143
  %6284 = vmatpush.bf16.msra.mxu0 %v6139
  %6285 = vmatpush.bf16.msra.mxu0 %v6135
  %6286 = vmatpush.bf16.msra.mxu0 %v6131
  %6287 = vmatmul.bf16.gmra.mxu0 %v5676
  %v6288 = vpop.f32.mrf.mxu0
  %v6289 = vadd.f32 %v6013, %v6288
  %v6290 = vpop.f32.mrf.mxu0
  %v6291 = vadd.f32 %v6015, %v6290
  %6292 = vmatmul.bf16.gmra.mxu0 %v5677
  %v6293 = vpop.f32.mrf.mxu0
  %v6294 = vadd.f32 %v6018, %v6293
  %v6295 = vpop.f32.mrf.mxu0
  %v6296 = vadd.f32 %v6020, %v6295
  %6297 = vmatmul.bf16.gmra.mxu0 %v5678
  %v6298 = vpop.f32.mrf.mxu0
  %v6299 = vadd.f32 %v6023, %v6298
  %v6300 = vpop.f32.mrf.mxu0
  %v6301 = vadd.f32 %v6025, %v6300
  %6302 = vmatmul.bf16.gmra.mxu0 %v5679
  %v6303 = vpop.f32.mrf.mxu0
  %v6304 = vadd.f32 %v6028, %v6303
  %v6305 = vpop.f32.mrf.mxu0
  %v6306 = vadd.f32 %v6030, %v6305
  %6307 = vdwg.mxu0
  %v6308 = vld [vmem:[%s10] sm:$0xf]
  %v6310 = vperm.slane %v6308, 0
  %v6311 = vperm.slane %v6308, 1
  %v6312 = vperm.slane %v6308, 2
  %v6313 = vperm.slane %v6308, 3
  %v6318 = vadd.f32 %v6202, %v6310
  %v6319 = vadd.f32 %v6231, %v6311
  %v6320 = vadd.f32 %v6260, %v6312
  %v6321 = vadd.f32 %v6289, %v6313
  %v6322 = vadd.f32 %v6204, %v6310
  %v6323 = vadd.f32 %v6233, %v6311
  %v6324 = vadd.f32 %v6262, %v6312
  %v6325 = vadd.f32 %v6291, %v6313
  %v6326 = vadd.f32 %v6207, %v6310
  %v6327 = vadd.f32 %v6236, %v6311
  %v6328 = vadd.f32 %v6265, %v6312
  %v6329 = vadd.f32 %v6294, %v6313
  %v6330 = vadd.f32 %v6209, %v6310
  %v6331 = vadd.f32 %v6238, %v6311
  %v6332 = vadd.f32 %v6267, %v6312
  %v6333 = vadd.f32 %v6296, %v6313
  %v6334 = vadd.f32 %v6212, %v6310
  %v6335 = vadd.f32 %v6241, %v6311
  %v6336 = vadd.f32 %v6270, %v6312
  %v6337 = vadd.f32 %v6299, %v6313
  %v6338 = vadd.f32 %v6214, %v6310
  %v6339 = vadd.f32 %v6243, %v6311
  %v6340 = vadd.f32 %v6272, %v6312
  %v6341 = vadd.f32 %v6301, %v6313
  %v6342 = vadd.f32 %v6217, %v6310
  %v6343 = vadd.f32 %v6246, %v6311
  %v6344 = vadd.f32 %v6275, %v6312
  %v6345 = vadd.f32 %v6304, %v6313
  %v6346 = vadd.f32 %v6219, %v6310
  %v6347 = vadd.f32 %v6248, %v6311
  %v6348 = vadd.f32 %v6277, %v6312
  %v6349 = vadd.f32 %v6306, %v6313
  %6350 = vst [vmem:[#allocation4] sm:$0xff] %v6318
  %6351 = vst [vmem:[#allocation4 + $0x8] sm:$0xff] %v6319
  %6352 = vst [vmem:[#allocation4 + $0x10] sm:$0xff] %v6320
  %6353 = vst [vmem:[#allocation4 + $0x18] sm:$0xff] %v6321
  %6354 = vst [vmem:[#allocation4 + $0x20] sm:$0xff] %v6322
  %6355 = vst [vmem:[#allocation4 + $0x28] sm:$0xff] %v6323
  %6356 = vst [vmem:[#allocation4 + $0x30] sm:$0xff] %v6324
  %6357 = vst [vmem:[#allocation4 + $0x38] sm:$0xff] %v6325
  %6358 = vst [vmem:[#allocation4 + $0x40] sm:$0xff] %v6326
  %6359 = vst [vmem:[#allocation4 + $0x48] sm:$0xff] %v6327
  %6360 = vst [vmem:[#allocation4 + $0x50] sm:$0xff] %v6328
  %6361 = vst [vmem:[#allocation4 + $0x58] sm:$0xff] %v6329
  %6362 = vst [vmem:[#allocation4 + $0x60] sm:$0xff] %v6330
  %6363 = vst [vmem:[#allocation4 + $0x68] sm:$0xff] %v6331
  %6364 = vst [vmem:[#allocation4 + $0x70] sm:$0xff] %v6332
  %6365 = vst [vmem:[#allocation4 + $0x78] sm:$0xff] %v6333
  %6366 = vst [vmem:[#allocation4 + $0x80] sm:$0xff] %v6334
  %6367 = vst [vmem:[#allocation4 + $0x88] sm:$0xff] %v6335
  %6368 = vst [vmem:[#allocation4 + $0x90] sm:$0xff] %v6336
  %6369 = vst [vmem:[#allocation4 + $0x98] sm:$0xff] %v6337
  %6370 = vst [vmem:[#allocation4 + $0xa0] sm:$0xff] %v6338
  %6371 = vst [vmem:[#allocation4 + $0xa8] sm:$0xff] %v6339
  %6372 = vst [vmem:[#allocation4 + $0xb0] sm:$0xff] %v6340
  %6373 = vst [vmem:[#allocation4 + $0xb8] sm:$0xff] %v6341
  %6374 = vst [vmem:[#allocation4 + $0xc0] sm:$0xff] %v6342
  %6375 = vst [vmem:[#allocation4 + $0xc8] sm:$0xff] %v6343
  %6376 = vst [vmem:[#allocation4 + $0xd0] sm:$0xff] %v6344
  %6377 = vst [vmem:[#allocation4 + $0xd8] sm:$0xff] %v6345
  %6378 = vst [vmem:[#allocation4 + $0xe0] sm:$0xff] %v6346
  %6379 = vst [vmem:[#allocation4 + $0xe8] sm:$0xff] %v6347
  %6380 = vst [vmem:[#allocation4 + $0xf0] sm:$0xff] %v6348
  %6381 = vst [vmem:[#allocation4 + $0xf8] sm:$0xff] %v6349
  %v6382 = vld [vmem:[#allocation4] sm:$0xff]
  %v6383 = vld [vmem:[#allocation4 + $0x8] sm:$0xff]
  %v6384 = vld [vmem:[#allocation4 + $0x10] sm:$0xff]
  %v6385 = vld [vmem:[#allocation4 + $0x18] sm:$0xff]
  %v6386 = vld [vmem:[#allocation11] sm:$0xff]
  %v6387 = vpack.c.bf16 %v6386, %v6386
  %v6388 = vld [vmem:[%s9] sm:$0xff]
  %v6389 = vld [vmem:[%s9 + $0x8] sm:$0xff]
  %v6390 = vld [vmem:[%s9 + $0x10] sm:$0xff]
  %v6391 = vld [vmem:[%s9 + $0x18] sm:$0xff]
  %v6392 = vld [vmem:[%s9 + $0x20] sm:$0xff]
  %v6393 = vld [vmem:[%s9 + $0x28] sm:$0xff]
  %v6394 = vld [vmem:[%s9 + $0x30] sm:$0xff]
  %v6395 = vld [vmem:[%s9 + $0x38] sm:$0xff]
  %v6396 = vld [vmem:[%s9 + $0x40] sm:$0xff]
  %v6397 = vld [vmem:[%s9 + $0x48] sm:$0xff]
  %v6398 = vld [vmem:[%s9 + $0x50] sm:$0xff]
  %v6399 = vld [vmem:[%s9 + $0x58] sm:$0xff]
  %v6400 = vld [vmem:[%s9 + $0x60] sm:$0xff]
  %v6401 = vld [vmem:[%s9 + $0x68] sm:$0xff]
  %v6402 = vld [vmem:[%s9 + $0x70] sm:$0xff]
  %v6403 = vld [vmem:[%s9 + $0x78] sm:$0xff]
  %v6404 = vld [vmem:[%s9 + $0x80] sm:$0xff]
  %v6405 = vld [vmem:[%s9 + $0x88] sm:$0xff]
  %v6406 = vld [vmem:[%s9 + $0x90] sm:$0xff]
  %v6407 = vld [vmem:[%s9 + $0x98] sm:$0xff]
  %v6408 = vld [vmem:[%s9 + $0xa0] sm:$0xff]
  %v6409 = vld [vmem:[%s9 + $0xa8] sm:$0xff]
  %v6410 = vld [vmem:[%s9 + $0xb0] sm:$0xff]
  %v6411 = vld [vmem:[%s9 + $0xb8] sm:$0xff]
  %v6412 = vld [vmem:[%s9 + $0xc0] sm:$0xff]
  %v6413 = vld [vmem:[%s9 + $0xc8] sm:$0xff]
  %v6414 = vld [vmem:[%s9 + $0xd0] sm:$0xff]
  %v6415 = vld [vmem:[%s9 + $0xd8] sm:$0xff]
  %v6416 = vld [vmem:[%s9 + $0xe0] sm:$0xff]
  %v6417 = vld [vmem:[%s9 + $0xe8] sm:$0xff]
  %v6418 = vld [vmem:[%s9 + $0xf0] sm:$0xff]
  %v6419 = vld [vmem:[%s9 + $0xf8] sm:$0xff]
  %v6452 = vunpack.c.l.b16 %v6388
  %v6453 = vunpack.c.h.b16 %v6388
  %v6454 = vunpack.c.l.b16 %v6389
  %v6455 = vunpack.c.h.b16 %v6389
  %v6456 = vunpack.c.l.b16 %v6390
  %v6457 = vunpack.c.h.b16 %v6390
  %v6458 = vunpack.c.l.b16 %v6391
  %v6459 = vunpack.c.h.b16 %v6391
  %v6460 = vunpack.c.l.b16 %v6392
  %v6461 = vunpack.c.h.b16 %v6392
  %v6462 = vunpack.c.l.b16 %v6393
  %v6463 = vunpack.c.h.b16 %v6393
  %v6464 = vunpack.c.l.b16 %v6394
  %v6465 = vunpack.c.h.b16 %v6394
  %v6466 = vunpack.c.l.b16 %v6395
  %v6467 = vunpack.c.h.b16 %v6395
  %v6468 = vunpack.c.l.b16 %v6396
  %v6469 = vunpack.c.h.b16 %v6396
  %v6470 = vunpack.c.l.b16 %v6397
  %v6471 = vunpack.c.h.b16 %v6397
  %v6472 = vunpack.c.l.b16 %v6398
  %v6473 = vunpack.c.h.b16 %v6398
  %v6474 = vunpack.c.l.b16 %v6399
  %v6475 = vunpack.c.h.b16 %v6399
  %v6476 = vunpack.c.l.b16 %v6400
  %v6477 = vunpack.c.h.b16 %v6400
  %v6478 = vunpack.c.l.b16 %v6401
  %v6479 = vunpack.c.h.b16 %v6401
  %v6480 = vunpack.c.l.b16 %v6402
  %v6481 = vunpack.c.h.b16 %v6402
  %v6482 = vunpack.c.l.b16 %v6403
  %v6483 = vunpack.c.h.b16 %v6403
  %v6484 = vunpack.c.l.b16 %v6404
  %v6485 = vunpack.c.h.b16 %v6404
  %v6486 = vunpack.c.l.b16 %v6405
  %v6487 = vunpack.c.h.b16 %v6405
  %v6488 = vunpack.c.l.b16 %v6406
  %v6489 = vunpack.c.h.b16 %v6406
  %v6490 = vunpack.c.l.b16 %v6407
  %v6491 = vunpack.c.h.b16 %v6407
  %v6492 = vunpack.c.l.b16 %v6408
  %v6493 = vunpack.c.h.b16 %v6408
  %v6494 = vunpack.c.l.b16 %v6409
  %v6495 = vunpack.c.h.b16 %v6409
  %v6496 = vunpack.c.l.b16 %v6410
  %v6497 = vunpack.c.h.b16 %v6410
  %v6498 = vunpack.c.l.b16 %v6411
  %v6499 = vunpack.c.h.b16 %v6411
  %v6500 = vunpack.c.l.b16 %v6412
  %v6501 = vunpack.c.h.b16 %v6412
  %v6502 = vunpack.c.l.b16 %v6413
  %v6503 = vunpack.c.h.b16 %v6413
  %v6504 = vunpack.c.l.b16 %v6414
  %v6505 = vunpack.c.h.b16 %v6414
  %v6506 = vunpack.c.l.b16 %v6415
  %v6507 = vunpack.c.h.b16 %v6415
  %v6508 = vunpack.c.l.b16 %v6416
  %v6509 = vunpack.c.h.b16 %v6416
  %v6510 = vunpack.c.l.b16 %v6417
  %v6511 = vunpack.c.h.b16 %v6417
  %v6512 = vunpack.c.l.b16 %v6418
  %v6513 = vunpack.c.h.b16 %v6418
  %v6514 = vunpack.c.l.b16 %v6419
  %v6515 = vunpack.c.h.b16 %v6419
  %v6516 = vpack.c.b16 %v6456, %v6452
  %v6517 = vpack.c.b16 %v6457, %v6453
  %v6518 = vpack.c.b16 %v6458, %v6454
  %v6519 = vpack.c.b16 %v6459, %v6455
  %v6520 = vpack.c.b16 %v6464, %v6460
  %v6521 = vpack.c.b16 %v6465, %v6461
  %v6522 = vpack.c.b16 %v6466, %v6462
  %v6523 = vpack.c.b16 %v6467, %v6463
  %v6524 = vpack.c.b16 %v6472, %v6468
  %v6525 = vpack.c.b16 %v6473, %v6469
  %v6526 = vpack.c.b16 %v6474, %v6470
  %v6527 = vpack.c.b16 %v6475, %v6471
  %v6528 = vpack.c.b16 %v6480, %v6476
  %v6529 = vpack.c.b16 %v6481, %v6477
  %v6530 = vpack.c.b16 %v6482, %v6478
  %v6531 = vpack.c.b16 %v6483, %v6479
  %v6532 = vpack.c.b16 %v6488, %v6484
  %v6533 = vpack.c.b16 %v6489, %v6485
  %v6534 = vpack.c.b16 %v6490, %v6486
  %v6535 = vpack.c.b16 %v6491, %v6487
  %v6536 = vpack.c.b16 %v6496, %v6492
  %v6537 = vpack.c.b16 %v6497, %v6493
  %v6538 = vpack.c.b16 %v6498, %v6494
  %v6539 = vpack.c.b16 %v6499, %v6495
  %v6540 = vpack.c.b16 %v6504, %v6500
  %v6541 = vpack.c.b16 %v6505, %v6501
  %v6542 = vpack.c.b16 %v6506, %v6502
  %v6543 = vpack.c.b16 %v6507, %v6503
  %v6544 = vpack.c.b16 %v6512, %v6508
  %v6545 = vpack.c.b16 %v6513, %v6509
  %v6546 = vpack.c.b16 %v6514, %v6510
  %v6547 = vpack.c.b16 %v6515, %v6511
  %6580 = vmatpush.bf16.msra.mxu0 %v6544
  %6581 = vmatpush.bf16.msra.mxu0 %v6540
  %6582 = vmatpush.bf16.msra.mxu0 %v6536
  %6583 = vmatpush.bf16.msra.mxu0 %v6532
  %6584 = vmatpush.bf16.msra.mxu0 %v6528
  %6585 = vmatpush.bf16.msra.mxu0 %v6524
  %6586 = vmatpush.bf16.msra.mxu0 %v6520
  %6587 = vmatpush.bf16.msra.mxu0 %v6516
  %6588 = vmatmul.bf16.gmra.mxu0 %v6387
  %v6589 = vpop.f32.mrf.mxu0
  %v6590 = vadd.f32 0.0, %v6589
  %v6591 = vpop.f32.mrf.mxu0
  %6592 = vdwg.mxu0
  %6593 = vmatpush.bf16.msra.mxu0 %v6545
  %6594 = vmatpush.bf16.msra.mxu0 %v6541
  %6595 = vmatpush.bf16.msra.mxu0 %v6537
  %6596 = vmatpush.bf16.msra.mxu0 %v6533
  %6597 = vmatpush.bf16.msra.mxu0 %v6529
  %6598 = vmatpush.bf16.msra.mxu0 %v6525
  %6599 = vmatpush.bf16.msra.mxu0 %v6521
  %6600 = vmatpush.bf16.msra.mxu0 %v6517
  %6601 = vmatmul.bf16.gmra.mxu0 %v6387
  %v6602 = vpop.f32.mrf.mxu0
  %v6603 = vadd.f32 0.0, %v6602
  %v6604 = vpop.f32.mrf.mxu0
  %6605 = vdwg.mxu0
  %6606 = vmatpush.bf16.msra.mxu0 %v6546
  %6607 = vmatpush.bf16.msra.mxu0 %v6542
  %6608 = vmatpush.bf16.msra.mxu0 %v6538
  %6609 = vmatpush.bf16.msra.mxu0 %v6534
  %6610 = vmatpush.bf16.msra.mxu0 %v6530
  %6611 = vmatpush.bf16.msra.mxu0 %v6526
  %6612 = vmatpush.bf16.msra.mxu0 %v6522
  %6613 = vmatpush.bf16.msra.mxu0 %v6518
  %6614 = vmatmul.bf16.gmra.mxu0 %v6387
  %v6615 = vpop.f32.mrf.mxu0
  %v6616 = vadd.f32 0.0, %v6615
  %v6617 = vpop.f32.mrf.mxu0
  %6618 = vdwg.mxu0
  %6619 = vmatpush.bf16.msra.mxu0 %v6547
  %6620 = vmatpush.bf16.msra.mxu0 %v6543
  %6621 = vmatpush.bf16.msra.mxu0 %v6539
  %6622 = vmatpush.bf16.msra.mxu0 %v6535
  %6623 = vmatpush.bf16.msra.mxu0 %v6531
  %6624 = vmatpush.bf16.msra.mxu0 %v6527
  %6625 = vmatpush.bf16.msra.mxu0 %v6523
  %6626 = vmatpush.bf16.msra.mxu0 %v6519
  %6627 = vmatmul.bf16.gmra.mxu0 %v6387
  %v6628 = vpop.f32.mrf.mxu0
  %v6629 = vadd.f32 0.0, %v6628
  %v6630 = vpop.f32.mrf.mxu0
  %6631 = vdwg.mxu0
  %v6632 = vadd.f32 %v6382, %v6590
  %v6633 = vadd.f32 %v6383, %v6603
  %v6634 = vadd.f32 %v6384, %v6616
  %v6635 = vadd.f32 %v6385, %v6629
  %v6636 = vld [vmem:[#allocation12] sm:$0xff]
  %v6637 = vxor.u32 %v6632, 2147483648
  %v6638 = vmul.f32 %v6637, 1.442695
  %v6639 = vpow.pop %v6638
  %v6640 = vadd.f32 %v6639, 1.0
  %v6641 = vrcp.pop %v6640
  %v6642 = vmul.f32 %v6640, %v6641
  %v6643 = vsub.f32 1.0, %v6642
  %v6644 = vmul.f32 %v6641, %v6643
  %v6645 = vadd.f32 %v6641, %v6644
  %vm6646 = vweird.f32 %v6640
  %vm6647 = vweird.f32 %v6641
  %vm6648 = vmor %vm6646, %vm6647
  %v6649 = vsel %vm6648, %v6641, %v6645
  %v6650 = vand.u32 2147483647, %v6640
  %vm6651 = vcmp.eq.f32.partialorder %v6650, 8.507059e+37
  %v6652 = vand.u32 %v6640, 2147483648
  %v6653 = vor.u32 1.1754944e-38, %v6652
  %v6654 = vsel %vm6651, %v6653, %v6649
  %v6655 = vmul.f32 1.0, %v6654
  %v6656 = vxor.u32 %v6633, 2147483648
  %v6657 = vmul.f32 %v6656, 1.442695
  %v6658 = vpow.pop %v6657
  %v6659 = vadd.f32 %v6658, 1.0
  %v6660 = vrcp.pop %v6659
  %v6661 = vmul.f32 %v6659, %v6660
  %v6662 = vsub.f32 1.0, %v6661
  %v6663 = vmul.f32 %v6660, %v6662
  %v6664 = vadd.f32 %v6660, %v6663
  %vm6665 = vweird.f32 %v6659
  %vm6666 = vweird.f32 %v6660
  %vm6667 = vmor %vm6665, %vm6666
  %v6668 = vsel %vm6667, %v6660, %v6664
  %v6669 = vand.u32 2147483647, %v6659
  %vm6670 = vcmp.eq.f32.partialorder %v6669, 8.507059e+37
  %v6671 = vand.u32 %v6659, 2147483648
  %v6672 = vor.u32 1.1754944e-38, %v6671
  %v6673 = vsel %vm6670, %v6672, %v6668
  %v6674 = vmul.f32 1.0, %v6673
  %v6675 = vtanh.pop %v6634
  %v6676 = vxor.u32 %v6635, 2147483648
  %v6677 = vmul.f32 %v6676, 1.442695
  %v6678 = vpow.pop %v6677
  %v6679 = vadd.f32 %v6678, 1.0
  %v6680 = vrcp.pop %v6679
  %v6681 = vmul.f32 %v6679, %v6680
  %v6682 = vsub.f32 1.0, %v6681
  %v6683 = vmul.f32 %v6680, %v6682
  %v6684 = vadd.f32 %v6680, %v6683
  %vm6685 = vweird.f32 %v6679
  %vm6686 = vweird.f32 %v6680
  %vm6687 = vmor %vm6685, %vm6686
  %v6688 = vsel %vm6687, %v6680, %v6684
  %v6689 = vand.u32 2147483647, %v6679
  %vm6690 = vcmp.eq.f32.partialorder %v6689, 8.507059e+37
  %v6691 = vand.u32 %v6679, 2147483648
  %v6692 = vor.u32 1.1754944e-38, %v6691
  %v6693 = vsel %vm6690, %v6692, %v6688
  %v6694 = vmul.f32 1.0, %v6693
  %v6695 = vmul.f32 %v6674, %v6636
  %v6696 = vmul.f32 %v6655, %v6675
  %v6697 = vadd.f32 %v6695, %v6696
  %v6698 = vtanh.pop %v6697
  %v6699 = vmul.f32 %v6694, %v6698
  %6700 = vst [vmem:[#allocation11] sm:$0xff] %v6699
  %6701 = vst [vmem:[#allocation12] sm:$0xff] %v6697
  %v6702 = vld [vmem:[#allocation4 + $0x20] sm:$0xff]
  %v6703 = vld [vmem:[#allocation4 + $0x28] sm:$0xff]
  %v6704 = vld [vmem:[#allocation4 + $0x30] sm:$0xff]
  %v6705 = vld [vmem:[#allocation4 + $0x38] sm:$0xff]
  %v6706 = vld [vmem:[#allocation11] sm:$0xff]
  %v6707 = vpack.c.bf16 %v6706, %v6706
  %v6708 = vld [vmem:[%s9] sm:$0xff]
  %v6709 = vld [vmem:[%s9 + $0x8] sm:$0xff]
  %v6710 = vld [vmem:[%s9 + $0x10] sm:$0xff]
  %v6711 = vld [vmem:[%s9 + $0x18] sm:$0xff]
  %v6712 = vld [vmem:[%s9 + $0x20] sm:$0xff]
  %v6713 = vld [vmem:[%s9 + $0x28] sm:$0xff]
  %v6714 = vld [vmem:[%s9 + $0x30] sm:$0xff]
  %v6715 = vld [vmem:[%s9 + $0x38] sm:$0xff]
  %v6716 = vld [vmem:[%s9 + $0x40] sm:$0xff]
  %v6717 = vld [vmem:[%s9 + $0x48] sm:$0xff]
  %v6718 = vld [vmem:[%s9 + $0x50] sm:$0xff]
  %v6719 = vld [vmem:[%s9 + $0x58] sm:$0xff]
  %v6720 = vld [vmem:[%s9 + $0x60] sm:$0xff]
  %v6721 = vld [vmem:[%s9 + $0x68] sm:$0xff]
  %v6722 = vld [vmem:[%s9 + $0x70] sm:$0xff]
  %v6723 = vld [vmem:[%s9 + $0x78] sm:$0xff]
  %v6724 = vld [vmem:[%s9 + $0x80] sm:$0xff]
  %v6725 = vld [vmem:[%s9 + $0x88] sm:$0xff]
  %v6726 = vld [vmem:[%s9 + $0x90] sm:$0xff]
  %v6727 = vld [vmem:[%s9 + $0x98] sm:$0xff]
  %v6728 = vld [vmem:[%s9 + $0xa0] sm:$0xff]
  %v6729 = vld [vmem:[%s9 + $0xa8] sm:$0xff]
  %v6730 = vld [vmem:[%s9 + $0xb0] sm:$0xff]
  %v6731 = vld [vmem:[%s9 + $0xb8] sm:$0xff]
  %v6732 = vld [vmem:[%s9 + $0xc0] sm:$0xff]
  %v6733 = vld [vmem:[%s9 + $0xc8] sm:$0xff]
  %v6734 = vld [vmem:[%s9 + $0xd0] sm:$0xff]
  %v6735 = vld [vmem:[%s9 + $0xd8] sm:$0xff]
  %v6736 = vld [vmem:[%s9 + $0xe0] sm:$0xff]
  %v6737 = vld [vmem:[%s9 + $0xe8] sm:$0xff]
  %v6738 = vld [vmem:[%s9 + $0xf0] sm:$0xff]
  %v6739 = vld [vmem:[%s9 + $0xf8] sm:$0xff]
  %v6772 = vunpack.c.l.b16 %v6708
  %v6773 = vunpack.c.h.b16 %v6708
  %v6774 = vunpack.c.l.b16 %v6709
  %v6775 = vunpack.c.h.b16 %v6709
  %v6776 = vunpack.c.l.b16 %v6710
  %v6777 = vunpack.c.h.b16 %v6710
  %v6778 = vunpack.c.l.b16 %v6711
  %v6779 = vunpack.c.h.b16 %v6711
  %v6780 = vunpack.c.l.b16 %v6712
  %v6781 = vunpack.c.h.b16 %v6712
  %v6782 = vunpack.c.l.b16 %v6713
  %v6783 = vunpack.c.h.b16 %v6713
  %v6784 = vunpack.c.l.b16 %v6714
  %v6785 = vunpack.c.h.b16 %v6714
  %v6786 = vunpack.c.l.b16 %v6715
  %v6787 = vunpack.c.h.b16 %v6715
  %v6788 = vunpack.c.l.b16 %v6716
  %v6789 = vunpack.c.h.b16 %v6716
  %v6790 = vunpack.c.l.b16 %v6717
  %v6791 = vunpack.c.h.b16 %v6717
  %v6792 = vunpack.c.l.b16 %v6718
  %v6793 = vunpack.c.h.b16 %v6718
  %v6794 = vunpack.c.l.b16 %v6719
  %v6795 = vunpack.c.h.b16 %v6719
  %v6796 = vunpack.c.l.b16 %v6720
  %v6797 = vunpack.c.h.b16 %v6720
  %v6798 = vunpack.c.l.b16 %v6721
  %v6799 = vunpack.c.h.b16 %v6721
  %v6800 = vunpack.c.l.b16 %v6722
  %v6801 = vunpack.c.h.b16 %v6722
  %v6802 = vunpack.c.l.b16 %v6723
  %v6803 = vunpack.c.h.b16 %v6723
  %v6804 = vunpack.c.l.b16 %v6724
  %v6805 = vunpack.c.h.b16 %v6724
  %v6806 = vunpack.c.l.b16 %v6725
  %v6807 = vunpack.c.h.b16 %v6725
  %v6808 = vunpack.c.l.b16 %v6726
  %v6809 = vunpack.c.h.b16 %v6726
  %v6810 = vunpack.c.l.b16 %v6727
  %v6811 = vunpack.c.h.b16 %v6727
  %v6812 = vunpack.c.l.b16 %v6728
  %v6813 = vunpack.c.h.b16 %v6728
  %v6814 = vunpack.c.l.b16 %v6729
  %v6815 = vunpack.c.h.b16 %v6729
  %v6816 = vunpack.c.l.b16 %v6730
  %v6817 = vunpack.c.h.b16 %v6730
  %v6818 = vunpack.c.l.b16 %v6731
  %v6819 = vunpack.c.h.b16 %v6731
  %v6820 = vunpack.c.l.b16 %v6732
  %v6821 = vunpack.c.h.b16 %v6732
  %v6822 = vunpack.c.l.b16 %v6733
  %v6823 = vunpack.c.h.b16 %v6733
  %v6824 = vunpack.c.l.b16 %v6734
  %v6825 = vunpack.c.h.b16 %v6734
  %v6826 = vunpack.c.l.b16 %v6735
  %v6827 = vunpack.c.h.b16 %v6735
  %v6828 = vunpack.c.l.b16 %v6736
  %v6829 = vunpack.c.h.b16 %v6736
  %v6830 = vunpack.c.l.b16 %v6737
  %v6831 = vunpack.c.h.b16 %v6737
  %v6832 = vunpack.c.l.b16 %v6738
  %v6833 = vunpack.c.h.b16 %v6738
  %v6834 = vunpack.c.l.b16 %v6739
  %v6835 = vunpack.c.h.b16 %v6739
  %v6836 = vpack.c.b16 %v6776, %v6772
  %v6837 = vpack.c.b16 %v6777, %v6773
  %v6838 = vpack.c.b16 %v6778, %v6774
  %v6839 = vpack.c.b16 %v6779, %v6775
  %v6840 = vpack.c.b16 %v6784, %v6780
  %v6841 = vpack.c.b16 %v6785, %v6781
  %v6842 = vpack.c.b16 %v6786, %v6782
  %v6843 = vpack.c.b16 %v6787, %v6783
  %v6844 = vpack.c.b16 %v6792, %v6788
  %v6845 = vpack.c.b16 %v6793, %v6789
  %v6846 = vpack.c.b16 %v6794, %v6790
  %v6847 = vpack.c.b16 %v6795, %v6791
  %v6848 = vpack.c.b16 %v6800, %v6796
  %v6849 = vpack.c.b16 %v6801, %v6797
  %v6850 = vpack.c.b16 %v6802, %v6798
  %v6851 = vpack.c.b16 %v6803, %v6799
  %v6852 = vpack.c.b16 %v6808, %v6804
  %v6853 = vpack.c.b16 %v6809, %v6805
  %v6854 = vpack.c.b16 %v6810, %v6806
  %v6855 = vpack.c.b16 %v6811, %v6807
  %v6856 = vpack.c.b16 %v6816, %v6812
  %v6857 = vpack.c.b16 %v6817, %v6813
  %v6858 = vpack.c.b16 %v6818, %v6814
  %v6859 = vpack.c.b16 %v6819, %v6815
  %v6860 = vpack.c.b16 %v6824, %v6820
  %v6861 = vpack.c.b16 %v6825, %v6821
  %v6862 = vpack.c.b16 %v6826, %v6822
  %v6863 = vpack.c.b16 %v6827, %v6823
  %v6864 = vpack.c.b16 %v6832, %v6828
  %v6865 = vpack.c.b16 %v6833, %v6829
  %v6866 = vpack.c.b16 %v6834, %v6830
  %v6867 = vpack.c.b16 %v6835, %v6831
  %6900 = vmatpush.bf16.msra.mxu0 %v6864
  %6901 = vmatpush.bf16.msra.mxu0 %v6860
  %6902 = vmatpush.bf16.msra.mxu0 %v6856
  %6903 = vmatpush.bf16.msra.mxu0 %v6852
  %6904 = vmatpush.bf16.msra.mxu0 %v6848
  %6905 = vmatpush.bf16.msra.mxu0 %v6844
  %6906 = vmatpush.bf16.msra.mxu0 %v6840
  %6907 = vmatpush.bf16.msra.mxu0 %v6836
  %6908 = vmatmul.bf16.gmra.mxu0 %v6707
  %v6909 = vpop.f32.mrf.mxu0
  %v6910 = vadd.f32 0.0, %v6909
  %v6911 = vpop.f32.mrf.mxu0
  %6912 = vdwg.mxu0
  %6913 = vmatpush.bf16.msra.mxu0 %v6865
  %6914 = vmatpush.bf16.msra.mxu0 %v6861
  %6915 = vmatpush.bf16.msra.mxu0 %v6857
  %6916 = vmatpush.bf16.msra.mxu0 %v6853
  %6917 = vmatpush.bf16.msra.mxu0 %v6849
  %6918 = vmatpush.bf16.msra.mxu0 %v6845
  %6919 = vmatpush.bf16.msra.mxu0 %v6841
  %6920 = vmatpush.bf16.msra.mxu0 %v6837
  %6921 = vmatmul.bf16.gmra.mxu0 %v6707
  %v6922 = vpop.f32.mrf.mxu0
  %v6923 = vadd.f32 0.0, %v6922
  %v6924 = vpop.f32.mrf.mxu0
  %6925 = vdwg.mxu0
  %6926 = vmatpush.bf16.msra.mxu0 %v6866
  %6927 = vmatpush.bf16.msra.mxu0 %v6862
  %6928 = vmatpush.bf16.msra.mxu0 %v6858
  %6929 = vmatpush.bf16.msra.mxu0 %v6854
  %6930 = vmatpush.bf16.msra.mxu0 %v6850
  %6931 = vmatpush.bf16.msra.mxu0 %v6846
  %6932 = vmatpush.bf16.msra.mxu0 %v6842
  %6933 = vmatpush.bf16.msra.mxu0 %v6838
  %6934 = vmatmul.bf16.gmra.mxu0 %v6707
  %v6935 = vpop.f32.mrf.mxu0
  %v6936 = vadd.f32 0.0, %v6935
  %v6937 = vpop.f32.mrf.mxu0
  %6938 = vdwg.mxu0
  %6939 = vmatpush.bf16.msra.mxu0 %v6867
  %6940 = vmatpush.bf16.msra.mxu0 %v6863
  %6941 = vmatpush.bf16.msra.mxu0 %v6859
  %6942 = vmatpush.bf16.msra.mxu0 %v6855
  %6943 = vmatpush.bf16.msra.mxu0 %v6851
  %6944 = vmatpush.bf16.msra.mxu0 %v6847
  %6945 = vmatpush.bf16.msra.mxu0 %v6843
  %6946 = vmatpush.bf16.msra.mxu0 %v6839
  %6947 = vmatmul.bf16.gmra.mxu0 %v6707
  %v6948 = vpop.f32.mrf.mxu0
  %v6949 = vadd.f32 0.0, %v6948
  %v6950 = vpop.f32.mrf.mxu0
  %6951 = vdwg.mxu0
  %v6952 = vadd.f32 %v6702, %v6910
  %v6953 = vadd.f32 %v6703, %v6923
  %v6954 = vadd.f32 %v6704, %v6936
  %v6955 = vadd.f32 %v6705, %v6949
  %v6956 = vld [vmem:[#allocation12] sm:$0xff]
  %v6957 = vxor.u32 %v6952, 2147483648
  %v6958 = vmul.f32 %v6957, 1.442695
  %v6959 = vpow.pop %v6958
  %v6960 = vadd.f32 %v6959, 1.0
  %v6961 = vrcp.pop %v6960
  %v6962 = vmul.f32 %v6960, %v6961
  %v6963 = vsub.f32 1.0, %v6962
  %v6964 = vmul.f32 %v6961, %v6963
  %v6965 = vadd.f32 %v6961, %v6964
  %vm6966 = vweird.f32 %v6960
  %vm6967 = vweird.f32 %v6961
  %vm6968 = vmor %vm6966, %vm6967
  %v6969 = vsel %vm6968, %v6961, %v6965
  %v6970 = vand.u32 2147483647, %v6960
  %vm6971 = vcmp.eq.f32.partialorder %v6970, 8.507059e+37
  %v6972 = vand.u32 %v6960, 2147483648
  %v6973 = vor.u32 1.1754944e-38, %v6972
  %v6974 = vsel %vm6971, %v6973, %v6969
  %v6975 = vmul.f32 1.0, %v6974
  %v6976 = vxor.u32 %v6953, 2147483648
  %v6977 = vmul.f32 %v6976, 1.442695
  %v6978 = vpow.pop %v6977
  %v6979 = vadd.f32 %v6978, 1.0
  %v6980 = vrcp.pop %v6979
  %v6981 = vmul.f32 %v6979, %v6980
  %v6982 = vsub.f32 1.0, %v6981
  %v6983 = vmul.f32 %v6980, %v6982
  %v6984 = vadd.f32 %v6980, %v6983
  %vm6985 = vweird.f32 %v6979
  %vm6986 = vweird.f32 %v6980
  %vm6987 = vmor %vm6985, %vm6986
  %v6988 = vsel %vm6987, %v6980, %v6984
  %v6989 = vand.u32 2147483647, %v6979
  %vm6990 = vcmp.eq.f32.partialorder %v6989, 8.507059e+37
  %v6991 = vand.u32 %v6979, 2147483648
  %v6992 = vor.u32 1.1754944e-38, %v6991
  %v6993 = vsel %vm6990, %v6992, %v6988
  %v6994 = vmul.f32 1.0, %v6993
  %v6995 = vtanh.pop %v6954
  %v6996 = vxor.u32 %v6955, 2147483648
  %v6997 = vmul.f32 %v6996, 1.442695
  %v6998 = vpow.pop %v6997
  %v6999 = vadd.f32 %v6998, 1.0
  %v7000 = vrcp.pop %v6999
  %v7001 = vmul.f32 %v6999, %v7000
  %v7002 = vsub.f32 1.0, %v7001
  %v7003 = vmul.f32 %v7000, %v7002
  %v7004 = vadd.f32 %v7000, %v7003
  %vm7005 = vweird.f32 %v6999
  %vm7006 = vweird.f32 %v7000
  %vm7007 = vmor %vm7005, %vm7006
  %v7008 = vsel %vm7007, %v7000, %v7004
  %v7009 = vand.u32 2147483647, %v6999
  %vm7010 = vcmp.eq.f32.partialorder %v7009, 8.507059e+37
  %v7011 = vand.u32 %v6999, 2147483648
  %v7012 = vor.u32 1.1754944e-38, %v7011
  %v7013 = vsel %vm7010, %v7012, %v7008
  %v7014 = vmul.f32 1.0, %v7013
  %v7015 = vmul.f32 %v6994, %v6956
  %v7016 = vmul.f32 %v6975, %v6995
  %v7017 = vadd.f32 %v7015, %v7016
  %v7018 = vtanh.pop %v7017
  %v7019 = vmul.f32 %v7014, %v7018
  %7020 = vst [vmem:[#allocation11] sm:$0xff] %v7019
  %7021 = vst [vmem:[#allocation12] sm:$0xff] %v7017
  %v7022 = vld [vmem:[#allocation4 + $0x40] sm:$0xff]
  %v7023 = vld [vmem:[#allocation4 + $0x48] sm:$0xff]
  %v7024 = vld [vmem:[#allocation4 + $0x50] sm:$0xff]
  %v7025 = vld [vmem:[#allocation4 + $0x58] sm:$0xff]
  %v7026 = vld [vmem:[#allocation11] sm:$0xff]
  %v7027 = vpack.c.bf16 %v7026, %v7026
  %v7028 = vld [vmem:[%s9] sm:$0xff]
  %v7029 = vld [vmem:[%s9 + $0x8] sm:$0xff]
  %v7030 = vld [vmem:[%s9 + $0x10] sm:$0xff]
  %v7031 = vld [vmem:[%s9 + $0x18] sm:$0xff]
  %v7032 = vld [vmem:[%s9 + $0x20] sm:$0xff]
  %v7033 = vld [vmem:[%s9 + $0x28] sm:$0xff]
  %v7034 = vld [vmem:[%s9 + $0x30] sm:$0xff]
  %v7035 = vld [vmem:[%s9 + $0x38] sm:$0xff]
  %v7036 = vld [vmem:[%s9 + $0x40] sm:$0xff]
  %v7037 = vld [vmem:[%s9 + $0x48] sm:$0xff]
  %v7038 = vld [vmem:[%s9 + $0x50] sm:$0xff]
  %v7039 = vld [vmem:[%s9 + $0x58] sm:$0xff]
  %v7040 = vld [vmem:[%s9 + $0x60] sm:$0xff]
  %v7041 = vld [vmem:[%s9 + $0x68] sm:$0xff]
  %v7042 = vld [vmem:[%s9 + $0x70] sm:$0xff]
  %v7043 = vld [vmem:[%s9 + $0x78] sm:$0xff]
  %v7044 = vld [vmem:[%s9 + $0x80] sm:$0xff]
  %v7045 = vld [vmem:[%s9 + $0x88] sm:$0xff]
  %v7046 = vld [vmem:[%s9 + $0x90] sm:$0xff]
  %v7047 = vld [vmem:[%s9 + $0x98] sm:$0xff]
  %v7048 = vld [vmem:[%s9 + $0xa0] sm:$0xff]
  %v7049 = vld [vmem:[%s9 + $0xa8] sm:$0xff]
  %v7050 = vld [vmem:[%s9 + $0xb0] sm:$0xff]
  %v7051 = vld [vmem:[%s9 + $0xb8] sm:$0xff]
  %v7052 = vld [vmem:[%s9 + $0xc0] sm:$0xff]
  %v7053 = vld [vmem:[%s9 + $0xc8] sm:$0xff]
  %v7054 = vld [vmem:[%s9 + $0xd0] sm:$0xff]
  %v7055 = vld [vmem:[%s9 + $0xd8] sm:$0xff]
  %v7056 = vld [vmem:[%s9 + $0xe0] sm:$0xff]
  %v7057 = vld [vmem:[%s9 + $0xe8] sm:$0xff]
  %v7058 = vld [vmem:[%s9 + $0xf0] sm:$0xff]
  %v7059 = vld [vmem:[%s9 + $0xf8] sm:$0xff]
  %v7092 = vunpack.c.l.b16 %v7028
  %v7093 = vunpack.c.h.b16 %v7028
  %v7094 = vunpack.c.l.b16 %v7029
  %v7095 = vunpack.c.h.b16 %v7029
  %v7096 = vunpack.c.l.b16 %v7030
  %v7097 = vunpack.c.h.b16 %v7030
  %v7098 = vunpack.c.l.b16 %v7031
  %v7099 = vunpack.c.h.b16 %v7031
  %v7100 = vunpack.c.l.b16 %v7032
  %v7101 = vunpack.c.h.b16 %v7032
  %v7102 = vunpack.c.l.b16 %v7033
  %v7103 = vunpack.c.h.b16 %v7033
  %v7104 = vunpack.c.l.b16 %v7034
  %v7105 = vunpack.c.h.b16 %v7034
  %v7106 = vunpack.c.l.b16 %v7035
  %v7107 = vunpack.c.h.b16 %v7035
  %v7108 = vunpack.c.l.b16 %v7036
  %v7109 = vunpack.c.h.b16 %v7036
  %v7110 = vunpack.c.l.b16 %v7037
  %v7111 = vunpack.c.h.b16 %v7037
  %v7112 = vunpack.c.l.b16 %v7038
  %v7113 = vunpack.c.h.b16 %v7038
  %v7114 = vunpack.c.l.b16 %v7039
  %v7115 = vunpack.c.h.b16 %v7039
  %v7116 = vunpack.c.l.b16 %v7040
  %v7117 = vunpack.c.h.b16 %v7040
  %v7118 = vunpack.c.l.b16 %v7041
  %v7119 = vunpack.c.h.b16 %v7041
  %v7120 = vunpack.c.l.b16 %v7042
  %v7121 = vunpack.c.h.b16 %v7042
  %v7122 = vunpack.c.l.b16 %v7043
  %v7123 = vunpack.c.h.b16 %v7043
  %v7124 = vunpack.c.l.b16 %v7044
  %v7125 = vunpack.c.h.b16 %v7044
  %v7126 = vunpack.c.l.b16 %v7045
  %v7127 = vunpack.c.h.b16 %v7045
  %v7128 = vunpack.c.l.b16 %v7046
  %v7129 = vunpack.c.h.b16 %v7046
  %v7130 = vunpack.c.l.b16 %v7047
  %v7131 = vunpack.c.h.b16 %v7047
  %v7132 = vunpack.c.l.b16 %v7048
  %v7133 = vunpack.c.h.b16 %v7048
  %v7134 = vunpack.c.l.b16 %v7049
  %v7135 = vunpack.c.h.b16 %v7049
  %v7136 = vunpack.c.l.b16 %v7050
  %v7137 = vunpack.c.h.b16 %v7050
  %v7138 = vunpack.c.l.b16 %v7051
  %v7139 = vunpack.c.h.b16 %v7051
  %v7140 = vunpack.c.l.b16 %v7052
  %v7141 = vunpack.c.h.b16 %v7052
  %v7142 = vunpack.c.l.b16 %v7053
  %v7143 = vunpack.c.h.b16 %v7053
  %v7144 = vunpack.c.l.b16 %v7054
  %v7145 = vunpack.c.h.b16 %v7054
  %v7146 = vunpack.c.l.b16 %v7055
  %v7147 = vunpack.c.h.b16 %v7055
  %v7148 = vunpack.c.l.b16 %v7056
  %v7149 = vunpack.c.h.b16 %v7056
  %v7150 = vunpack.c.l.b16 %v7057
  %v7151 = vunpack.c.h.b16 %v7057
  %v7152 = vunpack.c.l.b16 %v7058
  %v7153 = vunpack.c.h.b16 %v7058
  %v7154 = vunpack.c.l.b16 %v7059
  %v7155 = vunpack.c.h.b16 %v7059
  %v7156 = vpack.c.b16 %v7096, %v7092
  %v7157 = vpack.c.b16 %v7097, %v7093
  %v7158 = vpack.c.b16 %v7098, %v7094
  %v7159 = vpack.c.b16 %v7099, %v7095
  %v7160 = vpack.c.b16 %v7104, %v7100
  %v7161 = vpack.c.b16 %v7105, %v7101
  %v7162 = vpack.c.b16 %v7106, %v7102
  %v7163 = vpack.c.b16 %v7107, %v7103
  %v7164 = vpack.c.b16 %v7112, %v7108
  %v7165 = vpack.c.b16 %v7113, %v7109
  %v7166 = vpack.c.b16 %v7114, %v7110
  %v7167 = vpack.c.b16 %v7115, %v7111
  %v7168 = vpack.c.b16 %v7120, %v7116
  %v7169 = vpack.c.b16 %v7121, %v7117
  %v7170 = vpack.c.b16 %v7122, %v7118
  %v7171 = vpack.c.b16 %v7123, %v7119
  %v7172 = vpack.c.b16 %v7128, %v7124
  %v7173 = vpack.c.b16 %v7129, %v7125
  %v7174 = vpack.c.b16 %v7130, %v7126
  %v7175 = vpack.c.b16 %v7131, %v7127
  %v7176 = vpack.c.b16 %v7136, %v7132
  %v7177 = vpack.c.b16 %v7137, %v7133
  %v7178 = vpack.c.b16 %v7138, %v7134
  %v7179 = vpack.c.b16 %v7139, %v7135
  %v7180 = vpack.c.b16 %v7144, %v7140
  %v7181 = vpack.c.b16 %v7145, %v7141
  %v7182 = vpack.c.b16 %v7146, %v7142
  %v7183 = vpack.c.b16 %v7147, %v7143
  %v7184 = vpack.c.b16 %v7152, %v7148
  %v7185 = vpack.c.b16 %v7153, %v7149
  %v7186 = vpack.c.b16 %v7154, %v7150
  %v7187 = vpack.c.b16 %v7155, %v7151
  %7220 = vmatpush.bf16.msra.mxu0 %v7184
  %7221 = vmatpush.bf16.msra.mxu0 %v7180
  %7222 = vmatpush.bf16.msra.mxu0 %v7176
  %7223 = vmatpush.bf16.msra.mxu0 %v7172
  %7224 = vmatpush.bf16.msra.mxu0 %v7168
  %7225 = vmatpush.bf16.msra.mxu0 %v7164
  %7226 = vmatpush.bf16.msra.mxu0 %v7160
  %7227 = vmatpush.bf16.msra.mxu0 %v7156
  %7228 = vmatmul.bf16.gmra.mxu0 %v7027
  %v7229 = vpop.f32.mrf.mxu0
  %v7230 = vadd.f32 0.0, %v7229
  %v7231 = vpop.f32.mrf.mxu0
  %7232 = vdwg.mxu0
  %7233 = vmatpush.bf16.msra.mxu0 %v7185
  %7234 = vmatpush.bf16.msra.mxu0 %v7181
  %7235 = vmatpush.bf16.msra.mxu0 %v7177
  %7236 = vmatpush.bf16.msra.mxu0 %v7173
  %7237 = vmatpush.bf16.msra.mxu0 %v7169
  %7238 = vmatpush.bf16.msra.mxu0 %v7165
  %7239 = vmatpush.bf16.msra.mxu0 %v7161
  %7240 = vmatpush.bf16.msra.mxu0 %v7157
  %7241 = vmatmul.bf16.gmra.mxu0 %v7027
  %v7242 = vpop.f32.mrf.mxu0
  %v7243 = vadd.f32 0.0, %v7242
  %v7244 = vpop.f32.mrf.mxu0
  %7245 = vdwg.mxu0
  %7246 = vmatpush.bf16.msra.mxu0 %v7186
  %7247 = vmatpush.bf16.msra.mxu0 %v7182
  %7248 = vmatpush.bf16.msra.mxu0 %v7178
  %7249 = vmatpush.bf16.msra.mxu0 %v7174
  %7250 = vmatpush.bf16.msra.mxu0 %v7170
  %7251 = vmatpush.bf16.msra.mxu0 %v7166
  %7252 = vmatpush.bf16.msra.mxu0 %v7162
  %7253 = vmatpush.bf16.msra.mxu0 %v7158
  %7254 = vmatmul.bf16.gmra.mxu0 %v7027
  %v7255 = vpop.f32.mrf.mxu0
  %v7256 = vadd.f32 0.0, %v7255
  %v7257 = vpop.f32.mrf.mxu0
  %7258 = vdwg.mxu0
  %7259 = vmatpush.bf16.msra.mxu0 %v7187
  %7260 = vmatpush.bf16.msra.mxu0 %v7183
  %7261 = vmatpush.bf16.msra.mxu0 %v7179
  %7262 = vmatpush.bf16.msra.mxu0 %v7175
  %7263 = vmatpush.bf16.msra.mxu0 %v7171
  %7264 = vmatpush.bf16.msra.mxu0 %v7167
  %7265 = vmatpush.bf16.msra.mxu0 %v7163
  %7266 = vmatpush.bf16.msra.mxu0 %v7159
  %7267 = vmatmul.bf16.gmra.mxu0 %v7027
  %v7268 = vpop.f32.mrf.mxu0
  %v7269 = vadd.f32 0.0, %v7268
  %v7270 = vpop.f32.mrf.mxu0
  %7271 = vdwg.mxu0
  %v7272 = vadd.f32 %v7022, %v7230
  %v7273 = vadd.f32 %v7023, %v7243
  %v7274 = vadd.f32 %v7024, %v7256
  %v7275 = vadd.f32 %v7025, %v7269
  %v7276 = vld [vmem:[#allocation12] sm:$0xff]
  %v7277 = vxor.u32 %v7272, 2147483648
  %v7278 = vmul.f32 %v7277, 1.442695
  %v7279 = vpow.pop %v7278
  %v7280 = vadd.f32 %v7279, 1.0
  %v7281 = vrcp.pop %v7280
  %v7282 = vmul.f32 %v7280, %v7281
  %v7283 = vsub.f32 1.0, %v7282
  %v7284 = vmul.f32 %v7281, %v7283
  %v7285 = vadd.f32 %v7281, %v7284
  %vm7286 = vweird.f32 %v7280
  %vm7287 = vweird.f32 %v7281
  %vm7288 = vmor %vm7286, %vm7287
  %v7289 = vsel %vm7288, %v7281, %v7285
  %v7290 = vand.u32 2147483647, %v7280
  %vm7291 = vcmp.eq.f32.partialorder %v7290, 8.507059e+37
  %v7292 = vand.u32 %v7280, 2147483648
  %v7293 = vor.u32 1.1754944e-38, %v7292
  %v7294 = vsel %vm7291, %v7293, %v7289
  %v7295 = vmul.f32 1.0, %v7294
  %v7296 = vxor.u32 %v7273, 2147483648
  %v7297 = vmul.f32 %v7296, 1.442695
  %v7298 = vpow.pop %v7297
  %v7299 = vadd.f32 %v7298, 1.0
  %v7300 = vrcp.pop %v7299
  %v7301 = vmul.f32 %v7299, %v7300
  %v7302 = vsub.f32 1.0, %v7301
  %v7303 = vmul.f32 %v7300, %v7302
  %v7304 = vadd.f32 %v7300, %v7303
  %vm7305 = vweird.f32 %v7299
  %vm7306 = vweird.f32 %v7300
  %vm7307 = vmor %vm7305, %vm7306
  %v7308 = vsel %vm7307, %v7300, %v7304
  %v7309 = vand.u32 2147483647, %v7299
  %vm7310 = vcmp.eq.f32.partialorder %v7309, 8.507059e+37
  %v7311 = vand.u32 %v7299, 2147483648
  %v7312 = vor.u32 1.1754944e-38, %v7311
  %v7313 = vsel %vm7310, %v7312, %v7308
  %v7314 = vmul.f32 1.0, %v7313
  %v7315 = vtanh.pop %v7274
  %v7316 = vxor.u32 %v7275, 2147483648
  %v7317 = vmul.f32 %v7316, 1.442695
  %v7318 = vpow.pop %v7317
  %v7319 = vadd.f32 %v7318, 1.0
  %v7320 = vrcp.pop %v7319
  %v7321 = vmul.f32 %v7319, %v7320
  %v7322 = vsub.f32 1.0, %v7321
  %v7323 = vmul.f32 %v7320, %v7322
  %v7324 = vadd.f32 %v7320, %v7323
  %vm7325 = vweird.f32 %v7319
  %vm7326 = vweird.f32 %v7320
  %vm7327 = vmor %vm7325, %vm7326
  %v7328 = vsel %vm7327, %v7320, %v7324
  %v7329 = vand.u32 2147483647, %v7319
  %vm7330 = vcmp.eq.f32.partialorder %v7329, 8.507059e+37
  %v7331 = vand.u32 %v7319, 2147483648
  %v7332 = vor.u32 1.1754944e-38, %v7331
  %v7333 = vsel %vm7330, %v7332, %v7328
  %v7334 = vmul.f32 1.0, %v7333
  %v7335 = vmul.f32 %v7314, %v7276
  %v7336 = vmul.f32 %v7295, %v7315
  %v7337 = vadd.f32 %v7335, %v7336
  %v7338 = vtanh.pop %v7337
  %v7339 = vmul.f32 %v7334, %v7338
  %7340 = vst [vmem:[#allocation11] sm:$0xff] %v7339
  %7341 = vst [vmem:[#allocation12] sm:$0xff] %v7337
  %v7342 = vld [vmem:[#allocation4 + $0x60] sm:$0xff]
  %v7343 = vld [vmem:[#allocation4 + $0x68] sm:$0xff]
  %v7344 = vld [vmem:[#allocation4 + $0x70] sm:$0xff]
  %v7345 = vld [vmem:[#allocation4 + $0x78] sm:$0xff]
  %v7346 = vld [vmem:[#allocation11] sm:$0xff]
  %v7347 = vpack.c.bf16 %v7346, %v7346
  %v7348 = vld [vmem:[%s9] sm:$0xff]
  %v7349 = vld [vmem:[%s9 + $0x8] sm:$0xff]
  %v7350 = vld [vmem:[%s9 + $0x10] sm:$0xff]
  %v7351 = vld [vmem:[%s9 + $0x18] sm:$0xff]
  %v7352 = vld [vmem:[%s9 + $0x20] sm:$0xff]
  %v7353 = vld [vmem:[%s9 + $0x28] sm:$0xff]
  %v7354 = vld [vmem:[%s9 + $0x30] sm:$0xff]
  %v7355 = vld [vmem:[%s9 + $0x38] sm:$0xff]
  %v7356 = vld [vmem:[%s9 + $0x40] sm:$0xff]
  %v7357 = vld [vmem:[%s9 + $0x48] sm:$0xff]
  %v7358 = vld [vmem:[%s9 + $0x50] sm:$0xff]
  %v7359 = vld [vmem:[%s9 + $0x58] sm:$0xff]
  %v7360 = vld [vmem:[%s9 + $0x60] sm:$0xff]
  %v7361 = vld [vmem:[%s9 + $0x68] sm:$0xff]
  %v7362 = vld [vmem:[%s9 + $0x70] sm:$0xff]
  %v7363 = vld [vmem:[%s9 + $0x78] sm:$0xff]
  %v7364 = vld [vmem:[%s9 + $0x80] sm:$0xff]
  %v7365 = vld [vmem:[%s9 + $0x88] sm:$0xff]
  %v7366 = vld [vmem:[%s9 + $0x90] sm:$0xff]
  %v7367 = vld [vmem:[%s9 + $0x98] sm:$0xff]
  %v7368 = vld [vmem:[%s9 + $0xa0] sm:$0xff]
  %v7369 = vld [vmem:[%s9 + $0xa8] sm:$0xff]
  %v7370 = vld [vmem:[%s9 + $0xb0] sm:$0xff]
  %v7371 = vld [vmem:[%s9 + $0xb8] sm:$0xff]
  %v7372 = vld [vmem:[%s9 + $0xc0] sm:$0xff]
  %v7373 = vld [vmem:[%s9 + $0xc8] sm:$0xff]
  %v7374 = vld [vmem:[%s9 + $0xd0] sm:$0xff]
  %v7375 = vld [vmem:[%s9 + $0xd8] sm:$0xff]
  %v7376 = vld [vmem:[%s9 + $0xe0] sm:$0xff]
  %v7377 = vld [vmem:[%s9 + $0xe8] sm:$0xff]
  %v7378 = vld [vmem:[%s9 + $0xf0] sm:$0xff]
  %v7379 = vld [vmem:[%s9 + $0xf8] sm:$0xff]
  %v7412 = vunpack.c.l.b16 %v7348
  %v7413 = vunpack.c.h.b16 %v7348
  %v7414 = vunpack.c.l.b16 %v7349
  %v7415 = vunpack.c.h.b16 %v7349
  %v7416 = vunpack.c.l.b16 %v7350
  %v7417 = vunpack.c.h.b16 %v7350
  %v7418 = vunpack.c.l.b16 %v7351
  %v7419 = vunpack.c.h.b16 %v7351
  %v7420 = vunpack.c.l.b16 %v7352
  %v7421 = vunpack.c.h.b16 %v7352
  %v7422 = vunpack.c.l.b16 %v7353
  %v7423 = vunpack.c.h.b16 %v7353
  %v7424 = vunpack.c.l.b16 %v7354
  %v7425 = vunpack.c.h.b16 %v7354
  %v7426 = vunpack.c.l.b16 %v7355
  %v7427 = vunpack.c.h.b16 %v7355
  %v7428 = vunpack.c.l.b16 %v7356
  %v7429 = vunpack.c.h.b16 %v7356
  %v7430 = vunpack.c.l.b16 %v7357
  %v7431 = vunpack.c.h.b16 %v7357
  %v7432 = vunpack.c.l.b16 %v7358
  %v7433 = vunpack.c.h.b16 %v7358
  %v7434 = vunpack.c.l.b16 %v7359
  %v7435 = vunpack.c.h.b16 %v7359
  %v7436 = vunpack.c.l.b16 %v7360
  %v7437 = vunpack.c.h.b16 %v7360
  %v7438 = vunpack.c.l.b16 %v7361
  %v7439 = vunpack.c.h.b16 %v7361
  %v7440 = vunpack.c.l.b16 %v7362
  %v7441 = vunpack.c.h.b16 %v7362
  %v7442 = vunpack.c.l.b16 %v7363
  %v7443 = vunpack.c.h.b16 %v7363
  %v7444 = vunpack.c.l.b16 %v7364
  %v7445 = vunpack.c.h.b16 %v7364
  %v7446 = vunpack.c.l.b16 %v7365
  %v7447 = vunpack.c.h.b16 %v7365
  %v7448 = vunpack.c.l.b16 %v7366
  %v7449 = vunpack.c.h.b16 %v7366
  %v7450 = vunpack.c.l.b16 %v7367
  %v7451 = vunpack.c.h.b16 %v7367
  %v7452 = vunpack.c.l.b16 %v7368
  %v7453 = vunpack.c.h.b16 %v7368
  %v7454 = vunpack.c.l.b16 %v7369
  %v7455 = vunpack.c.h.b16 %v7369
  %v7456 = vunpack.c.l.b16 %v7370
  %v7457 = vunpack.c.h.b16 %v7370
  %v7458 = vunpack.c.l.b16 %v7371
  %v7459 = vunpack.c.h.b16 %v7371
  %v7460 = vunpack.c.l.b16 %v7372
  %v7461 = vunpack.c.h.b16 %v7372
  %v7462 = vunpack.c.l.b16 %v7373
  %v7463 = vunpack.c.h.b16 %v7373
  %v7464 = vunpack.c.l.b16 %v7374
  %v7465 = vunpack.c.h.b16 %v7374
  %v7466 = vunpack.c.l.b16 %v7375
  %v7467 = vunpack.c.h.b16 %v7375
  %v7468 = vunpack.c.l.b16 %v7376
  %v7469 = vunpack.c.h.b16 %v7376
  %v7470 = vunpack.c.l.b16 %v7377
  %v7471 = vunpack.c.h.b16 %v7377
  %v7472 = vunpack.c.l.b16 %v7378
  %v7473 = vunpack.c.h.b16 %v7378
  %v7474 = vunpack.c.l.b16 %v7379
  %v7475 = vunpack.c.h.b16 %v7379
  %v7476 = vpack.c.b16 %v7416, %v7412
  %v7477 = vpack.c.b16 %v7417, %v7413
  %v7478 = vpack.c.b16 %v7418, %v7414
  %v7479 = vpack.c.b16 %v7419, %v7415
  %v7480 = vpack.c.b16 %v7424, %v7420
  %v7481 = vpack.c.b16 %v7425, %v7421
  %v7482 = vpack.c.b16 %v7426, %v7422
  %v7483 = vpack.c.b16 %v7427, %v7423
  %v7484 = vpack.c.b16 %v7432, %v7428
  %v7485 = vpack.c.b16 %v7433, %v7429
  %v7486 = vpack.c.b16 %v7434, %v7430
  %v7487 = vpack.c.b16 %v7435, %v7431
  %v7488 = vpack.c.b16 %v7440, %v7436
  %v7489 = vpack.c.b16 %v7441, %v7437
  %v7490 = vpack.c.b16 %v7442, %v7438
  %v7491 = vpack.c.b16 %v7443, %v7439
  %v7492 = vpack.c.b16 %v7448, %v7444
  %v7493 = vpack.c.b16 %v7449, %v7445
  %v7494 = vpack.c.b16 %v7450, %v7446
  %v7495 = vpack.c.b16 %v7451, %v7447
  %v7496 = vpack.c.b16 %v7456, %v7452
  %v7497 = vpack.c.b16 %v7457, %v7453
  %v7498 = vpack.c.b16 %v7458, %v7454
  %v7499 = vpack.c.b16 %v7459, %v7455
  %v7500 = vpack.c.b16 %v7464, %v7460
  %v7501 = vpack.c.b16 %v7465, %v7461
  %v7502 = vpack.c.b16 %v7466, %v7462
  %v7503 = vpack.c.b16 %v7467, %v7463
  %v7504 = vpack.c.b16 %v7472, %v7468
  %v7505 = vpack.c.b16 %v7473, %v7469
  %v7506 = vpack.c.b16 %v7474, %v7470
  %v7507 = vpack.c.b16 %v7475, %v7471
  %7540 = vmatpush.bf16.msra.mxu0 %v7504
  %7541 = vmatpush.bf16.msra.mxu0 %v7500
  %7542 = vmatpush.bf16.msra.mxu0 %v7496
  %7543 = vmatpush.bf16.msra.mxu0 %v7492
  %7544 = vmatpush.bf16.msra.mxu0 %v7488
  %7545 = vmatpush.bf16.msra.mxu0 %v7484
  %7546 = vmatpush.bf16.msra.mxu0 %v7480
  %7547 = vmatpush.bf16.msra.mxu0 %v7476
  %7548 = vmatmul.bf16.gmra.mxu0 %v7347
  %v7549 = vpop.f32.mrf.mxu0
  %v7550 = vadd.f32 0.0, %v7549
  %v7551 = vpop.f32.mrf.mxu0
  %7552 = vdwg.mxu0
  %7553 = vmatpush.bf16.msra.mxu0 %v7505
  %7554 = vmatpush.bf16.msra.mxu0 %v7501
  %7555 = vmatpush.bf16.msra.mxu0 %v7497
  %7556 = vmatpush.bf16.msra.mxu0 %v7493
  %7557 = vmatpush.bf16.msra.mxu0 %v7489
  %7558 = vmatpush.bf16.msra.mxu0 %v7485
  %7559 = vmatpush.bf16.msra.mxu0 %v7481
  %7560 = vmatpush.bf16.msra.mxu0 %v7477
  %7561 = vmatmul.bf16.gmra.mxu0 %v7347
  %v7562 = vpop.f32.mrf.mxu0
  %v7563 = vadd.f32 0.0, %v7562
  %v7564 = vpop.f32.mrf.mxu0
  %7565 = vdwg.mxu0
  %7566 = vmatpush.bf16.msra.mxu0 %v7506
  %7567 = vmatpush.bf16.msra.mxu0 %v7502
  %7568 = vmatpush.bf16.msra.mxu0 %v7498
  %7569 = vmatpush.bf16.msra.mxu0 %v7494
  %7570 = vmatpush.bf16.msra.mxu0 %v7490
  %7571 = vmatpush.bf16.msra.mxu0 %v7486
  %7572 = vmatpush.bf16.msra.mxu0 %v7482
  %7573 = vmatpush.bf16.msra.mxu0 %v7478
  %7574 = vmatmul.bf16.gmra.mxu0 %v7347
  %v7575 = vpop.f32.mrf.mxu0
  %v7576 = vadd.f32 0.0, %v7575
  %v7577 = vpop.f32.mrf.mxu0
  %7578 = vdwg.mxu0
  %7579 = vmatpush.bf16.msra.mxu0 %v7507
  %7580 = vmatpush.bf16.msra.mxu0 %v7503
  %7581 = vmatpush.bf16.msra.mxu0 %v7499
  %7582 = vmatpush.bf16.msra.mxu0 %v7495
  %7583 = vmatpush.bf16.msra.mxu0 %v7491
  %7584 = vmatpush.bf16.msra.mxu0 %v7487
  %7585 = vmatpush.bf16.msra.mxu0 %v7483
  %7586 = vmatpush.bf16.msra.mxu0 %v7479
  %7587 = vmatmul.bf16.gmra.mxu0 %v7347
  %v7588 = vpop.f32.mrf.mxu0
  %v7589 = vadd.f32 0.0, %v7588
  %v7590 = vpop.f32.mrf.mxu0
  %7591 = vdwg.mxu0
  %v7592 = vadd.f32 %v7342, %v7550
  %v7593 = vadd.f32 %v7343, %v7563
  %v7594 = vadd.f32 %v7344, %v7576
  %v7595 = vadd.f32 %v7345, %v7589
  %v7596 = vld [vmem:[#allocation12] sm:$0xff]
  %v7597 = vxor.u32 %v7592, 2147483648
  %v7598 = vmul.f32 %v7597, 1.442695
  %v7599 = vpow.pop %v7598
  %v7600 = vadd.f32 %v7599, 1.0
  %v7601 = vrcp.pop %v7600
  %v7602 = vmul.f32 %v7600, %v7601
  %v7603 = vsub.f32 1.0, %v7602
  %v7604 = vmul.f32 %v7601, %v7603
  %v7605 = vadd.f32 %v7601, %v7604
  %vm7606 = vweird.f32 %v7600
  %vm7607 = vweird.f32 %v7601
  %vm7608 = vmor %vm7606, %vm7607
  %v7609 = vsel %vm7608, %v7601, %v7605
  %v7610 = vand.u32 2147483647, %v7600
  %vm7611 = vcmp.eq.f32.partialorder %v7610, 8.507059e+37
  %v7612 = vand.u32 %v7600, 2147483648
  %v7613 = vor.u32 1.1754944e-38, %v7612
  %v7614 = vsel %vm7611, %v7613, %v7609
  %v7615 = vmul.f32 1.0, %v7614
  %v7616 = vxor.u32 %v7593, 2147483648
  %v7617 = vmul.f32 %v7616, 1.442695
  %v7618 = vpow.pop %v7617
  %v7619 = vadd.f32 %v7618, 1.0
  %v7620 = vrcp.pop %v7619
  %v7621 = vmul.f32 %v7619, %v7620
  %v7622 = vsub.f32 1.0, %v7621
  %v7623 = vmul.f32 %v7620, %v7622
  %v7624 = vadd.f32 %v7620, %v7623
  %vm7625 = vweird.f32 %v7619
  %vm7626 = vweird.f32 %v7620
  %vm7627 = vmor %vm7625, %vm7626
  %v7628 = vsel %vm7627, %v7620, %v7624
  %v7629 = vand.u32 2147483647, %v7619
  %vm7630 = vcmp.eq.f32.partialorder %v7629, 8.507059e+37
  %v7631 = vand.u32 %v7619, 2147483648
  %v7632 = vor.u32 1.1754944e-38, %v7631
  %v7633 = vsel %vm7630, %v7632, %v7628
  %v7634 = vmul.f32 1.0, %v7633
  %v7635 = vtanh.pop %v7594
  %v7636 = vxor.u32 %v7595, 2147483648
  %v7637 = vmul.f32 %v7636, 1.442695
  %v7638 = vpow.pop %v7637
  %v7639 = vadd.f32 %v7638, 1.0
  %v7640 = vrcp.pop %v7639
  %v7641 = vmul.f32 %v7639, %v7640
  %v7642 = vsub.f32 1.0, %v7641
  %v7643 = vmul.f32 %v7640, %v7642
  %v7644 = vadd.f32 %v7640, %v7643
  %vm7645 = vweird.f32 %v7639
  %vm7646 = vweird.f32 %v7640
  %vm7647 = vmor %vm7645, %vm7646
  %v7648 = vsel %vm7647, %v7640, %v7644
  %v7649 = vand.u32 2147483647, %v7639
  %vm7650 = vcmp.eq.f32.partialorder %v7649, 8.507059e+37
  %v7651 = vand.u32 %v7639, 2147483648
  %v7652 = vor.u32 1.1754944e-38, %v7651
  %v7653 = vsel %vm7650, %v7652, %v7648
  %v7654 = vmul.f32 1.0, %v7653
  %v7655 = vmul.f32 %v7634, %v7596
  %v7656 = vmul.f32 %v7615, %v7635
  %v7657 = vadd.f32 %v7655, %v7656
  %v7658 = vtanh.pop %v7657
  %v7659 = vmul.f32 %v7654, %v7658
  %7660 = vst [vmem:[#allocation11] sm:$0xff] %v7659
  %7661 = vst [vmem:[#allocation12] sm:$0xff] %v7657
  %v7662 = vld [vmem:[#allocation4 + $0x80] sm:$0xff]
  %v7663 = vld [vmem:[#allocation4 + $0x88] sm:$0xff]
  %v7664 = vld [vmem:[#allocation4 + $0x90] sm:$0xff]
  %v7665 = vld [vmem:[#allocation4 + $0x98] sm:$0xff]
  %v7666 = vld [vmem:[#allocation11] sm:$0xff]
  %v7667 = vpack.c.bf16 %v7666, %v7666
  %v7668 = vld [vmem:[%s9] sm:$0xff]
  %v7669 = vld [vmem:[%s9 + $0x8] sm:$0xff]
  %v7670 = vld [vmem:[%s9 + $0x10] sm:$0xff]
  %v7671 = vld [vmem:[%s9 + $0x18] sm:$0xff]
  %v7672 = vld [vmem:[%s9 + $0x20] sm:$0xff]
  %v7673 = vld [vmem:[%s9 + $0x28] sm:$0xff]
  %v7674 = vld [vmem:[%s9 + $0x30] sm:$0xff]
  %v7675 = vld [vmem:[%s9 + $0x38] sm:$0xff]
  %v7676 = vld [vmem:[%s9 + $0x40] sm:$0xff]
  %v7677 = vld [vmem:[%s9 + $0x48] sm:$0xff]
  %v7678 = vld [vmem:[%s9 + $0x50] sm:$0xff]
  %v7679 = vld [vmem:[%s9 + $0x58] sm:$0xff]
  %v7680 = vld [vmem:[%s9 + $0x60] sm:$0xff]
  %v7681 = vld [vmem:[%s9 + $0x68] sm:$0xff]
  %v7682 = vld [vmem:[%s9 + $0x70] sm:$0xff]
  %v7683 = vld [vmem:[%s9 + $0x78] sm:$0xff]
  %v7684 = vld [vmem:[%s9 + $0x80] sm:$0xff]
  %v7685 = vld [vmem:[%s9 + $0x88] sm:$0xff]
  %v7686 = vld [vmem:[%s9 + $0x90] sm:$0xff]
  %v7687 = vld [vmem:[%s9 + $0x98] sm:$0xff]
  %v7688 = vld [vmem:[%s9 + $0xa0] sm:$0xff]
  %v7689 = vld [vmem:[%s9 + $0xa8] sm:$0xff]
  %v7690 = vld [vmem:[%s9 + $0xb0] sm:$0xff]
  %v7691 = vld [vmem:[%s9 + $0xb8] sm:$0xff]
  %v7692 = vld [vmem:[%s9 + $0xc0] sm:$0xff]
  %v7693 = vld [vmem:[%s9 + $0xc8] sm:$0xff]
  %v7694 = vld [vmem:[%s9 + $0xd0] sm:$0xff]
  %v7695 = vld [vmem:[%s9 + $0xd8] sm:$0xff]
  %v7696 = vld [vmem:[%s9 + $0xe0] sm:$0xff]
  %v7697 = vld [vmem:[%s9 + $0xe8] sm:$0xff]
  %v7698 = vld [vmem:[%s9 + $0xf0] sm:$0xff]
  %v7699 = vld [vmem:[%s9 + $0xf8] sm:$0xff]
  %v7732 = vunpack.c.l.b16 %v7668
  %v7733 = vunpack.c.h.b16 %v7668
  %v7734 = vunpack.c.l.b16 %v7669
  %v7735 = vunpack.c.h.b16 %v7669
  %v7736 = vunpack.c.l.b16 %v7670
  %v7737 = vunpack.c.h.b16 %v7670
  %v7738 = vunpack.c.l.b16 %v7671
  %v7739 = vunpack.c.h.b16 %v7671
  %v7740 = vunpack.c.l.b16 %v7672
  %v7741 = vunpack.c.h.b16 %v7672
  %v7742 = vunpack.c.l.b16 %v7673
  %v7743 = vunpack.c.h.b16 %v7673
  %v7744 = vunpack.c.l.b16 %v7674
  %v7745 = vunpack.c.h.b16 %v7674
  %v7746 = vunpack.c.l.b16 %v7675
  %v7747 = vunpack.c.h.b16 %v7675
  %v7748 = vunpack.c.l.b16 %v7676
  %v7749 = vunpack.c.h.b16 %v7676
  %v7750 = vunpack.c.l.b16 %v7677
  %v7751 = vunpack.c.h.b16 %v7677
  %v7752 = vunpack.c.l.b16 %v7678
  %v7753 = vunpack.c.h.b16 %v7678
  %v7754 = vunpack.c.l.b16 %v7679
  %v7755 = vunpack.c.h.b16 %v7679
  %v7756 = vunpack.c.l.b16 %v7680
  %v7757 = vunpack.c.h.b16 %v7680
  %v7758 = vunpack.c.l.b16 %v7681
  %v7759 = vunpack.c.h.b16 %v7681
  %v7760 = vunpack.c.l.b16 %v7682
  %v7761 = vunpack.c.h.b16 %v7682
  %v7762 = vunpack.c.l.b16 %v7683
  %v7763 = vunpack.c.h.b16 %v7683
  %v7764 = vunpack.c.l.b16 %v7684
  %v7765 = vunpack.c.h.b16 %v7684
  %v7766 = vunpack.c.l.b16 %v7685
  %v7767 = vunpack.c.h.b16 %v7685
  %v7768 = vunpack.c.l.b16 %v7686
  %v7769 = vunpack.c.h.b16 %v7686
  %v7770 = vunpack.c.l.b16 %v7687
  %v7771 = vunpack.c.h.b16 %v7687
  %v7772 = vunpack.c.l.b16 %v7688
  %v7773 = vunpack.c.h.b16 %v7688
  %v7774 = vunpack.c.l.b16 %v7689
  %v7775 = vunpack.c.h.b16 %v7689
  %v7776 = vunpack.c.l.b16 %v7690
  %v7777 = vunpack.c.h.b16 %v7690
  %v7778 = vunpack.c.l.b16 %v7691
  %v7779 = vunpack.c.h.b16 %v7691
  %v7780 = vunpack.c.l.b16 %v7692
  %v7781 = vunpack.c.h.b16 %v7692
  %v7782 = vunpack.c.l.b16 %v7693
  %v7783 = vunpack.c.h.b16 %v7693
  %v7784 = vunpack.c.l.b16 %v7694
  %v7785 = vunpack.c.h.b16 %v7694
  %v7786 = vunpack.c.l.b16 %v7695
  %v7787 = vunpack.c.h.b16 %v7695
  %v7788 = vunpack.c.l.b16 %v7696
  %v7789 = vunpack.c.h.b16 %v7696
  %v7790 = vunpack.c.l.b16 %v7697
  %v7791 = vunpack.c.h.b16 %v7697
  %v7792 = vunpack.c.l.b16 %v7698
  %v7793 = vunpack.c.h.b16 %v7698
  %v7794 = vunpack.c.l.b16 %v7699
  %v7795 = vunpack.c.h.b16 %v7699
  %v7796 = vpack.c.b16 %v7736, %v7732
  %v7797 = vpack.c.b16 %v7737, %v7733
  %v7798 = vpack.c.b16 %v7738, %v7734
  %v7799 = vpack.c.b16 %v7739, %v7735
  %v7800 = vpack.c.b16 %v7744, %v7740
  %v7801 = vpack.c.b16 %v7745, %v7741
  %v7802 = vpack.c.b16 %v7746, %v7742
  %v7803 = vpack.c.b16 %v7747, %v7743
  %v7804 = vpack.c.b16 %v7752, %v7748
  %v7805 = vpack.c.b16 %v7753, %v7749
  %v7806 = vpack.c.b16 %v7754, %v7750
  %v7807 = vpack.c.b16 %v7755, %v7751
  %v7808 = vpack.c.b16 %v7760, %v7756
  %v7809 = vpack.c.b16 %v7761, %v7757
  %v7810 = vpack.c.b16 %v7762, %v7758
  %v7811 = vpack.c.b16 %v7763, %v7759
  %v7812 = vpack.c.b16 %v7768, %v7764
  %v7813 = vpack.c.b16 %v7769, %v7765
  %v7814 = vpack.c.b16 %v7770, %v7766
  %v7815 = vpack.c.b16 %v7771, %v7767
  %v7816 = vpack.c.b16 %v7776, %v7772
  %v7817 = vpack.c.b16 %v7777, %v7773
  %v7818 = vpack.c.b16 %v7778, %v7774
  %v7819 = vpack.c.b16 %v7779, %v7775
  %v7820 = vpack.c.b16 %v7784, %v7780
  %v7821 = vpack.c.b16 %v7785, %v7781
  %v7822 = vpack.c.b16 %v7786, %v7782
  %v7823 = vpack.c.b16 %v7787, %v7783
  %v7824 = vpack.c.b16 %v7792, %v7788
  %v7825 = vpack.c.b16 %v7793, %v7789
  %v7826 = vpack.c.b16 %v7794, %v7790
  %v7827 = vpack.c.b16 %v7795, %v7791
  %7860 = vmatpush.bf16.msra.mxu0 %v7824
  %7861 = vmatpush.bf16.msra.mxu0 %v7820
  %7862 = vmatpush.bf16.msra.mxu0 %v7816
  %7863 = vmatpush.bf16.msra.mxu0 %v7812
  %7864 = vmatpush.bf16.msra.mxu0 %v7808
  %7865 = vmatpush.bf16.msra.mxu0 %v7804
  %7866 = vmatpush.bf16.msra.mxu0 %v7800
  %7867 = vmatpush.bf16.msra.mxu0 %v7796
  %7868 = vmatmul.bf16.gmra.mxu0 %v7667
  %v7869 = vpop.f32.mrf.mxu0
  %v7870 = vadd.f32 0.0, %v7869
  %v7871 = vpop.f32.mrf.mxu0
  %7872 = vdwg.mxu0
  %7873 = vmatpush.bf16.msra.mxu0 %v7825
  %7874 = vmatpush.bf16.msra.mxu0 %v7821
  %7875 = vmatpush.bf16.msra.mxu0 %v7817
  %7876 = vmatpush.bf16.msra.mxu0 %v7813
  %7877 = vmatpush.bf16.msra.mxu0 %v7809
  %7878 = vmatpush.bf16.msra.mxu0 %v7805
  %7879 = vmatpush.bf16.msra.mxu0 %v7801
  %7880 = vmatpush.bf16.msra.mxu0 %v7797
  %7881 = vmatmul.bf16.gmra.mxu0 %v7667
  %v7882 = vpop.f32.mrf.mxu0
  %v7883 = vadd.f32 0.0, %v7882
  %v7884 = vpop.f32.mrf.mxu0
  %7885 = vdwg.mxu0
  %7886 = vmatpush.bf16.msra.mxu0 %v7826
  %7887 = vmatpush.bf16.msra.mxu0 %v7822
  %7888 = vmatpush.bf16.msra.mxu0 %v7818
  %7889 = vmatpush.bf16.msra.mxu0 %v7814
  %7890 = vmatpush.bf16.msra.mxu0 %v7810
  %7891 = vmatpush.bf16.msra.mxu0 %v7806
  %7892 = vmatpush.bf16.msra.mxu0 %v7802
  %7893 = vmatpush.bf16.msra.mxu0 %v7798
  %7894 = vmatmul.bf16.gmra.mxu0 %v7667
  %v7895 = vpop.f32.mrf.mxu0
  %v7896 = vadd.f32 0.0, %v7895
  %v7897 = vpop.f32.mrf.mxu0
  %7898 = vdwg.mxu0
  %7899 = vmatpush.bf16.msra.mxu0 %v7827
  %7900 = vmatpush.bf16.msra.mxu0 %v7823
  %7901 = vmatpush.bf16.msra.mxu0 %v7819
  %7902 = vmatpush.bf16.msra.mxu0 %v7815
  %7903 = vmatpush.bf16.msra.mxu0 %v7811
  %7904 = vmatpush.bf16.msra.mxu0 %v7807
  %7905 = vmatpush.bf16.msra.mxu0 %v7803
  %7906 = vmatpush.bf16.msra.mxu0 %v7799
  %7907 = vmatmul.bf16.gmra.mxu0 %v7667
  %v7908 = vpop.f32.mrf.mxu0
  %v7909 = vadd.f32 0.0, %v7908
  %v7910 = vpop.f32.mrf.mxu0
  %7911 = vdwg.mxu0
  %v7912 = vadd.f32 %v7662, %v7870
  %v7913 = vadd.f32 %v7663, %v7883
  %v7914 = vadd.f32 %v7664, %v7896
  %v7915 = vadd.f32 %v7665, %v7909
  %v7916 = vld [vmem:[#allocation12] sm:$0xff]
  %v7917 = vxor.u32 %v7912, 2147483648
  %v7918 = vmul.f32 %v7917, 1.442695
  %v7919 = vpow.pop %v7918
  %v7920 = vadd.f32 %v7919, 1.0
  %v7921 = vrcp.pop %v7920
  %v7922 = vmul.f32 %v7920, %v7921
  %v7923 = vsub.f32 1.0, %v7922
  %v7924 = vmul.f32 %v7921, %v7923
  %v7925 = vadd.f32 %v7921, %v7924
  %vm7926 = vweird.f32 %v7920
  %vm7927 = vweird.f32 %v7921
  %vm7928 = vmor %vm7926, %vm7927
  %v7929 = vsel %vm7928, %v7921, %v7925
  %v7930 = vand.u32 2147483647, %v7920
  %vm7931 = vcmp.eq.f32.partialorder %v7930, 8.507059e+37
  %v7932 = vand.u32 %v7920, 2147483648
  %v7933 = vor.u32 1.1754944e-38, %v7932
  %v7934 = vsel %vm7931, %v7933, %v7929
  %v7935 = vmul.f32 1.0, %v7934
  %v7936 = vxor.u32 %v7913, 2147483648
  %v7937 = vmul.f32 %v7936, 1.442695
  %v7938 = vpow.pop %v7937
  %v7939 = vadd.f32 %v7938, 1.0
  %v7940 = vrcp.pop %v7939
  %v7941 = vmul.f32 %v7939, %v7940
  %v7942 = vsub.f32 1.0, %v7941
  %v7943 = vmul.f32 %v7940, %v7942
  %v7944 = vadd.f32 %v7940, %v7943
  %vm7945 = vweird.f32 %v7939
  %vm7946 = vweird.f32 %v7940
  %vm7947 = vmor %vm7945, %vm7946
  %v7948 = vsel %vm7947, %v7940, %v7944
  %v7949 = vand.u32 2147483647, %v7939
  %vm7950 = vcmp.eq.f32.partialorder %v7949, 8.507059e+37
  %v7951 = vand.u32 %v7939, 2147483648
  %v7952 = vor.u32 1.1754944e-38, %v7951
  %v7953 = vsel %vm7950, %v7952, %v7948
  %v7954 = vmul.f32 1.0, %v7953
  %v7955 = vtanh.pop %v7914
  %v7956 = vxor.u32 %v7915, 2147483648
  %v7957 = vmul.f32 %v7956, 1.442695
  %v7958 = vpow.pop %v7957
  %v7959 = vadd.f32 %v7958, 1.0
  %v7960 = vrcp.pop %v7959
  %v7961 = vmul.f32 %v7959, %v7960
  %v7962 = vsub.f32 1.0, %v7961
  %v7963 = vmul.f32 %v7960, %v7962
  %v7964 = vadd.f32 %v7960, %v7963
  %vm7965 = vweird.f32 %v7959
  %vm7966 = vweird.f32 %v7960
  %vm7967 = vmor %vm7965, %vm7966
  %v7968 = vsel %vm7967, %v7960, %v7964
  %v7969 = vand.u32 2147483647, %v7959
  %vm7970 = vcmp.eq.f32.partialorder %v7969, 8.507059e+37
  %v7971 = vand.u32 %v7959, 2147483648
  %v7972 = vor.u32 1.1754944e-38, %v7971
  %v7973 = vsel %vm7970, %v7972, %v7968
  %v7974 = vmul.f32 1.0, %v7973
  %v7975 = vmul.f32 %v7954, %v7916
  %v7976 = vmul.f32 %v7935, %v7955
  %v7977 = vadd.f32 %v7975, %v7976
  %v7978 = vtanh.pop %v7977
  %v7979 = vmul.f32 %v7974, %v7978
  %7980 = vst [vmem:[#allocation11] sm:$0xff] %v7979
  %7981 = vst [vmem:[#allocation12] sm:$0xff] %v7977
  %v7982 = vld [vmem:[#allocation4 + $0xa0] sm:$0xff]
  %v7983 = vld [vmem:[#allocation4 + $0xa8] sm:$0xff]
  %v7984 = vld [vmem:[#allocation4 + $0xb0] sm:$0xff]
  %v7985 = vld [vmem:[#allocation4 + $0xb8] sm:$0xff]
  %v7986 = vld [vmem:[#allocation11] sm:$0xff]
  %v7987 = vpack.c.bf16 %v7986, %v7986
  %v7988 = vld [vmem:[%s9] sm:$0xff]
  %v7989 = vld [vmem:[%s9 + $0x8] sm:$0xff]
  %v7990 = vld [vmem:[%s9 + $0x10] sm:$0xff]
  %v7991 = vld [vmem:[%s9 + $0x18] sm:$0xff]
  %v7992 = vld [vmem:[%s9 + $0x20] sm:$0xff]
  %v7993 = vld [vmem:[%s9 + $0x28] sm:$0xff]
  %v7994 = vld [vmem:[%s9 + $0x30] sm:$0xff]
  %v7995 = vld [vmem:[%s9 + $0x38] sm:$0xff]
  %v7996 = vld [vmem:[%s9 + $0x40] sm:$0xff]
  %v7997 = vld [vmem:[%s9 + $0x48] sm:$0xff]
  %v7998 = vld [vmem:[%s9 + $0x50] sm:$0xff]
  %v7999 = vld [vmem:[%s9 + $0x58] sm:$0xff]
  %v8000 = vld [vmem:[%s9 + $0x60] sm:$0xff]
  %v8001 = vld [vmem:[%s9 + $0x68] sm:$0xff]
  %v8002 = vld [vmem:[%s9 + $0x70] sm:$0xff]
  %v8003 = vld [vmem:[%s9 + $0x78] sm:$0xff]
  %v8004 = vld [vmem:[%s9 + $0x80] sm:$0xff]
  %v8005 = vld [vmem:[%s9 + $0x88] sm:$0xff]
  %v8006 = vld [vmem:[%s9 + $0x90] sm:$0xff]
  %v8007 = vld [vmem:[%s9 + $0x98] sm:$0xff]
  %v8008 = vld [vmem:[%s9 + $0xa0] sm:$0xff]
  %v8009 = vld [vmem:[%s9 + $0xa8] sm:$0xff]
  %v8010 = vld [vmem:[%s9 + $0xb0] sm:$0xff]
  %v8011 = vld [vmem:[%s9 + $0xb8] sm:$0xff]
  %v8012 = vld [vmem:[%s9 + $0xc0] sm:$0xff]
  %v8013 = vld [vmem:[%s9 + $0xc8] sm:$0xff]
  %v8014 = vld [vmem:[%s9 + $0xd0] sm:$0xff]
  %v8015 = vld [vmem:[%s9 + $0xd8] sm:$0xff]
  %v8016 = vld [vmem:[%s9 + $0xe0] sm:$0xff]
  %v8017 = vld [vmem:[%s9 + $0xe8] sm:$0xff]
  %v8018 = vld [vmem:[%s9 + $0xf0] sm:$0xff]
  %v8019 = vld [vmem:[%s9 + $0xf8] sm:$0xff]
  %v8052 = vunpack.c.l.b16 %v7988
  %v8053 = vunpack.c.h.b16 %v7988
  %v8054 = vunpack.c.l.b16 %v7989
  %v8055 = vunpack.c.h.b16 %v7989
  %v8056 = vunpack.c.l.b16 %v7990
  %v8057 = vunpack.c.h.b16 %v7990
  %v8058 = vunpack.c.l.b16 %v7991
  %v8059 = vunpack.c.h.b16 %v7991
  %v8060 = vunpack.c.l.b16 %v7992
  %v8061 = vunpack.c.h.b16 %v7992
  %v8062 = vunpack.c.l.b16 %v7993
  %v8063 = vunpack.c.h.b16 %v7993
  %v8064 = vunpack.c.l.b16 %v7994
  %v8065 = vunpack.c.h.b16 %v7994
  %v8066 = vunpack.c.l.b16 %v7995
  %v8067 = vunpack.c.h.b16 %v7995
  %v8068 = vunpack.c.l.b16 %v7996
  %v8069 = vunpack.c.h.b16 %v7996
  %v8070 = vunpack.c.l.b16 %v7997
  %v8071 = vunpack.c.h.b16 %v7997
  %v8072 = vunpack.c.l.b16 %v7998
  %v8073 = vunpack.c.h.b16 %v7998
  %v8074 = vunpack.c.l.b16 %v7999
  %v8075 = vunpack.c.h.b16 %v7999
  %v8076 = vunpack.c.l.b16 %v8000
  %v8077 = vunpack.c.h.b16 %v8000
  %v8078 = vunpack.c.l.b16 %v8001
  %v8079 = vunpack.c.h.b16 %v8001
  %v8080 = vunpack.c.l.b16 %v8002
  %v8081 = vunpack.c.h.b16 %v8002
  %v8082 = vunpack.c.l.b16 %v8003
  %v8083 = vunpack.c.h.b16 %v8003
  %v8084 = vunpack.c.l.b16 %v8004
  %v8085 = vunpack.c.h.b16 %v8004
  %v8086 = vunpack.c.l.b16 %v8005
  %v8087 = vunpack.c.h.b16 %v8005
  %v8088 = vunpack.c.l.b16 %v8006
  %v8089 = vunpack.c.h.b16 %v8006
  %v8090 = vunpack.c.l.b16 %v8007
  %v8091 = vunpack.c.h.b16 %v8007
  %v8092 = vunpack.c.l.b16 %v8008
  %v8093 = vunpack.c.h.b16 %v8008
  %v8094 = vunpack.c.l.b16 %v8009
  %v8095 = vunpack.c.h.b16 %v8009
  %v8096 = vunpack.c.l.b16 %v8010
  %v8097 = vunpack.c.h.b16 %v8010
  %v8098 = vunpack.c.l.b16 %v8011
  %v8099 = vunpack.c.h.b16 %v8011
  %v8100 = vunpack.c.l.b16 %v8012
  %v8101 = vunpack.c.h.b16 %v8012
  %v8102 = vunpack.c.l.b16 %v8013
  %v8103 = vunpack.c.h.b16 %v8013
  %v8104 = vunpack.c.l.b16 %v8014
  %v8105 = vunpack.c.h.b16 %v8014
  %v8106 = vunpack.c.l.b16 %v8015
  %v8107 = vunpack.c.h.b16 %v8015
  %v8108 = vunpack.c.l.b16 %v8016
  %v8109 = vunpack.c.h.b16 %v8016
  %v8110 = vunpack.c.l.b16 %v8017
  %v8111 = vunpack.c.h.b16 %v8017
  %v8112 = vunpack.c.l.b16 %v8018
  %v8113 = vunpack.c.h.b16 %v8018
  %v8114 = vunpack.c.l.b16 %v8019
  %v8115 = vunpack.c.h.b16 %v8019
  %v8116 = vpack.c.b16 %v8056, %v8052
  %v8117 = vpack.c.b16 %v8057, %v8053
  %v8118 = vpack.c.b16 %v8058, %v8054
  %v8119 = vpack.c.b16 %v8059, %v8055
  %v8120 = vpack.c.b16 %v8064, %v8060
  %v8121 = vpack.c.b16 %v8065, %v8061
  %v8122 = vpack.c.b16 %v8066, %v8062
  %v8123 = vpack.c.b16 %v8067, %v8063
  %v8124 = vpack.c.b16 %v8072, %v8068
  %v8125 = vpack.c.b16 %v8073, %v8069
  %v8126 = vpack.c.b16 %v8074, %v8070
  %v8127 = vpack.c.b16 %v8075, %v8071
  %v8128 = vpack.c.b16 %v8080, %v8076
  %v8129 = vpack.c.b16 %v8081, %v8077
  %v8130 = vpack.c.b16 %v8082, %v8078
  %v8131 = vpack.c.b16 %v8083, %v8079
  %v8132 = vpack.c.b16 %v8088, %v8084
  %v8133 = vpack.c.b16 %v8089, %v8085
  %v8134 = vpack.c.b16 %v8090, %v8086
  %v8135 = vpack.c.b16 %v8091, %v8087
  %v8136 = vpack.c.b16 %v8096, %v8092
  %v8137 = vpack.c.b16 %v8097, %v8093
  %v8138 = vpack.c.b16 %v8098, %v8094
  %v8139 = vpack.c.b16 %v8099, %v8095
  %v8140 = vpack.c.b16 %v8104, %v8100
  %v8141 = vpack.c.b16 %v8105, %v8101
  %v8142 = vpack.c.b16 %v8106, %v8102
  %v8143 = vpack.c.b16 %v8107, %v8103
  %v8144 = vpack.c.b16 %v8112, %v8108
  %v8145 = vpack.c.b16 %v8113, %v8109
  %v8146 = vpack.c.b16 %v8114, %v8110
  %v8147 = vpack.c.b16 %v8115, %v8111
  %8180 = vmatpush.bf16.msra.mxu0 %v8144
  %8181 = vmatpush.bf16.msra.mxu0 %v8140
  %8182 = vmatpush.bf16.msra.mxu0 %v8136
  %8183 = vmatpush.bf16.msra.mxu0 %v8132
  %8184 = vmatpush.bf16.msra.mxu0 %v8128
  %8185 = vmatpush.bf16.msra.mxu0 %v8124
  %8186 = vmatpush.bf16.msra.mxu0 %v8120
  %8187 = vmatpush.bf16.msra.mxu0 %v8116
  %8188 = vmatmul.bf16.gmra.mxu0 %v7987
  %v8189 = vpop.f32.mrf.mxu0
  %v8190 = vadd.f32 0.0, %v8189
  %v8191 = vpop.f32.mrf.mxu0
  %8192 = vdwg.mxu0
  %8193 = vmatpush.bf16.msra.mxu0 %v8145
  %8194 = vmatpush.bf16.msra.mxu0 %v8141
  %8195 = vmatpush.bf16.msra.mxu0 %v8137
  %8196 = vmatpush.bf16.msra.mxu0 %v8133
  %8197 = vmatpush.bf16.msra.mxu0 %v8129
  %8198 = vmatpush.bf16.msra.mxu0 %v8125
  %8199 = vmatpush.bf16.msra.mxu0 %v8121
  %8200 = vmatpush.bf16.msra.mxu0 %v8117
  %8201 = vmatmul.bf16.gmra.mxu0 %v7987
  %v8202 = vpop.f32.mrf.mxu0
  %v8203 = vadd.f32 0.0, %v8202
  %v8204 = vpop.f32.mrf.mxu0
  %8205 = vdwg.mxu0
  %8206 = vmatpush.bf16.msra.mxu0 %v8146
  %8207 = vmatpush.bf16.msra.mxu0 %v8142
  %8208 = vmatpush.bf16.msra.mxu0 %v8138
  %8209 = vmatpush.bf16.msra.mxu0 %v8134
  %8210 = vmatpush.bf16.msra.mxu0 %v8130
  %8211 = vmatpush.bf16.msra.mxu0 %v8126
  %8212 = vmatpush.bf16.msra.mxu0 %v8122
  %8213 = vmatpush.bf16.msra.mxu0 %v8118
  %8214 = vmatmul.bf16.gmra.mxu0 %v7987
  %v8215 = vpop.f32.mrf.mxu0
  %v8216 = vadd.f32 0.0, %v8215
  %v8217 = vpop.f32.mrf.mxu0
  %8218 = vdwg.mxu0
  %8219 = vmatpush.bf16.msra.mxu0 %v8147
  %8220 = vmatpush.bf16.msra.mxu0 %v8143
  %8221 = vmatpush.bf16.msra.mxu0 %v8139
  %8222 = vmatpush.bf16.msra.mxu0 %v8135
  %8223 = vmatpush.bf16.msra.mxu0 %v8131
  %8224 = vmatpush.bf16.msra.mxu0 %v8127
  %8225 = vmatpush.bf16.msra.mxu0 %v8123
  %8226 = vmatpush.bf16.msra.mxu0 %v8119
  %8227 = vmatmul.bf16.gmra.mxu0 %v7987
  %v8228 = vpop.f32.mrf.mxu0
  %v8229 = vadd.f32 0.0, %v8228
  %v8230 = vpop.f32.mrf.mxu0
  %8231 = vdwg.mxu0
  %v8232 = vadd.f32 %v7982, %v8190
  %v8233 = vadd.f32 %v7983, %v8203
  %v8234 = vadd.f32 %v7984, %v8216
  %v8235 = vadd.f32 %v7985, %v8229
  %v8236 = vld [vmem:[#allocation12] sm:$0xff]
  %v8237 = vxor.u32 %v8232, 2147483648
  %v8238 = vmul.f32 %v8237, 1.442695
  %v8239 = vpow.pop %v8238
  %v8240 = vadd.f32 %v8239, 1.0
  %v8241 = vrcp.pop %v8240
  %v8242 = vmul.f32 %v8240, %v8241
  %v8243 = vsub.f32 1.0, %v8242
  %v8244 = vmul.f32 %v8241, %v8243
  %v8245 = vadd.f32 %v8241, %v8244
  %vm8246 = vweird.f32 %v8240
  %vm8247 = vweird.f32 %v8241
  %vm8248 = vmor %vm8246, %vm8247
  %v8249 = vsel %vm8248, %v8241, %v8245
  %v8250 = vand.u32 2147483647, %v8240
  %vm8251 = vcmp.eq.f32.partialorder %v8250, 8.507059e+37
  %v8252 = vand.u32 %v8240, 2147483648
  %v8253 = vor.u32 1.1754944e-38, %v8252
  %v8254 = vsel %vm8251, %v8253, %v8249
  %v8255 = vmul.f32 1.0, %v8254
  %v8256 = vxor.u32 %v8233, 2147483648
  %v8257 = vmul.f32 %v8256, 1.442695
  %v8258 = vpow.pop %v8257
  %v8259 = vadd.f32 %v8258, 1.0
  %v8260 = vrcp.pop %v8259
  %v8261 = vmul.f32 %v8259, %v8260
  %v8262 = vsub.f32 1.0, %v8261
  %v8263 = vmul.f32 %v8260, %v8262
  %v8264 = vadd.f32 %v8260, %v8263
  %vm8265 = vweird.f32 %v8259
  %vm8266 = vweird.f32 %v8260
  %vm8267 = vmor %vm8265, %vm8266
  %v8268 = vsel %vm8267, %v8260, %v8264
  %v8269 = vand.u32 2147483647, %v8259
  %vm8270 = vcmp.eq.f32.partialorder %v8269, 8.507059e+37
  %v8271 = vand.u32 %v8259, 2147483648
  %v8272 = vor.u32 1.1754944e-38, %v8271
  %v8273 = vsel %vm8270, %v8272, %v8268
  %v8274 = vmul.f32 1.0, %v8273
  %v8275 = vtanh.pop %v8234
  %v8276 = vxor.u32 %v8235, 2147483648
  %v8277 = vmul.f32 %v8276, 1.442695
  %v8278 = vpow.pop %v8277
  %v8279 = vadd.f32 %v8278, 1.0
  %v8280 = vrcp.pop %v8279
  %v8281 = vmul.f32 %v8279, %v8280
  %v8282 = vsub.f32 1.0, %v8281
  %v8283 = vmul.f32 %v8280, %v8282
  %v8284 = vadd.f32 %v8280, %v8283
  %vm8285 = vweird.f32 %v8279
  %vm8286 = vweird.f32 %v8280
  %vm8287 = vmor %vm8285, %vm8286
  %v8288 = vsel %vm8287, %v8280, %v8284
  %v8289 = vand.u32 2147483647, %v8279
  %vm8290 = vcmp.eq.f32.partialorder %v8289, 8.507059e+37
  %v8291 = vand.u32 %v8279, 2147483648
  %v8292 = vor.u32 1.1754944e-38, %v8291
  %v8293 = vsel %vm8290, %v8292, %v8288
  %v8294 = vmul.f32 1.0, %v8293
  %v8295 = vmul.f32 %v8274, %v8236
  %v8296 = vmul.f32 %v8255, %v8275
  %v8297 = vadd.f32 %v8295, %v8296
  %v8298 = vtanh.pop %v8297
  %v8299 = vmul.f32 %v8294, %v8298
  %8300 = vst [vmem:[#allocation11] sm:$0xff] %v8299
  %8301 = vst [vmem:[#allocation12] sm:$0xff] %v8297
  %v8302 = vld [vmem:[#allocation4 + $0xc0] sm:$0xff]
  %v8303 = vld [vmem:[#allocation4 + $0xc8] sm:$0xff]
  %v8304 = vld [vmem:[#allocation4 + $0xd0] sm:$0xff]
  %v8305 = vld [vmem:[#allocation4 + $0xd8] sm:$0xff]
  %v8306 = vld [vmem:[#allocation11] sm:$0xff]
  %v8307 = vpack.c.bf16 %v8306, %v8306
  %v8308 = vld [vmem:[%s9] sm:$0xff]
  %v8309 = vld [vmem:[%s9 + $0x8] sm:$0xff]
  %v8310 = vld [vmem:[%s9 + $0x10] sm:$0xff]
  %v8311 = vld [vmem:[%s9 + $0x18] sm:$0xff]
  %v8312 = vld [vmem:[%s9 + $0x20] sm:$0xff]
  %v8313 = vld [vmem:[%s9 + $0x28] sm:$0xff]
  %v8314 = vld [vmem:[%s9 + $0x30] sm:$0xff]
  %v8315 = vld [vmem:[%s9 + $0x38] sm:$0xff]
  %v8316 = vld [vmem:[%s9 + $0x40] sm:$0xff]
  %v8317 = vld [vmem:[%s9 + $0x48] sm:$0xff]
  %v8318 = vld [vmem:[%s9 + $0x50] sm:$0xff]
  %v8319 = vld [vmem:[%s9 + $0x58] sm:$0xff]
  %v8320 = vld [vmem:[%s9 + $0x60] sm:$0xff]
  %v8321 = vld [vmem:[%s9 + $0x68] sm:$0xff]
  %v8322 = vld [vmem:[%s9 + $0x70] sm:$0xff]
  %v8323 = vld [vmem:[%s9 + $0x78] sm:$0xff]
  %v8324 = vld [vmem:[%s9 + $0x80] sm:$0xff]
  %v8325 = vld [vmem:[%s9 + $0x88] sm:$0xff]
  %v8326 = vld [vmem:[%s9 + $0x90] sm:$0xff]
  %v8327 = vld [vmem:[%s9 + $0x98] sm:$0xff]
  %v8328 = vld [vmem:[%s9 + $0xa0] sm:$0xff]
  %v8329 = vld [vmem:[%s9 + $0xa8] sm:$0xff]
  %v8330 = vld [vmem:[%s9 + $0xb0] sm:$0xff]
  %v8331 = vld [vmem:[%s9 + $0xb8] sm:$0xff]
  %v8332 = vld [vmem:[%s9 + $0xc0] sm:$0xff]
  %v8333 = vld [vmem:[%s9 + $0xc8] sm:$0xff]
  %v8334 = vld [vmem:[%s9 + $0xd0] sm:$0xff]
  %v8335 = vld [vmem:[%s9 + $0xd8] sm:$0xff]
  %v8336 = vld [vmem:[%s9 + $0xe0] sm:$0xff]
  %v8337 = vld [vmem:[%s9 + $0xe8] sm:$0xff]
  %v8338 = vld [vmem:[%s9 + $0xf0] sm:$0xff]
  %v8339 = vld [vmem:[%s9 + $0xf8] sm:$0xff]
  %v8372 = vunpack.c.l.b16 %v8308
  %v8373 = vunpack.c.h.b16 %v8308
  %v8374 = vunpack.c.l.b16 %v8309
  %v8375 = vunpack.c.h.b16 %v8309
  %v8376 = vunpack.c.l.b16 %v8310
  %v8377 = vunpack.c.h.b16 %v8310
  %v8378 = vunpack.c.l.b16 %v8311
  %v8379 = vunpack.c.h.b16 %v8311
  %v8380 = vunpack.c.l.b16 %v8312
  %v8381 = vunpack.c.h.b16 %v8312
  %v8382 = vunpack.c.l.b16 %v8313
  %v8383 = vunpack.c.h.b16 %v8313
  %v8384 = vunpack.c.l.b16 %v8314
  %v8385 = vunpack.c.h.b16 %v8314
  %v8386 = vunpack.c.l.b16 %v8315
  %v8387 = vunpack.c.h.b16 %v8315
  %v8388 = vunpack.c.l.b16 %v8316
  %v8389 = vunpack.c.h.b16 %v8316
  %v8390 = vunpack.c.l.b16 %v8317
  %v8391 = vunpack.c.h.b16 %v8317
  %v8392 = vunpack.c.l.b16 %v8318
  %v8393 = vunpack.c.h.b16 %v8318
  %v8394 = vunpack.c.l.b16 %v8319
  %v8395 = vunpack.c.h.b16 %v8319
  %v8396 = vunpack.c.l.b16 %v8320
  %v8397 = vunpack.c.h.b16 %v8320
  %v8398 = vunpack.c.l.b16 %v8321
  %v8399 = vunpack.c.h.b16 %v8321
  %v8400 = vunpack.c.l.b16 %v8322
  %v8401 = vunpack.c.h.b16 %v8322
  %v8402 = vunpack.c.l.b16 %v8323
  %v8403 = vunpack.c.h.b16 %v8323
  %v8404 = vunpack.c.l.b16 %v8324
  %v8405 = vunpack.c.h.b16 %v8324
  %v8406 = vunpack.c.l.b16 %v8325
  %v8407 = vunpack.c.h.b16 %v8325
  %v8408 = vunpack.c.l.b16 %v8326
  %v8409 = vunpack.c.h.b16 %v8326
  %v8410 = vunpack.c.l.b16 %v8327
  %v8411 = vunpack.c.h.b16 %v8327
  %v8412 = vunpack.c.l.b16 %v8328
  %v8413 = vunpack.c.h.b16 %v8328
  %v8414 = vunpack.c.l.b16 %v8329
  %v8415 = vunpack.c.h.b16 %v8329
  %v8416 = vunpack.c.l.b16 %v8330
  %v8417 = vunpack.c.h.b16 %v8330
  %v8418 = vunpack.c.l.b16 %v8331
  %v8419 = vunpack.c.h.b16 %v8331
  %v8420 = vunpack.c.l.b16 %v8332
  %v8421 = vunpack.c.h.b16 %v8332
  %v8422 = vunpack.c.l.b16 %v8333
  %v8423 = vunpack.c.h.b16 %v8333
  %v8424 = vunpack.c.l.b16 %v8334
  %v8425 = vunpack.c.h.b16 %v8334
  %v8426 = vunpack.c.l.b16 %v8335
  %v8427 = vunpack.c.h.b16 %v8335
  %v8428 = vunpack.c.l.b16 %v8336
  %v8429 = vunpack.c.h.b16 %v8336
  %v8430 = vunpack.c.l.b16 %v8337
  %v8431 = vunpack.c.h.b16 %v8337
  %v8432 = vunpack.c.l.b16 %v8338
  %v8433 = vunpack.c.h.b16 %v8338
  %v8434 = vunpack.c.l.b16 %v8339
  %v8435 = vunpack.c.h.b16 %v8339
  %v8436 = vpack.c.b16 %v8376, %v8372
  %v8437 = vpack.c.b16 %v8377, %v8373
  %v8438 = vpack.c.b16 %v8378, %v8374
  %v8439 = vpack.c.b16 %v8379, %v8375
  %v8440 = vpack.c.b16 %v8384, %v8380
  %v8441 = vpack.c.b16 %v8385, %v8381
  %v8442 = vpack.c.b16 %v8386, %v8382
  %v8443 = vpack.c.b16 %v8387, %v8383
  %v8444 = vpack.c.b16 %v8392, %v8388
  %v8445 = vpack.c.b16 %v8393, %v8389
  %v8446 = vpack.c.b16 %v8394, %v8390
  %v8447 = vpack.c.b16 %v8395, %v8391
  %v8448 = vpack.c.b16 %v8400, %v8396
  %v8449 = vpack.c.b16 %v8401, %v8397
  %v8450 = vpack.c.b16 %v8402, %v8398
  %v8451 = vpack.c.b16 %v8403, %v8399
  %v8452 = vpack.c.b16 %v8408, %v8404
  %v8453 = vpack.c.b16 %v8409, %v8405
  %v8454 = vpack.c.b16 %v8410, %v8406
  %v8455 = vpack.c.b16 %v8411, %v8407
  %v8456 = vpack.c.b16 %v8416, %v8412
  %v8457 = vpack.c.b16 %v8417, %v8413
  %v8458 = vpack.c.b16 %v8418, %v8414
  %v8459 = vpack.c.b16 %v8419, %v8415
  %v8460 = vpack.c.b16 %v8424, %v8420
  %v8461 = vpack.c.b16 %v8425, %v8421
  %v8462 = vpack.c.b16 %v8426, %v8422
  %v8463 = vpack.c.b16 %v8427, %v8423
  %v8464 = vpack.c.b16 %v8432, %v8428
  %v8465 = vpack.c.b16 %v8433, %v8429
  %v8466 = vpack.c.b16 %v8434, %v8430
  %v8467 = vpack.c.b16 %v8435, %v8431
  %8500 = vmatpush.bf16.msra.mxu0 %v8464
  %8501 = vmatpush.bf16.msra.mxu0 %v8460
  %8502 = vmatpush.bf16.msra.mxu0 %v8456
  %8503 = vmatpush.bf16.msra.mxu0 %v8452
  %8504 = vmatpush.bf16.msra.mxu0 %v8448
  %8505 = vmatpush.bf16.msra.mxu0 %v8444
  %8506 = vmatpush.bf16.msra.mxu0 %v8440
  %8507 = vmatpush.bf16.msra.mxu0 %v8436
  %8508 = vmatmul.bf16.gmra.mxu0 %v8307
  %v8509 = vpop.f32.mrf.mxu0
  %v8510 = vadd.f32 0.0, %v8509
  %v8511 = vpop.f32.mrf.mxu0
  %8512 = vdwg.mxu0
  %8513 = vmatpush.bf16.msra.mxu0 %v8465
  %8514 = vmatpush.bf16.msra.mxu0 %v8461
  %8515 = vmatpush.bf16.msra.mxu0 %v8457
  %8516 = vmatpush.bf16.msra.mxu0 %v8453
  %8517 = vmatpush.bf16.msra.mxu0 %v8449
  %8518 = vmatpush.bf16.msra.mxu0 %v8445
  %8519 = vmatpush.bf16.msra.mxu0 %v8441
  %8520 = vmatpush.bf16.msra.mxu0 %v8437
  %8521 = vmatmul.bf16.gmra.mxu0 %v8307
  %v8522 = vpop.f32.mrf.mxu0
  %v8523 = vadd.f32 0.0, %v8522
  %v8524 = vpop.f32.mrf.mxu0
  %8525 = vdwg.mxu0
  %8526 = vmatpush.bf16.msra.mxu0 %v8466
  %8527 = vmatpush.bf16.msra.mxu0 %v8462
  %8528 = vmatpush.bf16.msra.mxu0 %v8458
  %8529 = vmatpush.bf16.msra.mxu0 %v8454
  %8530 = vmatpush.bf16.msra.mxu0 %v8450
  %8531 = vmatpush.bf16.msra.mxu0 %v8446
  %8532 = vmatpush.bf16.msra.mxu0 %v8442
  %8533 = vmatpush.bf16.msra.mxu0 %v8438
  %8534 = vmatmul.bf16.gmra.mxu0 %v8307
  %v8535 = vpop.f32.mrf.mxu0
  %v8536 = vadd.f32 0.0, %v8535
  %v8537 = vpop.f32.mrf.mxu0
  %8538 = vdwg.mxu0
  %8539 = vmatpush.bf16.msra.mxu0 %v8467
  %8540 = vmatpush.bf16.msra.mxu0 %v8463
  %8541 = vmatpush.bf16.msra.mxu0 %v8459
  %8542 = vmatpush.bf16.msra.mxu0 %v8455
  %8543 = vmatpush.bf16.msra.mxu0 %v8451
  %8544 = vmatpush.bf16.msra.mxu0 %v8447
  %8545 = vmatpush.bf16.msra.mxu0 %v8443
  %8546 = vmatpush.bf16.msra.mxu0 %v8439
  %8547 = vmatmul.bf16.gmra.mxu0 %v8307
  %v8548 = vpop.f32.mrf.mxu0
  %v8549 = vadd.f32 0.0, %v8548
  %v8550 = vpop.f32.mrf.mxu0
  %8551 = vdwg.mxu0
  %v8552 = vadd.f32 %v8302, %v8510
  %v8553 = vadd.f32 %v8303, %v8523
  %v8554 = vadd.f32 %v8304, %v8536
  %v8555 = vadd.f32 %v8305, %v8549
  %v8556 = vld [vmem:[#allocation12] sm:$0xff]
  %v8557 = vxor.u32 %v8552, 2147483648
  %v8558 = vmul.f32 %v8557, 1.442695
  %v8559 = vpow.pop %v8558
  %v8560 = vadd.f32 %v8559, 1.0
  %v8561 = vrcp.pop %v8560
  %v8562 = vmul.f32 %v8560, %v8561
  %v8563 = vsub.f32 1.0, %v8562
  %v8564 = vmul.f32 %v8561, %v8563
  %v8565 = vadd.f32 %v8561, %v8564
  %vm8566 = vweird.f32 %v8560
  %vm8567 = vweird.f32 %v8561
  %vm8568 = vmor %vm8566, %vm8567
  %v8569 = vsel %vm8568, %v8561, %v8565
  %v8570 = vand.u32 2147483647, %v8560
  %vm8571 = vcmp.eq.f32.partialorder %v8570, 8.507059e+37
  %v8572 = vand.u32 %v8560, 2147483648
  %v8573 = vor.u32 1.1754944e-38, %v8572
  %v8574 = vsel %vm8571, %v8573, %v8569
  %v8575 = vmul.f32 1.0, %v8574
  %v8576 = vxor.u32 %v8553, 2147483648
  %v8577 = vmul.f32 %v8576, 1.442695
  %v8578 = vpow.pop %v8577
  %v8579 = vadd.f32 %v8578, 1.0
  %v8580 = vrcp.pop %v8579
  %v8581 = vmul.f32 %v8579, %v8580
  %v8582 = vsub.f32 1.0, %v8581
  %v8583 = vmul.f32 %v8580, %v8582
  %v8584 = vadd.f32 %v8580, %v8583
  %vm8585 = vweird.f32 %v8579
  %vm8586 = vweird.f32 %v8580
  %vm8587 = vmor %vm8585, %vm8586
  %v8588 = vsel %vm8587, %v8580, %v8584
  %v8589 = vand.u32 2147483647, %v8579
  %vm8590 = vcmp.eq.f32.partialorder %v8589, 8.507059e+37
  %v8591 = vand.u32 %v8579, 2147483648
  %v8592 = vor.u32 1.1754944e-38, %v8591
  %v8593 = vsel %vm8590, %v8592, %v8588
  %v8594 = vmul.f32 1.0, %v8593
  %v8595 = vtanh.pop %v8554
  %v8596 = vxor.u32 %v8555, 2147483648
  %v8597 = vmul.f32 %v8596, 1.442695
  %v8598 = vpow.pop %v8597
  %v8599 = vadd.f32 %v8598, 1.0
  %v8600 = vrcp.pop %v8599
  %v8601 = vmul.f32 %v8599, %v8600
  %v8602 = vsub.f32 1.0, %v8601
  %v8603 = vmul.f32 %v8600, %v8602
  %v8604 = vadd.f32 %v8600, %v8603
  %vm8605 = vweird.f32 %v8599
  %vm8606 = vweird.f32 %v8600
  %vm8607 = vmor %vm8605, %vm8606
  %v8608 = vsel %vm8607, %v8600, %v8604
  %v8609 = vand.u32 2147483647, %v8599
  %vm8610 = vcmp.eq.f32.partialorder %v8609, 8.507059e+37
  %v8611 = vand.u32 %v8599, 2147483648
  %v8612 = vor.u32 1.1754944e-38, %v8611
  %v8613 = vsel %vm8610, %v8612, %v8608
  %v8614 = vmul.f32 1.0, %v8613
  %v8615 = vmul.f32 %v8594, %v8556
  %v8616 = vmul.f32 %v8575, %v8595
  %v8617 = vadd.f32 %v8615, %v8616
  %v8618 = vtanh.pop %v8617
  %v8619 = vmul.f32 %v8614, %v8618
  %8620 = vst [vmem:[#allocation11] sm:$0xff] %v8619
  %8621 = vst [vmem:[#allocation12] sm:$0xff] %v8617
  %v8622 = vld [vmem:[#allocation4 + $0xe0] sm:$0xff]
  %v8623 = vld [vmem:[#allocation4 + $0xe8] sm:$0xff]
  %v8624 = vld [vmem:[#allocation4 + $0xf0] sm:$0xff]
  %v8625 = vld [vmem:[#allocation4 + $0xf8] sm:$0xff]
  %v8626 = vld [vmem:[#allocation11] sm:$0xff]
  %v8627 = vpack.c.bf16 %v8626, %v8626
  %v8628 = vld [vmem:[%s9] sm:$0xff]
  %v8629 = vld [vmem:[%s9 + $0x8] sm:$0xff]
  %v8630 = vld [vmem:[%s9 + $0x10] sm:$0xff]
  %v8631 = vld [vmem:[%s9 + $0x18] sm:$0xff]
  %v8632 = vld [vmem:[%s9 + $0x20] sm:$0xff]
  %v8633 = vld [vmem:[%s9 + $0x28] sm:$0xff]
  %v8634 = vld [vmem:[%s9 + $0x30] sm:$0xff]
  %v8635 = vld [vmem:[%s9 + $0x38] sm:$0xff]
  %v8636 = vld [vmem:[%s9 + $0x40] sm:$0xff]
  %v8637 = vld [vmem:[%s9 + $0x48] sm:$0xff]
  %v8638 = vld [vmem:[%s9 + $0x50] sm:$0xff]
  %v8639 = vld [vmem:[%s9 + $0x58] sm:$0xff]
  %v8640 = vld [vmem:[%s9 + $0x60] sm:$0xff]
  %v8641 = vld [vmem:[%s9 + $0x68] sm:$0xff]
  %v8642 = vld [vmem:[%s9 + $0x70] sm:$0xff]
  %v8643 = vld [vmem:[%s9 + $0x78] sm:$0xff]
  %v8644 = vld [vmem:[%s9 + $0x80] sm:$0xff]
  %v8645 = vld [vmem:[%s9 + $0x88] sm:$0xff]
  %v8646 = vld [vmem:[%s9 + $0x90] sm:$0xff]
  %v8647 = vld [vmem:[%s9 + $0x98] sm:$0xff]
  %v8648 = vld [vmem:[%s9 + $0xa0] sm:$0xff]
  %v8649 = vld [vmem:[%s9 + $0xa8] sm:$0xff]
  %v8650 = vld [vmem:[%s9 + $0xb0] sm:$0xff]
  %v8651 = vld [vmem:[%s9 + $0xb8] sm:$0xff]
  %v8652 = vld [vmem:[%s9 + $0xc0] sm:$0xff]
  %v8653 = vld [vmem:[%s9 + $0xc8] sm:$0xff]
  %v8654 = vld [vmem:[%s9 + $0xd0] sm:$0xff]
  %v8655 = vld [vmem:[%s9 + $0xd8] sm:$0xff]
  %v8656 = vld [vmem:[%s9 + $0xe0] sm:$0xff]
  %v8657 = vld [vmem:[%s9 + $0xe8] sm:$0xff]
  %v8658 = vld [vmem:[%s9 + $0xf0] sm:$0xff]
  %v8659 = vld [vmem:[%s9 + $0xf8] sm:$0xff]
  %v8692 = vunpack.c.l.b16 %v8628
  %v8693 = vunpack.c.h.b16 %v8628
  %v8694 = vunpack.c.l.b16 %v8629
  %v8695 = vunpack.c.h.b16 %v8629
  %v8696 = vunpack.c.l.b16 %v8630
  %v8697 = vunpack.c.h.b16 %v8630
  %v8698 = vunpack.c.l.b16 %v8631
  %v8699 = vunpack.c.h.b16 %v8631
  %v8700 = vunpack.c.l.b16 %v8632
  %v8701 = vunpack.c.h.b16 %v8632
  %v8702 = vunpack.c.l.b16 %v8633
  %v8703 = vunpack.c.h.b16 %v8633
  %v8704 = vunpack.c.l.b16 %v8634
  %v8705 = vunpack.c.h.b16 %v8634
  %v8706 = vunpack.c.l.b16 %v8635
  %v8707 = vunpack.c.h.b16 %v8635
  %v8708 = vunpack.c.l.b16 %v8636
  %v8709 = vunpack.c.h.b16 %v8636
  %v8710 = vunpack.c.l.b16 %v8637
  %v8711 = vunpack.c.h.b16 %v8637
  %v8712 = vunpack.c.l.b16 %v8638
  %v8713 = vunpack.c.h.b16 %v8638
  %v8714 = vunpack.c.l.b16 %v8639
  %v8715 = vunpack.c.h.b16 %v8639
  %v8716 = vunpack.c.l.b16 %v8640
  %v8717 = vunpack.c.h.b16 %v8640
  %v8718 = vunpack.c.l.b16 %v8641
  %v8719 = vunpack.c.h.b16 %v8641
  %v8720 = vunpack.c.l.b16 %v8642
  %v8721 = vunpack.c.h.b16 %v8642
  %v8722 = vunpack.c.l.b16 %v8643
  %v8723 = vunpack.c.h.b16 %v8643
  %v8724 = vunpack.c.l.b16 %v8644
  %v8725 = vunpack.c.h.b16 %v8644
  %v8726 = vunpack.c.l.b16 %v8645
  %v8727 = vunpack.c.h.b16 %v8645
  %v8728 = vunpack.c.l.b16 %v8646
  %v8729 = vunpack.c.h.b16 %v8646
  %v8730 = vunpack.c.l.b16 %v8647
  %v8731 = vunpack.c.h.b16 %v8647
  %v8732 = vunpack.c.l.b16 %v8648
  %v8733 = vunpack.c.h.b16 %v8648
  %v8734 = vunpack.c.l.b16 %v8649
  %v8735 = vunpack.c.h.b16 %v8649
  %v8736 = vunpack.c.l.b16 %v8650
  %v8737 = vunpack.c.h.b16 %v8650
  %v8738 = vunpack.c.l.b16 %v8651
  %v8739 = vunpack.c.h.b16 %v8651
  %v8740 = vunpack.c.l.b16 %v8652
  %v8741 = vunpack.c.h.b16 %v8652
  %v8742 = vunpack.c.l.b16 %v8653
  %v8743 = vunpack.c.h.b16 %v8653
  %v8744 = vunpack.c.l.b16 %v8654
  %v8745 = vunpack.c.h.b16 %v8654
  %v8746 = vunpack.c.l.b16 %v8655
  %v8747 = vunpack.c.h.b16 %v8655
  %v8748 = vunpack.c.l.b16 %v8656
  %v8749 = vunpack.c.h.b16 %v8656
  %v8750 = vunpack.c.l.b16 %v8657
  %v8751 = vunpack.c.h.b16 %v8657
  %v8752 = vunpack.c.l.b16 %v8658
  %v8753 = vunpack.c.h.b16 %v8658
  %v8754 = vunpack.c.l.b16 %v8659
  %v8755 = vunpack.c.h.b16 %v8659
  %v8756 = vpack.c.b16 %v8696, %v8692
  %v8757 = vpack.c.b16 %v8697, %v8693
  %v8758 = vpack.c.b16 %v8698, %v8694
  %v8759 = vpack.c.b16 %v8699, %v8695
  %v8760 = vpack.c.b16 %v8704, %v8700
  %v8761 = vpack.c.b16 %v8705, %v8701
  %v8762 = vpack.c.b16 %v8706, %v8702
  %v8763 = vpack.c.b16 %v8707, %v8703
  %v8764 = vpack.c.b16 %v8712, %v8708
  %v8765 = vpack.c.b16 %v8713, %v8709
  %v8766 = vpack.c.b16 %v8714, %v8710
  %v8767 = vpack.c.b16 %v8715, %v8711
  %v8768 = vpack.c.b16 %v8720, %v8716
  %v8769 = vpack.c.b16 %v8721, %v8717
  %v8770 = vpack.c.b16 %v8722, %v8718
  %v8771 = vpack.c.b16 %v8723, %v8719
  %v8772 = vpack.c.b16 %v8728, %v8724
  %v8773 = vpack.c.b16 %v8729, %v8725
  %v8774 = vpack.c.b16 %v8730, %v8726
  %v8775 = vpack.c.b16 %v8731, %v8727
  %v8776 = vpack.c.b16 %v8736, %v8732
  %v8777 = vpack.c.b16 %v8737, %v8733
  %v8778 = vpack.c.b16 %v8738, %v8734
  %v8779 = vpack.c.b16 %v8739, %v8735
  %v8780 = vpack.c.b16 %v8744, %v8740
  %v8781 = vpack.c.b16 %v8745, %v8741
  %v8782 = vpack.c.b16 %v8746, %v8742
  %v8783 = vpack.c.b16 %v8747, %v8743
  %v8784 = vpack.c.b16 %v8752, %v8748
  %v8785 = vpack.c.b16 %v8753, %v8749
  %v8786 = vpack.c.b16 %v8754, %v8750
  %v8787 = vpack.c.b16 %v8755, %v8751
  %8820 = vmatpush.bf16.msra.mxu0 %v8784
  %8821 = vmatpush.bf16.msra.mxu0 %v8780
  %8822 = vmatpush.bf16.msra.mxu0 %v8776
  %8823 = vmatpush.bf16.msra.mxu0 %v8772
  %8824 = vmatpush.bf16.msra.mxu0 %v8768
  %8825 = vmatpush.bf16.msra.mxu0 %v8764
  %8826 = vmatpush.bf16.msra.mxu0 %v8760
  %8827 = vmatpush.bf16.msra.mxu0 %v8756
  %8828 = vmatmul.bf16.gmra.mxu0 %v8627
  %v8829 = vpop.f32.mrf.mxu0
  %v8830 = vadd.f32 0.0, %v8829
  %v8831 = vpop.f32.mrf.mxu0
  %8832 = vdwg.mxu0
  %8833 = vmatpush.bf16.msra.mxu0 %v8785
  %8834 = vmatpush.bf16.msra.mxu0 %v8781
  %8835 = vmatpush.bf16.msra.mxu0 %v8777
  %8836 = vmatpush.bf16.msra.mxu0 %v8773
  %8837 = vmatpush.bf16.msra.mxu0 %v8769
  %8838 = vmatpush.bf16.msra.mxu0 %v8765
  %8839 = vmatpush.bf16.msra.mxu0 %v8761
  %8840 = vmatpush.bf16.msra.mxu0 %v8757
  %8841 = vmatmul.bf16.gmra.mxu0 %v8627
  %v8842 = vpop.f32.mrf.mxu0
  %v8843 = vadd.f32 0.0, %v8842
  %v8844 = vpop.f32.mrf.mxu0
  %8845 = vdwg.mxu0
  %8846 = vmatpush.bf16.msra.mxu0 %v8786
  %8847 = vmatpush.bf16.msra.mxu0 %v8782
  %8848 = vmatpush.bf16.msra.mxu0 %v8778
  %8849 = vmatpush.bf16.msra.mxu0 %v8774
  %8850 = vmatpush.bf16.msra.mxu0 %v8770
  %8851 = vmatpush.bf16.msra.mxu0 %v8766
  %8852 = vmatpush.bf16.msra.mxu0 %v8762
  %8853 = vmatpush.bf16.msra.mxu0 %v8758
  %8854 = vmatmul.bf16.gmra.mxu0 %v8627
  %v8855 = vpop.f32.mrf.mxu0
  %v8856 = vadd.f32 0.0, %v8855
  %v8857 = vpop.f32.mrf.mxu0
  %8858 = vdwg.mxu0
  %8859 = vmatpush.bf16.msra.mxu0 %v8787
  %8860 = vmatpush.bf16.msra.mxu0 %v8783
  %8861 = vmatpush.bf16.msra.mxu0 %v8779
  %8862 = vmatpush.bf16.msra.mxu0 %v8775
  %8863 = vmatpush.bf16.msra.mxu0 %v8771
  %8864 = vmatpush.bf16.msra.mxu0 %v8767
  %8865 = vmatpush.bf16.msra.mxu0 %v8763
  %8866 = vmatpush.bf16.msra.mxu0 %v8759
  %8867 = vmatmul.bf16.gmra.mxu0 %v8627
  %v8868 = vpop.f32.mrf.mxu0
  %v8869 = vadd.f32 0.0, %v8868
  %v8870 = vpop.f32.mrf.mxu0
  %8871 = vdwg.mxu0
  %v8872 = vadd.f32 %v8622, %v8830
  %v8873 = vadd.f32 %v8623, %v8843
  %v8874 = vadd.f32 %v8624, %v8856
  %v8875 = vadd.f32 %v8625, %v8869
  %v8876 = vld [vmem:[#allocation12] sm:$0xff]
  %v8877 = vxor.u32 %v8872, 2147483648
  %v8878 = vmul.f32 %v8877, 1.442695
  %v8879 = vpow.pop %v8878
  %v8880 = vadd.f32 %v8879, 1.0
  %v8881 = vrcp.pop %v8880
  %v8882 = vmul.f32 %v8880, %v8881
  %v8883 = vsub.f32 1.0, %v8882
  %v8884 = vmul.f32 %v8881, %v8883
  %v8885 = vadd.f32 %v8881, %v8884
  %vm8886 = vweird.f32 %v8880
  %vm8887 = vweird.f32 %v8881
  %vm8888 = vmor %vm8886, %vm8887
  %v8889 = vsel %vm8888, %v8881, %v8885
  %v8890 = vand.u32 2147483647, %v8880
  %vm8891 = vcmp.eq.f32.partialorder %v8890, 8.507059e+37
  %v8892 = vand.u32 %v8880, 2147483648
  %v8893 = vor.u32 1.1754944e-38, %v8892
  %v8894 = vsel %vm8891, %v8893, %v8889
  %v8895 = vmul.f32 1.0, %v8894
  %v8896 = vxor.u32 %v8873, 2147483648
  %v8897 = vmul.f32 %v8896, 1.442695
  %v8898 = vpow.pop %v8897
  %v8899 = vadd.f32 %v8898, 1.0
  %v8900 = vrcp.pop %v8899
  %v8901 = vmul.f32 %v8899, %v8900
  %v8902 = vsub.f32 1.0, %v8901
  %v8903 = vmul.f32 %v8900, %v8902
  %v8904 = vadd.f32 %v8900, %v8903
  %vm8905 = vweird.f32 %v8899
  %vm8906 = vweird.f32 %v8900
  %vm8907 = vmor %vm8905, %vm8906
  %v8908 = vsel %vm8907, %v8900, %v8904
  %v8909 = vand.u32 2147483647, %v8899
  %vm8910 = vcmp.eq.f32.partialorder %v8909, 8.507059e+37
  %v8911 = vand.u32 %v8899, 2147483648
  %v8912 = vor.u32 1.1754944e-38, %v8911
  %v8913 = vsel %vm8910, %v8912, %v8908
  %v8914 = vmul.f32 1.0, %v8913
  %v8915 = vtanh.pop %v8874
  %v8916 = vxor.u32 %v8875, 2147483648
  %v8917 = vmul.f32 %v8916, 1.442695
  %v8918 = vpow.pop %v8917
  %v8919 = vadd.f32 %v8918, 1.0
  %v8920 = vrcp.pop %v8919
  %v8921 = vmul.f32 %v8919, %v8920
  %v8922 = vsub.f32 1.0, %v8921
  %v8923 = vmul.f32 %v8920, %v8922
  %v8924 = vadd.f32 %v8920, %v8923
  %vm8925 = vweird.f32 %v8919
  %vm8926 = vweird.f32 %v8920
  %vm8927 = vmor %vm8925, %vm8926
  %v8928 = vsel %vm8927, %v8920, %v8924
  %v8929 = vand.u32 2147483647, %v8919
  %vm8930 = vcmp.eq.f32.partialorder %v8929, 8.507059e+37
  %v8931 = vand.u32 %v8919, 2147483648
  %v8932 = vor.u32 1.1754944e-38, %v8931
  %v8933 = vsel %vm8930, %v8932, %v8928
  %v8934 = vmul.f32 1.0, %v8933
  %v8935 = vmul.f32 %v8914, %v8876
  %v8936 = vmul.f32 %v8895, %v8915
  %v8937 = vadd.f32 %v8935, %v8936
  %v8938 = vtanh.pop %v8937
  %v8939 = vmul.f32 %v8934, %v8938
  %8940 = vst [vmem:[#allocation11] sm:$0xff] %v8939
  %8941 = vst [vmem:[#allocation12] sm:$0xff] %v8937
  %v8942 = vld [vmem:[#allocation11] sm:$0xff]
  %v8943 = vld [vmem:[%s11] sm:$0xff]
  %v8944 = vld [vmem:[%s11 + $0x8] sm:$0xff]
  %v8945 = vld [vmem:[%s11 + $0x10] sm:$0xff]
  %v8946 = vld [vmem:[%s11 + $0x18] sm:$0xff]
  %v8947 = vld [vmem:[%s11 + $0x20] sm:$0xff]
  %v8948 = vld [vmem:[%s11 + $0x28] sm:$0xff]
  %v8949 = vld [vmem:[%s11 + $0x30] sm:$0xff]
  %v8950 = vld [vmem:[%s11 + $0x38] sm:$0xff]
  %v8951 = vld [vmem:[%s11 + $0x40] sm:$0xff]
  %v8952 = vld [vmem:[%s11 + $0x48] sm:$0xff]
  %v8953 = vld [vmem:[%s11 + $0x50] sm:$0xff]
  %v8954 = vld [vmem:[%s11 + $0x58] sm:$0xff]
  %v8955 = vld [vmem:[%s11 + $0x60] sm:$0xff]
  %v8956 = vld [vmem:[%s11 + $0x68] sm:$0xff]
  %v8957 = vld [vmem:[%s11 + $0x70] sm:$0xff]
  %v8958 = vld [vmem:[%s11 + $0x78] sm:$0xff]
  %v8959 = vld [vmem:[%s11 + $0x80] sm:$0xff]
  %v8960 = vld [vmem:[%s11 + $0x88] sm:$0xff]
  %v8961 = vld [vmem:[%s11 + $0x90] sm:$0xff]
  %v8962 = vld [vmem:[%s11 + $0x98] sm:$0xff]
  %v8963 = vld [vmem:[%s11 + $0xa0] sm:$0xff]
  %v8964 = vld [vmem:[%s11 + $0xa8] sm:$0xff]
  %v8965 = vld [vmem:[%s11 + $0xb0] sm:$0xff]
  %v8966 = vld [vmem:[%s11 + $0xb8] sm:$0xff]
  %v8967 = vld [vmem:[%s11 + $0xc0] sm:$0xff]
  %v8968 = vld [vmem:[%s11 + $0xc8] sm:$0xff]
  %v8969 = vld [vmem:[%s11 + $0xd0] sm:$0xff]
  %v8970 = vld [vmem:[%s11 + $0xd8] sm:$0xff]
  %v8971 = vld [vmem:[%s11 + $0xe0] sm:$0xff]
  %v8972 = vld [vmem:[%s11 + $0xe8] sm:$0xff]
  %v8973 = vld [vmem:[%s11 + $0xf0] sm:$0xff]
  %v8974 = vld [vmem:[%s11 + $0xf8] sm:$0xff]
  %v8975 = vld [vmem:[%s11 + $0x100] sm:$0xff]
  %v8976 = vld [vmem:[%s11 + $0x108] sm:$0xff]
  %v8977 = vld [vmem:[%s11 + $0x110] sm:$0xff]
  %v8978 = vld [vmem:[%s11 + $0x118] sm:$0xff]
  %v8979 = vld [vmem:[%s11 + $0x120] sm:$0xff]
  %v8980 = vld [vmem:[%s11 + $0x128] sm:$0xff]
  %v8981 = vld [vmem:[%s11 + $0x130] sm:$0xff]
  %v8982 = vld [vmem:[%s11 + $0x138] sm:$0xff]
  %v8983 = vld [vmem:[%s11 + $0x140] sm:$0xff]
  %v8984 = vld [vmem:[%s11 + $0x148] sm:$0xff]
  %v8985 = vld [vmem:[%s11 + $0x150] sm:$0xff]
  %v8986 = vld [vmem:[%s11 + $0x158] sm:$0xff]
  %v8987 = vld [vmem:[%s11 + $0x160] sm:$0xff]
  %v8988 = vld [vmem:[%s11 + $0x168] sm:$0xff]
  %v8989 = vld [vmem:[%s11 + $0x170] sm:$0xff]
  %v8990 = vld [vmem:[%s11 + $0x178] sm:$0xff]
  %v8991 = vld [vmem:[%s12] sm:$0x7]
  %v8993 = vperm.slane %v8991, 0
  %v8994 = vperm.slane %v8991, 1
  %v8995 = vperm.slane %v8991, 2
  %8999 = vmatpush.msra.mxu0 %v8988
  %9000 = vmatpush.msra.mxu0 %v8985
  %9001 = vmatpush.msra.mxu0 %v8982
  %9002 = vmatpush.msra.mxu0 %v8979
  %9003 = vmatpush.msra.mxu0 %v8976
  %9004 = vmatpush.msra.mxu0 %v8973
  %9005 = vmatpush.msra.mxu0 %v8970
  %9006 = vmatpush.msra.mxu0 %v8967
  %9007 = vmatpush.msra.mxu0 %v8964
  %9008 = vmatpush.msra.mxu0 %v8961
  %9009 = vmatpush.msra.mxu0 %v8958
  %9010 = vmatpush.msra.mxu0 %v8955
  %9011 = vmatpush.msra.mxu0 %v8952
  %9012 = vmatpush.msra.mxu0 %v8949
  %9013 = vmatpush.msra.mxu0 %v8946
  %9014 = vmatpush.msra.mxu0 %v8943
  %9015 = vmatmul.f32.gmra.mxu0 %v8942
  %v9016 = vpop.f32.mrf.mxu0
  %v9017 = vadd.f32 %v8993, %v9016
  %9018 = vdwg.mxu0
  %9019 = vmatpush.msra.mxu0 %v8989
  %9020 = vmatpush.msra.mxu0 %v8986
  %9021 = vmatpush.msra.mxu0 %v8983
  %9022 = vmatpush.msra.mxu0 %v8980
  %9023 = vmatpush.msra.mxu0 %v8977
  %9024 = vmatpush.msra.mxu0 %v8974
  %9025 = vmatpush.msra.mxu0 %v8971
  %9026 = vmatpush.msra.mxu0 %v8968
  %9027 = vmatpush.msra.mxu0 %v8965
  %9028 = vmatpush.msra.mxu0 %v8962
  %9029 = vmatpush.msra.mxu0 %v8959
  %9030 = vmatpush.msra.mxu0 %v8956
  %9031 = vmatpush.msra.mxu0 %v8953
  %9032 = vmatpush.msra.mxu0 %v8950
  %9033 = vmatpush.msra.mxu0 %v8947
  %9034 = vmatpush.msra.mxu0 %v8944
  %9035 = vmatmul.f32.gmra.mxu0 %v8942
  %v9036 = vpop.f32.mrf.mxu0
  %v9037 = vadd.f32 %v8994, %v9036
  %9038 = vdwg.mxu0
  %9039 = vmatpush.msra.mxu0 %v8990
  %9040 = vmatpush.msra.mxu0 %v8987
  %9041 = vmatpush.msra.mxu0 %v8984
  %9042 = vmatpush.msra.mxu0 %v8981
  %9043 = vmatpush.msra.mxu0 %v8978
  %9044 = vmatpush.msra.mxu0 %v8975
  %9045 = vmatpush.msra.mxu0 %v8972
  %9046 = vmatpush.msra.mxu0 %v8969
  %9047 = vmatpush.msra.mxu0 %v8966
  %9048 = vmatpush.msra.mxu0 %v8963
  %9049 = vmatpush.msra.mxu0 %v8960
  %9050 = vmatpush.msra.mxu0 %v8957
  %9051 = vmatpush.msra.mxu0 %v8954
  %9052 = vmatpush.msra.mxu0 %v8951
  %9053 = vmatpush.msra.mxu0 %v8948
  %9054 = vmatpush.msra.mxu0 %v8945
  %9055 = vmatmul.f32.gmra.mxu0 %v8942
  %v9056 = vpop.f32.mrf.mxu0
  %v9057 = vadd.f32 %v8995, %v9056
  %9058 = vdwg.mxu0
  %vm9059 = vcmp.gt.f32.partialorder %v9017, 0.0
  %vm9060 = vcmp.gt.f32.partialorder %v9037, 0.0
  %vm9061 = vcmp.gt.f32.partialorder %v9057, 0.0
  %v9062 = vmin.f32 %v9017, 0.0
  %v9063 = vmin.f32 %v9037, 0.0
  %v9064 = vmin.f32 %v9057, 0.0
  %v9065 = vmul.f32 %v9062, 1.442695
  %v9066 = vpow.pop %v9065
  %v9067 = vmul.f32 %v9063, 1.442695
  %v9068 = vpow.pop %v9067
  %v9069 = vmul.f32 %v9064, 1.442695
  %v9070 = vpow.pop %v9069
  %v9071 = vsub.f32 %v9066, 1.0
  %v9072 = vsub.f32 %v9068, 1.0
  %v9073 = vsub.f32 %v9070, 1.0
  %v9074 = vmul.f32 %v9071, 1.6732632
  %v9075 = vmul.f32 %v9072, 1.6732632
  %v9076 = vmul.f32 %v9073, 1.6732632
  %v9077 = vsel %vm9059, %v9017, %v9074
  %v9078 = vsel %vm9060, %v9037, %v9075
  %v9079 = vsel %vm9061, %v9057, %v9076
  %v9080 = vmul.f32 %v9077, 1.050701
  %v9081 = vmul.f32 %v9078, 1.050701
  %v9082 = vmul.f32 %v9079, 1.050701
  %v9083 = vld [vmem:[%s13] sm:$0xff]
  %v9084 = vld [vmem:[%s13 + $0x8] sm:$0xff]
  %v9085 = vld [vmem:[%s13 + $0x10] sm:$0xff]
  %v9086 = vld [vmem:[%s13 + $0x18] sm:$0xff]
  %v9087 = vld [vmem:[%s13 + $0x20] sm:$0xff]
  %v9088 = vld [vmem:[%s13 + $0x28] sm:$0xff]
  %v9089 = vld [vmem:[%s13 + $0x30] sm:$0xff]
  %v9090 = vld [vmem:[%s13 + $0x38] sm:$0xff]
  %v9091 = vld [vmem:[%s13 + $0x40] sm:$0xff]
  %v9092 = vld [vmem:[%s13 + $0x48] sm:$0xff]
  %v9093 = vld [vmem:[%s13 + $0x50] sm:$0xff]
  %v9094 = vld [vmem:[%s13 + $0x58] sm:$0xff]
  %v9095 = vld [vmem:[%s13 + $0x60] sm:$0xff]
  %v9096 = vld [vmem:[%s13 + $0x68] sm:$0xff]
  %v9097 = vld [vmem:[%s13 + $0x70] sm:$0xff]
  %v9098 = vld [vmem:[%s13 + $0x78] sm:$0xff]
  %v9099 = vld [vmem:[%s13 + $0x80] sm:$0xff]
  %v9100 = vld [vmem:[%s13 + $0x88] sm:$0xff]
  %v9101 = vld [vmem:[%s13 + $0x90] sm:$0xff]
  %v9102 = vld [vmem:[%s13 + $0x98] sm:$0xff]
  %v9103 = vld [vmem:[%s13 + $0xa0] sm:$0xff]
  %v9104 = vld [vmem:[%s13 + $0xa8] sm:$0xff]
  %v9105 = vld [vmem:[%s13 + $0xb0] sm:$0xff]
  %v9106 = vld [vmem:[%s13 + $0xb8] sm:$0xff]
  %v9107 = vld [vmem:[%s13 + $0xc0] sm:$0xff]
  %v9108 = vld [vmem:[%s13 + $0xc8] sm:$0xff]
  %v9109 = vld [vmem:[%s13 + $0xd0] sm:$0xff]
  %v9110 = vld [vmem:[%s13 + $0xd8] sm:$0xff]
  %v9111 = vld [vmem:[%s13 + $0xe0] sm:$0xff]
  %v9112 = vld [vmem:[%s13 + $0xe8] sm:$0xff]
  %v9113 = vld [vmem:[%s13 + $0xf0] sm:$0xff]
  %v9114 = vld [vmem:[%s13 + $0xf8] sm:$0xff]
  %v9115 = vld [vmem:[%s13 + $0x100] sm:$0xff]
  %v9116 = vld [vmem:[%s13 + $0x108] sm:$0xff]
  %v9117 = vld [vmem:[%s13 + $0x110] sm:$0xff]
  %v9118 = vld [vmem:[%s13 + $0x118] sm:$0xff]
  %v9119 = vld [vmem:[%s13 + $0x120] sm:$0xff]
  %v9120 = vld [vmem:[%s13 + $0x128] sm:$0xf]
  %v9121 = vld [vmem:[#allocation13] sm:$0x1]
  %v9123 = vperm.slane %v9121, 0
  %vm9125 = vcmask 359424
  %v9127 = vsel %vm9125, %v9082, 0
  %vm9129 = vcmask 1043456
  %v9131 = vsel %vm9129, %v9120, 0
  %9133 = vmatpush.msra.mxu0 %v9098
  %9134 = vmatpush.msra.mxu0 %v9097
  %9135 = vmatpush.msra.mxu0 %v9096
  %9136 = vmatpush.msra.mxu0 %v9095
  %9137 = vmatpush.msra.mxu0 %v9094
  %9138 = vmatpush.msra.mxu0 %v9093
  %9139 = vmatpush.msra.mxu0 %v9092
  %9140 = vmatpush.msra.mxu0 %v9091
  %9141 = vmatpush.msra.mxu0 %v9090
  %9142 = vmatpush.msra.mxu0 %v9089
  %9143 = vmatpush.msra.mxu0 %v9088
  %9144 = vmatpush.msra.mxu0 %v9087
  %9145 = vmatpush.msra.mxu0 %v9086
  %9146 = vmatpush.msra.mxu0 %v9085
  %9147 = vmatpush.msra.mxu0 %v9084
  %9148 = vmatpush.msra.mxu0 %v9083
  %9149 = vmatmul.f32.gmra.mxu0 %v9080
  %v9150 = vpop.f32.mrf.mxu0
  %v9151 = vadd.f32 %v9123, %v9150
  %9152 = vdwg.mxu0
  %9153 = vmatpush.msra.mxu0 %v9114
  %9154 = vmatpush.msra.mxu0 %v9113
  %9155 = vmatpush.msra.mxu0 %v9112
  %9156 = vmatpush.msra.mxu0 %v9111
  %9157 = vmatpush.msra.mxu0 %v9110
  %9158 = vmatpush.msra.mxu0 %v9109
  %9159 = vmatpush.msra.mxu0 %v9108
  %9160 = vmatpush.msra.mxu0 %v9107
  %9161 = vmatpush.msra.mxu0 %v9106
  %9162 = vmatpush.msra.mxu0 %v9105
  %9163 = vmatpush.msra.mxu0 %v9104
  %9164 = vmatpush.msra.mxu0 %v9103
  %9165 = vmatpush.msra.mxu0 %v9102
  %9166 = vmatpush.msra.mxu0 %v9101
  %9167 = vmatpush.msra.mxu0 %v9100
  %9168 = vmatpush.msra.mxu0 %v9099
  %9169 = vmatmul.f32.gmra.mxu0 %v9081
  %v9170 = vpop.f32.mrf.mxu0
  %v9171 = vadd.f32 %v9151, %v9170
  %9172 = vdwg.mxu0
  %9173 = vmatpush.msra.mxu0 0.0
  %9174 = vmatpush.msra.mxu0 0.0
  %9175 = vmatpush.msra.mxu0 0.0
  %9176 = vmatpush.msra.mxu0 0.0
  %9177 = vmatpush.msra.mxu0 0.0
  %9178 = vmatpush.msra.mxu0 0.0
  %9179 = vmatpush.msra.mxu0 0.0
  %9180 = vmatpush.msra.mxu0 0.0
  %9181 = vmatpush.msra.mxu0 0.0
  %9182 = vmatpush.msra.mxu0 0.0
  %9183 = vmatpush.msra.mxu0 %v9131
  %9184 = vmatpush.msra.mxu0 %v9119
  %9185 = vmatpush.msra.mxu0 %v9118
  %9186 = vmatpush.msra.mxu0 %v9117
  %9187 = vmatpush.msra.mxu0 %v9116
  %9188 = vmatpush.msra.mxu0 %v9115
  %9189 = vmatmul.f32.gmra.mxu0 %v9127
  %v9190 = vpop.f32.mrf.mxu0
  %v9191 = vadd.f32 %v9171, %v9190
  %9192 = vdwg.mxu0
  %9193 = vst.msk [vmem:[%s15] sm:$0xff] %vm76, %v9191
  // Predicated region
  $region62: #{lstm_model_forward.1} parent=0 // pred_check
    _
  $region63: #{lstm_model_forward.1} parent=0 // pred_check_branch
    %9195 = sbr.rel (0) target = $region65
  $region64: #{lstm_model_forward.1} parent=0 // pred_region
    _
  $region65: #{lstm_model_forward.1} parent=0 // pred_fallthru
    _
  // Predicated region
  $region66: #{lstm_model_forward.1} parent=0 // pred_check
    _
  $region67: #{lstm_model_forward.1} parent=0 // pred_check_branch
    %9197 = sbr.rel (0) target = $region69
  $region68: #{lstm_model_forward.1} parent=0 // pred_region
    _
  $region69: #{lstm_model_forward.1} parent=0 // pred_fallthru
    _

</llo_original>
